<compile_context>
chip_gen: v5e
topology: v5e:2x2
jax: 0.10.0
libtpu: 0.0.40
codegen_flags: <defaults>
</compile_context>

<pallas_src>
import functools
import math

import jax
import jax.numpy as jnp
from jax.experimental import pallas as pl
from jax.experimental.pallas import tpu as pltpu

# ----------------------------- model hyper-params -----------------------------
BATCH = 2
IN_CH = 3
IMG = 16
PATCH = 4
EMBED = 32
DEPTH = 2
NUM_CLASSES = 10

D_INNER = 2 * EMBED          # expand = 2
D_STATE = 16
D_CONV = 4
DT_RANK = math.ceil(EMBED / 16)
LN_EPS = 1e-5

SEQ = (IMG // PATCH) ** 2            # 16 tokens
PATCH_DIM = IN_CH * PATCH * PATCH    # 48
HEAD_PAD = 128                       # lane-dense padded head output
SCAN_BLK = 4                         # scan steps per unrolled block (caps live h_t)
VEC_LAYER_ROWS = 3 + D_CONV          # packed small-vector rows per layer
VEC_ROWS = 2 + DEPTH * VEC_LAYER_ROWS


# ------------------------------ in-kernel helpers ------------------------------
def _mm(x, w_bf16):
    """(m,k) @ (k,n): bf16 MXU inputs, f32 accumulation."""
    return jnp.dot(x.astype(jnp.bfloat16), w_bf16,
                   preferred_element_type=jnp.float32)


def _mm_nt(w_bf16, x):
    """(m,k) @ (n,k)^T -> (m,n): contraction over the shared last axis."""
    return jax.lax.dot_general(
        w_bf16, x.astype(jnp.bfloat16),
        dimension_numbers=(((1,), (1,)), ((), ())),
        preferred_element_type=jnp.float32)


def _layernorm(x, w, b):
    mean = jnp.mean(x, axis=-1, keepdims=True)
    var = jnp.mean(jnp.square(x - mean), axis=-1, keepdims=True)
    return (x - mean) * jax.lax.rsqrt(var + LN_EPS) * w + b


def _silu(x):
    return x * jax.nn.sigmoid(x)


# ================================ fused kernel =================================
def _vim_fwd_kernel(
    patches_ref, patch_w_ref, in_proj_w_ref, w_dt_ref, w_bc_t_ref,
    A_sd_ref, out_proj_w_ref, head_w_ref, vecs_ref,
    out_ref, *, nb,
):
    """Entire VisionMamba forward for `nb` batch elements per grid step."""
    f32 = jnp.float32
    nrows = nb * SEQ

    # ---- unpack the single lane-dense packed small-vector operand -------------
    vecs = vecs_ref[...]                                   # (VEC_ROWS, 128) f32
    patch_b  = vecs[0:1, 0:EMBED]
    norm_f_w = vecs[0:1, EMBED:2 * EMBED]
    norm_f_b = vecs[0:1, 2 * EMBED:3 * EMBED]
    head_b   = vecs[1:2, :]                                # (1, HEAD_PAD)

    # ---- hoisted constants for the causal-conv masked shifts ------------------
    # local token index within each length-SEQ batch segment; masks zero both the
    # causal left-pad and any cross-batch wraparound from the roll.
    row_ids = jax.lax.broadcasted_iota(jnp.int32, (nrows, D_INNER), 0)
    if (SEQ & (SEQ - 1)) == 0:
        local_t = jnp.bitwise_and(row_ids, SEQ - 1)
    else:
        local_t = row_ids % SEQ
    shift_mask = {s: local_t >= s for s in range(1, D_CONV)}

    # ---- PatchEmbed: Conv2d(k=patch, stride=patch) == per-patch linear --------
    hidden = _mm(patches_ref[...], patch_w_ref[...]) + patch_b   # (nb*L, D)

    residual = None
    for l in range(DEPTH):
        base = 2 + l * VEC_LAYER_ROWS
        ln_w    = vecs[base + 0:base + 1, 0:EMBED]
        ln_b    = vecs[base + 0:base + 1, EMBED:2 * EMBED]
        conv_b  = vecs[base + 1:base + 2, 0:D_INNER]
        dt_bias = vecs[base + 1:base + 2, D_INNER:2 * D_INNER]
        Dvec    = vecs[base + 2:base + 3, 0:D_INNER]
        conv_w  = vecs[base + 3:base + 3 + D_CONV, 0:D_INNER]    # (K, d_inner)
        A_sd    = A_sd_ref[l]                                    # (d_state, d_inner)

        # ---------- Block: Add -> LayerNorm -> Mamba mixer ---------------------
        residual = hidden if residual is None else residual + hidden
        normed = _layernorm(residual, ln_w, ln_b)

        # in_proj, split into x / z; gate = silu(z) is time-parallel (hoisted)
        xz = _mm(normed, in_proj_w_ref[l])                       # (nb*L, 2*d_inner)
        xc = xz[:, :D_INNER]
        gate = _silu(xz[:, D_INNER:])

        # causal depthwise conv1d: per tap a masked sublane roll + VPU mul-add
        # (out[t] = sum_k w[k] * x[t + k - (K-1)], x[<0] = 0 per batch segment)
        acc = conv_b
        for k in range(D_CONV):
            s = D_CONV - 1 - k
            if s == 0:
                xs = xc
            else:
                xs = jnp.where(shift_mask[s],
                               pltpu.roll(xc, shift=s, axis=0), 0.0)
            acc = acc + xs * conv_w[k:k + 1, :]
        xconv = _silu(acc)                                       # (nb*L, d_inner)

        # x_proj with dt_proj folded in (exact); B/C produced directly in
        # (d_state, token) orientation via W @ x^T so the scan needs no transposes.
        dt = jax.nn.softplus(_mm(xconv, w_dt_ref[l]) + dt_bias)  # (nb*L, d_inner)
        bct = _mm_nt(w_bc_t_ref[l], xconv)                       # (2*d_state, nb*L)

        # time-parallel precompute (off the recurrence critical path)
        du = dt * xconv                                          # (nb*L, d_inner)
        Du = xconv * Dvec                                        # (nb*L, d_inner)

        # ---------- selective scan: block-unrolled, vreg-resident outputs ------
        ys = []
        for b in range(nb):
            h = jnp.zeros((D_STATE, D_INNER), f32)
            for t0 in range(0, SEQ, SCAN_BLK):
                rows = [b * SEQ + t for t in range(t0, min(t0 + SCAN_BLK, SEQ))]
                # off-chain precompute (EUP exp, lane broadcasts) for this block
                dA_blk  = [jnp.exp(dt[r:r + 1, :] * A_sd) for r in rows]
                dBu_blk = [bct[:D_STATE, r:r + 1] * du[r:r + 1, :] for r in rows]
                C_blk   = [bct[D_STATE:, r:r + 1] for r in rows]
                hs = []
                for i in range(len(rows)):          # only this is truly serial
                    h = dA_blk[i] * h + dBu_blk[i]
                    hs.append(h)
                # batched XLU reduces after the chain, not between h updates
                for i, r in enumerate(rows):
                    y_r = jnp.sum(hs[i] * C_blk[i], axis=0, keepdims=True)
                    ys.append((y_r + Du[r:r + 1, :]) * gate[r:r + 1, :])
        y = jnp.concatenate(ys, axis=0)                          # (nb*L, d_inner)

        # out_proj; y never round-trips HBM or VMEM scratch
        hidden = _mm(y, out_proj_w_ref[l])                       # (nb*L, D)

    # ---- final Add -> norm_f, last-token pool ('none'), classifier head ------
    residual = residual + hidden
    normed = _layernorm(residual, norm_f_w, norm_f_b)
    feat = jnp.concatenate(
        [normed[b * SEQ + SEQ - 1:b * SEQ + SEQ, :] for b in range(nb)], axis=0)
    out_ref[0] = _mm(feat, head_w_ref[...]) + head_b             # (nb, HEAD_PAD)


# ============================ parameter preparation ============================
def _prepare_params(params):
    """Stack per-layer weights, fold dt_proj into x_proj, cast MXU weights bf16,
    and pack every tiny f32 vector into one lane-dense (VEC_ROWS, 128) operand."""
    bf16 = jnp.bfloat16
    layers = params["layers"]

    def stack(fn):
        return jnp.stack([fn(lp) for lp in layers], axis=0)

    in_proj_w = stack(lambda lp: lp["in_proj_w"]).astype(bf16)
    # fold dt_proj into x_proj (exact in f32), dt_proj_b added in-kernel pre-softplus
    w_dt = stack(lambda lp: lp["x_proj_w"][:, :DT_RANK] @ lp["dt_proj_w"]).astype(bf16)
    # B/C projection, pre-transposed so the kernel gets (d_state, token) via W @ x^T
    w_bc_t = stack(lambda lp: lp["x_proj_w"][:, DT_RANK:].T).astype(bf16)
    A_sd = stack(lambda lp: (-jnp.exp(lp["A_log"])).T)           # (d_state, d_inner)
    out_proj_w = stack(lambda lp: lp["out_proj_w"]).astype(bf16)

    patch_w = params["patch_w"].astype(bf16)
    head_w = jnp.zeros((EMBED, HEAD_PAD), jnp.float32)
    head_w = head_w.at[:, :NUM_CLASSES].set(params["head_w"]).astype(bf16)

    # ---- packed small-vector operand: (VEC_ROWS, 128) f32 --------------------
    def row():
        return jnp.zeros((128,), jnp.float32)

    rows = []
    r0 = row()
    r0 = r0.at[0:EMBED].set(params["patch_b"])
    r0 = r0.at[EMBED:2 * EMBED].set(params["norm_f_w"])
    r0 = r0.at[2 * EMBED:3 * EMBED].set(params["norm_f_b"])
    rows.append(r0)
    rows.append(row().at[:NUM_CLASSES].set(params["head_b"]))
    for lp in layers:
        rows.append(row().at[0:EMBED].set(lp["ln_w"])
                         .at[EMBED:2 * EMBED].set(lp["ln_b"]))
        rows.append(row().at[0:D_INNER].set(lp["conv_b"])
                         .at[D_INNER:2 * D_INNER].set(lp["dt_proj_b"]))
        rows.append(row().at[0:D_INNER].set(lp["D"]))
        for k in range(D_CONV):
            rows.append(row().at[0:D_INNER].set(lp["conv_w"][k]))
    vecs = jnp.stack(rows, axis=0)                               # (VEC_ROWS, 128)

    return (patch_w, in_proj_w, w_dt, w_bc_t, A_sd, out_proj_w, head_w, vecs)


def _full_spec(a):
    r = a.ndim
    return pl.BlockSpec(a.shape, lambda b, _r=r: (0,) * _r)


def _tc_per_chip():
    """Best-effort TensorCore count per device (megacore chips -> 2)."""
    try:
        kind = jax.devices()[0].device_kind.lower()
    except Exception:
        return 1
    if any(tag in kind for tag in ("v7", "7x", "v5p", "v4")):
        return 2
    return 1


def _cost_estimate(batch, prep, patches):
    per_layer = (
        2 * SEQ * EMBED * 2 * D_INNER        # in_proj
        + 2 * SEQ * D_INNER * D_INNER        # dt projection (dt_proj folded)
        + 2 * SEQ * D_INNER * 2 * D_STATE    # B/C projection
        + 2 * SEQ * D_INNER * EMBED          # out_proj
        + 2 * SEQ * D_INNER * D_CONV         # depthwise conv
        + 10 * SEQ * D_STATE * D_INNER       # selective scan mul/adds
        + 12 * SEQ * D_INNER                 # gating / norms / elementwise
    )
    flops = batch * (2 * SEQ * PATCH_DIM * EMBED + DEPTH * per_layer
                     + 2 * EMBED * HEAD_PAD + 10 * SEQ * EMBED)
    transcendentals = batch * DEPTH * (SEQ * D_STATE * D_INNER + 4 * SEQ * D_INNER)
    byts = int(patches.size) * patches.dtype.itemsize + batch * HEAD_PAD * 4
    byts += sum(int(a.size) * a.dtype.itemsize for a in prep)
    return int(flops), int(transcendentals), int(byts)


# =================================== forward ===================================
@jax.jit
def vision_mamba_forward(x_img, params):
    """x_img: (B, C, H, W) float32 (NCHW, PyTorch convention) -> (B, NUM_CLASSES)."""
    B, C, H, W = x_img.shape
    gh, gw = H // PATCH, W // PATCH
    L = gh * gw

    # PatchEmbed im2col: per-patch vectors, ordered (C, P, P) like Conv2d weight.
    patches = (
        x_img.reshape(B, C, gh, PATCH, gw, PATCH)
        .transpose(0, 2, 4, 1, 3, 5)
        .reshape(B * L, C * PATCH * PATCH)
    )
    prep = _prepare_params(params)

    # Chip-aware batch grid: one element per step on multi-TC chips (v7x megacore
    # parallelism via "parallel"); whole batch fused into one step on v5e/v6e.
    nb = 1 if (_tc_per_chip() >= 2 and B > 1) else B
    nblk = B // nb

    in_specs = [pl.BlockSpec((nb * L, C * PATCH * PATCH), lambda b: (b, 0))]
    in_specs += [_full_spec(a) for a in prep]

    flops, transc, byts = _cost_estimate(B, prep, patches)

    out = pl.pallas_call(
        functools.partial(_vim_fwd_kernel, nb=nb),
        out_shape=jax.ShapeDtypeStruct((nblk, nb, HEAD_PAD), jnp.float32),
        grid=(nblk,),
        in_specs=in_specs,
        out_specs=pl.BlockSpec((1, nb, HEAD_PAD), lambda b: (b, 0, 0)),
        compiler_params=pltpu.CompilerParams(dimension_semantics=("parallel",)),
        cost_estimate=pl.CostEstimate(flops=flops, transcendentals=transc,
                                      bytes_accessed=byts),
    )(patches, *prep)

    return out.reshape(B, HEAD_PAD)[:, :NUM_CLASSES]


# ================================ parameter init ===============================
def init_params(key):
    keys = iter(jax.random.split(key, 8 * DEPTH + 8))

    def nrm(shape, std=0.02):
        return (std * jax.random.normal(next(keys), shape)).astype(jnp.float32)

    params = {
        "patch_w": nrm((PATCH_DIM, EMBED)),
        "patch_b": jnp.zeros((EMBED,), jnp.float32),
        "norm_f_w": jnp.ones((EMBED,), jnp.float32),
        "norm_f_b": jnp.zeros((EMBED,), jnp.float32),
        "head_w": nrm((EMBED, NUM_CLASSES)),
        "head_b": jnp.zeros((NUM_CLASSES,), jnp.float32),
    }
    layers = []
    dt_bias = math.log(math.expm1(0.01))  # inverse-softplus of dt_init_floor
    for _ in range(DEPTH):
        lp = {
            "ln_w": jnp.ones((EMBED,), jnp.float32),
            "ln_b": jnp.zeros((EMBED,), jnp.float32),
            "in_proj_w": nrm((EMBED, 2 * D_INNER)),
            "conv_w": nrm((D_CONV, D_INNER), std=0.1),
            "conv_b": jnp.zeros((D_INNER,), jnp.float32),
            "x_proj_w": nrm((D_INNER, DT_RANK + 2 * D_STATE)),
            "dt_proj_w": nrm((DT_RANK, D_INNER), std=0.1),
            "dt_proj_b": jnp.full((D_INNER,), dt_bias, jnp.float32),
            "A_log": jnp.log(
                jnp.tile(jnp.arange(1, D_STATE + 1, dtype=jnp.float32)[None, :],
                         (D_INNER, 1))
            ),
            "D": jnp.ones((D_INNER,), jnp.float32),
            "out_proj_w": nrm((D_INNER, EMBED)),
        }
        layers.append(lp)
    params["layers"] = layers
    return params


# ===================================== main ====================================
if __name__ == "__main__":
    key = jax.random.PRNGKey(0)
    kx, kp = jax.random.split(key)
    x = jax.random.normal(kx, (BATCH, IN_CH, IMG, IMG), dtype=jnp.float32)
    params = init_params(kp)

    logits = vision_mamba_forward(x, params)
    logits = jax.block_until_ready(logits)
    assert logits.shape == (BATCH, NUM_CLASSES)
    assert bool(jnp.all(jnp.isfinite(logits)))
    print("KERNEL_OK")
</pallas_src>

<mosaic_0001>
module attributes {stable_mosaic.version = 11 : i64} {
  func.func @_vim_fwd_kernel(%arg0: i32, %arg1: memref<32x48xf32, #tpu.memory_space<vmem>>, %arg2: memref<48x32xbf16, #tpu.memory_space<vmem>>, %arg3: memref<2x32x128xbf16, #tpu.memory_space<vmem>>, %arg4: memref<2x64x64xbf16, #tpu.memory_space<vmem>>, %arg5: memref<2x32x64xbf16, #tpu.memory_space<vmem>>, %arg6: memref<2x16x64xf32, #tpu.memory_space<vmem>>, %arg7: memref<2x64x32xbf16, #tpu.memory_space<vmem>>, %arg8: memref<32x128xbf16, #tpu.memory_space<vmem>>, %arg9: memref<16x128xf32, #tpu.memory_space<vmem>>, %arg10: memref<1x2x128xf32, #tpu.memory_space<vmem>>) attributes {dimension_semantics = [#tpu.dimension_semantics<parallel>], iteration_bounds = array<i64: 1>, scalar_prefetch = 0 : i64, scratch_operands = 0 : i64, tpu.core_type = #tpu.core_type<tc>, window_params = [{transform_indices = @transform_0, window_bounds = array<i64: 32, 48>}, {pipeline_mode = #tpu.pipeline_mode<synchronous>, transform_indices = @transform_1, window_bounds = array<i64: 48, 32>}, {pipeline_mode = #tpu.pipeline_mode<synchronous>, transform_indices = @transform_2, window_bounds = array<i64: 2, 32, 128>}, {pipeline_mode = #tpu.pipeline_mode<synchronous>, transform_indices = @transform_3, window_bounds = array<i64: 2, 64, 64>}, {pipeline_mode = #tpu.pipeline_mode<synchronous>, transform_indices = @transform_4, window_bounds = array<i64: 2, 32, 64>}, {pipeline_mode = #tpu.pipeline_mode<synchronous>, transform_indices = @transform_5, window_bounds = array<i64: 2, 16, 64>}, {pipeline_mode = #tpu.pipeline_mode<synchronous>, transform_indices = @transform_6, window_bounds = array<i64: 2, 64, 32>}, {pipeline_mode = #tpu.pipeline_mode<synchronous>, transform_indices = @transform_7, window_bounds = array<i64: 32, 128>}, {pipeline_mode = #tpu.pipeline_mode<synchronous>, transform_indices = @transform_8, window_bounds = array<i64: 16, 128>}, {transform_indices = @transform_9, window_bounds = array<i64: 1, 2, 128>}]} {
    %c0 = arith.constant 0 : index
    %c0_0 = arith.constant 0 : index
    %0 = vector.load %arg9[%c0, %c0_0] : memref<16x128xf32, #tpu.memory_space<vmem>>, vector<16x128xf32>
    %1 = vector.extract_strided_slice %0 {offsets = [0, 0], sizes = [1, 32], strides = [1, 1]} : vector<16x128xf32> to vector<1x32xf32>
    %2 = vector.extract_strided_slice %0 {offsets = [0, 32], sizes = [1, 32], strides = [1, 1]} : vector<16x128xf32> to vector<1x32xf32>
    %3 = vector.extract_strided_slice %0 {offsets = [0, 64], sizes = [1, 32], strides = [1, 1]} : vector<16x128xf32> to vector<1x32xf32>
    %4 = vector.extract_strided_slice %0 {offsets = [1, 0], sizes = [1, 128], strides = [1, 1]} : vector<16x128xf32> to vector<1x128xf32>
    %5 = tpu.iota {dimensions = array<i32: 0>} : vector<32x64xi32>
    %c15_i32 = arith.constant 15 : i32
    %6 = vector.broadcast %c15_i32 : i32 to vector<32x64xi32>
    %7 = arith.andi %5, %6 : vector<32x64xi32>
    %c1_i32 = arith.constant 1 : i32
    %8 = vector.broadcast %c1_i32 : i32 to vector<32x64xi32>
    %9 = arith.cmpi sge, %7, %8 : vector<32x64xi32>
    %c2_i32 = arith.constant 2 : i32
    %10 = vector.broadcast %c2_i32 : i32 to vector<32x64xi32>
    %11 = arith.cmpi sge, %7, %10 : vector<32x64xi32>
    %c3_i32 = arith.constant 3 : i32
    %12 = vector.broadcast %c3_i32 : i32 to vector<32x64xi32>
    %13 = arith.cmpi sge, %7, %12 : vector<32x64xi32>
    %c0_1 = arith.constant 0 : index
    %c0_2 = arith.constant 0 : index
    %14 = vector.load %arg1[%c0_1, %c0_2] : memref<32x48xf32, #tpu.memory_space<vmem>>, vector<32x48xf32>
    %c0_3 = arith.constant 0 : index
    %c0_4 = arith.constant 0 : index
    %15 = vector.load %arg2[%c0_3, %c0_4] : memref<48x32xbf16, #tpu.memory_space<vmem>>, vector<48x32xbf16>
    %16 = arith.truncf %14 : vector<32x48xf32> to vector<32x48xbf16>
    %cst = arith.constant dense<0.000000e+00> : vector<32x32xf32>
    %17 = tpu.matmul %16, %15, %cst {dimension_numbers = #tpu.dot_dimension_numbers<[1], [0], [0], [1], [0, 0, 1, 1], [], []>} : vector<32x48xbf16>, vector<48x32xbf16>, vector<32x32xf32> -> vector<32x32xf32>
    %18 = vector.broadcast %1 : vector<1x32xf32> to vector<32x32xf32>
    %19 = arith.addf %17, %18 : vector<32x32xf32>
    %20 = vector.extract_strided_slice %0 {offsets = [2, 0], sizes = [1, 32], strides = [1, 1]} : vector<16x128xf32> to vector<1x32xf32>
    %21 = vector.extract_strided_slice %0 {offsets = [2, 32], sizes = [1, 32], strides = [1, 1]} : vector<16x128xf32> to vector<1x32xf32>
    %22 = vector.extract_strided_slice %0 {offsets = [3, 0], sizes = [1, 64], strides = [1, 1]} : vector<16x128xf32> to vector<1x64xf32>
    %23 = vector.extract_strided_slice %0 {offsets = [3, 64], sizes = [1, 64], strides = [1, 1]} : vector<16x128xf32> to vector<1x64xf32>
    %24 = vector.extract_strided_slice %0 {offsets = [4, 0], sizes = [1, 64], strides = [1, 1]} : vector<16x128xf32> to vector<1x64xf32>
    %25 = vector.extract_strided_slice %0 {offsets = [5, 0], sizes = [4, 64], strides = [1, 1]} : vector<16x128xf32> to vector<4x64xf32>
    %c0_5 = arith.constant 0 : index
    %c0_6 = arith.constant 0 : index
    %c0_7 = arith.constant 0 : index
    %26 = vector.load %arg6[%c0_5, %c0_6, %c0_7] : memref<2x16x64xf32, #tpu.memory_space<vmem>>, vector<1x16x64xf32>
    %27 = vector.shape_cast %26 : vector<1x16x64xf32> to vector<16x64xf32>
    %cst_8 = arith.constant dense<0.000000e+00> : vector<32xf32>
    %28 = vector.multi_reduction <add>, %19, %cst_8 [1] : vector<32x32xf32> to vector<32xf32>
    %29 = vector.shape_cast %28 : vector<32xf32> to vector<32x1xf32>
    %cst_9 = arith.constant 3.200000e+01 : f32
    %30 = vector.broadcast %cst_9 : f32 to vector<32x1xf32>
    %31 = arith.divf %29, %30 : vector<32x1xf32>
    %32 = vector.broadcast %31 : vector<32x1xf32> to vector<32x32xf32>
    %33 = arith.subf %19, %32 : vector<32x32xf32>
    %34 = arith.mulf %33, %33 : vector<32x32xf32>
    %cst_10 = arith.constant dense<0.000000e+00> : vector<32xf32>
    %35 = vector.multi_reduction <add>, %34, %cst_10 [1] : vector<32x32xf32> to vector<32xf32>
    %36 = vector.shape_cast %35 : vector<32xf32> to vector<32x1xf32>
    %cst_11 = arith.constant 3.200000e+01 : f32
    %37 = vector.broadcast %cst_11 : f32 to vector<32x1xf32>
    %38 = arith.divf %36, %37 : vector<32x1xf32>
    %39 = vector.broadcast %31 : vector<32x1xf32> to vector<32x32xf32>
    %40 = arith.subf %19, %39 : vector<32x32xf32>
    %cst_12 = arith.constant 9.99999974E-6 : f32
    %41 = vector.broadcast %cst_12 : f32 to vector<32x1xf32>
    %42 = arith.addf %38, %41 : vector<32x1xf32>
    %43 = math.rsqrt %42 : vector<32x1xf32>
    %44 = vector.broadcast %43 : vector<32x1xf32> to vector<32x32xf32>
    %45 = arith.mulf %40, %44 : vector<32x32xf32>
    %46 = vector.broadcast %20 : vector<1x32xf32> to vector<32x32xf32>
    %47 = arith.mulf %45, %46 : vector<32x32xf32>
    %48 = vector.broadcast %21 : vector<1x32xf32> to vector<32x32xf32>
    %49 = arith.addf %47, %48 : vector<32x32xf32>
    %c0_13 = arith.constant 0 : index
    %c0_14 = arith.constant 0 : index
    %c0_15 = arith.constant 0 : index
    %50 = vector.load %arg3[%c0_13, %c0_14, %c0_15] : memref<2x32x128xbf16, #tpu.memory_space<vmem>>, vector<1x32x128xbf16>
    %51 = vector.shape_cast %50 : vector<1x32x128xbf16> to vector<32x128xbf16>
    %52 = arith.truncf %49 : vector<32x32xf32> to vector<32x32xbf16>
    %cst_16 = arith.constant dense<0.000000e+00> : vector<32x128xf32>
    %53 = tpu.matmul %52, %51, %cst_16 {dimension_numbers = #tpu.dot_dimension_numbers<[1], [0], [0], [1], [0, 0, 1, 1], [], []>} : vector<32x32xbf16>, vector<32x128xbf16>, vector<32x128xf32> -> vector<32x128xf32>
    %54 = vector.extract_strided_slice %53 {offsets = [0, 0], sizes = [32, 64], strides = [1, 1]} : vector<32x128xf32> to vector<32x64xf32>
    %55 = vector.extract_strided_slice %53 {offsets = [0, 64], sizes = [32, 64], strides = [1, 1]} : vector<32x128xf32> to vector<32x64xf32>
    %56 = arith.negf %55 : vector<32x64xf32>
    %57 = math.exp %56 : vector<32x64xf32>
    %cst_17 = arith.constant 1.000000e+00 : f32
    %58 = vector.broadcast %cst_17 : f32 to vector<32x64xf32>
    %59 = arith.addf %58, %57 : vector<32x64xf32>
    %60 = arith.divf %58, %59 : vector<32x64xf32>
    %61 = arith.mulf %55, %60 : vector<32x64xf32>
    %c3_i32_18 = arith.constant 3 : i32
    %62 = tpu.dynamic_rotate %54 by %c3_i32_18 dim 0 : vector<32x64xf32>, i32 -> vector<32x64xf32>
    %cst_19 = arith.constant 0.000000e+00 : f32
    %63 = vector.broadcast %cst_19 : f32 to vector<32x64xf32>
    %64 = arith.select %13, %62, %63 : vector<32x64xi1>, vector<32x64xf32>
    %65 = vector.extract_strided_slice %25 {offsets = [0, 0], sizes = [1, 64], strides = [1, 1]} : vector<4x64xf32> to vector<1x64xf32>
    %66 = vector.broadcast %65 : vector<1x64xf32> to vector<32x64xf32>
    %67 = arith.mulf %64, %66 : vector<32x64xf32>
    %68 = vector.broadcast %22 : vector<1x64xf32> to vector<32x64xf32>
    %69 = arith.addf %68, %67 : vector<32x64xf32>
    %c2_i32_20 = arith.constant 2 : i32
    %70 = tpu.dynamic_rotate %54 by %c2_i32_20 dim 0 : vector<32x64xf32>, i32 -> vector<32x64xf32>
    %cst_21 = arith.constant 0.000000e+00 : f32
    %71 = vector.broadcast %cst_21 : f32 to vector<32x64xf32>
    %72 = arith.select %11, %70, %71 : vector<32x64xi1>, vector<32x64xf32>
    %73 = vector.extract_strided_slice %25 {offsets = [1, 0], sizes = [1, 64], strides = [1, 1]} : vector<4x64xf32> to vector<1x64xf32>
    %74 = vector.broadcast %73 : vector<1x64xf32> to vector<32x64xf32>
    %75 = arith.mulf %72, %74 : vector<32x64xf32>
    %76 = arith.addf %69, %75 : vector<32x64xf32>
    %c1_i32_22 = arith.constant 1 : i32
    %77 = tpu.dynamic_rotate %54 by %c1_i32_22 dim 0 : vector<32x64xf32>, i32 -> vector<32x64xf32>
    %cst_23 = arith.constant 0.000000e+00 : f32
    %78 = vector.broadcast %cst_23 : f32 to vector<32x64xf32>
    %79 = arith.select %9, %77, %78 : vector<32x64xi1>, vector<32x64xf32>
    %80 = vector.extract_strided_slice %25 {offsets = [2, 0], sizes = [1, 64], strides = [1, 1]} : vector<4x64xf32> to vector<1x64xf32>
    %81 = vector.broadcast %80 : vector<1x64xf32> to vector<32x64xf32>
    %82 = arith.mulf %79, %81 : vector<32x64xf32>
    %83 = arith.addf %76, %82 : vector<32x64xf32>
    %84 = vector.extract_strided_slice %25 {offsets = [3, 0], sizes = [1, 64], strides = [1, 1]} : vector<4x64xf32> to vector<1x64xf32>
    %85 = vector.broadcast %84 : vector<1x64xf32> to vector<32x64xf32>
    %86 = arith.mulf %54, %85 : vector<32x64xf32>
    %87 = arith.addf %83, %86 : vector<32x64xf32>
    %88 = arith.negf %87 : vector<32x64xf32>
    %89 = math.exp %88 : vector<32x64xf32>
    %cst_24 = arith.constant 1.000000e+00 : f32
    %90 = vector.broadcast %cst_24 : f32 to vector<32x64xf32>
    %91 = arith.addf %90, %89 : vector<32x64xf32>
    %92 = arith.divf %90, %91 : vector<32x64xf32>
    %93 = arith.mulf %87, %92 : vector<32x64xf32>
    %c0_25 = arith.constant 0 : index
    %c0_26 = arith.constant 0 : index
    %c0_27 = arith.constant 0 : index
    %94 = vector.load %arg4[%c0_25, %c0_26, %c0_27] : memref<2x64x64xbf16, #tpu.memory_space<vmem>>, vector<1x64x64xbf16>
    %95 = vector.shape_cast %94 : vector<1x64x64xbf16> to vector<64x64xbf16>
    %96 = arith.truncf %93 : vector<32x64xf32> to vector<32x64xbf16>
    %cst_28 = arith.constant dense<0.000000e+00> : vector<32x64xf32>
    %97 = tpu.matmul %96, %95, %cst_28 {dimension_numbers = #tpu.dot_dimension_numbers<[1], [0], [0], [1], [0, 0, 1, 1], [], []>} : vector<32x64xbf16>, vector<64x64xbf16>, vector<32x64xf32> -> vector<32x64xf32>
    %98 = vector.broadcast %23 : vector<1x64xf32> to vector<32x64xf32>
    %99 = arith.addf %97, %98 : vector<32x64xf32>
    %cst_29 = arith.constant 0.000000e+00 : f32
    %100 = vector.broadcast %cst_29 : f32 to vector<32x64xf32>
    %101 = arith.maximumf %99, %100 : vector<32x64xf32>
    %102 = vector.broadcast %cst_29 : f32 to vector<32x64xf32>
    %103 = arith.subf %99, %102 : vector<32x64xf32>
    %104 = arith.cmpf one, %103, %103 : vector<32x64xf32>
    %105 = vector.broadcast %cst_29 : f32 to vector<32x64xf32>
    %106 = arith.addf %99, %105 : vector<32x64xf32>
    %107 = math.absf %103 : vector<32x64xf32>
    %cst_30 = arith.constant 0.000000e+00 : f32
    %108 = vector.broadcast %cst_30 : f32 to vector<32x64xf32>
    %109 = arith.subf %108, %107 : vector<32x64xf32>
    %110 = math.exp %109 : vector<32x64xf32>
    %111 = math.log1p %110 : vector<32x64xf32>
    %112 = arith.addf %101, %111 : vector<32x64xf32>
    %113 = arith.select %104, %106, %112 : vector<32x64xi1>, vector<32x64xf32>
    %c0_31 = arith.constant 0 : index
    %c0_32 = arith.constant 0 : index
    %c0_33 = arith.constant 0 : index
    %114 = vector.load %arg5[%c0_31, %c0_32, %c0_33] : memref<2x32x64xbf16, #tpu.memory_space<vmem>>, vector<1x32x64xbf16>
    %115 = vector.shape_cast %114 : vector<1x32x64xbf16> to vector<32x64xbf16>
    %116 = arith.truncf %93 : vector<32x64xf32> to vector<32x64xbf16>
    %cst_34 = arith.constant dense<0.000000e+00> : vector<32x32xf32>
    %117 = tpu.matmul %115, %116, %cst_34 {dimension_numbers = #tpu.dot_dimension_numbers<[1], [1], [0], [0], [0, 0, 1, 0], [], []>} : vector<32x64xbf16>, vector<32x64xbf16>, vector<32x32xf32> -> vector<32x32xf32>
    %118 = arith.mulf %113, %93 : vector<32x64xf32>
    %119 = vector.broadcast %24 : vector<1x64xf32> to vector<32x64xf32>
    %120 = arith.mulf %93, %119 : vector<32x64xf32>
    %cst_35 = arith.constant 0.000000e+00 : f32
    %121 = vector.broadcast %cst_35 : f32 to vector<16x64xf32>
    %122 = vector.extract_strided_slice %113 {offsets = [0, 0], sizes = [1, 64], strides = [1, 1]} : vector<32x64xf32> to vector<1x64xf32>
    %123 = vector.broadcast %122 : vector<1x64xf32> to vector<16x64xf32>
    %124 = arith.mulf %123, %27 : vector<16x64xf32>
    %125 = math.exp %124 : vector<16x64xf32>
    %126 = vector.extract_strided_slice %113 {offsets = [1, 0], sizes = [1, 64], strides = [1, 1]} : vector<32x64xf32> to vector<1x64xf32>
    %127 = vector.broadcast %126 : vector<1x64xf32> to vector<16x64xf32>
    %128 = arith.mulf %127, %27 : vector<16x64xf32>
    %129 = math.exp %128 : vector<16x64xf32>
    %130 = vector.extract_strided_slice %113 {offsets = [2, 0], sizes = [1, 64], strides = [1, 1]} : vector<32x64xf32> to vector<1x64xf32>
    %131 = vector.broadcast %130 : vector<1x64xf32> to vector<16x64xf32>
    %132 = arith.mulf %131, %27 : vector<16x64xf32>
    %133 = math.exp %132 : vector<16x64xf32>
    %134 = vector.extract_strided_slice %113 {offsets = [3, 0], sizes = [1, 64], strides = [1, 1]} : vector<32x64xf32> to vector<1x64xf32>
    %135 = vector.broadcast %134 : vector<1x64xf32> to vector<16x64xf32>
    %136 = arith.mulf %135, %27 : vector<16x64xf32>
    %137 = math.exp %136 : vector<16x64xf32>
    %138 = vector.extract_strided_slice %117 {offsets = [0, 0], sizes = [16, 1], strides = [1, 1]} : vector<32x32xf32> to vector<16x1xf32>
    %139 = vector.extract_strided_slice %118 {offsets = [0, 0], sizes = [1, 64], strides = [1, 1]} : vector<32x64xf32> to vector<1x64xf32>
    %140 = vector.broadcast %138 : vector<16x1xf32> to vector<16x64xf32>
    %141 = vector.broadcast %139 : vector<1x64xf32> to vector<16x64xf32>
    %142 = arith.mulf %140, %141 : vector<16x64xf32>
    %143 = vector.extract_strided_slice %117 {offsets = [0, 1], sizes = [16, 1], strides = [1, 1]} : vector<32x32xf32> to vector<16x1xf32>
    %144 = vector.extract_strided_slice %118 {offsets = [1, 0], sizes = [1, 64], strides = [1, 1]} : vector<32x64xf32> to vector<1x64xf32>
    %145 = vector.broadcast %143 : vector<16x1xf32> to vector<16x64xf32>
    %146 = vector.broadcast %144 : vector<1x64xf32> to vector<16x64xf32>
    %147 = arith.mulf %145, %146 : vector<16x64xf32>
    %148 = vector.extract_strided_slice %117 {offsets = [0, 2], sizes = [16, 1], strides = [1, 1]} : vector<32x32xf32> to vector<16x1xf32>
    %149 = vector.extract_strided_slice %118 {offsets = [2, 0], sizes = [1, 64], strides = [1, 1]} : vector<32x64xf32> to vector<1x64xf32>
    %150 = vector.broadcast %148 : vector<16x1xf32> to vector<16x64xf32>
    %151 = vector.broadcast %149 : vector<1x64xf32> to vector<16x64xf32>
    %152 = arith.mulf %150, %151 : vector<16x64xf32>
    %153 = vector.extract_strided_slice %117 {offsets = [0, 3], sizes = [16, 1], strides = [1, 1]} : vector<32x32xf32> to vector<16x1xf32>
    %154 = vector.extract_strided_slice %118 {offsets = [3, 0], sizes = [1, 64], strides = [1, 1]} : vector<32x64xf32> to vector<1x64xf32>
    %155 = vector.broadcast %153 : vector<16x1xf32> to vector<16x64xf32>
    %156 = vector.broadcast %154 : vector<1x64xf32> to vector<16x64xf32>
    %157 = arith.mulf %155, %156 : vector<16x64xf32>
    %158 = vector.extract_strided_slice %117 {offsets = [16, 0], sizes = [16, 1], strides = [1, 1]} : vector<32x32xf32> to vector<16x1xf32>
    %159 = vector.extract_strided_slice %117 {offsets = [16, 1], sizes = [16, 1], strides = [1, 1]} : vector<32x32xf32> to vector<16x1xf32>
    %160 = vector.extract_strided_slice %117 {offsets = [16, 2], sizes = [16, 1], strides = [1, 1]} : vector<32x32xf32> to vector<16x1xf32>
    %161 = vector.extract_strided_slice %117 {offsets = [16, 3], sizes = [16, 1], strides = [1, 1]} : vector<32x32xf32> to vector<16x1xf32>
    %162 = arith.mulf %125, %121 : vector<16x64xf32>
    %163 = arith.addf %162, %142 : vector<16x64xf32>
    %164 = arith.mulf %129, %163 : vector<16x64xf32>
    %165 = arith.addf %164, %147 : vector<16x64xf32>
    %166 = arith.mulf %133, %165 : vector<16x64xf32>
    %167 = arith.addf %166, %152 : vector<16x64xf32>
    %168 = arith.mulf %137, %167 : vector<16x64xf32>
    %169 = arith.addf %168, %157 : vector<16x64xf32>
    %170 = vector.broadcast %158 : vector<16x1xf32> to vector<16x64xf32>
    %171 = arith.mulf %163, %170 : vector<16x64xf32>
    %cst_36 = arith.constant dense<0.000000e+00> : vector<64xf32>
    %172 = vector.multi_reduction <add>, %171, %cst_36 [0] : vector<16x64xf32> to vector<64xf32>
    %173 = vector.shape_cast %172 : vector<64xf32> to vector<1x64xf32>
    %174 = vector.extract_strided_slice %120 {offsets = [0, 0], sizes = [1, 64], strides = [1, 1]} : vector<32x64xf32> to vector<1x64xf32>
    %175 = arith.addf %173, %174 : vector<1x64xf32>
    %176 = vector.extract_strided_slice %61 {offsets = [0, 0], sizes = [1, 64], strides = [1, 1]} : vector<32x64xf32> to vector<1x64xf32>
    %177 = arith.mulf %175, %176 : vector<1x64xf32>
    %178 = vector.broadcast %159 : vector<16x1xf32> to vector<16x64xf32>
    %179 = arith.mulf %165, %178 : vector<16x64xf32>
    %cst_37 = arith.constant dense<0.000000e+00> : vector<64xf32>
    %180 = vector.multi_reduction <add>, %179, %cst_37 [0] : vector<16x64xf32> to vector<64xf32>
    %181 = vector.shape_cast %180 : vector<64xf32> to vector<1x64xf32>
    %182 = vector.extract_strided_slice %120 {offsets = [1, 0], sizes = [1, 64], strides = [1, 1]} : vector<32x64xf32> to vector<1x64xf32>
    %183 = arith.addf %181, %182 : vector<1x64xf32>
    %184 = vector.extract_strided_slice %61 {offsets = [1, 0], sizes = [1, 64], strides = [1, 1]} : vector<32x64xf32> to vector<1x64xf32>
    %185 = arith.mulf %183, %184 : vector<1x64xf32>
    %186 = vector.broadcast %160 : vector<16x1xf32> to vector<16x64xf32>
    %187 = arith.mulf %167, %186 : vector<16x64xf32>
    %cst_38 = arith.constant dense<0.000000e+00> : vector<64xf32>
    %188 = vector.multi_reduction <add>, %187, %cst_38 [0] : vector<16x64xf32> to vector<64xf32>
    %189 = vector.shape_cast %188 : vector<64xf32> to vector<1x64xf32>
    %190 = vector.extract_strided_slice %120 {offsets = [2, 0], sizes = [1, 64], strides = [1, 1]} : vector<32x64xf32> to vector<1x64xf32>
    %191 = arith.addf %189, %190 : vector<1x64xf32>
    %192 = vector.extract_strided_slice %61 {offsets = [2, 0], sizes = [1, 64], strides = [1, 1]} : vector<32x64xf32> to vector<1x64xf32>
    %193 = arith.mulf %191, %192 : vector<1x64xf32>
    %194 = vector.broadcast %161 : vector<16x1xf32> to vector<16x64xf32>
    %195 = arith.mulf %169, %194 : vector<16x64xf32>
    %cst_39 = arith.constant dense<0.000000e+00> : vector<64xf32>
    %196 = vector.multi_reduction <add>, %195, %cst_39 [0] : vector<16x64xf32> to vector<64xf32>
    %197 = vector.shape_cast %196 : vector<64xf32> to vector<1x64xf32>
    %198 = vector.extract_strided_slice %120 {offsets = [3, 0], sizes = [1, 64], strides = [1, 1]} : vector<32x64xf32> to vector<1x64xf32>
    %199 = arith.addf %197, %198 : vector<1x64xf32>
    %200 = vector.extract_strided_slice %61 {offsets = [3, 0], sizes = [1, 64], strides = [1, 1]} : vector<32x64xf32> to vector<1x64xf32>
    %201 = arith.mulf %199, %200 : vector<1x64xf32>
    %202 = vector.extract_strided_slice %113 {offsets = [4, 0], sizes = [1, 64], strides = [1, 1]} : vector<32x64xf32> to vector<1x64xf32>
    %203 = vector.broadcast %202 : vector<1x64xf32> to vector<16x64xf32>
    %204 = arith.mulf %203, %27 : vector<16x64xf32>
    %205 = math.exp %204 : vector<16x64xf32>
    %206 = vector.extract_strided_slice %113 {offsets = [5, 0], sizes = [1, 64], strides = [1, 1]} : vector<32x64xf32> to vector<1x64xf32>
    %207 = vector.broadcast %206 : vector<1x64xf32> to vector<16x64xf32>
    %208 = arith.mulf %207, %27 : vector<16x64xf32>
    %209 = math.exp %208 : vector<16x64xf32>
    %210 = vector.extract_strided_slice %113 {offsets = [6, 0], sizes = [1, 64], strides = [1, 1]} : vector<32x64xf32> to vector<1x64xf32>
    %211 = vector.broadcast %210 : vector<1x64xf32> to vector<16x64xf32>
    %212 = arith.mulf %211, %27 : vector<16x64xf32>
    %213 = math.exp %212 : vector<16x64xf32>
    %214 = vector.extract_strided_slice %113 {offsets = [7, 0], sizes = [1, 64], strides = [1, 1]} : vector<32x64xf32> to vector<1x64xf32>
    %215 = vector.broadcast %214 : vector<1x64xf32> to vector<16x64xf32>
    %216 = arith.mulf %215, %27 : vector<16x64xf32>
    %217 = math.exp %216 : vector<16x64xf32>
    %218 = vector.extract_strided_slice %117 {offsets = [0, 4], sizes = [16, 1], strides = [1, 1]} : vector<32x32xf32> to vector<16x1xf32>
    %219 = vector.extract_strided_slice %118 {offsets = [4, 0], sizes = [1, 64], strides = [1, 1]} : vector<32x64xf32> to vector<1x64xf32>
    %220 = vector.broadcast %218 : vector<16x1xf32> to vector<16x64xf32>
    %221 = vector.broadcast %219 : vector<1x64xf32> to vector<16x64xf32>
    %222 = arith.mulf %220, %221 : vector<16x64xf32>
    %223 = vector.extract_strided_slice %117 {offsets = [0, 5], sizes = [16, 1], strides = [1, 1]} : vector<32x32xf32> to vector<16x1xf32>
    %224 = vector.extract_strided_slice %118 {offsets = [5, 0], sizes = [1, 64], strides = [1, 1]} : vector<32x64xf32> to vector<1x64xf32>
    %225 = vector.broadcast %223 : vector<16x1xf32> to vector<16x64xf32>
    %226 = vector.broadcast %224 : vector<1x64xf32> to vector<16x64xf32>
    %227 = arith.mulf %225, %226 : vector<16x64xf32>
    %228 = vector.extract_strided_slice %117 {offsets = [0, 6], sizes = [16, 1], strides = [1, 1]} : vector<32x32xf32> to vector<16x1xf32>
    %229 = vector.extract_strided_slice %118 {offsets = [6, 0], sizes = [1, 64], strides = [1, 1]} : vector<32x64xf32> to vector<1x64xf32>
    %230 = vector.broadcast %228 : vector<16x1xf32> to vector<16x64xf32>
    %231 = vector.broadcast %229 : vector<1x64xf32> to vector<16x64xf32>
    %232 = arith.mulf %230, %231 : vector<16x64xf32>
    %233 = vector.extract_strided_slice %117 {offsets = [0, 7], sizes = [16, 1], strides = [1, 1]} : vector<32x32xf32> to vector<16x1xf32>
    %234 = vector.extract_strided_slice %118 {offsets = [7, 0], sizes = [1, 64], strides = [1, 1]} : vector<32x64xf32> to vector<1x64xf32>
    %235 = vector.broadcast %233 : vector<16x1xf32> to vector<16x64xf32>
    %236 = vector.broadcast %234 : vector<1x64xf32> to vector<16x64xf32>
    %237 = arith.mulf %235, %236 : vector<16x64xf32>
    %238 = vector.extract_strided_slice %117 {offsets = [16, 4], sizes = [16, 1], strides = [1, 1]} : vector<32x32xf32> to vector<16x1xf32>
    %239 = vector.extract_strided_slice %117 {offsets = [16, 5], sizes = [16, 1], strides = [1, 1]} : vector<32x32xf32> to vector<16x1xf32>
    %240 = vector.extract_strided_slice %117 {offsets = [16, 6], sizes = [16, 1], strides = [1, 1]} : vector<32x32xf32> to vector<16x1xf32>
    %241 = vector.extract_strided_slice %117 {offsets = [16, 7], sizes = [16, 1], strides = [1, 1]} : vector<32x32xf32> to vector<16x1xf32>
    %242 = arith.mulf %205, %169 : vector<16x64xf32>
    %243 = arith.addf %242, %222 : vector<16x64xf32>
    %244 = arith.mulf %209, %243 : vector<16x64xf32>
    %245 = arith.addf %244, %227 : vector<16x64xf32>
    %246 = arith.mulf %213, %245 : vector<16x64xf32>
    %247 = arith.addf %246, %232 : vector<16x64xf32>
    %248 = arith.mulf %217, %247 : vector<16x64xf32>
    %249 = arith.addf %248, %237 : vector<16x64xf32>
    %250 = vector.broadcast %238 : vector<16x1xf32> to vector<16x64xf32>
    %251 = arith.mulf %243, %250 : vector<16x64xf32>
    %cst_40 = arith.constant dense<0.000000e+00> : vector<64xf32>
    %252 = vector.multi_reduction <add>, %251, %cst_40 [0] : vector<16x64xf32> to vector<64xf32>
    %253 = vector.shape_cast %252 : vector<64xf32> to vector<1x64xf32>
    %254 = vector.extract_strided_slice %120 {offsets = [4, 0], sizes = [1, 64], strides = [1, 1]} : vector<32x64xf32> to vector<1x64xf32>
    %255 = arith.addf %253, %254 : vector<1x64xf32>
    %256 = vector.extract_strided_slice %61 {offsets = [4, 0], sizes = [1, 64], strides = [1, 1]} : vector<32x64xf32> to vector<1x64xf32>
    %257 = arith.mulf %255, %256 : vector<1x64xf32>
    %258 = vector.broadcast %239 : vector<16x1xf32> to vector<16x64xf32>
    %259 = arith.mulf %245, %258 : vector<16x64xf32>
    %cst_41 = arith.constant dense<0.000000e+00> : vector<64xf32>
    %260 = vector.multi_reduction <add>, %259, %cst_41 [0] : vector<16x64xf32> to vector<64xf32>
    %261 = vector.shape_cast %260 : vector<64xf32> to vector<1x64xf32>
    %262 = vector.extract_strided_slice %120 {offsets = [5, 0], sizes = [1, 64], strides = [1, 1]} : vector<32x64xf32> to vector<1x64xf32>
    %263 = arith.addf %261, %262 : vector<1x64xf32>
    %264 = vector.extract_strided_slice %61 {offsets = [5, 0], sizes = [1, 64], strides = [1, 1]} : vector<32x64xf32> to vector<1x64xf32>
    %265 = arith.mulf %263, %264 : vector<1x64xf32>
    %266 = vector.broadcast %240 : vector<16x1xf32> to vector<16x64xf32>
    %267 = arith.mulf %247, %266 : vector<16x64xf32>
    %cst_42 = arith.constant dense<0.000000e+00> : vector<64xf32>
    %268 = vector.multi_reduction <add>, %267, %cst_42 [0] : vector<16x64xf32> to vector<64xf32>
    %269 = vector.shape_cast %268 : vector<64xf32> to vector<1x64xf32>
    %270 = vector.extract_strided_slice %120 {offsets = [6, 0], sizes = [1, 64], strides = [1, 1]} : vector<32x64xf32> to vector<1x64xf32>
    %271 = arith.addf %269, %270 : vector<1x64xf32>
    %272 = vector.extract_strided_slice %61 {offsets = [6, 0], sizes = [1, 64], strides = [1, 1]} : vector<32x64xf32> to vector<1x64xf32>
    %273 = arith.mulf %271, %272 : vector<1x64xf32>
    %274 = vector.broadcast %241 : vector<16x1xf32> to vector<16x64xf32>
    %275 = arith.mulf %249, %274 : vector<16x64xf32>
    %cst_43 = arith.constant dense<0.000000e+00> : vector<64xf32>
    %276 = vector.multi_reduction <add>, %275, %cst_43 [0] : vector<16x64xf32> to vector<64xf32>
    %277 = vector.shape_cast %276 : vector<64xf32> to vector<1x64xf32>
    %278 = vector.extract_strided_slice %120 {offsets = [7, 0], sizes = [1, 64], strides = [1, 1]} : vector<32x64xf32> to vector<1x64xf32>
    %279 = arith.addf %277, %278 : vector<1x64xf32>
    %280 = vector.extract_strided_slice %61 {offsets = [7, 0], sizes = [1, 64], strides = [1, 1]} : vector<32x64xf32> to vector<1x64xf32>
    %281 = arith.mulf %279, %280 : vector<1x64xf32>
    %282 = vector.extract_strided_slice %113 {offsets = [8, 0], sizes = [1, 64], strides = [1, 1]} : vector<32x64xf32> to vector<1x64xf32>
    %283 = vector.broadcast %282 : vector<1x64xf32> to vector<16x64xf32>
    %284 = arith.mulf %283, %27 : vector<16x64xf32>
    %285 = math.exp %284 : vector<16x64xf32>
    %286 = vector.extract_strided_slice %113 {offsets = [9, 0], sizes = [1, 64], strides = [1, 1]} : vector<32x64xf32> to vector<1x64xf32>
    %287 = vector.broadcast %286 : vector<1x64xf32> to vector<16x64xf32>
    %288 = arith.mulf %287, %27 : vector<16x64xf32>
    %289 = math.exp %288 : vector<16x64xf32>
    %290 = vector.extract_strided_slice %113 {offsets = [10, 0], sizes = [1, 64], strides = [1, 1]} : vector<32x64xf32> to vector<1x64xf32>
    %291 = vector.broadcast %290 : vector<1x64xf32> to vector<16x64xf32>
    %292 = arith.mulf %291, %27 : vector<16x64xf32>
    %293 = math.exp %292 : vector<16x64xf32>
    %294 = vector.extract_strided_slice %113 {offsets = [11, 0], sizes = [1, 64], strides = [1, 1]} : vector<32x64xf32> to vector<1x64xf32>
    %295 = vector.broadcast %294 : vector<1x64xf32> to vector<16x64xf32>
    %296 = arith.mulf %295, %27 : vector<16x64xf32>
    %297 = math.exp %296 : vector<16x64xf32>
    %298 = vector.extract_strided_slice %117 {offsets = [0, 8], sizes = [16, 1], strides = [1, 1]} : vector<32x32xf32> to vector<16x1xf32>
    %299 = vector.extract_strided_slice %118 {offsets = [8, 0], sizes = [1, 64], strides = [1, 1]} : vector<32x64xf32> to vector<1x64xf32>
    %300 = vector.broadcast %298 : vector<16x1xf32> to vector<16x64xf32>
    %301 = vector.broadcast %299 : vector<1x64xf32> to vector<16x64xf32>
    %302 = arith.mulf %300, %301 : vector<16x64xf32>
    %303 = vector.extract_strided_slice %117 {offsets = [0, 9], sizes = [16, 1], strides = [1, 1]} : vector<32x32xf32> to vector<16x1xf32>
    %304 = vector.extract_strided_slice %118 {offsets = [9, 0], sizes = [1, 64], strides = [1, 1]} : vector<32x64xf32> to vector<1x64xf32>
    %305 = vector.broadcast %303 : vector<16x1xf32> to vector<16x64xf32>
    %306 = vector.broadcast %304 : vector<1x64xf32> to vector<16x64xf32>
    %307 = arith.mulf %305, %306 : vector<16x64xf32>
    %308 = vector.extract_strided_slice %117 {offsets = [0, 10], sizes = [16, 1], strides = [1, 1]} : vector<32x32xf32> to vector<16x1xf32>
    %309 = vector.extract_strided_slice %118 {offsets = [10, 0], sizes = [1, 64], strides = [1, 1]} : vector<32x64xf32> to vector<1x64xf32>
    %310 = vector.broadcast %308 : vector<16x1xf32> to vector<16x64xf32>
    %311 = vector.broadcast %309 : vector<1x64xf32> to vector<16x64xf32>
    %312 = arith.mulf %310, %311 : vector<16x64xf32>
    %313 = vector.extract_strided_slice %117 {offsets = [0, 11], sizes = [16, 1], strides = [1, 1]} : vector<32x32xf32> to vector<16x1xf32>
    %314 = vector.extract_strided_slice %118 {offsets = [11, 0], sizes = [1, 64], strides = [1, 1]} : vector<32x64xf32> to vector<1x64xf32>
    %315 = vector.broadcast %313 : vector<16x1xf32> to vector<16x64xf32>
    %316 = vector.broadcast %314 : vector<1x64xf32> to vector<16x64xf32>
    %317 = arith.mulf %315, %316 : vector<16x64xf32>
    %318 = vector.extract_strided_slice %117 {offsets = [16, 8], sizes = [16, 1], strides = [1, 1]} : vector<32x32xf32> to vector<16x1xf32>
    %319 = vector.extract_strided_slice %117 {offsets = [16, 9], sizes = [16, 1], strides = [1, 1]} : vector<32x32xf32> to vector<16x1xf32>
    %320 = vector.extract_strided_slice %117 {offsets = [16, 10], sizes = [16, 1], strides = [1, 1]} : vector<32x32xf32> to vector<16x1xf32>
    %321 = vector.extract_strided_slice %117 {offsets = [16, 11], sizes = [16, 1], strides = [1, 1]} : vector<32x32xf32> to vector<16x1xf32>
    %322 = arith.mulf %285, %249 : vector<16x64xf32>
    %323 = arith.addf %322, %302 : vector<16x64xf32>
    %324 = arith.mulf %289, %323 : vector<16x64xf32>
    %325 = arith.addf %324, %307 : vector<16x64xf32>
    %326 = arith.mulf %293, %325 : vector<16x64xf32>
    %327 = arith.addf %326, %312 : vector<16x64xf32>
    %328 = arith.mulf %297, %327 : vector<16x64xf32>
    %329 = arith.addf %328, %317 : vector<16x64xf32>
    %330 = vector.broadcast %318 : vector<16x1xf32> to vector<16x64xf32>
    %331 = arith.mulf %323, %330 : vector<16x64xf32>
    %cst_44 = arith.constant dense<0.000000e+00> : vector<64xf32>
    %332 = vector.multi_reduction <add>, %331, %cst_44 [0] : vector<16x64xf32> to vector<64xf32>
    %333 = vector.shape_cast %332 : vector<64xf32> to vector<1x64xf32>
    %334 = vector.extract_strided_slice %120 {offsets = [8, 0], sizes = [1, 64], strides = [1, 1]} : vector<32x64xf32> to vector<1x64xf32>
    %335 = arith.addf %333, %334 : vector<1x64xf32>
    %336 = vector.extract_strided_slice %61 {offsets = [8, 0], sizes = [1, 64], strides = [1, 1]} : vector<32x64xf32> to vector<1x64xf32>
    %337 = arith.mulf %335, %336 : vector<1x64xf32>
    %338 = vector.broadcast %319 : vector<16x1xf32> to vector<16x64xf32>
    %339 = arith.mulf %325, %338 : vector<16x64xf32>
    %cst_45 = arith.constant dense<0.000000e+00> : vector<64xf32>
    %340 = vector.multi_reduction <add>, %339, %cst_45 [0] : vector<16x64xf32> to vector<64xf32>
    %341 = vector.shape_cast %340 : vector<64xf32> to vector<1x64xf32>
    %342 = vector.extract_strided_slice %120 {offsets = [9, 0], sizes = [1, 64], strides = [1, 1]} : vector<32x64xf32> to vector<1x64xf32>
    %343 = arith.addf %341, %342 : vector<1x64xf32>
    %344 = vector.extract_strided_slice %61 {offsets = [9, 0], sizes = [1, 64], strides = [1, 1]} : vector<32x64xf32> to vector<1x64xf32>
    %345 = arith.mulf %343, %344 : vector<1x64xf32>
    %346 = vector.broadcast %320 : vector<16x1xf32> to vector<16x64xf32>
    %347 = arith.mulf %327, %346 : vector<16x64xf32>
    %cst_46 = arith.constant dense<0.000000e+00> : vector<64xf32>
    %348 = vector.multi_reduction <add>, %347, %cst_46 [0] : vector<16x64xf32> to vector<64xf32>
    %349 = vector.shape_cast %348 : vector<64xf32> to vector<1x64xf32>
    %350 = vector.extract_strided_slice %120 {offsets = [10, 0], sizes = [1, 64], strides = [1, 1]} : vector<32x64xf32> to vector<1x64xf32>
    %351 = arith.addf %349, %350 : vector<1x64xf32>
    %352 = vector.extract_strided_slice %61 {offsets = [10, 0], sizes = [1, 64], strides = [1, 1]} : vector<32x64xf32> to vector<1x64xf32>
    %353 = arith.mulf %351, %352 : vector<1x64xf32>
    %354 = vector.broadcast %321 : vector<16x1xf32> to vector<16x64xf32>
    %355 = arith.mulf %329, %354 : vector<16x64xf32>
    %cst_47 = arith.constant dense<0.000000e+00> : vector<64xf32>
    %356 = vector.multi_reduction <add>, %355, %cst_47 [0] : vector<16x64xf32> to vector<64xf32>
    %357 = vector.shape_cast %356 : vector<64xf32> to vector<1x64xf32>
    %358 = vector.extract_strided_slice %120 {offsets = [11, 0], sizes = [1, 64], strides = [1, 1]} : vector<32x64xf32> to vector<1x64xf32>
    %359 = arith.addf %357, %358 : vector<1x64xf32>
    %360 = vector.extract_strided_slice %61 {offsets = [11, 0], sizes = [1, 64], strides = [1, 1]} : vector<32x64xf32> to vector<1x64xf32>
    %361 = arith.mulf %359, %360 : vector<1x64xf32>
    %362 = vector.extract_strided_slice %113 {offsets = [12, 0], sizes = [1, 64], strides = [1, 1]} : vector<32x64xf32> to vector<1x64xf32>
    %363 = vector.broadcast %362 : vector<1x64xf32> to vector<16x64xf32>
    %364 = arith.mulf %363, %27 : vector<16x64xf32>
    %365 = math.exp %364 : vector<16x64xf32>
    %366 = vector.extract_strided_slice %113 {offsets = [13, 0], sizes = [1, 64], strides = [1, 1]} : vector<32x64xf32> to vector<1x64xf32>
    %367 = vector.broadcast %366 : vector<1x64xf32> to vector<16x64xf32>
    %368 = arith.mulf %367, %27 : vector<16x64xf32>
    %369 = math.exp %368 : vector<16x64xf32>
    %370 = vector.extract_strided_slice %113 {offsets = [14, 0], sizes = [1, 64], strides = [1, 1]} : vector<32x64xf32> to vector<1x64xf32>
    %371 = vector.broadcast %370 : vector<1x64xf32> to vector<16x64xf32>
    %372 = arith.mulf %371, %27 : vector<16x64xf32>
    %373 = math.exp %372 : vector<16x64xf32>
    %374 = vector.extract_strided_slice %113 {offsets = [15, 0], sizes = [1, 64], strides = [1, 1]} : vector<32x64xf32> to vector<1x64xf32>
    %375 = vector.broadcast %374 : vector<1x64xf32> to vector<16x64xf32>
    %376 = arith.mulf %375, %27 : vector<16x64xf32>
    %377 = math.exp %376 : vector<16x64xf32>
    %378 = vector.extract_strided_slice %117 {offsets = [0, 12], sizes = [16, 1], strides = [1, 1]} : vector<32x32xf32> to vector<16x1xf32>
    %379 = vector.extract_strided_slice %118 {offsets = [12, 0], sizes = [1, 64], strides = [1, 1]} : vector<32x64xf32> to vector<1x64xf32>
    %380 = vector.broadcast %378 : vector<16x1xf32> to vector<16x64xf32>
    %381 = vector.broadcast %379 : vector<1x64xf32> to vector<16x64xf32>
    %382 = arith.mulf %380, %381 : vector<16x64xf32>
    %383 = vector.extract_strided_slice %117 {offsets = [0, 13], sizes = [16, 1], strides = [1, 1]} : vector<32x32xf32> to vector<16x1xf32>
    %384 = vector.extract_strided_slice %118 {offsets = [13, 0], sizes = [1, 64], strides = [1, 1]} : vector<32x64xf32> to vector<1x64xf32>
    %385 = vector.broadcast %383 : vector<16x1xf32> to vector<16x64xf32>
    %386 = vector.broadcast %384 : vector<1x64xf32> to vector<16x64xf32>
    %387 = arith.mulf %385, %386 : vector<16x64xf32>
    %388 = vector.extract_strided_slice %117 {offsets = [0, 14], sizes = [16, 1], strides = [1, 1]} : vector<32x32xf32> to vector<16x1xf32>
    %389 = vector.extract_strided_slice %118 {offsets = [14, 0], sizes = [1, 64], strides = [1, 1]} : vector<32x64xf32> to vector<1x64xf32>
    %390 = vector.broadcast %388 : vector<16x1xf32> to vector<16x64xf32>
    %391 = vector.broadcast %389 : vector<1x64xf32> to vector<16x64xf32>
    %392 = arith.mulf %390, %391 : vector<16x64xf32>
    %393 = vector.extract_strided_slice %117 {offsets = [0, 15], sizes = [16, 1], strides = [1, 1]} : vector<32x32xf32> to vector<16x1xf32>
    %394 = vector.extract_strided_slice %118 {offsets = [15, 0], sizes = [1, 64], strides = [1, 1]} : vector<32x64xf32> to vector<1x64xf32>
    %395 = vector.broadcast %393 : vector<16x1xf32> to vector<16x64xf32>
    %396 = vector.broadcast %394 : vector<1x64xf32> to vector<16x64xf32>
    %397 = arith.mulf %395, %396 : vector<16x64xf32>
    %398 = vector.extract_strided_slice %117 {offsets = [16, 12], sizes = [16, 1], strides = [1, 1]} : vector<32x32xf32> to vector<16x1xf32>
    %399 = vector.extract_strided_slice %117 {offsets = [16, 13], sizes = [16, 1], strides = [1, 1]} : vector<32x32xf32> to vector<16x1xf32>
    %400 = vector.extract_strided_slice %117 {offsets = [16, 14], sizes = [16, 1], strides = [1, 1]} : vector<32x32xf32> to vector<16x1xf32>
    %401 = vector.extract_strided_slice %117 {offsets = [16, 15], sizes = [16, 1], strides = [1, 1]} : vector<32x32xf32> to vector<16x1xf32>
    %402 = arith.mulf %365, %329 : vector<16x64xf32>
    %403 = arith.addf %402, %382 : vector<16x64xf32>
    %404 = arith.mulf %369, %403 : vector<16x64xf32>
    %405 = arith.addf %404, %387 : vector<16x64xf32>
    %406 = arith.mulf %373, %405 : vector<16x64xf32>
    %407 = arith.addf %406, %392 : vector<16x64xf32>
    %408 = arith.mulf %377, %407 : vector<16x64xf32>
    %409 = arith.addf %408, %397 : vector<16x64xf32>
    %410 = vector.broadcast %398 : vector<16x1xf32> to vector<16x64xf32>
    %411 = arith.mulf %403, %410 : vector<16x64xf32>
    %cst_48 = arith.constant dense<0.000000e+00> : vector<64xf32>
    %412 = vector.multi_reduction <add>, %411, %cst_48 [0] : vector<16x64xf32> to vector<64xf32>
    %413 = vector.shape_cast %412 : vector<64xf32> to vector<1x64xf32>
    %414 = vector.extract_strided_slice %120 {offsets = [12, 0], sizes = [1, 64], strides = [1, 1]} : vector<32x64xf32> to vector<1x64xf32>
    %415 = arith.addf %413, %414 : vector<1x64xf32>
    %416 = vector.extract_strided_slice %61 {offsets = [12, 0], sizes = [1, 64], strides = [1, 1]} : vector<32x64xf32> to vector<1x64xf32>
    %417 = arith.mulf %415, %416 : vector<1x64xf32>
    %418 = vector.broadcast %399 : vector<16x1xf32> to vector<16x64xf32>
    %419 = arith.mulf %405, %418 : vector<16x64xf32>
    %cst_49 = arith.constant dense<0.000000e+00> : vector<64xf32>
    %420 = vector.multi_reduction <add>, %419, %cst_49 [0] : vector<16x64xf32> to vector<64xf32>
    %421 = vector.shape_cast %420 : vector<64xf32> to vector<1x64xf32>
    %422 = vector.extract_strided_slice %120 {offsets = [13, 0], sizes = [1, 64], strides = [1, 1]} : vector<32x64xf32> to vector<1x64xf32>
    %423 = arith.addf %421, %422 : vector<1x64xf32>
    %424 = vector.extract_strided_slice %61 {offsets = [13, 0], sizes = [1, 64], strides = [1, 1]} : vector<32x64xf32> to vector<1x64xf32>
    %425 = arith.mulf %423, %424 : vector<1x64xf32>
    %426 = vector.broadcast %400 : vector<16x1xf32> to vector<16x64xf32>
    %427 = arith.mulf %407, %426 : vector<16x64xf32>
    %cst_50 = arith.constant dense<0.000000e+00> : vector<64xf32>
    %428 = vector.multi_reduction <add>, %427, %cst_50 [0] : vector<16x64xf32> to vector<64xf32>
    %429 = vector.shape_cast %428 : vector<64xf32> to vector<1x64xf32>
    %430 = vector.extract_strided_slice %120 {offsets = [14, 0], sizes = [1, 64], strides = [1, 1]} : vector<32x64xf32> to vector<1x64xf32>
    %431 = arith.addf %429, %430 : vector<1x64xf32>
    %432 = vector.extract_strided_slice %61 {offsets = [14, 0], sizes = [1, 64], strides = [1, 1]} : vector<32x64xf32> to vector<1x64xf32>
    %433 = arith.mulf %431, %432 : vector<1x64xf32>
    %434 = vector.broadcast %401 : vector<16x1xf32> to vector<16x64xf32>
    %435 = arith.mulf %409, %434 : vector<16x64xf32>
    %cst_51 = arith.constant dense<0.000000e+00> : vector<64xf32>
    %436 = vector.multi_reduction <add>, %435, %cst_51 [0] : vector<16x64xf32> to vector<64xf32>
    %437 = vector.shape_cast %436 : vector<64xf32> to vector<1x64xf32>
    %438 = vector.extract_strided_slice %120 {offsets = [15, 0], sizes = [1, 64], strides = [1, 1]} : vector<32x64xf32> to vector<1x64xf32>
    %439 = arith.addf %437, %438 : vector<1x64xf32>
    %440 = vector.extract_strided_slice %61 {offsets = [15, 0], sizes = [1, 64], strides = [1, 1]} : vector<32x64xf32> to vector<1x64xf32>
    %441 = arith.mulf %439, %440 : vector<1x64xf32>
    %cst_52 = arith.constant 0.000000e+00 : f32
    %442 = vector.broadcast %cst_52 : f32 to vector<16x64xf32>
    %443 = vector.extract_strided_slice %113 {offsets = [16, 0], sizes = [1, 64], strides = [1, 1]} : vector<32x64xf32> to vector<1x64xf32>
    %444 = vector.broadcast %443 : vector<1x64xf32> to vector<16x64xf32>
    %445 = arith.mulf %444, %27 : vector<16x64xf32>
    %446 = math.exp %445 : vector<16x64xf32>
    %447 = vector.extract_strided_slice %113 {offsets = [17, 0], sizes = [1, 64], strides = [1, 1]} : vector<32x64xf32> to vector<1x64xf32>
    %448 = vector.broadcast %447 : vector<1x64xf32> to vector<16x64xf32>
    %449 = arith.mulf %448, %27 : vector<16x64xf32>
    %450 = math.exp %449 : vector<16x64xf32>
    %451 = vector.extract_strided_slice %113 {offsets = [18, 0], sizes = [1, 64], strides = [1, 1]} : vector<32x64xf32> to vector<1x64xf32>
    %452 = vector.broadcast %451 : vector<1x64xf32> to vector<16x64xf32>
    %453 = arith.mulf %452, %27 : vector<16x64xf32>
    %454 = math.exp %453 : vector<16x64xf32>
    %455 = vector.extract_strided_slice %113 {offsets = [19, 0], sizes = [1, 64], strides = [1, 1]} : vector<32x64xf32> to vector<1x64xf32>
    %456 = vector.broadcast %455 : vector<1x64xf32> to vector<16x64xf32>
    %457 = arith.mulf %456, %27 : vector<16x64xf32>
    %458 = math.exp %457 : vector<16x64xf32>
    %459 = vector.extract_strided_slice %117 {offsets = [0, 16], sizes = [16, 1], strides = [1, 1]} : vector<32x32xf32> to vector<16x1xf32>
    %460 = vector.extract_strided_slice %118 {offsets = [16, 0], sizes = [1, 64], strides = [1, 1]} : vector<32x64xf32> to vector<1x64xf32>
    %461 = vector.broadcast %459 : vector<16x1xf32> to vector<16x64xf32>
    %462 = vector.broadcast %460 : vector<1x64xf32> to vector<16x64xf32>
    %463 = arith.mulf %461, %462 : vector<16x64xf32>
    %464 = vector.extract_strided_slice %117 {offsets = [0, 17], sizes = [16, 1], strides = [1, 1]} : vector<32x32xf32> to vector<16x1xf32>
    %465 = vector.extract_strided_slice %118 {offsets = [17, 0], sizes = [1, 64], strides = [1, 1]} : vector<32x64xf32> to vector<1x64xf32>
    %466 = vector.broadcast %464 : vector<16x1xf32> to vector<16x64xf32>
    %467 = vector.broadcast %465 : vector<1x64xf32> to vector<16x64xf32>
    %468 = arith.mulf %466, %467 : vector<16x64xf32>
    %469 = vector.extract_strided_slice %117 {offsets = [0, 18], sizes = [16, 1], strides = [1, 1]} : vector<32x32xf32> to vector<16x1xf32>
    %470 = vector.extract_strided_slice %118 {offsets = [18, 0], sizes = [1, 64], strides = [1, 1]} : vector<32x64xf32> to vector<1x64xf32>
    %471 = vector.broadcast %469 : vector<16x1xf32> to vector<16x64xf32>
    %472 = vector.broadcast %470 : vector<1x64xf32> to vector<16x64xf32>
    %473 = arith.mulf %471, %472 : vector<16x64xf32>
    %474 = vector.extract_strided_slice %117 {offsets = [0, 19], sizes = [16, 1], strides = [1, 1]} : vector<32x32xf32> to vector<16x1xf32>
    %475 = vector.extract_strided_slice %118 {offsets = [19, 0], sizes = [1, 64], strides = [1, 1]} : vector<32x64xf32> to vector<1x64xf32>
    %476 = vector.broadcast %474 : vector<16x1xf32> to vector<16x64xf32>
    %477 = vector.broadcast %475 : vector<1x64xf32> to vector<16x64xf32>
    %478 = arith.mulf %476, %477 : vector<16x64xf32>
    %479 = vector.extract_strided_slice %117 {offsets = [16, 16], sizes = [16, 1], strides = [1, 1]} : vector<32x32xf32> to vector<16x1xf32>
    %480 = vector.extract_strided_slice %117 {offsets = [16, 17], sizes = [16, 1], strides = [1, 1]} : vector<32x32xf32> to vector<16x1xf32>
    %481 = vector.extract_strided_slice %117 {offsets = [16, 18], sizes = [16, 1], strides = [1, 1]} : vector<32x32xf32> to vector<16x1xf32>
    %482 = vector.extract_strided_slice %117 {offsets = [16, 19], sizes = [16, 1], strides = [1, 1]} : vector<32x32xf32> to vector<16x1xf32>
    %483 = arith.mulf %446, %442 : vector<16x64xf32>
    %484 = arith.addf %483, %463 : vector<16x64xf32>
    %485 = arith.mulf %450, %484 : vector<16x64xf32>
    %486 = arith.addf %485, %468 : vector<16x64xf32>
    %487 = arith.mulf %454, %486 : vector<16x64xf32>
    %488 = arith.addf %487, %473 : vector<16x64xf32>
    %489 = arith.mulf %458, %488 : vector<16x64xf32>
    %490 = arith.addf %489, %478 : vector<16x64xf32>
    %491 = vector.broadcast %479 : vector<16x1xf32> to vector<16x64xf32>
    %492 = arith.mulf %484, %491 : vector<16x64xf32>
    %cst_53 = arith.constant dense<0.000000e+00> : vector<64xf32>
    %493 = vector.multi_reduction <add>, %492, %cst_53 [0] : vector<16x64xf32> to vector<64xf32>
    %494 = vector.shape_cast %493 : vector<64xf32> to vector<1x64xf32>
    %495 = vector.extract_strided_slice %120 {offsets = [16, 0], sizes = [1, 64], strides = [1, 1]} : vector<32x64xf32> to vector<1x64xf32>
    %496 = arith.addf %494, %495 : vector<1x64xf32>
    %497 = vector.extract_strided_slice %61 {offsets = [16, 0], sizes = [1, 64], strides = [1, 1]} : vector<32x64xf32> to vector<1x64xf32>
    %498 = arith.mulf %496, %497 : vector<1x64xf32>
    %499 = vector.broadcast %480 : vector<16x1xf32> to vector<16x64xf32>
    %500 = arith.mulf %486, %499 : vector<16x64xf32>
    %cst_54 = arith.constant dense<0.000000e+00> : vector<64xf32>
    %501 = vector.multi_reduction <add>, %500, %cst_54 [0] : vector<16x64xf32> to vector<64xf32>
    %502 = vector.shape_cast %501 : vector<64xf32> to vector<1x64xf32>
    %503 = vector.extract_strided_slice %120 {offsets = [17, 0], sizes = [1, 64], strides = [1, 1]} : vector<32x64xf32> to vector<1x64xf32>
    %504 = arith.addf %502, %503 : vector<1x64xf32>
    %505 = vector.extract_strided_slice %61 {offsets = [17, 0], sizes = [1, 64], strides = [1, 1]} : vector<32x64xf32> to vector<1x64xf32>
    %506 = arith.mulf %504, %505 : vector<1x64xf32>
    %507 = vector.broadcast %481 : vector<16x1xf32> to vector<16x64xf32>
    %508 = arith.mulf %488, %507 : vector<16x64xf32>
    %cst_55 = arith.constant dense<0.000000e+00> : vector<64xf32>
    %509 = vector.multi_reduction <add>, %508, %cst_55 [0] : vector<16x64xf32> to vector<64xf32>
    %510 = vector.shape_cast %509 : vector<64xf32> to vector<1x64xf32>
    %511 = vector.extract_strided_slice %120 {offsets = [18, 0], sizes = [1, 64], strides = [1, 1]} : vector<32x64xf32> to vector<1x64xf32>
    %512 = arith.addf %510, %511 : vector<1x64xf32>
    %513 = vector.extract_strided_slice %61 {offsets = [18, 0], sizes = [1, 64], strides = [1, 1]} : vector<32x64xf32> to vector<1x64xf32>
    %514 = arith.mulf %512, %513 : vector<1x64xf32>
    %515 = vector.broadcast %482 : vector<16x1xf32> to vector<16x64xf32>
    %516 = arith.mulf %490, %515 : vector<16x64xf32>
    %cst_56 = arith.constant dense<0.000000e+00> : vector<64xf32>
    %517 = vector.multi_reduction <add>, %516, %cst_56 [0] : vector<16x64xf32> to vector<64xf32>
    %518 = vector.shape_cast %517 : vector<64xf32> to vector<1x64xf32>
    %519 = vector.extract_strided_slice %120 {offsets = [19, 0], sizes = [1, 64], strides = [1, 1]} : vector<32x64xf32> to vector<1x64xf32>
    %520 = arith.addf %518, %519 : vector<1x64xf32>
    %521 = vector.extract_strided_slice %61 {offsets = [19, 0], sizes = [1, 64], strides = [1, 1]} : vector<32x64xf32> to vector<1x64xf32>
    %522 = arith.mulf %520, %521 : vector<1x64xf32>
    %523 = vector.extract_strided_slice %113 {offsets = [20, 0], sizes = [1, 64], strides = [1, 1]} : vector<32x64xf32> to vector<1x64xf32>
    %524 = vector.broadcast %523 : vector<1x64xf32> to vector<16x64xf32>
    %525 = arith.mulf %524, %27 : vector<16x64xf32>
    %526 = math.exp %525 : vector<16x64xf32>
    %527 = vector.extract_strided_slice %113 {offsets = [21, 0], sizes = [1, 64], strides = [1, 1]} : vector<32x64xf32> to vector<1x64xf32>
    %528 = vector.broadcast %527 : vector<1x64xf32> to vector<16x64xf32>
    %529 = arith.mulf %528, %27 : vector<16x64xf32>
    %530 = math.exp %529 : vector<16x64xf32>
    %531 = vector.extract_strided_slice %113 {offsets = [22, 0], sizes = [1, 64], strides = [1, 1]} : vector<32x64xf32> to vector<1x64xf32>
    %532 = vector.broadcast %531 : vector<1x64xf32> to vector<16x64xf32>
    %533 = arith.mulf %532, %27 : vector<16x64xf32>
    %534 = math.exp %533 : vector<16x64xf32>
    %535 = vector.extract_strided_slice %113 {offsets = [23, 0], sizes = [1, 64], strides = [1, 1]} : vector<32x64xf32> to vector<1x64xf32>
    %536 = vector.broadcast %535 : vector<1x64xf32> to vector<16x64xf32>
    %537 = arith.mulf %536, %27 : vector<16x64xf32>
    %538 = math.exp %537 : vector<16x64xf32>
    %539 = vector.extract_strided_slice %117 {offsets = [0, 20], sizes = [16, 1], strides = [1, 1]} : vector<32x32xf32> to vector<16x1xf32>
    %540 = vector.extract_strided_slice %118 {offsets = [20, 0], sizes = [1, 64], strides = [1, 1]} : vector<32x64xf32> to vector<1x64xf32>
    %541 = vector.broadcast %539 : vector<16x1xf32> to vector<16x64xf32>
    %542 = vector.broadcast %540 : vector<1x64xf32> to vector<16x64xf32>
    %543 = arith.mulf %541, %542 : vector<16x64xf32>
    %544 = vector.extract_strided_slice %117 {offsets = [0, 21], sizes = [16, 1], strides = [1, 1]} : vector<32x32xf32> to vector<16x1xf32>
    %545 = vector.extract_strided_slice %118 {offsets = [21, 0], sizes = [1, 64], strides = [1, 1]} : vector<32x64xf32> to vector<1x64xf32>
    %546 = vector.broadcast %544 : vector<16x1xf32> to vector<16x64xf32>
    %547 = vector.broadcast %545 : vector<1x64xf32> to vector<16x64xf32>
    %548 = arith.mulf %546, %547 : vector<16x64xf32>
    %549 = vector.extract_strided_slice %117 {offsets = [0, 22], sizes = [16, 1], strides = [1, 1]} : vector<32x32xf32> to vector<16x1xf32>
    %550 = vector.extract_strided_slice %118 {offsets = [22, 0], sizes = [1, 64], strides = [1, 1]} : vector<32x64xf32> to vector<1x64xf32>
    %551 = vector.broadcast %549 : vector<16x1xf32> to vector<16x64xf32>
    %552 = vector.broadcast %550 : vector<1x64xf32> to vector<16x64xf32>
    %553 = arith.mulf %551, %552 : vector<16x64xf32>
    %554 = vector.extract_strided_slice %117 {offsets = [0, 23], sizes = [16, 1], strides = [1, 1]} : vector<32x32xf32> to vector<16x1xf32>
    %555 = vector.extract_strided_slice %118 {offsets = [23, 0], sizes = [1, 64], strides = [1, 1]} : vector<32x64xf32> to vector<1x64xf32>
    %556 = vector.broadcast %554 : vector<16x1xf32> to vector<16x64xf32>
    %557 = vector.broadcast %555 : vector<1x64xf32> to vector<16x64xf32>
    %558 = arith.mulf %556, %557 : vector<16x64xf32>
    %559 = vector.extract_strided_slice %117 {offsets = [16, 20], sizes = [16, 1], strides = [1, 1]} : vector<32x32xf32> to vector<16x1xf32>
    %560 = vector.extract_strided_slice %117 {offsets = [16, 21], sizes = [16, 1], strides = [1, 1]} : vector<32x32xf32> to vector<16x1xf32>
    %561 = vector.extract_strided_slice %117 {offsets = [16, 22], sizes = [16, 1], strides = [1, 1]} : vector<32x32xf32> to vector<16x1xf32>
    %562 = vector.extract_strided_slice %117 {offsets = [16, 23], sizes = [16, 1], strides = [1, 1]} : vector<32x32xf32> to vector<16x1xf32>
    %563 = arith.mulf %526, %490 : vector<16x64xf32>
    %564 = arith.addf %563, %543 : vector<16x64xf32>
    %565 = arith.mulf %530, %564 : vector<16x64xf32>
    %566 = arith.addf %565, %548 : vector<16x64xf32>
    %567 = arith.mulf %534, %566 : vector<16x64xf32>
    %568 = arith.addf %567, %553 : vector<16x64xf32>
    %569 = arith.mulf %538, %568 : vector<16x64xf32>
    %570 = arith.addf %569, %558 : vector<16x64xf32>
    %571 = vector.broadcast %559 : vector<16x1xf32> to vector<16x64xf32>
    %572 = arith.mulf %564, %571 : vector<16x64xf32>
    %cst_57 = arith.constant dense<0.000000e+00> : vector<64xf32>
    %573 = vector.multi_reduction <add>, %572, %cst_57 [0] : vector<16x64xf32> to vector<64xf32>
    %574 = vector.shape_cast %573 : vector<64xf32> to vector<1x64xf32>
    %575 = vector.extract_strided_slice %120 {offsets = [20, 0], sizes = [1, 64], strides = [1, 1]} : vector<32x64xf32> to vector<1x64xf32>
    %576 = arith.addf %574, %575 : vector<1x64xf32>
    %577 = vector.extract_strided_slice %61 {offsets = [20, 0], sizes = [1, 64], strides = [1, 1]} : vector<32x64xf32> to vector<1x64xf32>
    %578 = arith.mulf %576, %577 : vector<1x64xf32>
    %579 = vector.broadcast %560 : vector<16x1xf32> to vector<16x64xf32>
    %580 = arith.mulf %566, %579 : vector<16x64xf32>
    %cst_58 = arith.constant dense<0.000000e+00> : vector<64xf32>
    %581 = vector.multi_reduction <add>, %580, %cst_58 [0] : vector<16x64xf32> to vector<64xf32>
    %582 = vector.shape_cast %581 : vector<64xf32> to vector<1x64xf32>
    %583 = vector.extract_strided_slice %120 {offsets = [21, 0], sizes = [1, 64], strides = [1, 1]} : vector<32x64xf32> to vector<1x64xf32>
    %584 = arith.addf %582, %583 : vector<1x64xf32>
    %585 = vector.extract_strided_slice %61 {offsets = [21, 0], sizes = [1, 64], strides = [1, 1]} : vector<32x64xf32> to vector<1x64xf32>
    %586 = arith.mulf %584, %585 : vector<1x64xf32>
    %587 = vector.broadcast %561 : vector<16x1xf32> to vector<16x64xf32>
    %588 = arith.mulf %568, %587 : vector<16x64xf32>
    %cst_59 = arith.constant dense<0.000000e+00> : vector<64xf32>
    %589 = vector.multi_reduction <add>, %588, %cst_59 [0] : vector<16x64xf32> to vector<64xf32>
    %590 = vector.shape_cast %589 : vector<64xf32> to vector<1x64xf32>
    %591 = vector.extract_strided_slice %120 {offsets = [22, 0], sizes = [1, 64], strides = [1, 1]} : vector<32x64xf32> to vector<1x64xf32>
    %592 = arith.addf %590, %591 : vector<1x64xf32>
    %593 = vector.extract_strided_slice %61 {offsets = [22, 0], sizes = [1, 64], strides = [1, 1]} : vector<32x64xf32> to vector<1x64xf32>
    %594 = arith.mulf %592, %593 : vector<1x64xf32>
    %595 = vector.broadcast %562 : vector<16x1xf32> to vector<16x64xf32>
    %596 = arith.mulf %570, %595 : vector<16x64xf32>
    %cst_60 = arith.constant dense<0.000000e+00> : vector<64xf32>
    %597 = vector.multi_reduction <add>, %596, %cst_60 [0] : vector<16x64xf32> to vector<64xf32>
    %598 = vector.shape_cast %597 : vector<64xf32> to vector<1x64xf32>
    %599 = vector.extract_strided_slice %120 {offsets = [23, 0], sizes = [1, 64], strides = [1, 1]} : vector<32x64xf32> to vector<1x64xf32>
    %600 = arith.addf %598, %599 : vector<1x64xf32>
    %601 = vector.extract_strided_slice %61 {offsets = [23, 0], sizes = [1, 64], strides = [1, 1]} : vector<32x64xf32> to vector<1x64xf32>
    %602 = arith.mulf %600, %601 : vector<1x64xf32>
    %603 = vector.extract_strided_slice %113 {offsets = [24, 0], sizes = [1, 64], strides = [1, 1]} : vector<32x64xf32> to vector<1x64xf32>
    %604 = vector.broadcast %603 : vector<1x64xf32> to vector<16x64xf32>
    %605 = arith.mulf %604, %27 : vector<16x64xf32>
    %606 = math.exp %605 : vector<16x64xf32>
    %607 = vector.extract_strided_slice %113 {offsets = [25, 0], sizes = [1, 64], strides = [1, 1]} : vector<32x64xf32> to vector<1x64xf32>
    %608 = vector.broadcast %607 : vector<1x64xf32> to vector<16x64xf32>
    %609 = arith.mulf %608, %27 : vector<16x64xf32>
    %610 = math.exp %609 : vector<16x64xf32>
    %611 = vector.extract_strided_slice %113 {offsets = [26, 0], sizes = [1, 64], strides = [1, 1]} : vector<32x64xf32> to vector<1x64xf32>
    %612 = vector.broadcast %611 : vector<1x64xf32> to vector<16x64xf32>
    %613 = arith.mulf %612, %27 : vector<16x64xf32>
    %614 = math.exp %613 : vector<16x64xf32>
    %615 = vector.extract_strided_slice %113 {offsets = [27, 0], sizes = [1, 64], strides = [1, 1]} : vector<32x64xf32> to vector<1x64xf32>
    %616 = vector.broadcast %615 : vector<1x64xf32> to vector<16x64xf32>
    %617 = arith.mulf %616, %27 : vector<16x64xf32>
    %618 = math.exp %617 : vector<16x64xf32>
    %619 = vector.extract_strided_slice %117 {offsets = [0, 24], sizes = [16, 1], strides = [1, 1]} : vector<32x32xf32> to vector<16x1xf32>
    %620 = vector.extract_strided_slice %118 {offsets = [24, 0], sizes = [1, 64], strides = [1, 1]} : vector<32x64xf32> to vector<1x64xf32>
    %621 = vector.broadcast %619 : vector<16x1xf32> to vector<16x64xf32>
    %622 = vector.broadcast %620 : vector<1x64xf32> to vector<16x64xf32>
    %623 = arith.mulf %621, %622 : vector<16x64xf32>
    %624 = vector.extract_strided_slice %117 {offsets = [0, 25], sizes = [16, 1], strides = [1, 1]} : vector<32x32xf32> to vector<16x1xf32>
    %625 = vector.extract_strided_slice %118 {offsets = [25, 0], sizes = [1, 64], strides = [1, 1]} : vector<32x64xf32> to vector<1x64xf32>
    %626 = vector.broadcast %624 : vector<16x1xf32> to vector<16x64xf32>
    %627 = vector.broadcast %625 : vector<1x64xf32> to vector<16x64xf32>
    %628 = arith.mulf %626, %627 : vector<16x64xf32>
    %629 = vector.extract_strided_slice %117 {offsets = [0, 26], sizes = [16, 1], strides = [1, 1]} : vector<32x32xf32> to vector<16x1xf32>
    %630 = vector.extract_strided_slice %118 {offsets = [26, 0], sizes = [1, 64], strides = [1, 1]} : vector<32x64xf32> to vector<1x64xf32>
    %631 = vector.broadcast %629 : vector<16x1xf32> to vector<16x64xf32>
    %632 = vector.broadcast %630 : vector<1x64xf32> to vector<16x64xf32>
    %633 = arith.mulf %631, %632 : vector<16x64xf32>
    %634 = vector.extract_strided_slice %117 {offsets = [0, 27], sizes = [16, 1], strides = [1, 1]} : vector<32x32xf32> to vector<16x1xf32>
    %635 = vector.extract_strided_slice %118 {offsets = [27, 0], sizes = [1, 64], strides = [1, 1]} : vector<32x64xf32> to vector<1x64xf32>
    %636 = vector.broadcast %634 : vector<16x1xf32> to vector<16x64xf32>
    %637 = vector.broadcast %635 : vector<1x64xf32> to vector<16x64xf32>
    %638 = arith.mulf %636, %637 : vector<16x64xf32>
    %639 = vector.extract_strided_slice %117 {offsets = [16, 24], sizes = [16, 1], strides = [1, 1]} : vector<32x32xf32> to vector<16x1xf32>
    %640 = vector.extract_strided_slice %117 {offsets = [16, 25], sizes = [16, 1], strides = [1, 1]} : vector<32x32xf32> to vector<16x1xf32>
    %641 = vector.extract_strided_slice %117 {offsets = [16, 26], sizes = [16, 1], strides = [1, 1]} : vector<32x32xf32> to vector<16x1xf32>
    %642 = vector.extract_strided_slice %117 {offsets = [16, 27], sizes = [16, 1], strides = [1, 1]} : vector<32x32xf32> to vector<16x1xf32>
    %643 = arith.mulf %606, %570 : vector<16x64xf32>
    %644 = arith.addf %643, %623 : vector<16x64xf32>
    %645 = arith.mulf %610, %644 : vector<16x64xf32>
    %646 = arith.addf %645, %628 : vector<16x64xf32>
    %647 = arith.mulf %614, %646 : vector<16x64xf32>
    %648 = arith.addf %647, %633 : vector<16x64xf32>
    %649 = arith.mulf %618, %648 : vector<16x64xf32>
    %650 = arith.addf %649, %638 : vector<16x64xf32>
    %651 = vector.broadcast %639 : vector<16x1xf32> to vector<16x64xf32>
    %652 = arith.mulf %644, %651 : vector<16x64xf32>
    %cst_61 = arith.constant dense<0.000000e+00> : vector<64xf32>
    %653 = vector.multi_reduction <add>, %652, %cst_61 [0] : vector<16x64xf32> to vector<64xf32>
    %654 = vector.shape_cast %653 : vector<64xf32> to vector<1x64xf32>
    %655 = vector.extract_strided_slice %120 {offsets = [24, 0], sizes = [1, 64], strides = [1, 1]} : vector<32x64xf32> to vector<1x64xf32>
    %656 = arith.addf %654, %655 : vector<1x64xf32>
    %657 = vector.extract_strided_slice %61 {offsets = [24, 0], sizes = [1, 64], strides = [1, 1]} : vector<32x64xf32> to vector<1x64xf32>
    %658 = arith.mulf %656, %657 : vector<1x64xf32>
    %659 = vector.broadcast %640 : vector<16x1xf32> to vector<16x64xf32>
    %660 = arith.mulf %646, %659 : vector<16x64xf32>
    %cst_62 = arith.constant dense<0.000000e+00> : vector<64xf32>
    %661 = vector.multi_reduction <add>, %660, %cst_62 [0] : vector<16x64xf32> to vector<64xf32>
    %662 = vector.shape_cast %661 : vector<64xf32> to vector<1x64xf32>
    %663 = vector.extract_strided_slice %120 {offsets = [25, 0], sizes = [1, 64], strides = [1, 1]} : vector<32x64xf32> to vector<1x64xf32>
    %664 = arith.addf %662, %663 : vector<1x64xf32>
    %665 = vector.extract_strided_slice %61 {offsets = [25, 0], sizes = [1, 64], strides = [1, 1]} : vector<32x64xf32> to vector<1x64xf32>
    %666 = arith.mulf %664, %665 : vector<1x64xf32>
    %667 = vector.broadcast %641 : vector<16x1xf32> to vector<16x64xf32>
    %668 = arith.mulf %648, %667 : vector<16x64xf32>
    %cst_63 = arith.constant dense<0.000000e+00> : vector<64xf32>
    %669 = vector.multi_reduction <add>, %668, %cst_63 [0] : vector<16x64xf32> to vector<64xf32>
    %670 = vector.shape_cast %669 : vector<64xf32> to vector<1x64xf32>
    %671 = vector.extract_strided_slice %120 {offsets = [26, 0], sizes = [1, 64], strides = [1, 1]} : vector<32x64xf32> to vector<1x64xf32>
    %672 = arith.addf %670, %671 : vector<1x64xf32>
    %673 = vector.extract_strided_slice %61 {offsets = [26, 0], sizes = [1, 64], strides = [1, 1]} : vector<32x64xf32> to vector<1x64xf32>
    %674 = arith.mulf %672, %673 : vector<1x64xf32>
    %675 = vector.broadcast %642 : vector<16x1xf32> to vector<16x64xf32>
    %676 = arith.mulf %650, %675 : vector<16x64xf32>
    %cst_64 = arith.constant dense<0.000000e+00> : vector<64xf32>
    %677 = vector.multi_reduction <add>, %676, %cst_64 [0] : vector<16x64xf32> to vector<64xf32>
    %678 = vector.shape_cast %677 : vector<64xf32> to vector<1x64xf32>
    %679 = vector.extract_strided_slice %120 {offsets = [27, 0], sizes = [1, 64], strides = [1, 1]} : vector<32x64xf32> to vector<1x64xf32>
    %680 = arith.addf %678, %679 : vector<1x64xf32>
    %681 = vector.extract_strided_slice %61 {offsets = [27, 0], sizes = [1, 64], strides = [1, 1]} : vector<32x64xf32> to vector<1x64xf32>
    %682 = arith.mulf %680, %681 : vector<1x64xf32>
    %683 = vector.extract_strided_slice %113 {offsets = [28, 0], sizes = [1, 64], strides = [1, 1]} : vector<32x64xf32> to vector<1x64xf32>
    %684 = vector.broadcast %683 : vector<1x64xf32> to vector<16x64xf32>
    %685 = arith.mulf %684, %27 : vector<16x64xf32>
    %686 = math.exp %685 : vector<16x64xf32>
    %687 = vector.extract_strided_slice %113 {offsets = [29, 0], sizes = [1, 64], strides = [1, 1]} : vector<32x64xf32> to vector<1x64xf32>
    %688 = vector.broadcast %687 : vector<1x64xf32> to vector<16x64xf32>
    %689 = arith.mulf %688, %27 : vector<16x64xf32>
    %690 = math.exp %689 : vector<16x64xf32>
    %691 = vector.extract_strided_slice %113 {offsets = [30, 0], sizes = [1, 64], strides = [1, 1]} : vector<32x64xf32> to vector<1x64xf32>
    %692 = vector.broadcast %691 : vector<1x64xf32> to vector<16x64xf32>
    %693 = arith.mulf %692, %27 : vector<16x64xf32>
    %694 = math.exp %693 : vector<16x64xf32>
    %695 = vector.extract_strided_slice %113 {offsets = [31, 0], sizes = [1, 64], strides = [1, 1]} : vector<32x64xf32> to vector<1x64xf32>
    %696 = vector.broadcast %695 : vector<1x64xf32> to vector<16x64xf32>
    %697 = arith.mulf %696, %27 : vector<16x64xf32>
    %698 = math.exp %697 : vector<16x64xf32>
    %699 = vector.extract_strided_slice %117 {offsets = [0, 28], sizes = [16, 1], strides = [1, 1]} : vector<32x32xf32> to vector<16x1xf32>
    %700 = vector.extract_strided_slice %118 {offsets = [28, 0], sizes = [1, 64], strides = [1, 1]} : vector<32x64xf32> to vector<1x64xf32>
    %701 = vector.broadcast %699 : vector<16x1xf32> to vector<16x64xf32>
    %702 = vector.broadcast %700 : vector<1x64xf32> to vector<16x64xf32>
    %703 = arith.mulf %701, %702 : vector<16x64xf32>
    %704 = vector.extract_strided_slice %117 {offsets = [0, 29], sizes = [16, 1], strides = [1, 1]} : vector<32x32xf32> to vector<16x1xf32>
    %705 = vector.extract_strided_slice %118 {offsets = [29, 0], sizes = [1, 64], strides = [1, 1]} : vector<32x64xf32> to vector<1x64xf32>
    %706 = vector.broadcast %704 : vector<16x1xf32> to vector<16x64xf32>
    %707 = vector.broadcast %705 : vector<1x64xf32> to vector<16x64xf32>
    %708 = arith.mulf %706, %707 : vector<16x64xf32>
    %709 = vector.extract_strided_slice %117 {offsets = [0, 30], sizes = [16, 1], strides = [1, 1]} : vector<32x32xf32> to vector<16x1xf32>
    %710 = vector.extract_strided_slice %118 {offsets = [30, 0], sizes = [1, 64], strides = [1, 1]} : vector<32x64xf32> to vector<1x64xf32>
    %711 = vector.broadcast %709 : vector<16x1xf32> to vector<16x64xf32>
    %712 = vector.broadcast %710 : vector<1x64xf32> to vector<16x64xf32>
    %713 = arith.mulf %711, %712 : vector<16x64xf32>
    %714 = vector.extract_strided_slice %117 {offsets = [0, 31], sizes = [16, 1], strides = [1, 1]} : vector<32x32xf32> to vector<16x1xf32>
    %715 = vector.extract_strided_slice %118 {offsets = [31, 0], sizes = [1, 64], strides = [1, 1]} : vector<32x64xf32> to vector<1x64xf32>
    %716 = vector.broadcast %714 : vector<16x1xf32> to vector<16x64xf32>
    %717 = vector.broadcast %715 : vector<1x64xf32> to vector<16x64xf32>
    %718 = arith.mulf %716, %717 : vector<16x64xf32>
    %719 = vector.extract_strided_slice %117 {offsets = [16, 28], sizes = [16, 1], strides = [1, 1]} : vector<32x32xf32> to vector<16x1xf32>
    %720 = vector.extract_strided_slice %117 {offsets = [16, 29], sizes = [16, 1], strides = [1, 1]} : vector<32x32xf32> to vector<16x1xf32>
    %721 = vector.extract_strided_slice %117 {offsets = [16, 30], sizes = [16, 1], strides = [1, 1]} : vector<32x32xf32> to vector<16x1xf32>
    %722 = vector.extract_strided_slice %117 {offsets = [16, 31], sizes = [16, 1], strides = [1, 1]} : vector<32x32xf32> to vector<16x1xf32>
    %723 = arith.mulf %686, %650 : vector<16x64xf32>
    %724 = arith.addf %723, %703 : vector<16x64xf32>
    %725 = arith.mulf %690, %724 : vector<16x64xf32>
    %726 = arith.addf %725, %708 : vector<16x64xf32>
    %727 = arith.mulf %694, %726 : vector<16x64xf32>
    %728 = arith.addf %727, %713 : vector<16x64xf32>
    %729 = arith.mulf %698, %728 : vector<16x64xf32>
    %730 = arith.addf %729, %718 : vector<16x64xf32>
    %731 = vector.broadcast %719 : vector<16x1xf32> to vector<16x64xf32>
    %732 = arith.mulf %724, %731 : vector<16x64xf32>
    %cst_65 = arith.constant dense<0.000000e+00> : vector<64xf32>
    %733 = vector.multi_reduction <add>, %732, %cst_65 [0] : vector<16x64xf32> to vector<64xf32>
    %734 = vector.shape_cast %733 : vector<64xf32> to vector<1x64xf32>
    %735 = vector.extract_strided_slice %120 {offsets = [28, 0], sizes = [1, 64], strides = [1, 1]} : vector<32x64xf32> to vector<1x64xf32>
    %736 = arith.addf %734, %735 : vector<1x64xf32>
    %737 = vector.extract_strided_slice %61 {offsets = [28, 0], sizes = [1, 64], strides = [1, 1]} : vector<32x64xf32> to vector<1x64xf32>
    %738 = arith.mulf %736, %737 : vector<1x64xf32>
    %739 = vector.broadcast %720 : vector<16x1xf32> to vector<16x64xf32>
    %740 = arith.mulf %726, %739 : vector<16x64xf32>
    %cst_66 = arith.constant dense<0.000000e+00> : vector<64xf32>
    %741 = vector.multi_reduction <add>, %740, %cst_66 [0] : vector<16x64xf32> to vector<64xf32>
    %742 = vector.shape_cast %741 : vector<64xf32> to vector<1x64xf32>
    %743 = vector.extract_strided_slice %120 {offsets = [29, 0], sizes = [1, 64], strides = [1, 1]} : vector<32x64xf32> to vector<1x64xf32>
    %744 = arith.addf %742, %743 : vector<1x64xf32>
    %745 = vector.extract_strided_slice %61 {offsets = [29, 0], sizes = [1, 64], strides = [1, 1]} : vector<32x64xf32> to vector<1x64xf32>
    %746 = arith.mulf %744, %745 : vector<1x64xf32>
    %747 = vector.broadcast %721 : vector<16x1xf32> to vector<16x64xf32>
    %748 = arith.mulf %728, %747 : vector<16x64xf32>
    %cst_67 = arith.constant dense<0.000000e+00> : vector<64xf32>
    %749 = vector.multi_reduction <add>, %748, %cst_67 [0] : vector<16x64xf32> to vector<64xf32>
    %750 = vector.shape_cast %749 : vector<64xf32> to vector<1x64xf32>
    %751 = vector.extract_strided_slice %120 {offsets = [30, 0], sizes = [1, 64], strides = [1, 1]} : vector<32x64xf32> to vector<1x64xf32>
    %752 = arith.addf %750, %751 : vector<1x64xf32>
    %753 = vector.extract_strided_slice %61 {offsets = [30, 0], sizes = [1, 64], strides = [1, 1]} : vector<32x64xf32> to vector<1x64xf32>
    %754 = arith.mulf %752, %753 : vector<1x64xf32>
    %755 = vector.broadcast %722 : vector<16x1xf32> to vector<16x64xf32>
    %756 = arith.mulf %730, %755 : vector<16x64xf32>
    %cst_68 = arith.constant dense<0.000000e+00> : vector<64xf32>
    %757 = vector.multi_reduction <add>, %756, %cst_68 [0] : vector<16x64xf32> to vector<64xf32>
    %758 = vector.shape_cast %757 : vector<64xf32> to vector<1x64xf32>
    %759 = vector.extract_strided_slice %120 {offsets = [31, 0], sizes = [1, 64], strides = [1, 1]} : vector<32x64xf32> to vector<1x64xf32>
    %760 = arith.addf %758, %759 : vector<1x64xf32>
    %761 = vector.extract_strided_slice %61 {offsets = [31, 0], sizes = [1, 64], strides = [1, 1]} : vector<32x64xf32> to vector<1x64xf32>
    %762 = arith.mulf %760, %761 : vector<1x64xf32>
    %763 = tpu.concatenate %177, %185, %193, %201, %257, %265, %273, %281, %337, %345, %353, %361, %417, %425, %433, %441 in 0 : vector<1x64xf32>, vector<1x64xf32>, vector<1x64xf32>, vector<1x64xf32>, vector<1x64xf32>, vector<1x64xf32>, vector<1x64xf32>, vector<1x64xf32>, vector<1x64xf32>, vector<1x64xf32>, vector<1x64xf32>, vector<1x64xf32>, vector<1x64xf32>, vector<1x64xf32>, vector<1x64xf32>, vector<1x64xf32> -> vector<16x64xf32>
    %764 = tpu.concatenate %498, %506, %514, %522, %578, %586, %594, %602, %658, %666, %674, %682, %738, %746, %754, %762 in 0 : vector<1x64xf32>, vector<1x64xf32>, vector<1x64xf32>, vector<1x64xf32>, vector<1x64xf32>, vector<1x64xf32>, vector<1x64xf32>, vector<1x64xf32>, vector<1x64xf32>, vector<1x64xf32>, vector<1x64xf32>, vector<1x64xf32>, vector<1x64xf32>, vector<1x64xf32>, vector<1x64xf32>, vector<1x64xf32> -> vector<16x64xf32>
    %765 = tpu.concatenate %763, %764 in 0 : vector<16x64xf32>, vector<16x64xf32> -> vector<32x64xf32>
    %c0_69 = arith.constant 0 : index
    %c0_70 = arith.constant 0 : index
    %c0_71 = arith.constant 0 : index
    %766 = vector.load %arg7[%c0_69, %c0_70, %c0_71] : memref<2x64x32xbf16, #tpu.memory_space<vmem>>, vector<1x64x32xbf16>
    %767 = vector.shape_cast %766 : vector<1x64x32xbf16> to vector<64x32xbf16>
    %768 = arith.truncf %765 : vector<32x64xf32> to vector<32x64xbf16>
    %cst_72 = arith.constant dense<0.000000e+00> : vector<32x32xf32>
    %769 = tpu.matmul %768, %767, %cst_72 {dimension_numbers = #tpu.dot_dimension_numbers<[1], [0], [0], [1], [0, 0, 1, 1], [], []>} : vector<32x64xbf16>, vector<64x32xbf16>, vector<32x32xf32> -> vector<32x32xf32>
    %770 = vector.extract_strided_slice %0 {offsets = [9, 0], sizes = [1, 32], strides = [1, 1]} : vector<16x128xf32> to vector<1x32xf32>
    %771 = vector.extract_strided_slice %0 {offsets = [9, 32], sizes = [1, 32], strides = [1, 1]} : vector<16x128xf32> to vector<1x32xf32>
    %772 = vector.extract_strided_slice %0 {offsets = [10, 0], sizes = [1, 64], strides = [1, 1]} : vector<16x128xf32> to vector<1x64xf32>
    %773 = vector.extract_strided_slice %0 {offsets = [10, 64], sizes = [1, 64], strides = [1, 1]} : vector<16x128xf32> to vector<1x64xf32>
    %774 = vector.extract_strided_slice %0 {offsets = [11, 0], sizes = [1, 64], strides = [1, 1]} : vector<16x128xf32> to vector<1x64xf32>
    %775 = vector.extract_strided_slice %0 {offsets = [12, 0], sizes = [4, 64], strides = [1, 1]} : vector<16x128xf32> to vector<4x64xf32>
    %c1 = arith.constant 1 : index
    %c0_73 = arith.constant 0 : index
    %c0_74 = arith.constant 0 : index
    %776 = vector.load %arg6[%c1, %c0_73, %c0_74] : memref<2x16x64xf32, #tpu.memory_space<vmem>>, vector<1x16x64xf32>
    %777 = vector.shape_cast %776 : vector<1x16x64xf32> to vector<16x64xf32>
    %778 = arith.addf %19, %769 : vector<32x32xf32>
    %cst_75 = arith.constant dense<0.000000e+00> : vector<32xf32>
    %779 = vector.multi_reduction <add>, %778, %cst_75 [1] : vector<32x32xf32> to vector<32xf32>
    %780 = vector.shape_cast %779 : vector<32xf32> to vector<32x1xf32>
    %cst_76 = arith.constant 3.200000e+01 : f32
    %781 = vector.broadcast %cst_76 : f32 to vector<32x1xf32>
    %782 = arith.divf %780, %781 : vector<32x1xf32>
    %783 = vector.broadcast %782 : vector<32x1xf32> to vector<32x32xf32>
    %784 = arith.subf %778, %783 : vector<32x32xf32>
    %785 = arith.mulf %784, %784 : vector<32x32xf32>
    %cst_77 = arith.constant dense<0.000000e+00> : vector<32xf32>
    %786 = vector.multi_reduction <add>, %785, %cst_77 [1] : vector<32x32xf32> to vector<32xf32>
    %787 = vector.shape_cast %786 : vector<32xf32> to vector<32x1xf32>
    %cst_78 = arith.constant 3.200000e+01 : f32
    %788 = vector.broadcast %cst_78 : f32 to vector<32x1xf32>
    %789 = arith.divf %787, %788 : vector<32x1xf32>
    %790 = vector.broadcast %782 : vector<32x1xf32> to vector<32x32xf32>
    %791 = arith.subf %778, %790 : vector<32x32xf32>
    %cst_79 = arith.constant 9.99999974E-6 : f32
    %792 = vector.broadcast %cst_79 : f32 to vector<32x1xf32>
    %793 = arith.addf %789, %792 : vector<32x1xf32>
    %794 = math.rsqrt %793 : vector<32x1xf32>
    %795 = vector.broadcast %794 : vector<32x1xf32> to vector<32x32xf32>
    %796 = arith.mulf %791, %795 : vector<32x32xf32>
    %797 = vector.broadcast %770 : vector<1x32xf32> to vector<32x32xf32>
    %798 = arith.mulf %796, %797 : vector<32x32xf32>
    %799 = vector.broadcast %771 : vector<1x32xf32> to vector<32x32xf32>
    %800 = arith.addf %798, %799 : vector<32x32xf32>
    %c1_80 = arith.constant 1 : index
    %c0_81 = arith.constant 0 : index
    %c0_82 = arith.constant 0 : index
    %801 = vector.load %arg3[%c1_80, %c0_81, %c0_82] : memref<2x32x128xbf16, #tpu.memory_space<vmem>>, vector<1x32x128xbf16>
    %802 = vector.shape_cast %801 : vector<1x32x128xbf16> to vector<32x128xbf16>
    %803 = arith.truncf %800 : vector<32x32xf32> to vector<32x32xbf16>
    %cst_83 = arith.constant dense<0.000000e+00> : vector<32x128xf32>
    %804 = tpu.matmul %803, %802, %cst_83 {dimension_numbers = #tpu.dot_dimension_numbers<[1], [0], [0], [1], [0, 0, 1, 1], [], []>} : vector<32x32xbf16>, vector<32x128xbf16>, vector<32x128xf32> -> vector<32x128xf32>
    %805 = vector.extract_strided_slice %804 {offsets = [0, 0], sizes = [32, 64], strides = [1, 1]} : vector<32x128xf32> to vector<32x64xf32>
    %806 = vector.extract_strided_slice %804 {offsets = [0, 64], sizes = [32, 64], strides = [1, 1]} : vector<32x128xf32> to vector<32x64xf32>
    %807 = arith.negf %806 : vector<32x64xf32>
    %808 = math.exp %807 : vector<32x64xf32>
    %cst_84 = arith.constant 1.000000e+00 : f32
    %809 = vector.broadcast %cst_84 : f32 to vector<32x64xf32>
    %810 = arith.addf %809, %808 : vector<32x64xf32>
    %811 = arith.divf %809, %810 : vector<32x64xf32>
    %812 = arith.mulf %806, %811 : vector<32x64xf32>
    %c3_i32_85 = arith.constant 3 : i32
    %813 = tpu.dynamic_rotate %805 by %c3_i32_85 dim 0 : vector<32x64xf32>, i32 -> vector<32x64xf32>
    %cst_86 = arith.constant 0.000000e+00 : f32
    %814 = vector.broadcast %cst_86 : f32 to vector<32x64xf32>
    %815 = arith.select %13, %813, %814 : vector<32x64xi1>, vector<32x64xf32>
    %816 = vector.extract_strided_slice %775 {offsets = [0, 0], sizes = [1, 64], strides = [1, 1]} : vector<4x64xf32> to vector<1x64xf32>
    %817 = vector.broadcast %816 : vector<1x64xf32> to vector<32x64xf32>
    %818 = arith.mulf %815, %817 : vector<32x64xf32>
    %819 = vector.broadcast %772 : vector<1x64xf32> to vector<32x64xf32>
    %820 = arith.addf %819, %818 : vector<32x64xf32>
    %c2_i32_87 = arith.constant 2 : i32
    %821 = tpu.dynamic_rotate %805 by %c2_i32_87 dim 0 : vector<32x64xf32>, i32 -> vector<32x64xf32>
    %cst_88 = arith.constant 0.000000e+00 : f32
    %822 = vector.broadcast %cst_88 : f32 to vector<32x64xf32>
    %823 = arith.select %11, %821, %822 : vector<32x64xi1>, vector<32x64xf32>
    %824 = vector.extract_strided_slice %775 {offsets = [1, 0], sizes = [1, 64], strides = [1, 1]} : vector<4x64xf32> to vector<1x64xf32>
    %825 = vector.broadcast %824 : vector<1x64xf32> to vector<32x64xf32>
    %826 = arith.mulf %823, %825 : vector<32x64xf32>
    %827 = arith.addf %820, %826 : vector<32x64xf32>
    %c1_i32_89 = arith.constant 1 : i32
    %828 = tpu.dynamic_rotate %805 by %c1_i32_89 dim 0 : vector<32x64xf32>, i32 -> vector<32x64xf32>
    %cst_90 = arith.constant 0.000000e+00 : f32
    %829 = vector.broadcast %cst_90 : f32 to vector<32x64xf32>
    %830 = arith.select %9, %828, %829 : vector<32x64xi1>, vector<32x64xf32>
    %831 = vector.extract_strided_slice %775 {offsets = [2, 0], sizes = [1, 64], strides = [1, 1]} : vector<4x64xf32> to vector<1x64xf32>
    %832 = vector.broadcast %831 : vector<1x64xf32> to vector<32x64xf32>
    %833 = arith.mulf %830, %832 : vector<32x64xf32>
    %834 = arith.addf %827, %833 : vector<32x64xf32>
    %835 = vector.extract_strided_slice %775 {offsets = [3, 0], sizes = [1, 64], strides = [1, 1]} : vector<4x64xf32> to vector<1x64xf32>
    %836 = vector.broadcast %835 : vector<1x64xf32> to vector<32x64xf32>
    %837 = arith.mulf %805, %836 : vector<32x64xf32>
    %838 = arith.addf %834, %837 : vector<32x64xf32>
    %839 = arith.negf %838 : vector<32x64xf32>
    %840 = math.exp %839 : vector<32x64xf32>
    %cst_91 = arith.constant 1.000000e+00 : f32
    %841 = vector.broadcast %cst_91 : f32 to vector<32x64xf32>
    %842 = arith.addf %841, %840 : vector<32x64xf32>
    %843 = arith.divf %841, %842 : vector<32x64xf32>
    %844 = arith.mulf %838, %843 : vector<32x64xf32>
    %c1_92 = arith.constant 1 : index
    %c0_93 = arith.constant 0 : index
    %c0_94 = arith.constant 0 : index
    %845 = vector.load %arg4[%c1_92, %c0_93, %c0_94] : memref<2x64x64xbf16, #tpu.memory_space<vmem>>, vector<1x64x64xbf16>
    %846 = vector.shape_cast %845 : vector<1x64x64xbf16> to vector<64x64xbf16>
    %847 = arith.truncf %844 : vector<32x64xf32> to vector<32x64xbf16>
    %cst_95 = arith.constant dense<0.000000e+00> : vector<32x64xf32>
    %848 = tpu.matmul %847, %846, %cst_95 {dimension_numbers = #tpu.dot_dimension_numbers<[1], [0], [0], [1], [0, 0, 1, 1], [], []>} : vector<32x64xbf16>, vector<64x64xbf16>, vector<32x64xf32> -> vector<32x64xf32>
    %849 = vector.broadcast %773 : vector<1x64xf32> to vector<32x64xf32>
    %850 = arith.addf %848, %849 : vector<32x64xf32>
    %cst_96 = arith.constant 0.000000e+00 : f32
    %851 = vector.broadcast %cst_96 : f32 to vector<32x64xf32>
    %852 = arith.maximumf %850, %851 : vector<32x64xf32>
    %853 = vector.broadcast %cst_96 : f32 to vector<32x64xf32>
    %854 = arith.subf %850, %853 : vector<32x64xf32>
    %855 = arith.cmpf one, %854, %854 : vector<32x64xf32>
    %856 = vector.broadcast %cst_96 : f32 to vector<32x64xf32>
    %857 = arith.addf %850, %856 : vector<32x64xf32>
    %858 = math.absf %854 : vector<32x64xf32>
    %cst_97 = arith.constant 0.000000e+00 : f32
    %859 = vector.broadcast %cst_97 : f32 to vector<32x64xf32>
    %860 = arith.subf %859, %858 : vector<32x64xf32>
    %861 = math.exp %860 : vector<32x64xf32>
    %862 = math.log1p %861 : vector<32x64xf32>
    %863 = arith.addf %852, %862 : vector<32x64xf32>
    %864 = arith.select %855, %857, %863 : vector<32x64xi1>, vector<32x64xf32>
    %c1_98 = arith.constant 1 : index
    %c0_99 = arith.constant 0 : index
    %c0_100 = arith.constant 0 : index
    %865 = vector.load %arg5[%c1_98, %c0_99, %c0_100] : memref<2x32x64xbf16, #tpu.memory_space<vmem>>, vector<1x32x64xbf16>
    %866 = vector.shape_cast %865 : vector<1x32x64xbf16> to vector<32x64xbf16>
    %867 = arith.truncf %844 : vector<32x64xf32> to vector<32x64xbf16>
    %cst_101 = arith.constant dense<0.000000e+00> : vector<32x32xf32>
    %868 = tpu.matmul %866, %867, %cst_101 {dimension_numbers = #tpu.dot_dimension_numbers<[1], [1], [0], [0], [0, 0, 1, 0], [], []>} : vector<32x64xbf16>, vector<32x64xbf16>, vector<32x32xf32> -> vector<32x32xf32>
    %869 = arith.mulf %864, %844 : vector<32x64xf32>
    %870 = vector.broadcast %774 : vector<1x64xf32> to vector<32x64xf32>
    %871 = arith.mulf %844, %870 : vector<32x64xf32>
    %cst_102 = arith.constant 0.000000e+00 : f32
    %872 = vector.broadcast %cst_102 : f32 to vector<16x64xf32>
    %873 = vector.extract_strided_slice %864 {offsets = [0, 0], sizes = [1, 64], strides = [1, 1]} : vector<32x64xf32> to vector<1x64xf32>
    %874 = vector.broadcast %873 : vector<1x64xf32> to vector<16x64xf32>
    %875 = arith.mulf %874, %777 : vector<16x64xf32>
    %876 = math.exp %875 : vector<16x64xf32>
    %877 = vector.extract_strided_slice %864 {offsets = [1, 0], sizes = [1, 64], strides = [1, 1]} : vector<32x64xf32> to vector<1x64xf32>
    %878 = vector.broadcast %877 : vector<1x64xf32> to vector<16x64xf32>
    %879 = arith.mulf %878, %777 : vector<16x64xf32>
    %880 = math.exp %879 : vector<16x64xf32>
    %881 = vector.extract_strided_slice %864 {offsets = [2, 0], sizes = [1, 64], strides = [1, 1]} : vector<32x64xf32> to vector<1x64xf32>
    %882 = vector.broadcast %881 : vector<1x64xf32> to vector<16x64xf32>
    %883 = arith.mulf %882, %777 : vector<16x64xf32>
    %884 = math.exp %883 : vector<16x64xf32>
    %885 = vector.extract_strided_slice %864 {offsets = [3, 0], sizes = [1, 64], strides = [1, 1]} : vector<32x64xf32> to vector<1x64xf32>
    %886 = vector.broadcast %885 : vector<1x64xf32> to vector<16x64xf32>
    %887 = arith.mulf %886, %777 : vector<16x64xf32>
    %888 = math.exp %887 : vector<16x64xf32>
    %889 = vector.extract_strided_slice %868 {offsets = [0, 0], sizes = [16, 1], strides = [1, 1]} : vector<32x32xf32> to vector<16x1xf32>
    %890 = vector.extract_strided_slice %869 {offsets = [0, 0], sizes = [1, 64], strides = [1, 1]} : vector<32x64xf32> to vector<1x64xf32>
    %891 = vector.broadcast %889 : vector<16x1xf32> to vector<16x64xf32>
    %892 = vector.broadcast %890 : vector<1x64xf32> to vector<16x64xf32>
    %893 = arith.mulf %891, %892 : vector<16x64xf32>
    %894 = vector.extract_strided_slice %868 {offsets = [0, 1], sizes = [16, 1], strides = [1, 1]} : vector<32x32xf32> to vector<16x1xf32>
    %895 = vector.extract_strided_slice %869 {offsets = [1, 0], sizes = [1, 64], strides = [1, 1]} : vector<32x64xf32> to vector<1x64xf32>
    %896 = vector.broadcast %894 : vector<16x1xf32> to vector<16x64xf32>
    %897 = vector.broadcast %895 : vector<1x64xf32> to vector<16x64xf32>
    %898 = arith.mulf %896, %897 : vector<16x64xf32>
    %899 = vector.extract_strided_slice %868 {offsets = [0, 2], sizes = [16, 1], strides = [1, 1]} : vector<32x32xf32> to vector<16x1xf32>
    %900 = vector.extract_strided_slice %869 {offsets = [2, 0], sizes = [1, 64], strides = [1, 1]} : vector<32x64xf32> to vector<1x64xf32>
    %901 = vector.broadcast %899 : vector<16x1xf32> to vector<16x64xf32>
    %902 = vector.broadcast %900 : vector<1x64xf32> to vector<16x64xf32>
    %903 = arith.mulf %901, %902 : vector<16x64xf32>
    %904 = vector.extract_strided_slice %868 {offsets = [0, 3], sizes = [16, 1], strides = [1, 1]} : vector<32x32xf32> to vector<16x1xf32>
    %905 = vector.extract_strided_slice %869 {offsets = [3, 0], sizes = [1, 64], strides = [1, 1]} : vector<32x64xf32> to vector<1x64xf32>
    %906 = vector.broadcast %904 : vector<16x1xf32> to vector<16x64xf32>
    %907 = vector.broadcast %905 : vector<1x64xf32> to vector<16x64xf32>
    %908 = arith.mulf %906, %907 : vector<16x64xf32>
    %909 = vector.extract_strided_slice %868 {offsets = [16, 0], sizes = [16, 1], strides = [1, 1]} : vector<32x32xf32> to vector<16x1xf32>
    %910 = vector.extract_strided_slice %868 {offsets = [16, 1], sizes = [16, 1], strides = [1, 1]} : vector<32x32xf32> to vector<16x1xf32>
    %911 = vector.extract_strided_slice %868 {offsets = [16, 2], sizes = [16, 1], strides = [1, 1]} : vector<32x32xf32> to vector<16x1xf32>
    %912 = vector.extract_strided_slice %868 {offsets = [16, 3], sizes = [16, 1], strides = [1, 1]} : vector<32x32xf32> to vector<16x1xf32>
    %913 = arith.mulf %876, %872 : vector<16x64xf32>
    %914 = arith.addf %913, %893 : vector<16x64xf32>
    %915 = arith.mulf %880, %914 : vector<16x64xf32>
    %916 = arith.addf %915, %898 : vector<16x64xf32>
    %917 = arith.mulf %884, %916 : vector<16x64xf32>
    %918 = arith.addf %917, %903 : vector<16x64xf32>
    %919 = arith.mulf %888, %918 : vector<16x64xf32>
    %920 = arith.addf %919, %908 : vector<16x64xf32>
    %921 = vector.broadcast %909 : vector<16x1xf32> to vector<16x64xf32>
    %922 = arith.mulf %914, %921 : vector<16x64xf32>
    %cst_103 = arith.constant dense<0.000000e+00> : vector<64xf32>
    %923 = vector.multi_reduction <add>, %922, %cst_103 [0] : vector<16x64xf32> to vector<64xf32>
    %924 = vector.shape_cast %923 : vector<64xf32> to vector<1x64xf32>
    %925 = vector.extract_strided_slice %871 {offsets = [0, 0], sizes = [1, 64], strides = [1, 1]} : vector<32x64xf32> to vector<1x64xf32>
    %926 = arith.addf %924, %925 : vector<1x64xf32>
    %927 = vector.extract_strided_slice %812 {offsets = [0, 0], sizes = [1, 64], strides = [1, 1]} : vector<32x64xf32> to vector<1x64xf32>
    %928 = arith.mulf %926, %927 : vector<1x64xf32>
    %929 = vector.broadcast %910 : vector<16x1xf32> to vector<16x64xf32>
    %930 = arith.mulf %916, %929 : vector<16x64xf32>
    %cst_104 = arith.constant dense<0.000000e+00> : vector<64xf32>
    %931 = vector.multi_reduction <add>, %930, %cst_104 [0] : vector<16x64xf32> to vector<64xf32>
    %932 = vector.shape_cast %931 : vector<64xf32> to vector<1x64xf32>
    %933 = vector.extract_strided_slice %871 {offsets = [1, 0], sizes = [1, 64], strides = [1, 1]} : vector<32x64xf32> to vector<1x64xf32>
    %934 = arith.addf %932, %933 : vector<1x64xf32>
    %935 = vector.extract_strided_slice %812 {offsets = [1, 0], sizes = [1, 64], strides = [1, 1]} : vector<32x64xf32> to vector<1x64xf32>
    %936 = arith.mulf %934, %935 : vector<1x64xf32>
    %937 = vector.broadcast %911 : vector<16x1xf32> to vector<16x64xf32>
    %938 = arith.mulf %918, %937 : vector<16x64xf32>
    %cst_105 = arith.constant dense<0.000000e+00> : vector<64xf32>
    %939 = vector.multi_reduction <add>, %938, %cst_105 [0] : vector<16x64xf32> to vector<64xf32>
    %940 = vector.shape_cast %939 : vector<64xf32> to vector<1x64xf32>
    %941 = vector.extract_strided_slice %871 {offsets = [2, 0], sizes = [1, 64], strides = [1, 1]} : vector<32x64xf32> to vector<1x64xf32>
    %942 = arith.addf %940, %941 : vector<1x64xf32>
    %943 = vector.extract_strided_slice %812 {offsets = [2, 0], sizes = [1, 64], strides = [1, 1]} : vector<32x64xf32> to vector<1x64xf32>
    %944 = arith.mulf %942, %943 : vector<1x64xf32>
    %945 = vector.broadcast %912 : vector<16x1xf32> to vector<16x64xf32>
    %946 = arith.mulf %920, %945 : vector<16x64xf32>
    %cst_106 = arith.constant dense<0.000000e+00> : vector<64xf32>
    %947 = vector.multi_reduction <add>, %946, %cst_106 [0] : vector<16x64xf32> to vector<64xf32>
    %948 = vector.shape_cast %947 : vector<64xf32> to vector<1x64xf32>
    %949 = vector.extract_strided_slice %871 {offsets = [3, 0], sizes = [1, 64], strides = [1, 1]} : vector<32x64xf32> to vector<1x64xf32>
    %950 = arith.addf %948, %949 : vector<1x64xf32>
    %951 = vector.extract_strided_slice %812 {offsets = [3, 0], sizes = [1, 64], strides = [1, 1]} : vector<32x64xf32> to vector<1x64xf32>
    %952 = arith.mulf %950, %951 : vector<1x64xf32>
    %953 = vector.extract_strided_slice %864 {offsets = [4, 0], sizes = [1, 64], strides = [1, 1]} : vector<32x64xf32> to vector<1x64xf32>
    %954 = vector.broadcast %953 : vector<1x64xf32> to vector<16x64xf32>
    %955 = arith.mulf %954, %777 : vector<16x64xf32>
    %956 = math.exp %955 : vector<16x64xf32>
    %957 = vector.extract_strided_slice %864 {offsets = [5, 0], sizes = [1, 64], strides = [1, 1]} : vector<32x64xf32> to vector<1x64xf32>
    %958 = vector.broadcast %957 : vector<1x64xf32> to vector<16x64xf32>
    %959 = arith.mulf %958, %777 : vector<16x64xf32>
    %960 = math.exp %959 : vector<16x64xf32>
    %961 = vector.extract_strided_slice %864 {offsets = [6, 0], sizes = [1, 64], strides = [1, 1]} : vector<32x64xf32> to vector<1x64xf32>
    %962 = vector.broadcast %961 : vector<1x64xf32> to vector<16x64xf32>
    %963 = arith.mulf %962, %777 : vector<16x64xf32>
    %964 = math.exp %963 : vector<16x64xf32>
    %965 = vector.extract_strided_slice %864 {offsets = [7, 0], sizes = [1, 64], strides = [1, 1]} : vector<32x64xf32> to vector<1x64xf32>
    %966 = vector.broadcast %965 : vector<1x64xf32> to vector<16x64xf32>
    %967 = arith.mulf %966, %777 : vector<16x64xf32>
    %968 = math.exp %967 : vector<16x64xf32>
    %969 = vector.extract_strided_slice %868 {offsets = [0, 4], sizes = [16, 1], strides = [1, 1]} : vector<32x32xf32> to vector<16x1xf32>
    %970 = vector.extract_strided_slice %869 {offsets = [4, 0], sizes = [1, 64], strides = [1, 1]} : vector<32x64xf32> to vector<1x64xf32>
    %971 = vector.broadcast %969 : vector<16x1xf32> to vector<16x64xf32>
    %972 = vector.broadcast %970 : vector<1x64xf32> to vector<16x64xf32>
    %973 = arith.mulf %971, %972 : vector<16x64xf32>
    %974 = vector.extract_strided_slice %868 {offsets = [0, 5], sizes = [16, 1], strides = [1, 1]} : vector<32x32xf32> to vector<16x1xf32>
    %975 = vector.extract_strided_slice %869 {offsets = [5, 0], sizes = [1, 64], strides = [1, 1]} : vector<32x64xf32> to vector<1x64xf32>
    %976 = vector.broadcast %974 : vector<16x1xf32> to vector<16x64xf32>
    %977 = vector.broadcast %975 : vector<1x64xf32> to vector<16x64xf32>
    %978 = arith.mulf %976, %977 : vector<16x64xf32>
    %979 = vector.extract_strided_slice %868 {offsets = [0, 6], sizes = [16, 1], strides = [1, 1]} : vector<32x32xf32> to vector<16x1xf32>
    %980 = vector.extract_strided_slice %869 {offsets = [6, 0], sizes = [1, 64], strides = [1, 1]} : vector<32x64xf32> to vector<1x64xf32>
    %981 = vector.broadcast %979 : vector<16x1xf32> to vector<16x64xf32>
    %982 = vector.broadcast %980 : vector<1x64xf32> to vector<16x64xf32>
    %983 = arith.mulf %981, %982 : vector<16x64xf32>
    %984 = vector.extract_strided_slice %868 {offsets = [0, 7], sizes = [16, 1], strides = [1, 1]} : vector<32x32xf32> to vector<16x1xf32>
    %985 = vector.extract_strided_slice %869 {offsets = [7, 0], sizes = [1, 64], strides = [1, 1]} : vector<32x64xf32> to vector<1x64xf32>
    %986 = vector.broadcast %984 : vector<16x1xf32> to vector<16x64xf32>
    %987 = vector.broadcast %985 : vector<1x64xf32> to vector<16x64xf32>
    %988 = arith.mulf %986, %987 : vector<16x64xf32>
    %989 = vector.extract_strided_slice %868 {offsets = [16, 4], sizes = [16, 1], strides = [1, 1]} : vector<32x32xf32> to vector<16x1xf32>
    %990 = vector.extract_strided_slice %868 {offsets = [16, 5], sizes = [16, 1], strides = [1, 1]} : vector<32x32xf32> to vector<16x1xf32>
    %991 = vector.extract_strided_slice %868 {offsets = [16, 6], sizes = [16, 1], strides = [1, 1]} : vector<32x32xf32> to vector<16x1xf32>
    %992 = vector.extract_strided_slice %868 {offsets = [16, 7], sizes = [16, 1], strides = [1, 1]} : vector<32x32xf32> to vector<16x1xf32>
    %993 = arith.mulf %956, %920 : vector<16x64xf32>
    %994 = arith.addf %993, %973 : vector<16x64xf32>
    %995 = arith.mulf %960, %994 : vector<16x64xf32>
    %996 = arith.addf %995, %978 : vector<16x64xf32>
    %997 = arith.mulf %964, %996 : vector<16x64xf32>
    %998 = arith.addf %997, %983 : vector<16x64xf32>
    %999 = arith.mulf %968, %998 : vector<16x64xf32>
    %1000 = arith.addf %999, %988 : vector<16x64xf32>
    %1001 = vector.broadcast %989 : vector<16x1xf32> to vector<16x64xf32>
    %1002 = arith.mulf %994, %1001 : vector<16x64xf32>
    %cst_107 = arith.constant dense<0.000000e+00> : vector<64xf32>
    %1003 = vector.multi_reduction <add>, %1002, %cst_107 [0] : vector<16x64xf32> to vector<64xf32>
    %1004 = vector.shape_cast %1003 : vector<64xf32> to vector<1x64xf32>
    %1005 = vector.extract_strided_slice %871 {offsets = [4, 0], sizes = [1, 64], strides = [1, 1]} : vector<32x64xf32> to vector<1x64xf32>
    %1006 = arith.addf %1004, %1005 : vector<1x64xf32>
    %1007 = vector.extract_strided_slice %812 {offsets = [4, 0], sizes = [1, 64], strides = [1, 1]} : vector<32x64xf32> to vector<1x64xf32>
    %1008 = arith.mulf %1006, %1007 : vector<1x64xf32>
    %1009 = vector.broadcast %990 : vector<16x1xf32> to vector<16x64xf32>
    %1010 = arith.mulf %996, %1009 : vector<16x64xf32>
    %cst_108 = arith.constant dense<0.000000e+00> : vector<64xf32>
    %1011 = vector.multi_reduction <add>, %1010, %cst_108 [0] : vector<16x64xf32> to vector<64xf32>
    %1012 = vector.shape_cast %1011 : vector<64xf32> to vector<1x64xf32>
    %1013 = vector.extract_strided_slice %871 {offsets = [5, 0], sizes = [1, 64], strides = [1, 1]} : vector<32x64xf32> to vector<1x64xf32>
    %1014 = arith.addf %1012, %1013 : vector<1x64xf32>
    %1015 = vector.extract_strided_slice %812 {offsets = [5, 0], sizes = [1, 64], strides = [1, 1]} : vector<32x64xf32> to vector<1x64xf32>
    %1016 = arith.mulf %1014, %1015 : vector<1x64xf32>
    %1017 = vector.broadcast %991 : vector<16x1xf32> to vector<16x64xf32>
    %1018 = arith.mulf %998, %1017 : vector<16x64xf32>
    %cst_109 = arith.constant dense<0.000000e+00> : vector<64xf32>
    %1019 = vector.multi_reduction <add>, %1018, %cst_109 [0] : vector<16x64xf32> to vector<64xf32>
    %1020 = vector.shape_cast %1019 : vector<64xf32> to vector<1x64xf32>
    %1021 = vector.extract_strided_slice %871 {offsets = [6, 0], sizes = [1, 64], strides = [1, 1]} : vector<32x64xf32> to vector<1x64xf32>
    %1022 = arith.addf %1020, %1021 : vector<1x64xf32>
    %1023 = vector.extract_strided_slice %812 {offsets = [6, 0], sizes = [1, 64], strides = [1, 1]} : vector<32x64xf32> to vector<1x64xf32>
    %1024 = arith.mulf %1022, %1023 : vector<1x64xf32>
    %1025 = vector.broadcast %992 : vector<16x1xf32> to vector<16x64xf32>
    %1026 = arith.mulf %1000, %1025 : vector<16x64xf32>
    %cst_110 = arith.constant dense<0.000000e+00> : vector<64xf32>
    %1027 = vector.multi_reduction <add>, %1026, %cst_110 [0] : vector<16x64xf32> to vector<64xf32>
    %1028 = vector.shape_cast %1027 : vector<64xf32> to vector<1x64xf32>
    %1029 = vector.extract_strided_slice %871 {offsets = [7, 0], sizes = [1, 64], strides = [1, 1]} : vector<32x64xf32> to vector<1x64xf32>
    %1030 = arith.addf %1028, %1029 : vector<1x64xf32>
    %1031 = vector.extract_strided_slice %812 {offsets = [7, 0], sizes = [1, 64], strides = [1, 1]} : vector<32x64xf32> to vector<1x64xf32>
    %1032 = arith.mulf %1030, %1031 : vector<1x64xf32>
    %1033 = vector.extract_strided_slice %864 {offsets = [8, 0], sizes = [1, 64], strides = [1, 1]} : vector<32x64xf32> to vector<1x64xf32>
    %1034 = vector.broadcast %1033 : vector<1x64xf32> to vector<16x64xf32>
    %1035 = arith.mulf %1034, %777 : vector<16x64xf32>
    %1036 = math.exp %1035 : vector<16x64xf32>
    %1037 = vector.extract_strided_slice %864 {offsets = [9, 0], sizes = [1, 64], strides = [1, 1]} : vector<32x64xf32> to vector<1x64xf32>
    %1038 = vector.broadcast %1037 : vector<1x64xf32> to vector<16x64xf32>
    %1039 = arith.mulf %1038, %777 : vector<16x64xf32>
    %1040 = math.exp %1039 : vector<16x64xf32>
    %1041 = vector.extract_strided_slice %864 {offsets = [10, 0], sizes = [1, 64], strides = [1, 1]} : vector<32x64xf32> to vector<1x64xf32>
    %1042 = vector.broadcast %1041 : vector<1x64xf32> to vector<16x64xf32>
    %1043 = arith.mulf %1042, %777 : vector<16x64xf32>
    %1044 = math.exp %1043 : vector<16x64xf32>
    %1045 = vector.extract_strided_slice %864 {offsets = [11, 0], sizes = [1, 64], strides = [1, 1]} : vector<32x64xf32> to vector<1x64xf32>
    %1046 = vector.broadcast %1045 : vector<1x64xf32> to vector<16x64xf32>
    %1047 = arith.mulf %1046, %777 : vector<16x64xf32>
    %1048 = math.exp %1047 : vector<16x64xf32>
    %1049 = vector.extract_strided_slice %868 {offsets = [0, 8], sizes = [16, 1], strides = [1, 1]} : vector<32x32xf32> to vector<16x1xf32>
    %1050 = vector.extract_strided_slice %869 {offsets = [8, 0], sizes = [1, 64], strides = [1, 1]} : vector<32x64xf32> to vector<1x64xf32>
    %1051 = vector.broadcast %1049 : vector<16x1xf32> to vector<16x64xf32>
    %1052 = vector.broadcast %1050 : vector<1x64xf32> to vector<16x64xf32>
    %1053 = arith.mulf %1051, %1052 : vector<16x64xf32>
    %1054 = vector.extract_strided_slice %868 {offsets = [0, 9], sizes = [16, 1], strides = [1, 1]} : vector<32x32xf32> to vector<16x1xf32>
    %1055 = vector.extract_strided_slice %869 {offsets = [9, 0], sizes = [1, 64], strides = [1, 1]} : vector<32x64xf32> to vector<1x64xf32>
    %1056 = vector.broadcast %1054 : vector<16x1xf32> to vector<16x64xf32>
    %1057 = vector.broadcast %1055 : vector<1x64xf32> to vector<16x64xf32>
    %1058 = arith.mulf %1056, %1057 : vector<16x64xf32>
    %1059 = vector.extract_strided_slice %868 {offsets = [0, 10], sizes = [16, 1], strides = [1, 1]} : vector<32x32xf32> to vector<16x1xf32>
    %1060 = vector.extract_strided_slice %869 {offsets = [10, 0], sizes = [1, 64], strides = [1, 1]} : vector<32x64xf32> to vector<1x64xf32>
    %1061 = vector.broadcast %1059 : vector<16x1xf32> to vector<16x64xf32>
    %1062 = vector.broadcast %1060 : vector<1x64xf32> to vector<16x64xf32>
    %1063 = arith.mulf %1061, %1062 : vector<16x64xf32>
    %1064 = vector.extract_strided_slice %868 {offsets = [0, 11], sizes = [16, 1], strides = [1, 1]} : vector<32x32xf32> to vector<16x1xf32>
    %1065 = vector.extract_strided_slice %869 {offsets = [11, 0], sizes = [1, 64], strides = [1, 1]} : vector<32x64xf32> to vector<1x64xf32>
    %1066 = vector.broadcast %1064 : vector<16x1xf32> to vector<16x64xf32>
    %1067 = vector.broadcast %1065 : vector<1x64xf32> to vector<16x64xf32>
    %1068 = arith.mulf %1066, %1067 : vector<16x64xf32>
    %1069 = vector.extract_strided_slice %868 {offsets = [16, 8], sizes = [16, 1], strides = [1, 1]} : vector<32x32xf32> to vector<16x1xf32>
    %1070 = vector.extract_strided_slice %868 {offsets = [16, 9], sizes = [16, 1], strides = [1, 1]} : vector<32x32xf32> to vector<16x1xf32>
    %1071 = vector.extract_strided_slice %868 {offsets = [16, 10], sizes = [16, 1], strides = [1, 1]} : vector<32x32xf32> to vector<16x1xf32>
    %1072 = vector.extract_strided_slice %868 {offsets = [16, 11], sizes = [16, 1], strides = [1, 1]} : vector<32x32xf32> to vector<16x1xf32>
    %1073 = arith.mulf %1036, %1000 : vector<16x64xf32>
    %1074 = arith.addf %1073, %1053 : vector<16x64xf32>
    %1075 = arith.mulf %1040, %1074 : vector<16x64xf32>
    %1076 = arith.addf %1075, %1058 : vector<16x64xf32>
    %1077 = arith.mulf %1044, %1076 : vector<16x64xf32>
    %1078 = arith.addf %1077, %1063 : vector<16x64xf32>
    %1079 = arith.mulf %1048, %1078 : vector<16x64xf32>
    %1080 = arith.addf %1079, %1068 : vector<16x64xf32>
    %1081 = vector.broadcast %1069 : vector<16x1xf32> to vector<16x64xf32>
    %1082 = arith.mulf %1074, %1081 : vector<16x64xf32>
    %cst_111 = arith.constant dense<0.000000e+00> : vector<64xf32>
    %1083 = vector.multi_reduction <add>, %1082, %cst_111 [0] : vector<16x64xf32> to vector<64xf32>
    %1084 = vector.shape_cast %1083 : vector<64xf32> to vector<1x64xf32>
    %1085 = vector.extract_strided_slice %871 {offsets = [8, 0], sizes = [1, 64], strides = [1, 1]} : vector<32x64xf32> to vector<1x64xf32>
    %1086 = arith.addf %1084, %1085 : vector<1x64xf32>
    %1087 = vector.extract_strided_slice %812 {offsets = [8, 0], sizes = [1, 64], strides = [1, 1]} : vector<32x64xf32> to vector<1x64xf32>
    %1088 = arith.mulf %1086, %1087 : vector<1x64xf32>
    %1089 = vector.broadcast %1070 : vector<16x1xf32> to vector<16x64xf32>
    %1090 = arith.mulf %1076, %1089 : vector<16x64xf32>
    %cst_112 = arith.constant dense<0.000000e+00> : vector<64xf32>
    %1091 = vector.multi_reduction <add>, %1090, %cst_112 [0] : vector<16x64xf32> to vector<64xf32>
    %1092 = vector.shape_cast %1091 : vector<64xf32> to vector<1x64xf32>
    %1093 = vector.extract_strided_slice %871 {offsets = [9, 0], sizes = [1, 64], strides = [1, 1]} : vector<32x64xf32> to vector<1x64xf32>
    %1094 = arith.addf %1092, %1093 : vector<1x64xf32>
    %1095 = vector.extract_strided_slice %812 {offsets = [9, 0], sizes = [1, 64], strides = [1, 1]} : vector<32x64xf32> to vector<1x64xf32>
    %1096 = arith.mulf %1094, %1095 : vector<1x64xf32>
    %1097 = vector.broadcast %1071 : vector<16x1xf32> to vector<16x64xf32>
    %1098 = arith.mulf %1078, %1097 : vector<16x64xf32>
    %cst_113 = arith.constant dense<0.000000e+00> : vector<64xf32>
    %1099 = vector.multi_reduction <add>, %1098, %cst_113 [0] : vector<16x64xf32> to vector<64xf32>
    %1100 = vector.shape_cast %1099 : vector<64xf32> to vector<1x64xf32>
    %1101 = vector.extract_strided_slice %871 {offsets = [10, 0], sizes = [1, 64], strides = [1, 1]} : vector<32x64xf32> to vector<1x64xf32>
    %1102 = arith.addf %1100, %1101 : vector<1x64xf32>
    %1103 = vector.extract_strided_slice %812 {offsets = [10, 0], sizes = [1, 64], strides = [1, 1]} : vector<32x64xf32> to vector<1x64xf32>
    %1104 = arith.mulf %1102, %1103 : vector<1x64xf32>
    %1105 = vector.broadcast %1072 : vector<16x1xf32> to vector<16x64xf32>
    %1106 = arith.mulf %1080, %1105 : vector<16x64xf32>
    %cst_114 = arith.constant dense<0.000000e+00> : vector<64xf32>
    %1107 = vector.multi_reduction <add>, %1106, %cst_114 [0] : vector<16x64xf32> to vector<64xf32>
    %1108 = vector.shape_cast %1107 : vector<64xf32> to vector<1x64xf32>
    %1109 = vector.extract_strided_slice %871 {offsets = [11, 0], sizes = [1, 64], strides = [1, 1]} : vector<32x64xf32> to vector<1x64xf32>
    %1110 = arith.addf %1108, %1109 : vector<1x64xf32>
    %1111 = vector.extract_strided_slice %812 {offsets = [11, 0], sizes = [1, 64], strides = [1, 1]} : vector<32x64xf32> to vector<1x64xf32>
    %1112 = arith.mulf %1110, %1111 : vector<1x64xf32>
    %1113 = vector.extract_strided_slice %864 {offsets = [12, 0], sizes = [1, 64], strides = [1, 1]} : vector<32x64xf32> to vector<1x64xf32>
    %1114 = vector.broadcast %1113 : vector<1x64xf32> to vector<16x64xf32>
    %1115 = arith.mulf %1114, %777 : vector<16x64xf32>
    %1116 = math.exp %1115 : vector<16x64xf32>
    %1117 = vector.extract_strided_slice %864 {offsets = [13, 0], sizes = [1, 64], strides = [1, 1]} : vector<32x64xf32> to vector<1x64xf32>
    %1118 = vector.broadcast %1117 : vector<1x64xf32> to vector<16x64xf32>
    %1119 = arith.mulf %1118, %777 : vector<16x64xf32>
    %1120 = math.exp %1119 : vector<16x64xf32>
    %1121 = vector.extract_strided_slice %864 {offsets = [14, 0], sizes = [1, 64], strides = [1, 1]} : vector<32x64xf32> to vector<1x64xf32>
    %1122 = vector.broadcast %1121 : vector<1x64xf32> to vector<16x64xf32>
    %1123 = arith.mulf %1122, %777 : vector<16x64xf32>
    %1124 = math.exp %1123 : vector<16x64xf32>
    %1125 = vector.extract_strided_slice %864 {offsets = [15, 0], sizes = [1, 64], strides = [1, 1]} : vector<32x64xf32> to vector<1x64xf32>
    %1126 = vector.broadcast %1125 : vector<1x64xf32> to vector<16x64xf32>
    %1127 = arith.mulf %1126, %777 : vector<16x64xf32>
    %1128 = math.exp %1127 : vector<16x64xf32>
    %1129 = vector.extract_strided_slice %868 {offsets = [0, 12], sizes = [16, 1], strides = [1, 1]} : vector<32x32xf32> to vector<16x1xf32>
    %1130 = vector.extract_strided_slice %869 {offsets = [12, 0], sizes = [1, 64], strides = [1, 1]} : vector<32x64xf32> to vector<1x64xf32>
    %1131 = vector.broadcast %1129 : vector<16x1xf32> to vector<16x64xf32>
    %1132 = vector.broadcast %1130 : vector<1x64xf32> to vector<16x64xf32>
    %1133 = arith.mulf %1131, %1132 : vector<16x64xf32>
    %1134 = vector.extract_strided_slice %868 {offsets = [0, 13], sizes = [16, 1], strides = [1, 1]} : vector<32x32xf32> to vector<16x1xf32>
    %1135 = vector.extract_strided_slice %869 {offsets = [13, 0], sizes = [1, 64], strides = [1, 1]} : vector<32x64xf32> to vector<1x64xf32>
    %1136 = vector.broadcast %1134 : vector<16x1xf32> to vector<16x64xf32>
    %1137 = vector.broadcast %1135 : vector<1x64xf32> to vector<16x64xf32>
    %1138 = arith.mulf %1136, %1137 : vector<16x64xf32>
    %1139 = vector.extract_strided_slice %868 {offsets = [0, 14], sizes = [16, 1], strides = [1, 1]} : vector<32x32xf32> to vector<16x1xf32>
    %1140 = vector.extract_strided_slice %869 {offsets = [14, 0], sizes = [1, 64], strides = [1, 1]} : vector<32x64xf32> to vector<1x64xf32>
    %1141 = vector.broadcast %1139 : vector<16x1xf32> to vector<16x64xf32>
    %1142 = vector.broadcast %1140 : vector<1x64xf32> to vector<16x64xf32>
    %1143 = arith.mulf %1141, %1142 : vector<16x64xf32>
    %1144 = vector.extract_strided_slice %868 {offsets = [0, 15], sizes = [16, 1], strides = [1, 1]} : vector<32x32xf32> to vector<16x1xf32>
    %1145 = vector.extract_strided_slice %869 {offsets = [15, 0], sizes = [1, 64], strides = [1, 1]} : vector<32x64xf32> to vector<1x64xf32>
    %1146 = vector.broadcast %1144 : vector<16x1xf32> to vector<16x64xf32>
    %1147 = vector.broadcast %1145 : vector<1x64xf32> to vector<16x64xf32>
    %1148 = arith.mulf %1146, %1147 : vector<16x64xf32>
    %1149 = vector.extract_strided_slice %868 {offsets = [16, 12], sizes = [16, 1], strides = [1, 1]} : vector<32x32xf32> to vector<16x1xf32>
    %1150 = vector.extract_strided_slice %868 {offsets = [16, 13], sizes = [16, 1], strides = [1, 1]} : vector<32x32xf32> to vector<16x1xf32>
    %1151 = vector.extract_strided_slice %868 {offsets = [16, 14], sizes = [16, 1], strides = [1, 1]} : vector<32x32xf32> to vector<16x1xf32>
    %1152 = vector.extract_strided_slice %868 {offsets = [16, 15], sizes = [16, 1], strides = [1, 1]} : vector<32x32xf32> to vector<16x1xf32>
    %1153 = arith.mulf %1116, %1080 : vector<16x64xf32>
    %1154 = arith.addf %1153, %1133 : vector<16x64xf32>
    %1155 = arith.mulf %1120, %1154 : vector<16x64xf32>
    %1156 = arith.addf %1155, %1138 : vector<16x64xf32>
    %1157 = arith.mulf %1124, %1156 : vector<16x64xf32>
    %1158 = arith.addf %1157, %1143 : vector<16x64xf32>
    %1159 = arith.mulf %1128, %1158 : vector<16x64xf32>
    %1160 = arith.addf %1159, %1148 : vector<16x64xf32>
    %1161 = vector.broadcast %1149 : vector<16x1xf32> to vector<16x64xf32>
    %1162 = arith.mulf %1154, %1161 : vector<16x64xf32>
    %cst_115 = arith.constant dense<0.000000e+00> : vector<64xf32>
    %1163 = vector.multi_reduction <add>, %1162, %cst_115 [0] : vector<16x64xf32> to vector<64xf32>
    %1164 = vector.shape_cast %1163 : vector<64xf32> to vector<1x64xf32>
    %1165 = vector.extract_strided_slice %871 {offsets = [12, 0], sizes = [1, 64], strides = [1, 1]} : vector<32x64xf32> to vector<1x64xf32>
    %1166 = arith.addf %1164, %1165 : vector<1x64xf32>
    %1167 = vector.extract_strided_slice %812 {offsets = [12, 0], sizes = [1, 64], strides = [1, 1]} : vector<32x64xf32> to vector<1x64xf32>
    %1168 = arith.mulf %1166, %1167 : vector<1x64xf32>
    %1169 = vector.broadcast %1150 : vector<16x1xf32> to vector<16x64xf32>
    %1170 = arith.mulf %1156, %1169 : vector<16x64xf32>
    %cst_116 = arith.constant dense<0.000000e+00> : vector<64xf32>
    %1171 = vector.multi_reduction <add>, %1170, %cst_116 [0] : vector<16x64xf32> to vector<64xf32>
    %1172 = vector.shape_cast %1171 : vector<64xf32> to vector<1x64xf32>
    %1173 = vector.extract_strided_slice %871 {offsets = [13, 0], sizes = [1, 64], strides = [1, 1]} : vector<32x64xf32> to vector<1x64xf32>
    %1174 = arith.addf %1172, %1173 : vector<1x64xf32>
    %1175 = vector.extract_strided_slice %812 {offsets = [13, 0], sizes = [1, 64], strides = [1, 1]} : vector<32x64xf32> to vector<1x64xf32>
    %1176 = arith.mulf %1174, %1175 : vector<1x64xf32>
    %1177 = vector.broadcast %1151 : vector<16x1xf32> to vector<16x64xf32>
    %1178 = arith.mulf %1158, %1177 : vector<16x64xf32>
    %cst_117 = arith.constant dense<0.000000e+00> : vector<64xf32>
    %1179 = vector.multi_reduction <add>, %1178, %cst_117 [0] : vector<16x64xf32> to vector<64xf32>
    %1180 = vector.shape_cast %1179 : vector<64xf32> to vector<1x64xf32>
    %1181 = vector.extract_strided_slice %871 {offsets = [14, 0], sizes = [1, 64], strides = [1, 1]} : vector<32x64xf32> to vector<1x64xf32>
    %1182 = arith.addf %1180, %1181 : vector<1x64xf32>
    %1183 = vector.extract_strided_slice %812 {offsets = [14, 0], sizes = [1, 64], strides = [1, 1]} : vector<32x64xf32> to vector<1x64xf32>
    %1184 = arith.mulf %1182, %1183 : vector<1x64xf32>
    %1185 = vector.broadcast %1152 : vector<16x1xf32> to vector<16x64xf32>
    %1186 = arith.mulf %1160, %1185 : vector<16x64xf32>
    %cst_118 = arith.constant dense<0.000000e+00> : vector<64xf32>
    %1187 = vector.multi_reduction <add>, %1186, %cst_118 [0] : vector<16x64xf32> to vector<64xf32>
    %1188 = vector.shape_cast %1187 : vector<64xf32> to vector<1x64xf32>
    %1189 = vector.extract_strided_slice %871 {offsets = [15, 0], sizes = [1, 64], strides = [1, 1]} : vector<32x64xf32> to vector<1x64xf32>
    %1190 = arith.addf %1188, %1189 : vector<1x64xf32>
    %1191 = vector.extract_strided_slice %812 {offsets = [15, 0], sizes = [1, 64], strides = [1, 1]} : vector<32x64xf32> to vector<1x64xf32>
    %1192 = arith.mulf %1190, %1191 : vector<1x64xf32>
    %cst_119 = arith.constant 0.000000e+00 : f32
    %1193 = vector.broadcast %cst_119 : f32 to vector<16x64xf32>
    %1194 = vector.extract_strided_slice %864 {offsets = [16, 0], sizes = [1, 64], strides = [1, 1]} : vector<32x64xf32> to vector<1x64xf32>
    %1195 = vector.broadcast %1194 : vector<1x64xf32> to vector<16x64xf32>
    %1196 = arith.mulf %1195, %777 : vector<16x64xf32>
    %1197 = math.exp %1196 : vector<16x64xf32>
    %1198 = vector.extract_strided_slice %864 {offsets = [17, 0], sizes = [1, 64], strides = [1, 1]} : vector<32x64xf32> to vector<1x64xf32>
    %1199 = vector.broadcast %1198 : vector<1x64xf32> to vector<16x64xf32>
    %1200 = arith.mulf %1199, %777 : vector<16x64xf32>
    %1201 = math.exp %1200 : vector<16x64xf32>
    %1202 = vector.extract_strided_slice %864 {offsets = [18, 0], sizes = [1, 64], strides = [1, 1]} : vector<32x64xf32> to vector<1x64xf32>
    %1203 = vector.broadcast %1202 : vector<1x64xf32> to vector<16x64xf32>
    %1204 = arith.mulf %1203, %777 : vector<16x64xf32>
    %1205 = math.exp %1204 : vector<16x64xf32>
    %1206 = vector.extract_strided_slice %864 {offsets = [19, 0], sizes = [1, 64], strides = [1, 1]} : vector<32x64xf32> to vector<1x64xf32>
    %1207 = vector.broadcast %1206 : vector<1x64xf32> to vector<16x64xf32>
    %1208 = arith.mulf %1207, %777 : vector<16x64xf32>
    %1209 = math.exp %1208 : vector<16x64xf32>
    %1210 = vector.extract_strided_slice %868 {offsets = [0, 16], sizes = [16, 1], strides = [1, 1]} : vector<32x32xf32> to vector<16x1xf32>
    %1211 = vector.extract_strided_slice %869 {offsets = [16, 0], sizes = [1, 64], strides = [1, 1]} : vector<32x64xf32> to vector<1x64xf32>
    %1212 = vector.broadcast %1210 : vector<16x1xf32> to vector<16x64xf32>
    %1213 = vector.broadcast %1211 : vector<1x64xf32> to vector<16x64xf32>
    %1214 = arith.mulf %1212, %1213 : vector<16x64xf32>
    %1215 = vector.extract_strided_slice %868 {offsets = [0, 17], sizes = [16, 1], strides = [1, 1]} : vector<32x32xf32> to vector<16x1xf32>
    %1216 = vector.extract_strided_slice %869 {offsets = [17, 0], sizes = [1, 64], strides = [1, 1]} : vector<32x64xf32> to vector<1x64xf32>
    %1217 = vector.broadcast %1215 : vector<16x1xf32> to vector<16x64xf32>
    %1218 = vector.broadcast %1216 : vector<1x64xf32> to vector<16x64xf32>
    %1219 = arith.mulf %1217, %1218 : vector<16x64xf32>
    %1220 = vector.extract_strided_slice %868 {offsets = [0, 18], sizes = [16, 1], strides = [1, 1]} : vector<32x32xf32> to vector<16x1xf32>
    %1221 = vector.extract_strided_slice %869 {offsets = [18, 0], sizes = [1, 64], strides = [1, 1]} : vector<32x64xf32> to vector<1x64xf32>
    %1222 = vector.broadcast %1220 : vector<16x1xf32> to vector<16x64xf32>
    %1223 = vector.broadcast %1221 : vector<1x64xf32> to vector<16x64xf32>
    %1224 = arith.mulf %1222, %1223 : vector<16x64xf32>
    %1225 = vector.extract_strided_slice %868 {offsets = [0, 19], sizes = [16, 1], strides = [1, 1]} : vector<32x32xf32> to vector<16x1xf32>
    %1226 = vector.extract_strided_slice %869 {offsets = [19, 0], sizes = [1, 64], strides = [1, 1]} : vector<32x64xf32> to vector<1x64xf32>
    %1227 = vector.broadcast %1225 : vector<16x1xf32> to vector<16x64xf32>
    %1228 = vector.broadcast %1226 : vector<1x64xf32> to vector<16x64xf32>
    %1229 = arith.mulf %1227, %1228 : vector<16x64xf32>
    %1230 = vector.extract_strided_slice %868 {offsets = [16, 16], sizes = [16, 1], strides = [1, 1]} : vector<32x32xf32> to vector<16x1xf32>
    %1231 = vector.extract_strided_slice %868 {offsets = [16, 17], sizes = [16, 1], strides = [1, 1]} : vector<32x32xf32> to vector<16x1xf32>
    %1232 = vector.extract_strided_slice %868 {offsets = [16, 18], sizes = [16, 1], strides = [1, 1]} : vector<32x32xf32> to vector<16x1xf32>
    %1233 = vector.extract_strided_slice %868 {offsets = [16, 19], sizes = [16, 1], strides = [1, 1]} : vector<32x32xf32> to vector<16x1xf32>
    %1234 = arith.mulf %1197, %1193 : vector<16x64xf32>
    %1235 = arith.addf %1234, %1214 : vector<16x64xf32>
    %1236 = arith.mulf %1201, %1235 : vector<16x64xf32>
    %1237 = arith.addf %1236, %1219 : vector<16x64xf32>
    %1238 = arith.mulf %1205, %1237 : vector<16x64xf32>
    %1239 = arith.addf %1238, %1224 : vector<16x64xf32>
    %1240 = arith.mulf %1209, %1239 : vector<16x64xf32>
    %1241 = arith.addf %1240, %1229 : vector<16x64xf32>
    %1242 = vector.broadcast %1230 : vector<16x1xf32> to vector<16x64xf32>
    %1243 = arith.mulf %1235, %1242 : vector<16x64xf32>
    %cst_120 = arith.constant dense<0.000000e+00> : vector<64xf32>
    %1244 = vector.multi_reduction <add>, %1243, %cst_120 [0] : vector<16x64xf32> to vector<64xf32>
    %1245 = vector.shape_cast %1244 : vector<64xf32> to vector<1x64xf32>
    %1246 = vector.extract_strided_slice %871 {offsets = [16, 0], sizes = [1, 64], strides = [1, 1]} : vector<32x64xf32> to vector<1x64xf32>
    %1247 = arith.addf %1245, %1246 : vector<1x64xf32>
    %1248 = vector.extract_strided_slice %812 {offsets = [16, 0], sizes = [1, 64], strides = [1, 1]} : vector<32x64xf32> to vector<1x64xf32>
    %1249 = arith.mulf %1247, %1248 : vector<1x64xf32>
    %1250 = vector.broadcast %1231 : vector<16x1xf32> to vector<16x64xf32>
    %1251 = arith.mulf %1237, %1250 : vector<16x64xf32>
    %cst_121 = arith.constant dense<0.000000e+00> : vector<64xf32>
    %1252 = vector.multi_reduction <add>, %1251, %cst_121 [0] : vector<16x64xf32> to vector<64xf32>
    %1253 = vector.shape_cast %1252 : vector<64xf32> to vector<1x64xf32>
    %1254 = vector.extract_strided_slice %871 {offsets = [17, 0], sizes = [1, 64], strides = [1, 1]} : vector<32x64xf32> to vector<1x64xf32>
    %1255 = arith.addf %1253, %1254 : vector<1x64xf32>
    %1256 = vector.extract_strided_slice %812 {offsets = [17, 0], sizes = [1, 64], strides = [1, 1]} : vector<32x64xf32> to vector<1x64xf32>
    %1257 = arith.mulf %1255, %1256 : vector<1x64xf32>
    %1258 = vector.broadcast %1232 : vector<16x1xf32> to vector<16x64xf32>
    %1259 = arith.mulf %1239, %1258 : vector<16x64xf32>
    %cst_122 = arith.constant dense<0.000000e+00> : vector<64xf32>
    %1260 = vector.multi_reduction <add>, %1259, %cst_122 [0] : vector<16x64xf32> to vector<64xf32>
    %1261 = vector.shape_cast %1260 : vector<64xf32> to vector<1x64xf32>
    %1262 = vector.extract_strided_slice %871 {offsets = [18, 0], sizes = [1, 64], strides = [1, 1]} : vector<32x64xf32> to vector<1x64xf32>
    %1263 = arith.addf %1261, %1262 : vector<1x64xf32>
    %1264 = vector.extract_strided_slice %812 {offsets = [18, 0], sizes = [1, 64], strides = [1, 1]} : vector<32x64xf32> to vector<1x64xf32>
    %1265 = arith.mulf %1263, %1264 : vector<1x64xf32>
    %1266 = vector.broadcast %1233 : vector<16x1xf32> to vector<16x64xf32>
    %1267 = arith.mulf %1241, %1266 : vector<16x64xf32>
    %cst_123 = arith.constant dense<0.000000e+00> : vector<64xf32>
    %1268 = vector.multi_reduction <add>, %1267, %cst_123 [0] : vector<16x64xf32> to vector<64xf32>
    %1269 = vector.shape_cast %1268 : vector<64xf32> to vector<1x64xf32>
    %1270 = vector.extract_strided_slice %871 {offsets = [19, 0], sizes = [1, 64], strides = [1, 1]} : vector<32x64xf32> to vector<1x64xf32>
    %1271 = arith.addf %1269, %1270 : vector<1x64xf32>
    %1272 = vector.extract_strided_slice %812 {offsets = [19, 0], sizes = [1, 64], strides = [1, 1]} : vector<32x64xf32> to vector<1x64xf32>
    %1273 = arith.mulf %1271, %1272 : vector<1x64xf32>
    %1274 = vector.extract_strided_slice %864 {offsets = [20, 0], sizes = [1, 64], strides = [1, 1]} : vector<32x64xf32> to vector<1x64xf32>
    %1275 = vector.broadcast %1274 : vector<1x64xf32> to vector<16x64xf32>
    %1276 = arith.mulf %1275, %777 : vector<16x64xf32>
    %1277 = math.exp %1276 : vector<16x64xf32>
    %1278 = vector.extract_strided_slice %864 {offsets = [21, 0], sizes = [1, 64], strides = [1, 1]} : vector<32x64xf32> to vector<1x64xf32>
    %1279 = vector.broadcast %1278 : vector<1x64xf32> to vector<16x64xf32>
    %1280 = arith.mulf %1279, %777 : vector<16x64xf32>
    %1281 = math.exp %1280 : vector<16x64xf32>
    %1282 = vector.extract_strided_slice %864 {offsets = [22, 0], sizes = [1, 64], strides = [1, 1]} : vector<32x64xf32> to vector<1x64xf32>
    %1283 = vector.broadcast %1282 : vector<1x64xf32> to vector<16x64xf32>
    %1284 = arith.mulf %1283, %777 : vector<16x64xf32>
    %1285 = math.exp %1284 : vector<16x64xf32>
    %1286 = vector.extract_strided_slice %864 {offsets = [23, 0], sizes = [1, 64], strides = [1, 1]} : vector<32x64xf32> to vector<1x64xf32>
    %1287 = vector.broadcast %1286 : vector<1x64xf32> to vector<16x64xf32>
    %1288 = arith.mulf %1287, %777 : vector<16x64xf32>
    %1289 = math.exp %1288 : vector<16x64xf32>
    %1290 = vector.extract_strided_slice %868 {offsets = [0, 20], sizes = [16, 1], strides = [1, 1]} : vector<32x32xf32> to vector<16x1xf32>
    %1291 = vector.extract_strided_slice %869 {offsets = [20, 0], sizes = [1, 64], strides = [1, 1]} : vector<32x64xf32> to vector<1x64xf32>
    %1292 = vector.broadcast %1290 : vector<16x1xf32> to vector<16x64xf32>
    %1293 = vector.broadcast %1291 : vector<1x64xf32> to vector<16x64xf32>
    %1294 = arith.mulf %1292, %1293 : vector<16x64xf32>
    %1295 = vector.extract_strided_slice %868 {offsets = [0, 21], sizes = [16, 1], strides = [1, 1]} : vector<32x32xf32> to vector<16x1xf32>
    %1296 = vector.extract_strided_slice %869 {offsets = [21, 0], sizes = [1, 64], strides = [1, 1]} : vector<32x64xf32> to vector<1x64xf32>
    %1297 = vector.broadcast %1295 : vector<16x1xf32> to vector<16x64xf32>
    %1298 = vector.broadcast %1296 : vector<1x64xf32> to vector<16x64xf32>
    %1299 = arith.mulf %1297, %1298 : vector<16x64xf32>
    %1300 = vector.extract_strided_slice %868 {offsets = [0, 22], sizes = [16, 1], strides = [1, 1]} : vector<32x32xf32> to vector<16x1xf32>
    %1301 = vector.extract_strided_slice %869 {offsets = [22, 0], sizes = [1, 64], strides = [1, 1]} : vector<32x64xf32> to vector<1x64xf32>
    %1302 = vector.broadcast %1300 : vector<16x1xf32> to vector<16x64xf32>
    %1303 = vector.broadcast %1301 : vector<1x64xf32> to vector<16x64xf32>
    %1304 = arith.mulf %1302, %1303 : vector<16x64xf32>
    %1305 = vector.extract_strided_slice %868 {offsets = [0, 23], sizes = [16, 1], strides = [1, 1]} : vector<32x32xf32> to vector<16x1xf32>
    %1306 = vector.extract_strided_slice %869 {offsets = [23, 0], sizes = [1, 64], strides = [1, 1]} : vector<32x64xf32> to vector<1x64xf32>
    %1307 = vector.broadcast %1305 : vector<16x1xf32> to vector<16x64xf32>
    %1308 = vector.broadcast %1306 : vector<1x64xf32> to vector<16x64xf32>
    %1309 = arith.mulf %1307, %1308 : vector<16x64xf32>
    %1310 = vector.extract_strided_slice %868 {offsets = [16, 20], sizes = [16, 1], strides = [1, 1]} : vector<32x32xf32> to vector<16x1xf32>
    %1311 = vector.extract_strided_slice %868 {offsets = [16, 21], sizes = [16, 1], strides = [1, 1]} : vector<32x32xf32> to vector<16x1xf32>
    %1312 = vector.extract_strided_slice %868 {offsets = [16, 22], sizes = [16, 1], strides = [1, 1]} : vector<32x32xf32> to vector<16x1xf32>
    %1313 = vector.extract_strided_slice %868 {offsets = [16, 23], sizes = [16, 1], strides = [1, 1]} : vector<32x32xf32> to vector<16x1xf32>
    %1314 = arith.mulf %1277, %1241 : vector<16x64xf32>
    %1315 = arith.addf %1314, %1294 : vector<16x64xf32>
    %1316 = arith.mulf %1281, %1315 : vector<16x64xf32>
    %1317 = arith.addf %1316, %1299 : vector<16x64xf32>
    %1318 = arith.mulf %1285, %1317 : vector<16x64xf32>
    %1319 = arith.addf %1318, %1304 : vector<16x64xf32>
    %1320 = arith.mulf %1289, %1319 : vector<16x64xf32>
    %1321 = arith.addf %1320, %1309 : vector<16x64xf32>
    %1322 = vector.broadcast %1310 : vector<16x1xf32> to vector<16x64xf32>
    %1323 = arith.mulf %1315, %1322 : vector<16x64xf32>
    %cst_124 = arith.constant dense<0.000000e+00> : vector<64xf32>
    %1324 = vector.multi_reduction <add>, %1323, %cst_124 [0] : vector<16x64xf32> to vector<64xf32>
    %1325 = vector.shape_cast %1324 : vector<64xf32> to vector<1x64xf32>
    %1326 = vector.extract_strided_slice %871 {offsets = [20, 0], sizes = [1, 64], strides = [1, 1]} : vector<32x64xf32> to vector<1x64xf32>
    %1327 = arith.addf %1325, %1326 : vector<1x64xf32>
    %1328 = vector.extract_strided_slice %812 {offsets = [20, 0], sizes = [1, 64], strides = [1, 1]} : vector<32x64xf32> to vector<1x64xf32>
    %1329 = arith.mulf %1327, %1328 : vector<1x64xf32>
    %1330 = vector.broadcast %1311 : vector<16x1xf32> to vector<16x64xf32>
    %1331 = arith.mulf %1317, %1330 : vector<16x64xf32>
    %cst_125 = arith.constant dense<0.000000e+00> : vector<64xf32>
    %1332 = vector.multi_reduction <add>, %1331, %cst_125 [0] : vector<16x64xf32> to vector<64xf32>
    %1333 = vector.shape_cast %1332 : vector<64xf32> to vector<1x64xf32>
    %1334 = vector.extract_strided_slice %871 {offsets = [21, 0], sizes = [1, 64], strides = [1, 1]} : vector<32x64xf32> to vector<1x64xf32>
    %1335 = arith.addf %1333, %1334 : vector<1x64xf32>
    %1336 = vector.extract_strided_slice %812 {offsets = [21, 0], sizes = [1, 64], strides = [1, 1]} : vector<32x64xf32> to vector<1x64xf32>
    %1337 = arith.mulf %1335, %1336 : vector<1x64xf32>
    %1338 = vector.broadcast %1312 : vector<16x1xf32> to vector<16x64xf32>
    %1339 = arith.mulf %1319, %1338 : vector<16x64xf32>
    %cst_126 = arith.constant dense<0.000000e+00> : vector<64xf32>
    %1340 = vector.multi_reduction <add>, %1339, %cst_126 [0] : vector<16x64xf32> to vector<64xf32>
    %1341 = vector.shape_cast %1340 : vector<64xf32> to vector<1x64xf32>
    %1342 = vector.extract_strided_slice %871 {offsets = [22, 0], sizes = [1, 64], strides = [1, 1]} : vector<32x64xf32> to vector<1x64xf32>
    %1343 = arith.addf %1341, %1342 : vector<1x64xf32>
    %1344 = vector.extract_strided_slice %812 {offsets = [22, 0], sizes = [1, 64], strides = [1, 1]} : vector<32x64xf32> to vector<1x64xf32>
    %1345 = arith.mulf %1343, %1344 : vector<1x64xf32>
    %1346 = vector.broadcast %1313 : vector<16x1xf32> to vector<16x64xf32>
    %1347 = arith.mulf %1321, %1346 : vector<16x64xf32>
    %cst_127 = arith.constant dense<0.000000e+00> : vector<64xf32>
    %1348 = vector.multi_reduction <add>, %1347, %cst_127 [0] : vector<16x64xf32> to vector<64xf32>
    %1349 = vector.shape_cast %1348 : vector<64xf32> to vector<1x64xf32>
    %1350 = vector.extract_strided_slice %871 {offsets = [23, 0], sizes = [1, 64], strides = [1, 1]} : vector<32x64xf32> to vector<1x64xf32>
    %1351 = arith.addf %1349, %1350 : vector<1x64xf32>
    %1352 = vector.extract_strided_slice %812 {offsets = [23, 0], sizes = [1, 64], strides = [1, 1]} : vector<32x64xf32> to vector<1x64xf32>
    %1353 = arith.mulf %1351, %1352 : vector<1x64xf32>
    %1354 = vector.extract_strided_slice %864 {offsets = [24, 0], sizes = [1, 64], strides = [1, 1]} : vector<32x64xf32> to vector<1x64xf32>
    %1355 = vector.broadcast %1354 : vector<1x64xf32> to vector<16x64xf32>
    %1356 = arith.mulf %1355, %777 : vector<16x64xf32>
    %1357 = math.exp %1356 : vector<16x64xf32>
    %1358 = vector.extract_strided_slice %864 {offsets = [25, 0], sizes = [1, 64], strides = [1, 1]} : vector<32x64xf32> to vector<1x64xf32>
    %1359 = vector.broadcast %1358 : vector<1x64xf32> to vector<16x64xf32>
    %1360 = arith.mulf %1359, %777 : vector<16x64xf32>
    %1361 = math.exp %1360 : vector<16x64xf32>
    %1362 = vector.extract_strided_slice %864 {offsets = [26, 0], sizes = [1, 64], strides = [1, 1]} : vector<32x64xf32> to vector<1x64xf32>
    %1363 = vector.broadcast %1362 : vector<1x64xf32> to vector<16x64xf32>
    %1364 = arith.mulf %1363, %777 : vector<16x64xf32>
    %1365 = math.exp %1364 : vector<16x64xf32>
    %1366 = vector.extract_strided_slice %864 {offsets = [27, 0], sizes = [1, 64], strides = [1, 1]} : vector<32x64xf32> to vector<1x64xf32>
    %1367 = vector.broadcast %1366 : vector<1x64xf32> to vector<16x64xf32>
    %1368 = arith.mulf %1367, %777 : vector<16x64xf32>
    %1369 = math.exp %1368 : vector<16x64xf32>
    %1370 = vector.extract_strided_slice %868 {offsets = [0, 24], sizes = [16, 1], strides = [1, 1]} : vector<32x32xf32> to vector<16x1xf32>
    %1371 = vector.extract_strided_slice %869 {offsets = [24, 0], sizes = [1, 64], strides = [1, 1]} : vector<32x64xf32> to vector<1x64xf32>
    %1372 = vector.broadcast %1370 : vector<16x1xf32> to vector<16x64xf32>
    %1373 = vector.broadcast %1371 : vector<1x64xf32> to vector<16x64xf32>
    %1374 = arith.mulf %1372, %1373 : vector<16x64xf32>
    %1375 = vector.extract_strided_slice %868 {offsets = [0, 25], sizes = [16, 1], strides = [1, 1]} : vector<32x32xf32> to vector<16x1xf32>
    %1376 = vector.extract_strided_slice %869 {offsets = [25, 0], sizes = [1, 64], strides = [1, 1]} : vector<32x64xf32> to vector<1x64xf32>
    %1377 = vector.broadcast %1375 : vector<16x1xf32> to vector<16x64xf32>
    %1378 = vector.broadcast %1376 : vector<1x64xf32> to vector<16x64xf32>
    %1379 = arith.mulf %1377, %1378 : vector<16x64xf32>
    %1380 = vector.extract_strided_slice %868 {offsets = [0, 26], sizes = [16, 1], strides = [1, 1]} : vector<32x32xf32> to vector<16x1xf32>
    %1381 = vector.extract_strided_slice %869 {offsets = [26, 0], sizes = [1, 64], strides = [1, 1]} : vector<32x64xf32> to vector<1x64xf32>
    %1382 = vector.broadcast %1380 : vector<16x1xf32> to vector<16x64xf32>
    %1383 = vector.broadcast %1381 : vector<1x64xf32> to vector<16x64xf32>
    %1384 = arith.mulf %1382, %1383 : vector<16x64xf32>
    %1385 = vector.extract_strided_slice %868 {offsets = [0, 27], sizes = [16, 1], strides = [1, 1]} : vector<32x32xf32> to vector<16x1xf32>
    %1386 = vector.extract_strided_slice %869 {offsets = [27, 0], sizes = [1, 64], strides = [1, 1]} : vector<32x64xf32> to vector<1x64xf32>
    %1387 = vector.broadcast %1385 : vector<16x1xf32> to vector<16x64xf32>
    %1388 = vector.broadcast %1386 : vector<1x64xf32> to vector<16x64xf32>
    %1389 = arith.mulf %1387, %1388 : vector<16x64xf32>
    %1390 = vector.extract_strided_slice %868 {offsets = [16, 24], sizes = [16, 1], strides = [1, 1]} : vector<32x32xf32> to vector<16x1xf32>
    %1391 = vector.extract_strided_slice %868 {offsets = [16, 25], sizes = [16, 1], strides = [1, 1]} : vector<32x32xf32> to vector<16x1xf32>
    %1392 = vector.extract_strided_slice %868 {offsets = [16, 26], sizes = [16, 1], strides = [1, 1]} : vector<32x32xf32> to vector<16x1xf32>
    %1393 = vector.extract_strided_slice %868 {offsets = [16, 27], sizes = [16, 1], strides = [1, 1]} : vector<32x32xf32> to vector<16x1xf32>
    %1394 = arith.mulf %1357, %1321 : vector<16x64xf32>
    %1395 = arith.addf %1394, %1374 : vector<16x64xf32>
    %1396 = arith.mulf %1361, %1395 : vector<16x64xf32>
    %1397 = arith.addf %1396, %1379 : vector<16x64xf32>
    %1398 = arith.mulf %1365, %1397 : vector<16x64xf32>
    %1399 = arith.addf %1398, %1384 : vector<16x64xf32>
    %1400 = arith.mulf %1369, %1399 : vector<16x64xf32>
    %1401 = arith.addf %1400, %1389 : vector<16x64xf32>
    %1402 = vector.broadcast %1390 : vector<16x1xf32> to vector<16x64xf32>
    %1403 = arith.mulf %1395, %1402 : vector<16x64xf32>
    %cst_128 = arith.constant dense<0.000000e+00> : vector<64xf32>
    %1404 = vector.multi_reduction <add>, %1403, %cst_128 [0] : vector<16x64xf32> to vector<64xf32>
    %1405 = vector.shape_cast %1404 : vector<64xf32> to vector<1x64xf32>
    %1406 = vector.extract_strided_slice %871 {offsets = [24, 0], sizes = [1, 64], strides = [1, 1]} : vector<32x64xf32> to vector<1x64xf32>
    %1407 = arith.addf %1405, %1406 : vector<1x64xf32>
    %1408 = vector.extract_strided_slice %812 {offsets = [24, 0], sizes = [1, 64], strides = [1, 1]} : vector<32x64xf32> to vector<1x64xf32>
    %1409 = arith.mulf %1407, %1408 : vector<1x64xf32>
    %1410 = vector.broadcast %1391 : vector<16x1xf32> to vector<16x64xf32>
    %1411 = arith.mulf %1397, %1410 : vector<16x64xf32>
    %cst_129 = arith.constant dense<0.000000e+00> : vector<64xf32>
    %1412 = vector.multi_reduction <add>, %1411, %cst_129 [0] : vector<16x64xf32> to vector<64xf32>
    %1413 = vector.shape_cast %1412 : vector<64xf32> to vector<1x64xf32>
    %1414 = vector.extract_strided_slice %871 {offsets = [25, 0], sizes = [1, 64], strides = [1, 1]} : vector<32x64xf32> to vector<1x64xf32>
    %1415 = arith.addf %1413, %1414 : vector<1x64xf32>
    %1416 = vector.extract_strided_slice %812 {offsets = [25, 0], sizes = [1, 64], strides = [1, 1]} : vector<32x64xf32> to vector<1x64xf32>
    %1417 = arith.mulf %1415, %1416 : vector<1x64xf32>
    %1418 = vector.broadcast %1392 : vector<16x1xf32> to vector<16x64xf32>
    %1419 = arith.mulf %1399, %1418 : vector<16x64xf32>
    %cst_130 = arith.constant dense<0.000000e+00> : vector<64xf32>
    %1420 = vector.multi_reduction <add>, %1419, %cst_130 [0] : vector<16x64xf32> to vector<64xf32>
    %1421 = vector.shape_cast %1420 : vector<64xf32> to vector<1x64xf32>
    %1422 = vector.extract_strided_slice %871 {offsets = [26, 0], sizes = [1, 64], strides = [1, 1]} : vector<32x64xf32> to vector<1x64xf32>
    %1423 = arith.addf %1421, %1422 : vector<1x64xf32>
    %1424 = vector.extract_strided_slice %812 {offsets = [26, 0], sizes = [1, 64], strides = [1, 1]} : vector<32x64xf32> to vector<1x64xf32>
    %1425 = arith.mulf %1423, %1424 : vector<1x64xf32>
    %1426 = vector.broadcast %1393 : vector<16x1xf32> to vector<16x64xf32>
    %1427 = arith.mulf %1401, %1426 : vector<16x64xf32>
    %cst_131 = arith.constant dense<0.000000e+00> : vector<64xf32>
    %1428 = vector.multi_reduction <add>, %1427, %cst_131 [0] : vector<16x64xf32> to vector<64xf32>
    %1429 = vector.shape_cast %1428 : vector<64xf32> to vector<1x64xf32>
    %1430 = vector.extract_strided_slice %871 {offsets = [27, 0], sizes = [1, 64], strides = [1, 1]} : vector<32x64xf32> to vector<1x64xf32>
    %1431 = arith.addf %1429, %1430 : vector<1x64xf32>
    %1432 = vector.extract_strided_slice %812 {offsets = [27, 0], sizes = [1, 64], strides = [1, 1]} : vector<32x64xf32> to vector<1x64xf32>
    %1433 = arith.mulf %1431, %1432 : vector<1x64xf32>
    %1434 = vector.extract_strided_slice %864 {offsets = [28, 0], sizes = [1, 64], strides = [1, 1]} : vector<32x64xf32> to vector<1x64xf32>
    %1435 = vector.broadcast %1434 : vector<1x64xf32> to vector<16x64xf32>
    %1436 = arith.mulf %1435, %777 : vector<16x64xf32>
    %1437 = math.exp %1436 : vector<16x64xf32>
    %1438 = vector.extract_strided_slice %864 {offsets = [29, 0], sizes = [1, 64], strides = [1, 1]} : vector<32x64xf32> to vector<1x64xf32>
    %1439 = vector.broadcast %1438 : vector<1x64xf32> to vector<16x64xf32>
    %1440 = arith.mulf %1439, %777 : vector<16x64xf32>
    %1441 = math.exp %1440 : vector<16x64xf32>
    %1442 = vector.extract_strided_slice %864 {offsets = [30, 0], sizes = [1, 64], strides = [1, 1]} : vector<32x64xf32> to vector<1x64xf32>
    %1443 = vector.broadcast %1442 : vector<1x64xf32> to vector<16x64xf32>
    %1444 = arith.mulf %1443, %777 : vector<16x64xf32>
    %1445 = math.exp %1444 : vector<16x64xf32>
    %1446 = vector.extract_strided_slice %864 {offsets = [31, 0], sizes = [1, 64], strides = [1, 1]} : vector<32x64xf32> to vector<1x64xf32>
    %1447 = vector.broadcast %1446 : vector<1x64xf32> to vector<16x64xf32>
    %1448 = arith.mulf %1447, %777 : vector<16x64xf32>
    %1449 = math.exp %1448 : vector<16x64xf32>
    %1450 = vector.extract_strided_slice %868 {offsets = [0, 28], sizes = [16, 1], strides = [1, 1]} : vector<32x32xf32> to vector<16x1xf32>
    %1451 = vector.extract_strided_slice %869 {offsets = [28, 0], sizes = [1, 64], strides = [1, 1]} : vector<32x64xf32> to vector<1x64xf32>
    %1452 = vector.broadcast %1450 : vector<16x1xf32> to vector<16x64xf32>
    %1453 = vector.broadcast %1451 : vector<1x64xf32> to vector<16x64xf32>
    %1454 = arith.mulf %1452, %1453 : vector<16x64xf32>
    %1455 = vector.extract_strided_slice %868 {offsets = [0, 29], sizes = [16, 1], strides = [1, 1]} : vector<32x32xf32> to vector<16x1xf32>
    %1456 = vector.extract_strided_slice %869 {offsets = [29, 0], sizes = [1, 64], strides = [1, 1]} : vector<32x64xf32> to vector<1x64xf32>
    %1457 = vector.broadcast %1455 : vector<16x1xf32> to vector<16x64xf32>
    %1458 = vector.broadcast %1456 : vector<1x64xf32> to vector<16x64xf32>
    %1459 = arith.mulf %1457, %1458 : vector<16x64xf32>
    %1460 = vector.extract_strided_slice %868 {offsets = [0, 30], sizes = [16, 1], strides = [1, 1]} : vector<32x32xf32> to vector<16x1xf32>
    %1461 = vector.extract_strided_slice %869 {offsets = [30, 0], sizes = [1, 64], strides = [1, 1]} : vector<32x64xf32> to vector<1x64xf32>
    %1462 = vector.broadcast %1460 : vector<16x1xf32> to vector<16x64xf32>
    %1463 = vector.broadcast %1461 : vector<1x64xf32> to vector<16x64xf32>
    %1464 = arith.mulf %1462, %1463 : vector<16x64xf32>
    %1465 = vector.extract_strided_slice %868 {offsets = [0, 31], sizes = [16, 1], strides = [1, 1]} : vector<32x32xf32> to vector<16x1xf32>
    %1466 = vector.extract_strided_slice %869 {offsets = [31, 0], sizes = [1, 64], strides = [1, 1]} : vector<32x64xf32> to vector<1x64xf32>
    %1467 = vector.broadcast %1465 : vector<16x1xf32> to vector<16x64xf32>
    %1468 = vector.broadcast %1466 : vector<1x64xf32> to vector<16x64xf32>
    %1469 = arith.mulf %1467, %1468 : vector<16x64xf32>
    %1470 = vector.extract_strided_slice %868 {offsets = [16, 28], sizes = [16, 1], strides = [1, 1]} : vector<32x32xf32> to vector<16x1xf32>
    %1471 = vector.extract_strided_slice %868 {offsets = [16, 29], sizes = [16, 1], strides = [1, 1]} : vector<32x32xf32> to vector<16x1xf32>
    %1472 = vector.extract_strided_slice %868 {offsets = [16, 30], sizes = [16, 1], strides = [1, 1]} : vector<32x32xf32> to vector<16x1xf32>
    %1473 = vector.extract_strided_slice %868 {offsets = [16, 31], sizes = [16, 1], strides = [1, 1]} : vector<32x32xf32> to vector<16x1xf32>
    %1474 = arith.mulf %1437, %1401 : vector<16x64xf32>
    %1475 = arith.addf %1474, %1454 : vector<16x64xf32>
    %1476 = arith.mulf %1441, %1475 : vector<16x64xf32>
    %1477 = arith.addf %1476, %1459 : vector<16x64xf32>
    %1478 = arith.mulf %1445, %1477 : vector<16x64xf32>
    %1479 = arith.addf %1478, %1464 : vector<16x64xf32>
    %1480 = arith.mulf %1449, %1479 : vector<16x64xf32>
    %1481 = arith.addf %1480, %1469 : vector<16x64xf32>
    %1482 = vector.broadcast %1470 : vector<16x1xf32> to vector<16x64xf32>
    %1483 = arith.mulf %1475, %1482 : vector<16x64xf32>
    %cst_132 = arith.constant dense<0.000000e+00> : vector<64xf32>
    %1484 = vector.multi_reduction <add>, %1483, %cst_132 [0] : vector<16x64xf32> to vector<64xf32>
    %1485 = vector.shape_cast %1484 : vector<64xf32> to vector<1x64xf32>
    %1486 = vector.extract_strided_slice %871 {offsets = [28, 0], sizes = [1, 64], strides = [1, 1]} : vector<32x64xf32> to vector<1x64xf32>
    %1487 = arith.addf %1485, %1486 : vector<1x64xf32>
    %1488 = vector.extract_strided_slice %812 {offsets = [28, 0], sizes = [1, 64], strides = [1, 1]} : vector<32x64xf32> to vector<1x64xf32>
    %1489 = arith.mulf %1487, %1488 : vector<1x64xf32>
    %1490 = vector.broadcast %1471 : vector<16x1xf32> to vector<16x64xf32>
    %1491 = arith.mulf %1477, %1490 : vector<16x64xf32>
    %cst_133 = arith.constant dense<0.000000e+00> : vector<64xf32>
    %1492 = vector.multi_reduction <add>, %1491, %cst_133 [0] : vector<16x64xf32> to vector<64xf32>
    %1493 = vector.shape_cast %1492 : vector<64xf32> to vector<1x64xf32>
    %1494 = vector.extract_strided_slice %871 {offsets = [29, 0], sizes = [1, 64], strides = [1, 1]} : vector<32x64xf32> to vector<1x64xf32>
    %1495 = arith.addf %1493, %1494 : vector<1x64xf32>
    %1496 = vector.extract_strided_slice %812 {offsets = [29, 0], sizes = [1, 64], strides = [1, 1]} : vector<32x64xf32> to vector<1x64xf32>
    %1497 = arith.mulf %1495, %1496 : vector<1x64xf32>
    %1498 = vector.broadcast %1472 : vector<16x1xf32> to vector<16x64xf32>
    %1499 = arith.mulf %1479, %1498 : vector<16x64xf32>
    %cst_134 = arith.constant dense<0.000000e+00> : vector<64xf32>
    %1500 = vector.multi_reduction <add>, %1499, %cst_134 [0] : vector<16x64xf32> to vector<64xf32>
    %1501 = vector.shape_cast %1500 : vector<64xf32> to vector<1x64xf32>
    %1502 = vector.extract_strided_slice %871 {offsets = [30, 0], sizes = [1, 64], strides = [1, 1]} : vector<32x64xf32> to vector<1x64xf32>
    %1503 = arith.addf %1501, %1502 : vector<1x64xf32>
    %1504 = vector.extract_strided_slice %812 {offsets = [30, 0], sizes = [1, 64], strides = [1, 1]} : vector<32x64xf32> to vector<1x64xf32>
    %1505 = arith.mulf %1503, %1504 : vector<1x64xf32>
    %1506 = vector.broadcast %1473 : vector<16x1xf32> to vector<16x64xf32>
    %1507 = arith.mulf %1481, %1506 : vector<16x64xf32>
    %cst_135 = arith.constant dense<0.000000e+00> : vector<64xf32>
    %1508 = vector.multi_reduction <add>, %1507, %cst_135 [0] : vector<16x64xf32> to vector<64xf32>
    %1509 = vector.shape_cast %1508 : vector<64xf32> to vector<1x64xf32>
    %1510 = vector.extract_strided_slice %871 {offsets = [31, 0], sizes = [1, 64], strides = [1, 1]} : vector<32x64xf32> to vector<1x64xf32>
    %1511 = arith.addf %1509, %1510 : vector<1x64xf32>
    %1512 = vector.extract_strided_slice %812 {offsets = [31, 0], sizes = [1, 64], strides = [1, 1]} : vector<32x64xf32> to vector<1x64xf32>
    %1513 = arith.mulf %1511, %1512 : vector<1x64xf32>
    %1514 = tpu.concatenate %928, %936, %944, %952, %1008, %1016, %1024, %1032, %1088, %1096, %1104, %1112, %1168, %1176, %1184, %1192 in 0 : vector<1x64xf32>, vector<1x64xf32>, vector<1x64xf32>, vector<1x64xf32>, vector<1x64xf32>, vector<1x64xf32>, vector<1x64xf32>, vector<1x64xf32>, vector<1x64xf32>, vector<1x64xf32>, vector<1x64xf32>, vector<1x64xf32>, vector<1x64xf32>, vector<1x64xf32>, vector<1x64xf32>, vector<1x64xf32> -> vector<16x64xf32>
    %1515 = tpu.concatenate %1249, %1257, %1265, %1273, %1329, %1337, %1345, %1353, %1409, %1417, %1425, %1433, %1489, %1497, %1505, %1513 in 0 : vector<1x64xf32>, vector<1x64xf32>, vector<1x64xf32>, vector<1x64xf32>, vector<1x64xf32>, vector<1x64xf32>, vector<1x64xf32>, vector<1x64xf32>, vector<1x64xf32>, vector<1x64xf32>, vector<1x64xf32>, vector<1x64xf32>, vector<1x64xf32>, vector<1x64xf32>, vector<1x64xf32>, vector<1x64xf32> -> vector<16x64xf32>
    %1516 = tpu.concatenate %1514, %1515 in 0 : vector<16x64xf32>, vector<16x64xf32> -> vector<32x64xf32>
    %c1_136 = arith.constant 1 : index
    %c0_137 = arith.constant 0 : index
    %c0_138 = arith.constant 0 : index
    %1517 = vector.load %arg7[%c1_136, %c0_137, %c0_138] : memref<2x64x32xbf16, #tpu.memory_space<vmem>>, vector<1x64x32xbf16>
    %1518 = vector.shape_cast %1517 : vector<1x64x32xbf16> to vector<64x32xbf16>
    %1519 = arith.truncf %1516 : vector<32x64xf32> to vector<32x64xbf16>
    %cst_139 = arith.constant dense<0.000000e+00> : vector<32x32xf32>
    %1520 = tpu.matmul %1519, %1518, %cst_139 {dimension_numbers = #tpu.dot_dimension_numbers<[1], [0], [0], [1], [0, 0, 1, 1], [], []>} : vector<32x64xbf16>, vector<64x32xbf16>, vector<32x32xf32> -> vector<32x32xf32>
    %1521 = arith.addf %778, %1520 : vector<32x32xf32>
    %cst_140 = arith.constant dense<0.000000e+00> : vector<32xf32>
    %1522 = vector.multi_reduction <add>, %1521, %cst_140 [1] : vector<32x32xf32> to vector<32xf32>
    %1523 = vector.shape_cast %1522 : vector<32xf32> to vector<32x1xf32>
    %cst_141 = arith.constant 3.200000e+01 : f32
    %1524 = vector.broadcast %cst_141 : f32 to vector<32x1xf32>
    %1525 = arith.divf %1523, %1524 : vector<32x1xf32>
    %1526 = vector.broadcast %1525 : vector<32x1xf32> to vector<32x32xf32>
    %1527 = arith.subf %1521, %1526 : vector<32x32xf32>
    %1528 = arith.mulf %1527, %1527 : vector<32x32xf32>
    %cst_142 = arith.constant dense<0.000000e+00> : vector<32xf32>
    %1529 = vector.multi_reduction <add>, %1528, %cst_142 [1] : vector<32x32xf32> to vector<32xf32>
    %1530 = vector.shape_cast %1529 : vector<32xf32> to vector<32x1xf32>
    %cst_143 = arith.constant 3.200000e+01 : f32
    %1531 = vector.broadcast %cst_143 : f32 to vector<32x1xf32>
    %1532 = arith.divf %1530, %1531 : vector<32x1xf32>
    %1533 = vector.broadcast %1525 : vector<32x1xf32> to vector<32x32xf32>
    %1534 = arith.subf %1521, %1533 : vector<32x32xf32>
    %cst_144 = arith.constant 9.99999974E-6 : f32
    %1535 = vector.broadcast %cst_144 : f32 to vector<32x1xf32>
    %1536 = arith.addf %1532, %1535 : vector<32x1xf32>
    %1537 = math.rsqrt %1536 : vector<32x1xf32>
    %1538 = vector.broadcast %1537 : vector<32x1xf32> to vector<32x32xf32>
    %1539 = arith.mulf %1534, %1538 : vector<32x32xf32>
    %1540 = vector.broadcast %2 : vector<1x32xf32> to vector<32x32xf32>
    %1541 = arith.mulf %1539, %1540 : vector<32x32xf32>
    %1542 = vector.broadcast %3 : vector<1x32xf32> to vector<32x32xf32>
    %1543 = arith.addf %1541, %1542 : vector<32x32xf32>
    %1544 = vector.extract_strided_slice %1543 {offsets = [15, 0], sizes = [1, 32], strides = [1, 1]} : vector<32x32xf32> to vector<1x32xf32>
    %1545 = vector.extract_strided_slice %1543 {offsets = [31, 0], sizes = [1, 32], strides = [1, 1]} : vector<32x32xf32> to vector<1x32xf32>
    %1546 = tpu.concatenate %1544, %1545 in 0 : vector<1x32xf32>, vector<1x32xf32> -> vector<2x32xf32>
    %c0_145 = arith.constant 0 : index
    %c0_146 = arith.constant 0 : index
    %1547 = vector.load %arg8[%c0_145, %c0_146] : memref<32x128xbf16, #tpu.memory_space<vmem>>, vector<32x128xbf16>
    %1548 = arith.truncf %1546 : vector<2x32xf32> to vector<2x32xbf16>
    %cst_147 = arith.constant dense<0.000000e+00> : vector<2x128xf32>
    %1549 = tpu.matmul %1548, %1547, %cst_147 {dimension_numbers = #tpu.dot_dimension_numbers<[1], [0], [0], [1], [0, 0, 1, 1], [], []>} : vector<2x32xbf16>, vector<32x128xbf16>, vector<2x128xf32> -> vector<2x128xf32>
    %1550 = vector.broadcast %4 : vector<1x128xf32> to vector<2x128xf32>
    %1551 = arith.addf %1549, %1550 : vector<2x128xf32>
    %c0_148 = arith.constant 0 : index
    %c0_149 = arith.constant 0 : index
    %c0_150 = arith.constant 0 : index
    %1552 = vector.load %arg10[%c0_148, %c0_149, %c0_150] : memref<1x2x128xf32, #tpu.memory_space<vmem>>, vector<1x2x128xf32>
    %1553 = vector.shape_cast %1552 : vector<1x2x128xf32> to vector<2x128xf32>
    %1554 = vector.shape_cast %1551 : vector<2x128xf32> to vector<1x2x128xf32>
    tpu.vector_store %arg10[%c0_148, %c0_149, %c0_150], %1554 {strides = array<i32>} : memref<1x2x128xf32, #tpu.memory_space<vmem>>, vector<1x2x128xf32>,
    return
  }
  func.func @transform_0(%arg0: i32) -> (i32, i32) {
    %c0_i32 = arith.constant 0 : i32
    %c0_i32_0 = arith.constant 0 : i32
    return %arg0, %c0_i32 : i32, i32
  }
  func.func @transform_1(%arg0: i32) -> (i32, i32) {
    %c0_i32 = arith.constant 0 : i32
    %c0_i32_0 = arith.constant 0 : i32
    %c0_i32_1 = arith.constant 0 : i32
    return %c0_i32, %c0_i32_0 : i32, i32
  }
  func.func @transform_2(%arg0: i32) -> (i32, i32, i32) {
    %c0_i32 = arith.constant 0 : i32
    %c0_i32_0 = arith.constant 0 : i32
    %c0_i32_1 = arith.constant 0 : i32
    %c0_i32_2 = arith.constant 0 : i32
    return %c0_i32, %c0_i32_0, %c0_i32_1 : i32, i32, i32
  }
  func.func @transform_3(%arg0: i32) -> (i32, i32, i32) {
    %c0_i32 = arith.constant 0 : i32
    %c0_i32_0 = arith.constant 0 : i32
    %c0_i32_1 = arith.constant 0 : i32
    %c0_i32_2 = arith.constant 0 : i32
    return %c0_i32, %c0_i32_0, %c0_i32_1 : i32, i32, i32
  }
  func.func @transform_4(%arg0: i32) -> (i32, i32, i32) {
    %c0_i32 = arith.constant 0 : i32
    %c0_i32_0 = arith.constant 0 : i32
    %c0_i32_1 = arith.constant 0 : i32
    %c0_i32_2 = arith.constant 0 : i32
    return %c0_i32, %c0_i32_0, %c0_i32_1 : i32, i32, i32
  }
  func.func @transform_5(%arg0: i32) -> (i32, i32, i32) {
    %c0_i32 = arith.constant 0 : i32
    %c0_i32_0 = arith.constant 0 : i32
    %c0_i32_1 = arith.constant 0 : i32
    %c0_i32_2 = arith.constant 0 : i32
    return %c0_i32, %c0_i32_0, %c0_i32_1 : i32, i32, i32
  }
  func.func @transform_6(%arg0: i32) -> (i32, i32, i32) {
    %c0_i32 = arith.constant 0 : i32
    %c0_i32_0 = arith.constant 0 : i32
    %c0_i32_1 = arith.constant 0 : i32
    %c0_i32_2 = arith.constant 0 : i32
    return %c0_i32, %c0_i32_0, %c0_i32_1 : i32, i32, i32
  }
  func.func @transform_7(%arg0: i32) -> (i32, i32) {
    %c0_i32 = arith.constant 0 : i32
    %c0_i32_0 = arith.constant 0 : i32
    %c0_i32_1 = arith.constant 0 : i32
    return %c0_i32, %c0_i32_0 : i32, i32
  }
  func.func @transform_8(%arg0: i32) -> (i32, i32) {
    %c0_i32 = arith.constant 0 : i32
    %c0_i32_0 = arith.constant 0 : i32
    %c0_i32_1 = arith.constant 0 : i32
    return %c0_i32, %c0_i32_0 : i32, i32
  }
  func.func @transform_9(%arg0: i32) -> (i32, i32, i32) {
    %c0_i32 = arith.constant 0 : i32
    %c0_i32_0 = arith.constant 0 : i32
    %c0_i32_1 = arith.constant 0 : i32
    return %arg0, %c0_i32, %c0_i32_0 : i32, i32, i32
  }
}

</mosaic_0001>

<llo_original>
// kernel: vision_mamba_forward.1
$region0: #{vision_mamba_forward.1}
  #allocation0 [shape = 'u32[]', space=smem, size = 0x4, offset = 0x4, fixed_abs, tag = 'smem constant byte address 0x4 - core index']
  #allocation1 [shape = 'u32[72,128]{1,0:T(1,128)}', space=vmem, size = 0x9000, scoped, tag = 'internal scratch']
  %s0 = inlined_call_operand.vmem [shape: f32[32,48], index: 0, kind: input, shape index: {}]
  %s1 = inlined_call_operand.vmem [shape: bf16[48,32], index: 1, kind: input, shape index: {}]
  %s2 = inlined_call_operand.vmem [shape: bf16[2,32,128], index: 2, kind: input, shape index: {}]
  %s3 = inlined_call_operand.vmem [shape: bf16[2,64,64], index: 3, kind: input, shape index: {}]
  %s4 = inlined_call_operand.vmem [shape: bf16[2,32,64], index: 4, kind: input, shape index: {}]
  %s5 = inlined_call_operand.vmem [shape: f32[2,16,64], index: 5, kind: input, shape index: {}]
  %s6 = inlined_call_operand.vmem [shape: bf16[2,64,32], index: 6, kind: input, shape index: {}]
  %s7 = inlined_call_operand.vmem [shape: bf16[32,128], index: 7, kind: input, shape index: {}]
  %s8 = inlined_call_operand.vmem [shape: f32[16,128], index: 8, kind: input, shape index: {}]
  %s9 = inlined_call_operand.hbm [shape: f32[1,2,128], index: 9, kind: output, shape index: {}]
  %s10 = sld [smem:[#allocation0]]
  $region46: #{vision_mamba_forward.1} parent=0
    _
  %s12 = ssub.s32 1, %s10
  %s13 = scalar_select 0, %s12, %s10
  $region1: #{vision_mamba_forward.1} parent=0
    #allocation2 [shape = 'u8[1024]{0}', space=vmem, size = 0x400, scoped, tag = 'output window, operand 0, single buffered']
    #allocation3 [shape = 's32[1]{0}', space=sflag, size = 0x4, scoped, tag = 'scoped memory for vision_mamba_forward.1']
    %14 = vsyncpa [#allocation3], 0
    // Predicated region
    $region2: #{vision_mamba_forward.1} parent=1 // pred_check
      _
    $region3: #{vision_mamba_forward.1} parent=1 // pred_check_branch
      %16 = sbr.rel (0) target = $region5
    $region4: #{vision_mamba_forward.1} parent=1 // pred_region
      _
    $region5: #{vision_mamba_forward.1} parent=1 // pred_fallthru
      _
    // Predicated region
    $region6: #{vision_mamba_forward.1} parent=1 // pred_check
      _
    $region7: #{vision_mamba_forward.1} parent=1 // pred_check_branch
      %18 = sbr.rel (0) target = $region9
    $region8: #{vision_mamba_forward.1} parent=1 // pred_region
      _
    $region9: #{vision_mamba_forward.1} parent=1 // pred_fallthru
      _
    // Predicated region
    $region10: #{vision_mamba_forward.1} parent=1 // pred_check
      _
    $region11: #{vision_mamba_forward.1} parent=1 // pred_check_branch
      %20 = sbr.rel (0) target = $region13
    $region12: #{vision_mamba_forward.1} parent=1 // pred_region
      _
    $region13: #{vision_mamba_forward.1} parent=1 // pred_fallthru
      _
    // Predicated region
    $region14: #{vision_mamba_forward.1} parent=1 // pred_check
      _
    $region15: #{vision_mamba_forward.1} parent=1 // pred_check_branch
      %22 = sbr.rel (0) target = $region17
    $region16: #{vision_mamba_forward.1} parent=1 // pred_region
      _
    $region17: #{vision_mamba_forward.1} parent=1 // pred_fallthru
      _
    // Predicated region
    $region18: #{vision_mamba_forward.1} parent=1 // pred_check
      _
    $region19: #{vision_mamba_forward.1} parent=1 // pred_check_branch
      %24 = sbr.rel (0) target = $region21
    $region20: #{vision_mamba_forward.1} parent=1 // pred_region
      _
    $region21: #{vision_mamba_forward.1} parent=1 // pred_fallthru
      _
    // Predicated region
    $region22: #{vision_mamba_forward.1} parent=1 // pred_check
      _
    $region23: #{vision_mamba_forward.1} parent=1 // pred_check_branch
      %26 = sbr.rel (0) target = $region25
    $region24: #{vision_mamba_forward.1} parent=1 // pred_region
      _
    $region25: #{vision_mamba_forward.1} parent=1 // pred_fallthru
      _
    // Predicated region
    $region26: #{vision_mamba_forward.1} parent=1 // pred_check
      _
    $region27: #{vision_mamba_forward.1} parent=1 // pred_check_branch
      %28 = sbr.rel (0) target = $region29
    $region28: #{vision_mamba_forward.1} parent=1 // pred_region
      _
    $region29: #{vision_mamba_forward.1} parent=1 // pred_fallthru
      _
    // Predicated region
    $region30: #{vision_mamba_forward.1} parent=1 // pred_check
      _
    $region31: #{vision_mamba_forward.1} parent=1 // pred_check_branch
      %30 = sbr.rel (0) target = $region33
    $region32: #{vision_mamba_forward.1} parent=1 // pred_region
      _
    $region33: #{vision_mamba_forward.1} parent=1 // pred_fallthru
      _
    // Predicated region
    $region34: #{vision_mamba_forward.1} parent=1 // pred_check
      _
    $region35: #{vision_mamba_forward.1} parent=1 // pred_check_branch
      %32 = sbr.rel (0) target = $region37
    $region36: #{vision_mamba_forward.1} parent=1 // pred_region
      _
    $region37: #{vision_mamba_forward.1} parent=1 // pred_fallthru
      _
    %v34 = vld [vmem:[%s8] sm:$0xff]
    %v35 = vld [vmem:[%s8 + $0x8] sm:$0xff]
    %v36 = vlaneseq
    %v37 = vshrl.u32 %v36, 7
    %v38 = vadd.s32 %v37, 8
    %v39 = vadd.s32 %v37, 16
    %v40 = vadd.s32 %v37, 24
    %v41 = vand.u32 %v37, 15
    %v42 = vand.u32 %v38, 15
    %v43 = vand.u32 %v39, 15
    %v44 = vand.u32 %v40, 15
    %vm45 = vcmp.ge.s32.totalorder %v41, 1
    %vm46 = vcmp.ge.s32.totalorder %v42, 1
    %vm47 = vcmp.ge.s32.totalorder %v43, 1
    %vm48 = vcmp.ge.s32.totalorder %v44, 1
    %vm49 = vcmp.ge.s32.totalorder %v41, 2
    %vm50 = vcmp.ge.s32.totalorder %v42, 2
    %vm51 = vcmp.ge.s32.totalorder %v43, 2
    %vm52 = vcmp.ge.s32.totalorder %v44, 2
    %vm53 = vcmp.ge.s32.totalorder %v41, 3
    %vm54 = vcmp.ge.s32.totalorder %v42, 3
    %vm55 = vcmp.ge.s32.totalorder %v43, 3
    %vm56 = vcmp.ge.s32.totalorder %v44, 3
    %v57 = vld [vmem:[%s0] sm:$0xff]
    %v58 = vld [vmem:[%s0 + $0x8] sm:$0xff]
    %v59 = vld [vmem:[%s0 + $0x10] sm:$0xff]
    %v60 = vld [vmem:[%s0 + $0x18] sm:$0xff]
    %v61 = vld [vmem:[%s1] sm:$0xf]
    %v62 = vld [vmem:[%s1 + $0x4] sm:$0xf]
    %v63 = vld [vmem:[%s1 + $0x8] sm:$0xf]
    %v64 = vld [vmem:[%s1 + $0xc] sm:$0xf]
    %v65 = vld [vmem:[%s1 + $0x10] sm:$0xf]
    %v66 = vld [vmem:[%s1 + $0x14] sm:$0xf]
    %v67 = vpack.c.bf16 %v58, %v57
    %v68 = vpack.c.bf16 %v60, %v59
    %v69 = vperm.slane %v34, 0
    %v76 = vunpack.c.l.b16 %v61
    %v77 = vunpack.c.l.b16 %v62
    %v78 = vunpack.c.l.b16 %v63
    %v79 = vunpack.c.l.b16 %v64
    %v80 = vunpack.c.l.b16 %v65
    %v81 = vunpack.c.l.b16 %v66
    %v82 = vpack.c.b16 %v77, %v76
    %v83 = vpack.c.b16 %v79, %v78
    %v84 = vpack.c.b16 %v81, %v80
    %vm88 = vcmask 392192
    %v90 = vsel %vm88, %v67, 0
    %v93 = vsel %vm88, %v68, 0
    %95 = vmatpush.bf16.msra.mxu0 0
    %96 = vmatpush.bf16.msra.mxu0 0
    %97 = vmatpush.bf16.msra.mxu0 0
    %98 = vmatpush.bf16.msra.mxu0 0
    %99 = vmatpush.bf16.msra.mxu0 0
    %100 = vmatpush.bf16.msra.mxu0 %v84
    %101 = vmatpush.bf16.msra.mxu0 %v83
    %102 = vmatpush.bf16.msra.mxu0 %v82
    %103 = vmatmul.bf16.gmra.mxu0 %v90
    %v104 = vpop.f32.mrf.mxu0
    %v105 = vadd.f32 %v69, %v104
    %v106 = vpop.f32.mrf.mxu0
    %v107 = vadd.f32 %v69, %v106
    %108 = vmatmul.bf16.gmra.mxu0 %v93
    %v109 = vpop.f32.mrf.mxu0
    %v110 = vadd.f32 %v69, %v109
    %v111 = vpop.f32.mrf.mxu0
    %v112 = vadd.f32 %v69, %v111
    %113 = vdwg.mxu0
    %v114 = vld [vmem:[%s5] sm:$0xff]
    %v115 = vld [vmem:[%s5 + $0x8] sm:$0xff]
    %vm116 = vcmask 261120
    %v117 = vsel %vm116, %v105, 0.0
    %118 = vadd.xlane.f32.xlu0 %v117
    %v119 = vpop.xlane.xlu0 %118
    %v120 = vsel %vm116, %v107, 0.0
    %121 = vadd.xlane.f32.xlu0 %v120
    %v122 = vpop.xlane.xlu0 %121
    %v123 = vsel %vm116, %v110, 0.0
    %124 = vadd.xlane.f32.xlu0 %v123
    %v125 = vpop.xlane.xlu0 %124
    %v126 = vsel %vm116, %v112, 0.0
    %127 = vadd.xlane.f32.xlu0 %v126
    %v128 = vpop.xlane.xlu0 %127
    %v129 = vrcp.pop 32.0
    %v130 = vmul.f32 32.0, %v129
    %v131 = vsub.f32 1.0, %v130
    %v132 = vmul.f32 %v129, %v131
    %v133 = vadd.f32 %v129, %v132
    %vm134 = vweird.f32 %v129
    %v135 = vsel %vm134, %v129, %v133
    %v136 = vmul.f32 %v119, %v135
    %v137 = vmul.f32 %v122, %v135
    %v138 = vmul.f32 %v125, %v135
    %v139 = vmul.f32 %v128, %v135
    %v140 = vsub.f32 %v105, %v136
    %v141 = vsub.f32 %v107, %v137
    %v142 = vsub.f32 %v110, %v138
    %v143 = vsub.f32 %v112, %v139
    %v144 = vmul.f32 %v140, %v140
    %v145 = vmul.f32 %v141, %v141
    %v146 = vmul.f32 %v142, %v142
    %v147 = vmul.f32 %v143, %v143
    %v148 = vsel %vm116, %v144, 0.0
    %149 = vadd.xlane.f32.xlu0 %v148
    %v150 = vpop.xlane.xlu0 %149
    %v151 = vsel %vm116, %v145, 0.0
    %152 = vadd.xlane.f32.xlu0 %v151
    %v153 = vpop.xlane.xlu0 %152
    %v154 = vsel %vm116, %v146, 0.0
    %155 = vadd.xlane.f32.xlu0 %v154
    %v156 = vpop.xlane.xlu0 %155
    %v157 = vsel %vm116, %v147, 0.0
    %158 = vadd.xlane.f32.xlu0 %v157
    %v159 = vpop.xlane.xlu0 %158
    %v160 = vmul.f32 %v150, %v135
    %v161 = vmul.f32 %v153, %v135
    %v162 = vmul.f32 %v156, %v135
    %v163 = vmul.f32 %v159, %v135
    %v164 = vadd.f32 %v160, 1e-05
    %v165 = vadd.f32 %v161, 1e-05
    %v166 = vadd.f32 %v162, 1e-05
    %v167 = vadd.f32 %v163, 1e-05
    %v168 = vrsqrt.pop %v164
    %v169 = vmul.f32 %v168, %v164
    %v170 = vmul.f32 %v169, %v168
    %v171 = vmul.f32 0.5, %v170
    %v172 = vsub.f32 1.5, %v171
    %v173 = vmul.f32 %v168, %v172
    %vm174 = vweird.f32 %v164
    %vm175 = vweird.f32 %v168
    %vm176 = vmor %vm174, %vm175
    %v177 = vsel %vm176, %v168, %v173
    %v178 = vrsqrt.pop %v165
    %v179 = vmul.f32 %v178, %v165
    %v180 = vmul.f32 %v179, %v178
    %v181 = vmul.f32 0.5, %v180
    %v182 = vsub.f32 1.5, %v181
    %v183 = vmul.f32 %v178, %v182
    %vm184 = vweird.f32 %v165
    %vm185 = vweird.f32 %v178
    %vm186 = vmor %vm184, %vm185
    %v187 = vsel %vm186, %v178, %v183
    %v188 = vrsqrt.pop %v166
    %v189 = vmul.f32 %v188, %v166
    %v190 = vmul.f32 %v189, %v188
    %v191 = vmul.f32 0.5, %v190
    %v192 = vsub.f32 1.5, %v191
    %v193 = vmul.f32 %v188, %v192
    %vm194 = vweird.f32 %v166
    %vm195 = vweird.f32 %v188
    %vm196 = vmor %vm194, %vm195
    %v197 = vsel %vm196, %v188, %v193
    %v198 = vrsqrt.pop %v167
    %v199 = vmul.f32 %v198, %v167
    %v200 = vmul.f32 %v199, %v198
    %v201 = vmul.f32 0.5, %v200
    %v202 = vsub.f32 1.5, %v201
    %v203 = vmul.f32 %v198, %v202
    %vm204 = vweird.f32 %v167
    %vm205 = vweird.f32 %v198
    %vm206 = vmor %vm204, %vm205
    %v207 = vsel %vm206, %v198, %v203
    %v208 = vmul.f32 %v140, %v177
    %v209 = vmul.f32 %v141, %v187
    %v210 = vmul.f32 %v142, %v197
    %v211 = vmul.f32 %v143, %v207
    %v212 = vperm.slane %v34, 2
    %v213 = vmul.f32 %v208, %v212
    %v214 = vmul.f32 %v209, %v212
    %v215 = vmul.f32 %v210, %v212
    %v216 = vmul.f32 %v211, %v212
    %218 = vrot.lane.b32.xlu0 %v212, 96
    %v219 = vpop.permute.xlu0 %218
    %v221 = vadd.f32 %v213, %v219
    %v222 = vadd.f32 %v214, %v219
    %v223 = vadd.f32 %v215, %v219
    %v224 = vadd.f32 %v216, %v219
    %v225 = vld [vmem:[%s2] sm:$0xf]
    %v226 = vld [vmem:[%s2 + $0x4] sm:$0xf]
    %v227 = vld [vmem:[%s2 + $0x8] sm:$0xf]
    %v228 = vld [vmem:[%s2 + $0xc] sm:$0xf]
    %v229 = vpack.c.bf16 %v222, %v221
    %v230 = vpack.c.bf16 %v224, %v223
    %v235 = vunpack.c.l.b16 %v225
    %v236 = vunpack.c.l.b16 %v226
    %v237 = vunpack.c.l.b16 %v227
    %v238 = vunpack.c.l.b16 %v228
    %v239 = vpack.c.b16 %v236, %v235
    %v240 = vpack.c.b16 %v238, %v237
    %v244 = vsel %vm116, %v229, 0
    %v247 = vsel %vm116, %v230, 0
    %249 = vmatpush.bf16.msra.mxu0 0
    %250 = vmatpush.bf16.msra.mxu0 0
    %251 = vmatpush.bf16.msra.mxu0 0
    %252 = vmatpush.bf16.msra.mxu0 0
    %253 = vmatpush.bf16.msra.mxu0 0
    %254 = vmatpush.bf16.msra.mxu0 0
    %255 = vmatpush.bf16.msra.mxu0 %v240
    %256 = vmatpush.bf16.msra.mxu0 %v239
    %257 = vmatmul.bf16.gmra.mxu0 %v244
    %v258 = vpop.f32.mrf.mxu0
    %v259 = vadd.f32 0.0, %v258
    %v260 = vpop.f32.mrf.mxu0
    %v261 = vadd.f32 0.0, %v260
    %262 = vmatmul.bf16.gmra.mxu0 %v247
    %v263 = vpop.f32.mrf.mxu0
    %v264 = vadd.f32 0.0, %v263
    %v265 = vpop.f32.mrf.mxu0
    %v266 = vadd.f32 0.0, %v265
    %267 = vdwg.mxu0
    %v268 = vxor.u32 %v259, 2147483648
    %v269 = vxor.u32 %v261, 2147483648
    %v270 = vxor.u32 %v264, 2147483648
    %v271 = vxor.u32 %v266, 2147483648
    %v272 = vmul.f32 %v268, 1.442695
    %v273 = vpow.pop %v272
    %v274 = vmul.f32 %v269, 1.442695
    %v275 = vpow.pop %v274
    %v276 = vmul.f32 %v270, 1.442695
    %v277 = vpow.pop %v276
    %v278 = vmul.f32 %v271, 1.442695
    %v279 = vpow.pop %v278
    %v280 = vadd.f32 %v273, 1.0
    %v281 = vadd.f32 %v275, 1.0
    %v282 = vadd.f32 %v277, 1.0
    %v283 = vadd.f32 %v279, 1.0
    %v284 = vrcp.pop %v280
    %v285 = vmul.f32 %v280, %v284
    %v286 = vsub.f32 1.0, %v285
    %v287 = vmul.f32 %v284, %v286
    %v288 = vadd.f32 %v284, %v287
    %vm289 = vweird.f32 %v280
    %vm290 = vweird.f32 %v284
    %vm291 = vmor %vm289, %vm290
    %v292 = vsel %vm291, %v284, %v288
    %v293 = vand.u32 2147483647, %v280
    %vm294 = vcmp.eq.f32.partialorder %v293, 8.507059e+37
    %v295 = vand.u32 %v280, 2147483648
    %v296 = vor.u32 1.1754944e-38, %v295
    %v297 = vsel %vm294, %v296, %v292
    %v298 = vmul.f32 1.0, %v297
    %v299 = vrcp.pop %v281
    %v300 = vmul.f32 %v281, %v299
    %v301 = vsub.f32 1.0, %v300
    %v302 = vmul.f32 %v299, %v301
    %v303 = vadd.f32 %v299, %v302
    %vm304 = vweird.f32 %v281
    %vm305 = vweird.f32 %v299
    %vm306 = vmor %vm304, %vm305
    %v307 = vsel %vm306, %v299, %v303
    %v308 = vand.u32 2147483647, %v281
    %vm309 = vcmp.eq.f32.partialorder %v308, 8.507059e+37
    %v310 = vand.u32 %v281, 2147483648
    %v311 = vor.u32 1.1754944e-38, %v310
    %v312 = vsel %vm309, %v311, %v307
    %v313 = vmul.f32 1.0, %v312
    %v314 = vrcp.pop %v282
    %v315 = vmul.f32 %v282, %v314
    %v316 = vsub.f32 1.0, %v315
    %v317 = vmul.f32 %v314, %v316
    %v318 = vadd.f32 %v314, %v317
    %vm319 = vweird.f32 %v282
    %vm320 = vweird.f32 %v314
    %vm321 = vmor %vm319, %vm320
    %v322 = vsel %vm321, %v314, %v318
    %v323 = vand.u32 2147483647, %v282
    %vm324 = vcmp.eq.f32.partialorder %v323, 8.507059e+37
    %v325 = vand.u32 %v282, 2147483648
    %v326 = vor.u32 1.1754944e-38, %v325
    %v327 = vsel %vm324, %v326, %v322
    %v328 = vmul.f32 1.0, %v327
    %v329 = vrcp.pop %v283
    %v330 = vmul.f32 %v283, %v329
    %v331 = vsub.f32 1.0, %v330
    %v332 = vmul.f32 %v329, %v331
    %v333 = vadd.f32 %v329, %v332
    %vm334 = vweird.f32 %v283
    %vm335 = vweird.f32 %v329
    %vm336 = vmor %vm334, %vm335
    %v337 = vsel %vm336, %v329, %v333
    %v338 = vand.u32 2147483647, %v283
    %vm339 = vcmp.eq.f32.partialorder %v338, 8.507059e+37
    %v340 = vand.u32 %v283, 2147483648
    %v341 = vor.u32 1.1754944e-38, %v340
    %v342 = vsel %vm339, %v341, %v337
    %v343 = vmul.f32 1.0, %v342
    %v344 = vmul.f32 %v259, %v298
    %v345 = vmul.f32 %v261, %v313
    %v346 = vmul.f32 %v264, %v328
    %v347 = vmul.f32 %v266, %v343
    %v348 = vrot.slane %v259, 5
    %v349 = vrot.slane %v261, 5
    %v350 = vrot.slane %v264, 5
    %v351 = vrot.slane %v266, 5
    %vm352 = vcmp.lt.s32.totalorder %v37, 3
    %v353 = vsel %vm352, %v350, %v351
    %v354 = vsel %vm352, %v349, %v350
    %v355 = vsel %vm352, %v348, %v349
    %v356 = vsel %vm352, %v351, %v348
    %v357 = vsel %vm53, %v356, 0.0
    %v358 = vsel %vm54, %v355, 0.0
    %v359 = vsel %vm55, %v354, 0.0
    %v360 = vsel %vm56, %v353, 0.0
    %v361 = vperm.slane %v34, 5
    %v362 = vmul.f32 %v357, %v361
    %v363 = vmul.f32 %v358, %v361
    %v364 = vmul.f32 %v359, %v361
    %v365 = vmul.f32 %v360, %v361
    %v366 = vperm.slane %v34, 3
    %v367 = vadd.f32 %v366, %v362
    %v368 = vadd.f32 %v366, %v363
    %v369 = vadd.f32 %v366, %v364
    %v370 = vadd.f32 %v366, %v365
    %v371 = vrot.slane %v259, 6
    %v372 = vrot.slane %v261, 6
    %v373 = vrot.slane %v264, 6
    %v374 = vrot.slane %v266, 6
    %vm375 = vcmp.lt.s32.totalorder %v37, 2
    %v376 = vsel %vm375, %v373, %v374
    %v377 = vsel %vm375, %v372, %v373
    %v378 = vsel %vm375, %v371, %v372
    %v379 = vsel %vm375, %v374, %v371
    %v380 = vsel %vm49, %v379, 0.0
    %v381 = vsel %vm50, %v378, 0.0
    %v382 = vsel %vm51, %v377, 0.0
    %v383 = vsel %vm52, %v376, 0.0
    %v384 = vperm.slane %v34, 6
    %v385 = vmul.f32 %v380, %v384
    %v386 = vmul.f32 %v381, %v384
    %v387 = vmul.f32 %v382, %v384
    %v388 = vmul.f32 %v383, %v384
    %v389 = vadd.f32 %v367, %v385
    %v390 = vadd.f32 %v368, %v386
    %v391 = vadd.f32 %v369, %v387
    %v392 = vadd.f32 %v370, %v388
    %v393 = vrot.slane %v259, 7
    %v394 = vrot.slane %v261, 7
    %v395 = vrot.slane %v264, 7
    %v396 = vrot.slane %v266, 7
    %vm397 = vcmp.lt.s32.totalorder %v37, 1
    %v398 = vsel %vm397, %v395, %v396
    %v399 = vsel %vm397, %v394, %v395
    %v400 = vsel %vm397, %v393, %v394
    %v401 = vsel %vm397, %v396, %v393
    %v402 = vsel %vm45, %v401, 0.0
    %v403 = vsel %vm46, %v400, 0.0
    %v404 = vsel %vm47, %v399, 0.0
    %v405 = vsel %vm48, %v398, 0.0
    %v406 = vperm.slane %v34, 7
    %v407 = vmul.f32 %v402, %v406
    %v408 = vmul.f32 %v403, %v406
    %v409 = vmul.f32 %v404, %v406
    %v410 = vmul.f32 %v405, %v406
    %v411 = vadd.f32 %v389, %v407
    %v412 = vadd.f32 %v390, %v408
    %v413 = vadd.f32 %v391, %v409
    %v414 = vadd.f32 %v392, %v410
    %v415 = vperm.slane %v35, 0
    %v416 = vmul.f32 %v259, %v415
    %v417 = vmul.f32 %v261, %v415
    %v418 = vmul.f32 %v264, %v415
    %v419 = vmul.f32 %v266, %v415
    %v420 = vadd.f32 %v411, %v416
    %v421 = vadd.f32 %v412, %v417
    %v422 = vadd.f32 %v413, %v418
    %v423 = vadd.f32 %v414, %v419
    %v424 = vxor.u32 %v420, 2147483648
    %v425 = vxor.u32 %v421, 2147483648
    %v426 = vxor.u32 %v422, 2147483648
    %v427 = vxor.u32 %v423, 2147483648
    %v428 = vmul.f32 %v424, 1.442695
    %v429 = vpow.pop %v428
    %v430 = vmul.f32 %v425, 1.442695
    %v431 = vpow.pop %v430
    %v432 = vmul.f32 %v426, 1.442695
    %v433 = vpow.pop %v432
    %v434 = vmul.f32 %v427, 1.442695
    %v435 = vpow.pop %v434
    %v436 = vadd.f32 %v429, 1.0
    %v437 = vadd.f32 %v431, 1.0
    %v438 = vadd.f32 %v433, 1.0
    %v439 = vadd.f32 %v435, 1.0
    %v440 = vrcp.pop %v436
    %v441 = vmul.f32 %v436, %v440
    %v442 = vsub.f32 1.0, %v441
    %v443 = vmul.f32 %v440, %v442
    %v444 = vadd.f32 %v440, %v443
    %vm445 = vweird.f32 %v436
    %vm446 = vweird.f32 %v440
    %vm447 = vmor %vm445, %vm446
    %v448 = vsel %vm447, %v440, %v444
    %v449 = vand.u32 2147483647, %v436
    %vm450 = vcmp.eq.f32.partialorder %v449, 8.507059e+37
    %v451 = vand.u32 %v436, 2147483648
    %v452 = vor.u32 1.1754944e-38, %v451
    %v453 = vsel %vm450, %v452, %v448
    %v454 = vmul.f32 1.0, %v453
    %v455 = vrcp.pop %v437
    %v456 = vmul.f32 %v437, %v455
    %v457 = vsub.f32 1.0, %v456
    %v458 = vmul.f32 %v455, %v457
    %v459 = vadd.f32 %v455, %v458
    %vm460 = vweird.f32 %v437
    %vm461 = vweird.f32 %v455
    %vm462 = vmor %vm460, %vm461
    %v463 = vsel %vm462, %v455, %v459
    %v464 = vand.u32 2147483647, %v437
    %vm465 = vcmp.eq.f32.partialorder %v464, 8.507059e+37
    %v466 = vand.u32 %v437, 2147483648
    %v467 = vor.u32 1.1754944e-38, %v466
    %v468 = vsel %vm465, %v467, %v463
    %v469 = vmul.f32 1.0, %v468
    %v470 = vrcp.pop %v438
    %v471 = vmul.f32 %v438, %v470
    %v472 = vsub.f32 1.0, %v471
    %v473 = vmul.f32 %v470, %v472
    %v474 = vadd.f32 %v470, %v473
    %vm475 = vweird.f32 %v438
    %vm476 = vweird.f32 %v470
    %vm477 = vmor %vm475, %vm476
    %v478 = vsel %vm477, %v470, %v474
    %v479 = vand.u32 2147483647, %v438
    %vm480 = vcmp.eq.f32.partialorder %v479, 8.507059e+37
    %v481 = vand.u32 %v438, 2147483648
    %v482 = vor.u32 1.1754944e-38, %v481
    %v483 = vsel %vm480, %v482, %v478
    %v484 = vmul.f32 1.0, %v483
    %v485 = vrcp.pop %v439
    %v486 = vmul.f32 %v439, %v485
    %v487 = vsub.f32 1.0, %v486
    %v488 = vmul.f32 %v485, %v487
    %v489 = vadd.f32 %v485, %v488
    %vm490 = vweird.f32 %v439
    %vm491 = vweird.f32 %v485
    %vm492 = vmor %vm490, %vm491
    %v493 = vsel %vm492, %v485, %v489
    %v494 = vand.u32 2147483647, %v439
    %vm495 = vcmp.eq.f32.partialorder %v494, 8.507059e+37
    %v496 = vand.u32 %v439, 2147483648
    %v497 = vor.u32 1.1754944e-38, %v496
    %v498 = vsel %vm495, %v497, %v493
    %v499 = vmul.f32 1.0, %v498
    %v500 = vmul.f32 %v420, %v454
    %v501 = vmul.f32 %v421, %v469
    %v502 = vmul.f32 %v422, %v484
    %v503 = vmul.f32 %v423, %v499
    %v504 = vld [vmem:[%s3] sm:$0xf]
    %v505 = vld [vmem:[%s3 + $0x4] sm:$0xf]
    %v506 = vld [vmem:[%s3 + $0x8] sm:$0xf]
    %v507 = vld [vmem:[%s3 + $0xc] sm:$0xf]
    %v508 = vld [vmem:[%s3 + $0x10] sm:$0xf]
    %v509 = vld [vmem:[%s3 + $0x14] sm:$0xf]
    %v510 = vld [vmem:[%s3 + $0x18] sm:$0xf]
    %v511 = vld [vmem:[%s3 + $0x1c] sm:$0xf]
    %v512 = vpack.c.bf16 %v501, %v500
    %v513 = vpack.c.bf16 %v503, %v502
    %v522 = vunpack.c.l.b16 %v504
    %v523 = vunpack.c.l.b16 %v505
    %v524 = vunpack.c.l.b16 %v506
    %v525 = vunpack.c.l.b16 %v507
    %v526 = vunpack.c.l.b16 %v508
    %v527 = vunpack.c.l.b16 %v509
    %v528 = vunpack.c.l.b16 %v510
    %v529 = vunpack.c.l.b16 %v511
    %v530 = vpack.c.b16 %v523, %v522
    %v531 = vpack.c.b16 %v525, %v524
    %v532 = vpack.c.b16 %v527, %v526
    %v533 = vpack.c.b16 %v529, %v528
    %539 = vrot.lane.b32.xlu0 %v366, 64
    %v540 = vpop.permute.xlu0 %539
    %vm542 = vcmask 523264
    %v544 = vsel %vm542, %v512, 0
    %v547 = vsel %vm542, %v513, 0
    %549 = vmatpush.bf16.msra.mxu0 0
    %550 = vmatpush.bf16.msra.mxu0 0
    %551 = vmatpush.bf16.msra.mxu0 0
    %552 = vmatpush.bf16.msra.mxu0 0
    %553 = vmatpush.bf16.msra.mxu0 %v533
    %554 = vmatpush.bf16.msra.mxu0 %v532
    %555 = vmatpush.bf16.msra.mxu0 %v531
    %556 = vmatpush.bf16.msra.mxu0 %v530
    %557 = vmatmul.bf16.gmra.mxu0 %v544
    %v558 = vpop.f32.mrf.mxu0
    %v559 = vadd.f32 %v540, %v558
    %v560 = vpop.f32.mrf.mxu0
    %v561 = vadd.f32 %v540, %v560
    %562 = vmatmul.bf16.gmra.mxu0 %v547
    %v563 = vpop.f32.mrf.mxu0
    %v564 = vadd.f32 %v540, %v563
    %v565 = vpop.f32.mrf.mxu0
    %v566 = vadd.f32 %v540, %v565
    %567 = vdwg.mxu0
    %v568 = vmax.f32 %v559, 0.0
    %v569 = vmax.f32 %v561, 0.0
    %v570 = vmax.f32 %v564, 0.0
    %v571 = vmax.f32 %v566, 0.0
    %vm572 = vcmp.ne.f32.partialorder %v559, %v559
    %vm573 = vcmp.ne.f32.partialorder %v561, %v561
    %vm574 = vcmp.ne.f32.partialorder %v564, %v564
    %vm575 = vcmp.ne.f32.partialorder %v566, %v566
    %v576 = vadd.f32 %v559, 0.0
    %v577 = vadd.f32 %v561, 0.0
    %v578 = vadd.f32 %v564, 0.0
    %v579 = vadd.f32 %v566, 0.0
    %v580 = vand.u32 2147483647, %v559
    %v581 = vand.u32 2147483647, %v561
    %v582 = vand.u32 2147483647, %v564
    %v583 = vand.u32 2147483647, %v566
    %v584 = vsub.f32 0.0, %v580
    %v585 = vsub.f32 0.0, %v581
    %v586 = vsub.f32 0.0, %v582
    %v587 = vsub.f32 0.0, %v583
    %v588 = vmul.f32 %v584, 1.442695
    %v589 = vpow.pop %v588
    %v590 = vmul.f32 %v585, 1.442695
    %v591 = vpow.pop %v590
    %v592 = vmul.f32 %v586, 1.442695
    %v593 = vpow.pop %v592
    %v594 = vmul.f32 %v587, 1.442695
    %v595 = vpow.pop %v594
    %v596 = vadd.f32 %v589, 1.0
    %v597 = vlog2.pop %v596
    %v598 = vmul.f32 %v597, 0.6931472
    %v599 = vmul.f32 -0.5, %v589
    %v600 = vadd.f32 %v599, 1.0
    %v601 = vmul.f32 %v600, %v589
    %v602 = vand.u32 2147483647, %v589
    %vm603 = vcmp.lt.f32.partialorder %v602, 0.0004427343
    %v604 = vsel %vm603, %v601, %v598
    %v605 = vadd.f32 %v591, 1.0
    %v606 = vlog2.pop %v605
    %v607 = vmul.f32 %v606, 0.6931472
    %v608 = vmul.f32 -0.5, %v591
    %v609 = vadd.f32 %v608, 1.0
    %v610 = vmul.f32 %v609, %v591
    %v611 = vand.u32 2147483647, %v591
    %vm612 = vcmp.lt.f32.partialorder %v611, 0.0004427343
    %v613 = vsel %vm612, %v610, %v607
    %v614 = vadd.f32 %v593, 1.0
    %v615 = vlog2.pop %v614
    %v616 = vmul.f32 %v615, 0.6931472
    %v617 = vmul.f32 -0.5, %v593
    %v618 = vadd.f32 %v617, 1.0
    %v619 = vmul.f32 %v618, %v593
    %v620 = vand.u32 2147483647, %v593
    %vm621 = vcmp.lt.f32.partialorder %v620, 0.0004427343
    %v622 = vsel %vm621, %v619, %v616
    %v623 = vadd.f32 %v595, 1.0
    %v624 = vlog2.pop %v623
    %v625 = vmul.f32 %v624, 0.6931472
    %v626 = vmul.f32 -0.5, %v595
    %v627 = vadd.f32 %v626, 1.0
    %v628 = vmul.f32 %v627, %v595
    %v629 = vand.u32 2147483647, %v595
    %vm630 = vcmp.lt.f32.partialorder %v629, 0.0004427343
    %v631 = vsel %vm630, %v628, %v625
    %v632 = vadd.f32 %v568, %v604
    %v633 = vadd.f32 %v569, %v613
    %v634 = vadd.f32 %v570, %v622
    %v635 = vadd.f32 %v571, %v631
    %v636 = vsel %vm572, %v576, %v632
    %v637 = vsel %vm573, %v577, %v633
    %v638 = vsel %vm574, %v578, %v634
    %v639 = vsel %vm575, %v579, %v635
    %v640 = vld [vmem:[%s4] sm:$0xf]
    %v641 = vld [vmem:[%s4 + $0x4] sm:$0xf]
    %v642 = vld [vmem:[%s4 + $0x8] sm:$0xf]
    %v643 = vld [vmem:[%s4 + $0xc] sm:$0xf]
    %v648 = vunpack.c.l.b16 %v640
    %v649 = vunpack.c.l.b16 %v641
    %v650 = vunpack.c.l.b16 %v642
    %v651 = vunpack.c.l.b16 %v643
    %v652 = vpack.c.b16 %v649, %v648
    %v653 = vpack.c.b16 %v651, %v650
    %v655 = vsel %vm542, %v652, 0
    %v658 = vsel %vm542, %v653, 0
    %660 = vmatpush.bf16.xpose.msra.mxu0 0
    %661 = vmatpush.bf16.xpose.msra.mxu0 0
    %662 = vmatpush.bf16.xpose.msra.mxu0 0
    %663 = vmatpush.bf16.xpose.msra.mxu0 0
    %664 = vmatpush.bf16.xpose.msra.mxu0 0
    %665 = vmatpush.bf16.xpose.msra.mxu0 0
    %666 = vmatpush.bf16.xpose.msra.mxu0 %v547
    %667 = vmatpush.bf16.xpose.msra.mxu0 %v544
    %668 = vmatmul.bf16.gmra.mxu0 %v655
    %v669 = vpop.f32.mrf.mxu0
    %v670 = vadd.f32 0.0, %v669
    %v671 = vpop.f32.mrf.mxu0
    %v672 = vadd.f32 0.0, %v671
    %673 = vmatmul.bf16.gmra.mxu0 %v658
    %v674 = vpop.f32.mrf.mxu0
    %v675 = vadd.f32 0.0, %v674
    %v676 = vpop.f32.mrf.mxu0
    %v677 = vadd.f32 0.0, %v676
    %678 = vdwg.mxu0
    %v679 = vmul.f32 %v636, %v500
    %v680 = vmul.f32 %v637, %v501
    %v681 = vmul.f32 %v638, %v502
    %v682 = vmul.f32 %v639, %v503
    %v683 = vperm.slane %v34, 4
    %v684 = vmul.f32 %v500, %v683
    %v685 = vmul.f32 %v501, %v683
    %v686 = vmul.f32 %v502, %v683
    %v687 = vmul.f32 %v503, %v683
    %v688 = vperm.slane %v636, 0
    %v689 = vmul.f32 %v688, %v114
    %v690 = vmul.f32 %v688, %v115
    %v691 = vmul.f32 %v689, 1.442695
    %v692 = vpow.pop %v691
    %v693 = vmul.f32 %v690, 1.442695
    %v694 = vpow.pop %v693
    %v695 = vperm.slane %v636, 1
    %v696 = vmul.f32 %v695, %v114
    %v697 = vmul.f32 %v695, %v115
    %v698 = vmul.f32 %v696, 1.442695
    %v699 = vpow.pop %v698
    %v700 = vmul.f32 %v697, 1.442695
    %v701 = vpow.pop %v700
    %v702 = vperm.slane %v636, 2
    %v703 = vmul.f32 %v702, %v114
    %v704 = vmul.f32 %v702, %v115
    %v705 = vmul.f32 %v703, 1.442695
    %v706 = vpow.pop %v705
    %v707 = vmul.f32 %v704, 1.442695
    %v708 = vpow.pop %v707
    %v709 = vperm.slane %v636, 3
    %v710 = vmul.f32 %v709, %v114
    %v711 = vmul.f32 %v709, %v115
    %v712 = vmul.f32 %v710, 1.442695
    %v713 = vpow.pop %v712
    %v714 = vmul.f32 %v711, 1.442695
    %v715 = vpow.pop %v714
    %717 = vset.pattern.permute.xlu0 0
    %718 = vperm.xlu0 %717, %v670
    %v719 = vpop.permute.xlu0 %718
    %722 = vset.pattern.permute.xlu0 0
    %723 = vperm.xlu0 %722, %v672
    %v724 = vpop.permute.xlu0 %723
    %v726 = vperm.slane %v679, 0
    %v727 = vmul.f32 %v719, %v726
    %v728 = vmul.f32 %v724, %v726
    %729 = vset.pattern.permute.xlu0 1
    %730 = vperm.xlu0 %729, %v670
    %v731 = vpop.permute.xlu0 %730
    %733 = vset.pattern.permute.xlu0 1
    %734 = vperm.xlu0 %733, %v672
    %v735 = vpop.permute.xlu0 %734
    %v737 = vperm.slane %v679, 1
    %v738 = vmul.f32 %v731, %v737
    %v739 = vmul.f32 %v735, %v737
    %740 = vset.pattern.permute.xlu0 2
    %741 = vperm.xlu0 %740, %v670
    %v742 = vpop.permute.xlu0 %741
    %744 = vset.pattern.permute.xlu0 2
    %745 = vperm.xlu0 %744, %v672
    %v746 = vpop.permute.xlu0 %745
    %v748 = vperm.slane %v679, 2
    %v749 = vmul.f32 %v742, %v748
    %v750 = vmul.f32 %v746, %v748
    %751 = vset.pattern.permute.xlu0 3
    %752 = vperm.xlu0 %751, %v670
    %v753 = vpop.permute.xlu0 %752
    %755 = vset.pattern.permute.xlu0 3
    %756 = vperm.xlu0 %755, %v672
    %v757 = vpop.permute.xlu0 %756
    %v759 = vperm.slane %v679, 3
    %v760 = vmul.f32 %v753, %v759
    %v761 = vmul.f32 %v757, %v759
    %v762 = vmul.f32 %v692, 0.0
    %v763 = vmul.f32 %v694, 0.0
    %v764 = vadd.f32 %v762, %v727
    %v765 = vadd.f32 %v763, %v728
    %v766 = vmul.f32 %v699, %v764
    %v767 = vmul.f32 %v701, %v765
    %v768 = vadd.f32 %v766, %v738
    %v769 = vadd.f32 %v767, %v739
    %v770 = vmul.f32 %v706, %v768
    %v771 = vmul.f32 %v708, %v769
    %v772 = vadd.f32 %v770, %v749
    %v773 = vadd.f32 %v771, %v750
    %v774 = vmul.f32 %v713, %v772
    %v775 = vmul.f32 %v715, %v773
    %v776 = vadd.f32 %v774, %v760
    %v777 = vadd.f32 %v775, %v761
    %779 = vset.pattern.permute.xlu0 0
    %780 = vperm.xlu0 %779, %v675
    %v781 = vpop.permute.xlu0 %780
    %784 = vset.pattern.permute.xlu0 0
    %785 = vperm.xlu0 %784, %v677
    %v786 = vpop.permute.xlu0 %785
    %v788 = vmul.f32 %v764, %v781
    %v789 = vmul.f32 %v765, %v786
    %v790 = vsel %vm542, %v788, 0.0
    %v791 = vsel %vm542, %v789, 0.0
    %v792 = vadd.f32 %v790, %v791
    %v793 = vrot.slane %v792, 4
    %v794 = vadd.f32 %v792, %v793
    %v795 = vrot.slane %v794, 2
    %v796 = vadd.f32 %v794, %v795
    %v797 = vrot.slane %v796, 1
    %v798 = vadd.f32 %v796, %v797
    %v799 = vadd.f32 %v798, %v684
    %801 = vrot.lane.b32.xlu0 %v344, 64
    %v802 = vpop.permute.xlu0 %801
    %v804 = vmul.f32 %v799, %v802
    %805 = vset.pattern.permute.xlu0 1
    %806 = vperm.xlu0 %805, %v675
    %v807 = vpop.permute.xlu0 %806
    %809 = vset.pattern.permute.xlu0 1
    %810 = vperm.xlu0 %809, %v677
    %v811 = vpop.permute.xlu0 %810
    %v813 = vmul.f32 %v768, %v807
    %v814 = vmul.f32 %v769, %v811
    %v815 = vsel %vm542, %v813, 0.0
    %v816 = vsel %vm542, %v814, 0.0
    %v817 = vadd.f32 %v815, %v816
    %v818 = vrot.slane %v817, 4
    %v819 = vadd.f32 %v817, %v818
    %v820 = vrot.slane %v819, 2
    %v821 = vadd.f32 %v819, %v820
    %v822 = vrot.slane %v821, 1
    %v823 = vadd.f32 %v821, %v822
    %v824 = vadd.f32 %v823, %v684
    %v825 = vmul.f32 %v824, %v802
    %826 = vset.pattern.permute.xlu0 2
    %827 = vperm.xlu0 %826, %v675
    %v828 = vpop.permute.xlu0 %827
    %830 = vset.pattern.permute.xlu0 2
    %831 = vperm.xlu0 %830, %v677
    %v832 = vpop.permute.xlu0 %831
    %v834 = vmul.f32 %v772, %v828
    %v835 = vmul.f32 %v773, %v832
    %v836 = vsel %vm542, %v834, 0.0
    %v837 = vsel %vm542, %v835, 0.0
    %v838 = vadd.f32 %v836, %v837
    %v839 = vrot.slane %v838, 4
    %v840 = vadd.f32 %v838, %v839
    %v841 = vrot.slane %v840, 2
    %v842 = vadd.f32 %v840, %v841
    %v843 = vrot.slane %v842, 1
    %v844 = vadd.f32 %v842, %v843
    %v845 = vadd.f32 %v844, %v684
    %v846 = vmul.f32 %v845, %v802
    %847 = vset.pattern.permute.xlu0 3
    %848 = vperm.xlu0 %847, %v675
    %v849 = vpop.permute.xlu0 %848
    %851 = vset.pattern.permute.xlu0 3
    %852 = vperm.xlu0 %851, %v677
    %v853 = vpop.permute.xlu0 %852
    %v855 = vmul.f32 %v776, %v849
    %v856 = vmul.f32 %v777, %v853
    %v857 = vsel %vm542, %v855, 0.0
    %v858 = vsel %vm542, %v856, 0.0
    %v859 = vadd.f32 %v857, %v858
    %v860 = vrot.slane %v859, 4
    %v861 = vadd.f32 %v859, %v860
    %v862 = vrot.slane %v861, 2
    %v863 = vadd.f32 %v861, %v862
    %v864 = vrot.slane %v863, 1
    %v865 = vadd.f32 %v863, %v864
    %v866 = vadd.f32 %v865, %v684
    %v867 = vmul.f32 %v866, %v802
    %v868 = vperm.slane %v636, 4
    %v869 = vmul.f32 %v868, %v114
    %v870 = vmul.f32 %v868, %v115
    %v871 = vmul.f32 %v869, 1.442695
    %v872 = vpow.pop %v871
    %v873 = vmul.f32 %v870, 1.442695
    %v874 = vpow.pop %v873
    %v875 = vperm.slane %v636, 5
    %v876 = vmul.f32 %v875, %v114
    %v877 = vmul.f32 %v875, %v115
    %v878 = vmul.f32 %v876, 1.442695
    %v879 = vpow.pop %v878
    %v880 = vmul.f32 %v877, 1.442695
    %v881 = vpow.pop %v880
    %v882 = vperm.slane %v636, 6
    %v883 = vmul.f32 %v882, %v114
    %v884 = vmul.f32 %v882, %v115
    %v885 = vmul.f32 %v883, 1.442695
    %v886 = vpow.pop %v885
    %v887 = vmul.f32 %v884, 1.442695
    %v888 = vpow.pop %v887
    %v889 = vperm.slane %v636, 7
    %v890 = vmul.f32 %v889, %v114
    %v891 = vmul.f32 %v889, %v115
    %v892 = vmul.f32 %v890, 1.442695
    %v893 = vpow.pop %v892
    %v894 = vmul.f32 %v891, 1.442695
    %v895 = vpow.pop %v894
    %896 = vset.pattern.permute.xlu0 4
    %897 = vperm.xlu0 %896, %v670
    %v898 = vpop.permute.xlu0 %897
    %900 = vset.pattern.permute.xlu0 4
    %901 = vperm.xlu0 %900, %v672
    %v902 = vpop.permute.xlu0 %901
    %v904 = vperm.slane %v679, 4
    %v905 = vmul.f32 %v898, %v904
    %v906 = vmul.f32 %v902, %v904
    %907 = vset.pattern.permute.xlu0 5
    %908 = vperm.xlu0 %907, %v670
    %v909 = vpop.permute.xlu0 %908
    %911 = vset.pattern.permute.xlu0 5
    %912 = vperm.xlu0 %911, %v672
    %v913 = vpop.permute.xlu0 %912
    %v915 = vperm.slane %v679, 5
    %v916 = vmul.f32 %v909, %v915
    %v917 = vmul.f32 %v913, %v915
    %918 = vset.pattern.permute.xlu0 6
    %919 = vperm.xlu0 %918, %v670
    %v920 = vpop.permute.xlu0 %919
    %922 = vset.pattern.permute.xlu0 6
    %923 = vperm.xlu0 %922, %v672
    %v924 = vpop.permute.xlu0 %923
    %v926 = vperm.slane %v679, 6
    %v927 = vmul.f32 %v920, %v926
    %v928 = vmul.f32 %v924, %v926
    %929 = vset.pattern.permute.xlu0 7
    %930 = vperm.xlu0 %929, %v670
    %v931 = vpop.permute.xlu0 %930
    %933 = vset.pattern.permute.xlu0 7
    %934 = vperm.xlu0 %933, %v672
    %v935 = vpop.permute.xlu0 %934
    %v937 = vperm.slane %v679, 7
    %v938 = vmul.f32 %v931, %v937
    %v939 = vmul.f32 %v935, %v937
    %v940 = vmul.f32 %v872, %v776
    %v941 = vmul.f32 %v874, %v777
    %v942 = vadd.f32 %v940, %v905
    %v943 = vadd.f32 %v941, %v906
    %v944 = vmul.f32 %v879, %v942
    %v945 = vmul.f32 %v881, %v943
    %v946 = vadd.f32 %v944, %v916
    %v947 = vadd.f32 %v945, %v917
    %v948 = vmul.f32 %v886, %v946
    %v949 = vmul.f32 %v888, %v947
    %v950 = vadd.f32 %v948, %v927
    %v951 = vadd.f32 %v949, %v928
    %v952 = vmul.f32 %v893, %v950
    %v953 = vmul.f32 %v895, %v951
    %v954 = vadd.f32 %v952, %v938
    %v955 = vadd.f32 %v953, %v939
    %956 = vset.pattern.permute.xlu0 4
    %957 = vperm.xlu0 %956, %v675
    %v958 = vpop.permute.xlu0 %957
    %960 = vset.pattern.permute.xlu0 4
    %961 = vperm.xlu0 %960, %v677
    %v962 = vpop.permute.xlu0 %961
    %v964 = vmul.f32 %v942, %v958
    %v965 = vmul.f32 %v943, %v962
    %v966 = vsel %vm542, %v964, 0.0
    %v967 = vsel %vm542, %v965, 0.0
    %v968 = vadd.f32 %v966, %v967
    %v969 = vrot.slane %v968, 4
    %v970 = vadd.f32 %v968, %v969
    %v971 = vrot.slane %v970, 2
    %v972 = vadd.f32 %v970, %v971
    %v973 = vrot.slane %v972, 1
    %v974 = vadd.f32 %v972, %v973
    %v975 = vadd.f32 %v974, %v684
    %v976 = vmul.f32 %v975, %v802
    %977 = vset.pattern.permute.xlu0 5
    %978 = vperm.xlu0 %977, %v675
    %v979 = vpop.permute.xlu0 %978
    %981 = vset.pattern.permute.xlu0 5
    %982 = vperm.xlu0 %981, %v677
    %v983 = vpop.permute.xlu0 %982
    %v985 = vmul.f32 %v946, %v979
    %v986 = vmul.f32 %v947, %v983
    %v987 = vsel %vm542, %v985, 0.0
    %v988 = vsel %vm542, %v986, 0.0
    %v989 = vadd.f32 %v987, %v988
    %v990 = vrot.slane %v989, 4
    %v991 = vadd.f32 %v989, %v990
    %v992 = vrot.slane %v991, 2
    %v993 = vadd.f32 %v991, %v992
    %v994 = vrot.slane %v993, 1
    %v995 = vadd.f32 %v993, %v994
    %v996 = vadd.f32 %v995, %v684
    %v997 = vmul.f32 %v996, %v802
    %998 = vset.pattern.permute.xlu0 6
    %999 = vperm.xlu0 %998, %v675
    %v1000 = vpop.permute.xlu0 %999
    %1002 = vset.pattern.permute.xlu0 6
    %1003 = vperm.xlu0 %1002, %v677
    %v1004 = vpop.permute.xlu0 %1003
    %v1006 = vmul.f32 %v950, %v1000
    %v1007 = vmul.f32 %v951, %v1004
    %v1008 = vsel %vm542, %v1006, 0.0
    %v1009 = vsel %vm542, %v1007, 0.0
    %v1010 = vadd.f32 %v1008, %v1009
    %v1011 = vrot.slane %v1010, 4
    %v1012 = vadd.f32 %v1010, %v1011
    %v1013 = vrot.slane %v1012, 2
    %v1014 = vadd.f32 %v1012, %v1013
    %v1015 = vrot.slane %v1014, 1
    %v1016 = vadd.f32 %v1014, %v1015
    %v1017 = vadd.f32 %v1016, %v684
    %v1018 = vmul.f32 %v1017, %v802
    %1019 = vset.pattern.permute.xlu0 7
    %1020 = vperm.xlu0 %1019, %v675
    %v1021 = vpop.permute.xlu0 %1020
    %1023 = vset.pattern.permute.xlu0 7
    %1024 = vperm.xlu0 %1023, %v677
    %v1025 = vpop.permute.xlu0 %1024
    %v1027 = vmul.f32 %v954, %v1021
    %v1028 = vmul.f32 %v955, %v1025
    %v1029 = vsel %vm542, %v1027, 0.0
    %v1030 = vsel %vm542, %v1028, 0.0
    %v1031 = vadd.f32 %v1029, %v1030
    %v1032 = vrot.slane %v1031, 4
    %v1033 = vadd.f32 %v1031, %v1032
    %v1034 = vrot.slane %v1033, 2
    %v1035 = vadd.f32 %v1033, %v1034
    %v1036 = vrot.slane %v1035, 1
    %v1037 = vadd.f32 %v1035, %v1036
    %v1038 = vadd.f32 %v1037, %v684
    %v1039 = vmul.f32 %v1038, %v802
    %v1040 = vperm.slane %v637, 0
    %v1041 = vmul.f32 %v1040, %v114
    %v1042 = vmul.f32 %v1040, %v115
    %v1043 = vmul.f32 %v1041, 1.442695
    %v1044 = vpow.pop %v1043
    %v1045 = vmul.f32 %v1042, 1.442695
    %v1046 = vpow.pop %v1045
    %v1047 = vperm.slane %v637, 1
    %v1048 = vmul.f32 %v1047, %v114
    %v1049 = vmul.f32 %v1047, %v115
    %v1050 = vmul.f32 %v1048, 1.442695
    %v1051 = vpow.pop %v1050
    %v1052 = vmul.f32 %v1049, 1.442695
    %v1053 = vpow.pop %v1052
    %v1054 = vperm.slane %v637, 2
    %v1055 = vmul.f32 %v1054, %v114
    %v1056 = vmul.f32 %v1054, %v115
    %v1057 = vmul.f32 %v1055, 1.442695
    %v1058 = vpow.pop %v1057
    %v1059 = vmul.f32 %v1056, 1.442695
    %v1060 = vpow.pop %v1059
    %v1061 = vperm.slane %v637, 3
    %v1062 = vmul.f32 %v1061, %v114
    %v1063 = vmul.f32 %v1061, %v115
    %v1064 = vmul.f32 %v1062, 1.442695
    %v1065 = vpow.pop %v1064
    %v1066 = vmul.f32 %v1063, 1.442695
    %v1067 = vpow.pop %v1066
    %1068 = vset.pattern.permute.xlu0 8
    %1069 = vperm.xlu0 %1068, %v670
    %v1070 = vpop.permute.xlu0 %1069
    %1072 = vset.pattern.permute.xlu0 8
    %1073 = vperm.xlu0 %1072, %v672
    %v1074 = vpop.permute.xlu0 %1073
    %v1076 = vperm.slane %v680, 0
    %v1077 = vmul.f32 %v1070, %v1076
    %v1078 = vmul.f32 %v1074, %v1076
    %1079 = vset.pattern.permute.xlu0 9
    %1080 = vperm.xlu0 %1079, %v670
    %v1081 = vpop.permute.xlu0 %1080
    %1083 = vset.pattern.permute.xlu0 9
    %1084 = vperm.xlu0 %1083, %v672
    %v1085 = vpop.permute.xlu0 %1084
    %v1087 = vperm.slane %v680, 1
    %v1088 = vmul.f32 %v1081, %v1087
    %v1089 = vmul.f32 %v1085, %v1087
    %1090 = vset.pattern.permute.xlu0 10
    %1091 = vperm.xlu0 %1090, %v670
    %v1092 = vpop.permute.xlu0 %1091
    %1094 = vset.pattern.permute.xlu0 10
    %1095 = vperm.xlu0 %1094, %v672
    %v1096 = vpop.permute.xlu0 %1095
    %v1098 = vperm.slane %v680, 2
    %v1099 = vmul.f32 %v1092, %v1098
    %v1100 = vmul.f32 %v1096, %v1098
    %1101 = vset.pattern.permute.xlu0 11
    %1102 = vperm.xlu0 %1101, %v670
    %v1103 = vpop.permute.xlu0 %1102
    %1105 = vset.pattern.permute.xlu0 11
    %1106 = vperm.xlu0 %1105, %v672
    %v1107 = vpop.permute.xlu0 %1106
    %v1109 = vperm.slane %v680, 3
    %v1110 = vmul.f32 %v1103, %v1109
    %v1111 = vmul.f32 %v1107, %v1109
    %v1112 = vmul.f32 %v1044, %v954
    %v1113 = vmul.f32 %v1046, %v955
    %v1114 = vadd.f32 %v1112, %v1077
    %v1115 = vadd.f32 %v1113, %v1078
    %v1116 = vmul.f32 %v1051, %v1114
    %v1117 = vmul.f32 %v1053, %v1115
    %v1118 = vadd.f32 %v1116, %v1088
    %v1119 = vadd.f32 %v1117, %v1089
    %v1120 = vmul.f32 %v1058, %v1118
    %v1121 = vmul.f32 %v1060, %v1119
    %v1122 = vadd.f32 %v1120, %v1099
    %v1123 = vadd.f32 %v1121, %v1100
    %v1124 = vmul.f32 %v1065, %v1122
    %v1125 = vmul.f32 %v1067, %v1123
    %v1126 = vadd.f32 %v1124, %v1110
    %v1127 = vadd.f32 %v1125, %v1111
    %1128 = vset.pattern.permute.xlu0 8
    %1129 = vperm.xlu0 %1128, %v675
    %v1130 = vpop.permute.xlu0 %1129
    %1132 = vset.pattern.permute.xlu0 8
    %1133 = vperm.xlu0 %1132, %v677
    %v1134 = vpop.permute.xlu0 %1133
    %v1136 = vmul.f32 %v1114, %v1130
    %v1137 = vmul.f32 %v1115, %v1134
    %v1138 = vsel %vm542, %v1136, 0.0
    %v1139 = vsel %vm542, %v1137, 0.0
    %v1140 = vadd.f32 %v1138, %v1139
    %v1141 = vrot.slane %v1140, 4
    %v1142 = vadd.f32 %v1140, %v1141
    %v1143 = vrot.slane %v1142, 2
    %v1144 = vadd.f32 %v1142, %v1143
    %v1145 = vrot.slane %v1144, 1
    %v1146 = vadd.f32 %v1144, %v1145
    %v1147 = vadd.f32 %v1146, %v685
    %1149 = vrot.lane.b32.xlu0 %v345, 64
    %v1150 = vpop.permute.xlu0 %1149
    %v1152 = vmul.f32 %v1147, %v1150
    %1153 = vset.pattern.permute.xlu0 9
    %1154 = vperm.xlu0 %1153, %v675
    %v1155 = vpop.permute.xlu0 %1154
    %1157 = vset.pattern.permute.xlu0 9
    %1158 = vperm.xlu0 %1157, %v677
    %v1159 = vpop.permute.xlu0 %1158
    %v1161 = vmul.f32 %v1118, %v1155
    %v1162 = vmul.f32 %v1119, %v1159
    %v1163 = vsel %vm542, %v1161, 0.0
    %v1164 = vsel %vm542, %v1162, 0.0
    %v1165 = vadd.f32 %v1163, %v1164
    %v1166 = vrot.slane %v1165, 4
    %v1167 = vadd.f32 %v1165, %v1166
    %v1168 = vrot.slane %v1167, 2
    %v1169 = vadd.f32 %v1167, %v1168
    %v1170 = vrot.slane %v1169, 1
    %v1171 = vadd.f32 %v1169, %v1170
    %v1172 = vadd.f32 %v1171, %v685
    %v1173 = vmul.f32 %v1172, %v1150
    %1174 = vset.pattern.permute.xlu0 10
    %1175 = vperm.xlu0 %1174, %v675
    %v1176 = vpop.permute.xlu0 %1175
    %1178 = vset.pattern.permute.xlu0 10
    %1179 = vperm.xlu0 %1178, %v677
    %v1180 = vpop.permute.xlu0 %1179
    %v1182 = vmul.f32 %v1122, %v1176
    %v1183 = vmul.f32 %v1123, %v1180
    %v1184 = vsel %vm542, %v1182, 0.0
    %v1185 = vsel %vm542, %v1183, 0.0
    %v1186 = vadd.f32 %v1184, %v1185
    %v1187 = vrot.slane %v1186, 4
    %v1188 = vadd.f32 %v1186, %v1187
    %v1189 = vrot.slane %v1188, 2
    %v1190 = vadd.f32 %v1188, %v1189
    %v1191 = vrot.slane %v1190, 1
    %v1192 = vadd.f32 %v1190, %v1191
    %v1193 = vadd.f32 %v1192, %v685
    %v1194 = vmul.f32 %v1193, %v1150
    %1195 = vset.pattern.permute.xlu0 11
    %1196 = vperm.xlu0 %1195, %v675
    %v1197 = vpop.permute.xlu0 %1196
    %1199 = vset.pattern.permute.xlu0 11
    %1200 = vperm.xlu0 %1199, %v677
    %v1201 = vpop.permute.xlu0 %1200
    %v1203 = vmul.f32 %v1126, %v1197
    %v1204 = vmul.f32 %v1127, %v1201
    %v1205 = vsel %vm542, %v1203, 0.0
    %v1206 = vsel %vm542, %v1204, 0.0
    %v1207 = vadd.f32 %v1205, %v1206
    %v1208 = vrot.slane %v1207, 4
    %v1209 = vadd.f32 %v1207, %v1208
    %v1210 = vrot.slane %v1209, 2
    %v1211 = vadd.f32 %v1209, %v1210
    %v1212 = vrot.slane %v1211, 1
    %v1213 = vadd.f32 %v1211, %v1212
    %v1214 = vadd.f32 %v1213, %v685
    %v1215 = vmul.f32 %v1214, %v1150
    %v1216 = vperm.slane %v637, 4
    %v1217 = vmul.f32 %v1216, %v114
    %v1218 = vmul.f32 %v1216, %v115
    %v1219 = vmul.f32 %v1217, 1.442695
    %v1220 = vpow.pop %v1219
    %v1221 = vmul.f32 %v1218, 1.442695
    %v1222 = vpow.pop %v1221
    %v1223 = vperm.slane %v637, 5
    %v1224 = vmul.f32 %v1223, %v114
    %v1225 = vmul.f32 %v1223, %v115
    %v1226 = vmul.f32 %v1224, 1.442695
    %v1227 = vpow.pop %v1226
    %v1228 = vmul.f32 %v1225, 1.442695
    %v1229 = vpow.pop %v1228
    %v1230 = vperm.slane %v637, 6
    %v1231 = vmul.f32 %v1230, %v114
    %v1232 = vmul.f32 %v1230, %v115
    %v1233 = vmul.f32 %v1231, 1.442695
    %v1234 = vpow.pop %v1233
    %v1235 = vmul.f32 %v1232, 1.442695
    %v1236 = vpow.pop %v1235
    %v1237 = vperm.slane %v637, 7
    %v1238 = vmul.f32 %v1237, %v114
    %v1239 = vmul.f32 %v1237, %v115
    %v1240 = vmul.f32 %v1238, 1.442695
    %v1241 = vpow.pop %v1240
    %v1242 = vmul.f32 %v1239, 1.442695
    %v1243 = vpow.pop %v1242
    %1244 = vset.pattern.permute.xlu0 12
    %1245 = vperm.xlu0 %1244, %v670
    %v1246 = vpop.permute.xlu0 %1245
    %1248 = vset.pattern.permute.xlu0 12
    %1249 = vperm.xlu0 %1248, %v672
    %v1250 = vpop.permute.xlu0 %1249
    %v1252 = vperm.slane %v680, 4
    %v1253 = vmul.f32 %v1246, %v1252
    %v1254 = vmul.f32 %v1250, %v1252
    %1255 = vset.pattern.permute.xlu0 13
    %1256 = vperm.xlu0 %1255, %v670
    %v1257 = vpop.permute.xlu0 %1256
    %1259 = vset.pattern.permute.xlu0 13
    %1260 = vperm.xlu0 %1259, %v672
    %v1261 = vpop.permute.xlu0 %1260
    %v1263 = vperm.slane %v680, 5
    %v1264 = vmul.f32 %v1257, %v1263
    %v1265 = vmul.f32 %v1261, %v1263
    %1266 = vset.pattern.permute.xlu0 14
    %1267 = vperm.xlu0 %1266, %v670
    %v1268 = vpop.permute.xlu0 %1267
    %1270 = vset.pattern.permute.xlu0 14
    %1271 = vperm.xlu0 %1270, %v672
    %v1272 = vpop.permute.xlu0 %1271
    %v1274 = vperm.slane %v680, 6
    %v1275 = vmul.f32 %v1268, %v1274
    %v1276 = vmul.f32 %v1272, %v1274
    %1277 = vset.pattern.permute.xlu0 15
    %1278 = vperm.xlu0 %1277, %v670
    %v1279 = vpop.permute.xlu0 %1278
    %1281 = vset.pattern.permute.xlu0 15
    %1282 = vperm.xlu0 %1281, %v672
    %v1283 = vpop.permute.xlu0 %1282
    %v1285 = vperm.slane %v680, 7
    %v1286 = vmul.f32 %v1279, %v1285
    %v1287 = vmul.f32 %v1283, %v1285
    %v1288 = vmul.f32 %v1220, %v1126
    %v1289 = vmul.f32 %v1222, %v1127
    %v1290 = vadd.f32 %v1288, %v1253
    %v1291 = vadd.f32 %v1289, %v1254
    %v1292 = vmul.f32 %v1227, %v1290
    %v1293 = vmul.f32 %v1229, %v1291
    %v1294 = vadd.f32 %v1292, %v1264
    %v1295 = vadd.f32 %v1293, %v1265
    %v1296 = vmul.f32 %v1234, %v1294
    %v1297 = vmul.f32 %v1236, %v1295
    %v1298 = vadd.f32 %v1296, %v1275
    %v1299 = vadd.f32 %v1297, %v1276
    %v1300 = vmul.f32 %v1241, %v1298
    %v1301 = vmul.f32 %v1243, %v1299
    %v1302 = vadd.f32 %v1300, %v1286
    %v1303 = vadd.f32 %v1301, %v1287
    %1304 = vset.pattern.permute.xlu0 12
    %1305 = vperm.xlu0 %1304, %v675
    %v1306 = vpop.permute.xlu0 %1305
    %1308 = vset.pattern.permute.xlu0 12
    %1309 = vperm.xlu0 %1308, %v677
    %v1310 = vpop.permute.xlu0 %1309
    %v1312 = vmul.f32 %v1290, %v1306
    %v1313 = vmul.f32 %v1291, %v1310
    %v1314 = vsel %vm542, %v1312, 0.0
    %v1315 = vsel %vm542, %v1313, 0.0
    %v1316 = vadd.f32 %v1314, %v1315
    %v1317 = vrot.slane %v1316, 4
    %v1318 = vadd.f32 %v1316, %v1317
    %v1319 = vrot.slane %v1318, 2
    %v1320 = vadd.f32 %v1318, %v1319
    %v1321 = vrot.slane %v1320, 1
    %v1322 = vadd.f32 %v1320, %v1321
    %v1323 = vadd.f32 %v1322, %v685
    %v1324 = vmul.f32 %v1323, %v1150
    %1325 = vset.pattern.permute.xlu0 13
    %1326 = vperm.xlu0 %1325, %v675
    %v1327 = vpop.permute.xlu0 %1326
    %1329 = vset.pattern.permute.xlu0 13
    %1330 = vperm.xlu0 %1329, %v677
    %v1331 = vpop.permute.xlu0 %1330
    %v1333 = vmul.f32 %v1294, %v1327
    %v1334 = vmul.f32 %v1295, %v1331
    %v1335 = vsel %vm542, %v1333, 0.0
    %v1336 = vsel %vm542, %v1334, 0.0
    %v1337 = vadd.f32 %v1335, %v1336
    %v1338 = vrot.slane %v1337, 4
    %v1339 = vadd.f32 %v1337, %v1338
    %v1340 = vrot.slane %v1339, 2
    %v1341 = vadd.f32 %v1339, %v1340
    %v1342 = vrot.slane %v1341, 1
    %v1343 = vadd.f32 %v1341, %v1342
    %v1344 = vadd.f32 %v1343, %v685
    %v1345 = vmul.f32 %v1344, %v1150
    %1346 = vset.pattern.permute.xlu0 14
    %1347 = vperm.xlu0 %1346, %v675
    %v1348 = vpop.permute.xlu0 %1347
    %1350 = vset.pattern.permute.xlu0 14
    %1351 = vperm.xlu0 %1350, %v677
    %v1352 = vpop.permute.xlu0 %1351
    %v1354 = vmul.f32 %v1298, %v1348
    %v1355 = vmul.f32 %v1299, %v1352
    %v1356 = vsel %vm542, %v1354, 0.0
    %v1357 = vsel %vm542, %v1355, 0.0
    %v1358 = vadd.f32 %v1356, %v1357
    %v1359 = vrot.slane %v1358, 4
    %v1360 = vadd.f32 %v1358, %v1359
    %v1361 = vrot.slane %v1360, 2
    %v1362 = vadd.f32 %v1360, %v1361
    %v1363 = vrot.slane %v1362, 1
    %v1364 = vadd.f32 %v1362, %v1363
    %v1365 = vadd.f32 %v1364, %v685
    %v1366 = vmul.f32 %v1365, %v1150
    %1367 = vset.pattern.permute.xlu0 15
    %1368 = vperm.xlu0 %1367, %v675
    %v1369 = vpop.permute.xlu0 %1368
    %1371 = vset.pattern.permute.xlu0 15
    %1372 = vperm.xlu0 %1371, %v677
    %v1373 = vpop.permute.xlu0 %1372
    %v1375 = vmul.f32 %v1302, %v1369
    %v1376 = vmul.f32 %v1303, %v1373
    %v1377 = vsel %vm542, %v1375, 0.0
    %v1378 = vsel %vm542, %v1376, 0.0
    %v1379 = vadd.f32 %v1377, %v1378
    %v1380 = vrot.slane %v1379, 4
    %v1381 = vadd.f32 %v1379, %v1380
    %v1382 = vrot.slane %v1381, 2
    %v1383 = vadd.f32 %v1381, %v1382
    %v1384 = vrot.slane %v1383, 1
    %v1385 = vadd.f32 %v1383, %v1384
    %v1386 = vadd.f32 %v1385, %v685
    %v1387 = vmul.f32 %v1386, %v1150
    %v1388 = vperm.slane %v638, 0
    %v1389 = vmul.f32 %v1388, %v114
    %v1390 = vmul.f32 %v1388, %v115
    %v1391 = vmul.f32 %v1389, 1.442695
    %v1392 = vpow.pop %v1391
    %v1393 = vmul.f32 %v1390, 1.442695
    %v1394 = vpow.pop %v1393
    %v1395 = vperm.slane %v638, 1
    %v1396 = vmul.f32 %v1395, %v114
    %v1397 = vmul.f32 %v1395, %v115
    %v1398 = vmul.f32 %v1396, 1.442695
    %v1399 = vpow.pop %v1398
    %v1400 = vmul.f32 %v1397, 1.442695
    %v1401 = vpow.pop %v1400
    %v1402 = vperm.slane %v638, 2
    %v1403 = vmul.f32 %v1402, %v114
    %v1404 = vmul.f32 %v1402, %v115
    %v1405 = vmul.f32 %v1403, 1.442695
    %v1406 = vpow.pop %v1405
    %v1407 = vmul.f32 %v1404, 1.442695
    %v1408 = vpow.pop %v1407
    %v1409 = vperm.slane %v638, 3
    %v1410 = vmul.f32 %v1409, %v114
    %v1411 = vmul.f32 %v1409, %v115
    %v1412 = vmul.f32 %v1410, 1.442695
    %v1413 = vpow.pop %v1412
    %v1414 = vmul.f32 %v1411, 1.442695
    %v1415 = vpow.pop %v1414
    %1416 = vset.pattern.permute.xlu0 16
    %1417 = vperm.xlu0 %1416, %v670
    %v1418 = vpop.permute.xlu0 %1417
    %1420 = vset.pattern.permute.xlu0 16
    %1421 = vperm.xlu0 %1420, %v672
    %v1422 = vpop.permute.xlu0 %1421
    %v1424 = vperm.slane %v681, 0
    %v1425 = vmul.f32 %v1418, %v1424
    %v1426 = vmul.f32 %v1422, %v1424
    %1427 = vset.pattern.permute.xlu0 17
    %1428 = vperm.xlu0 %1427, %v670
    %v1429 = vpop.permute.xlu0 %1428
    %1431 = vset.pattern.permute.xlu0 17
    %1432 = vperm.xlu0 %1431, %v672
    %v1433 = vpop.permute.xlu0 %1432
    %v1435 = vperm.slane %v681, 1
    %v1436 = vmul.f32 %v1429, %v1435
    %v1437 = vmul.f32 %v1433, %v1435
    %1438 = vset.pattern.permute.xlu0 18
    %1439 = vperm.xlu0 %1438, %v670
    %v1440 = vpop.permute.xlu0 %1439
    %1442 = vset.pattern.permute.xlu0 18
    %1443 = vperm.xlu0 %1442, %v672
    %v1444 = vpop.permute.xlu0 %1443
    %v1446 = vperm.slane %v681, 2
    %v1447 = vmul.f32 %v1440, %v1446
    %v1448 = vmul.f32 %v1444, %v1446
    %1449 = vset.pattern.permute.xlu0 19
    %1450 = vperm.xlu0 %1449, %v670
    %v1451 = vpop.permute.xlu0 %1450
    %1453 = vset.pattern.permute.xlu0 19
    %1454 = vperm.xlu0 %1453, %v672
    %v1455 = vpop.permute.xlu0 %1454
    %v1457 = vperm.slane %v681, 3
    %v1458 = vmul.f32 %v1451, %v1457
    %v1459 = vmul.f32 %v1455, %v1457
    %v1460 = vmul.f32 %v1392, 0.0
    %v1461 = vmul.f32 %v1394, 0.0
    %v1462 = vadd.f32 %v1460, %v1425
    %v1463 = vadd.f32 %v1461, %v1426
    %v1464 = vmul.f32 %v1399, %v1462
    %v1465 = vmul.f32 %v1401, %v1463
    %v1466 = vadd.f32 %v1464, %v1436
    %v1467 = vadd.f32 %v1465, %v1437
    %v1468 = vmul.f32 %v1406, %v1466
    %v1469 = vmul.f32 %v1408, %v1467
    %v1470 = vadd.f32 %v1468, %v1447
    %v1471 = vadd.f32 %v1469, %v1448
    %v1472 = vmul.f32 %v1413, %v1470
    %v1473 = vmul.f32 %v1415, %v1471
    %v1474 = vadd.f32 %v1472, %v1458
    %v1475 = vadd.f32 %v1473, %v1459
    %1476 = vset.pattern.permute.xlu0 16
    %1477 = vperm.xlu0 %1476, %v675
    %v1478 = vpop.permute.xlu0 %1477
    %1480 = vset.pattern.permute.xlu0 16
    %1481 = vperm.xlu0 %1480, %v677
    %v1482 = vpop.permute.xlu0 %1481
    %v1484 = vmul.f32 %v1462, %v1478
    %v1485 = vmul.f32 %v1463, %v1482
    %v1486 = vsel %vm542, %v1484, 0.0
    %v1487 = vsel %vm542, %v1485, 0.0
    %v1488 = vadd.f32 %v1486, %v1487
    %v1489 = vrot.slane %v1488, 4
    %v1490 = vadd.f32 %v1488, %v1489
    %v1491 = vrot.slane %v1490, 2
    %v1492 = vadd.f32 %v1490, %v1491
    %v1493 = vrot.slane %v1492, 1
    %v1494 = vadd.f32 %v1492, %v1493
    %v1495 = vadd.f32 %v1494, %v686
    %1497 = vrot.lane.b32.xlu0 %v346, 64
    %v1498 = vpop.permute.xlu0 %1497
    %v1500 = vmul.f32 %v1495, %v1498
    %1501 = vset.pattern.permute.xlu0 17
    %1502 = vperm.xlu0 %1501, %v675
    %v1503 = vpop.permute.xlu0 %1502
    %1505 = vset.pattern.permute.xlu0 17
    %1506 = vperm.xlu0 %1505, %v677
    %v1507 = vpop.permute.xlu0 %1506
    %v1509 = vmul.f32 %v1466, %v1503
    %v1510 = vmul.f32 %v1467, %v1507
    %v1511 = vsel %vm542, %v1509, 0.0
    %v1512 = vsel %vm542, %v1510, 0.0
    %v1513 = vadd.f32 %v1511, %v1512
    %v1514 = vrot.slane %v1513, 4
    %v1515 = vadd.f32 %v1513, %v1514
    %v1516 = vrot.slane %v1515, 2
    %v1517 = vadd.f32 %v1515, %v1516
    %v1518 = vrot.slane %v1517, 1
    %v1519 = vadd.f32 %v1517, %v1518
    %v1520 = vadd.f32 %v1519, %v686
    %v1521 = vmul.f32 %v1520, %v1498
    %1522 = vset.pattern.permute.xlu0 18
    %1523 = vperm.xlu0 %1522, %v675
    %v1524 = vpop.permute.xlu0 %1523
    %1526 = vset.pattern.permute.xlu0 18
    %1527 = vperm.xlu0 %1526, %v677
    %v1528 = vpop.permute.xlu0 %1527
    %v1530 = vmul.f32 %v1470, %v1524
    %v1531 = vmul.f32 %v1471, %v1528
    %v1532 = vsel %vm542, %v1530, 0.0
    %v1533 = vsel %vm542, %v1531, 0.0
    %v1534 = vadd.f32 %v1532, %v1533
    %v1535 = vrot.slane %v1534, 4
    %v1536 = vadd.f32 %v1534, %v1535
    %v1537 = vrot.slane %v1536, 2
    %v1538 = vadd.f32 %v1536, %v1537
    %v1539 = vrot.slane %v1538, 1
    %v1540 = vadd.f32 %v1538, %v1539
    %v1541 = vadd.f32 %v1540, %v686
    %v1542 = vmul.f32 %v1541, %v1498
    %1543 = vset.pattern.permute.xlu0 19
    %1544 = vperm.xlu0 %1543, %v675
    %v1545 = vpop.permute.xlu0 %1544
    %1547 = vset.pattern.permute.xlu0 19
    %1548 = vperm.xlu0 %1547, %v677
    %v1549 = vpop.permute.xlu0 %1548
    %v1551 = vmul.f32 %v1474, %v1545
    %v1552 = vmul.f32 %v1475, %v1549
    %v1553 = vsel %vm542, %v1551, 0.0
    %v1554 = vsel %vm542, %v1552, 0.0
    %v1555 = vadd.f32 %v1553, %v1554
    %v1556 = vrot.slane %v1555, 4
    %v1557 = vadd.f32 %v1555, %v1556
    %v1558 = vrot.slane %v1557, 2
    %v1559 = vadd.f32 %v1557, %v1558
    %v1560 = vrot.slane %v1559, 1
    %v1561 = vadd.f32 %v1559, %v1560
    %v1562 = vadd.f32 %v1561, %v686
    %v1563 = vmul.f32 %v1562, %v1498
    %v1564 = vperm.slane %v638, 4
    %v1565 = vmul.f32 %v1564, %v114
    %v1566 = vmul.f32 %v1564, %v115
    %v1567 = vmul.f32 %v1565, 1.442695
    %v1568 = vpow.pop %v1567
    %v1569 = vmul.f32 %v1566, 1.442695
    %v1570 = vpow.pop %v1569
    %v1571 = vperm.slane %v638, 5
    %v1572 = vmul.f32 %v1571, %v114
    %v1573 = vmul.f32 %v1571, %v115
    %v1574 = vmul.f32 %v1572, 1.442695
    %v1575 = vpow.pop %v1574
    %v1576 = vmul.f32 %v1573, 1.442695
    %v1577 = vpow.pop %v1576
    %v1578 = vperm.slane %v638, 6
    %v1579 = vmul.f32 %v1578, %v114
    %v1580 = vmul.f32 %v1578, %v115
    %v1581 = vmul.f32 %v1579, 1.442695
    %v1582 = vpow.pop %v1581
    %v1583 = vmul.f32 %v1580, 1.442695
    %v1584 = vpow.pop %v1583
    %v1585 = vperm.slane %v638, 7
    %v1586 = vmul.f32 %v1585, %v114
    %v1587 = vmul.f32 %v1585, %v115
    %v1588 = vmul.f32 %v1586, 1.442695
    %v1589 = vpow.pop %v1588
    %v1590 = vmul.f32 %v1587, 1.442695
    %v1591 = vpow.pop %v1590
    %1592 = vset.pattern.permute.xlu0 20
    %1593 = vperm.xlu0 %1592, %v670
    %v1594 = vpop.permute.xlu0 %1593
    %1596 = vset.pattern.permute.xlu0 20
    %1597 = vperm.xlu0 %1596, %v672
    %v1598 = vpop.permute.xlu0 %1597
    %v1600 = vperm.slane %v681, 4
    %v1601 = vmul.f32 %v1594, %v1600
    %v1602 = vmul.f32 %v1598, %v1600
    %1603 = vset.pattern.permute.xlu0 21
    %1604 = vperm.xlu0 %1603, %v670
    %v1605 = vpop.permute.xlu0 %1604
    %1607 = vset.pattern.permute.xlu0 21
    %1608 = vperm.xlu0 %1607, %v672
    %v1609 = vpop.permute.xlu0 %1608
    %v1611 = vperm.slane %v681, 5
    %v1612 = vmul.f32 %v1605, %v1611
    %v1613 = vmul.f32 %v1609, %v1611
    %1614 = vset.pattern.permute.xlu0 22
    %1615 = vperm.xlu0 %1614, %v670
    %v1616 = vpop.permute.xlu0 %1615
    %1618 = vset.pattern.permute.xlu0 22
    %1619 = vperm.xlu0 %1618, %v672
    %v1620 = vpop.permute.xlu0 %1619
    %v1622 = vperm.slane %v681, 6
    %v1623 = vmul.f32 %v1616, %v1622
    %v1624 = vmul.f32 %v1620, %v1622
    %1625 = vset.pattern.permute.xlu0 23
    %1626 = vperm.xlu0 %1625, %v670
    %v1627 = vpop.permute.xlu0 %1626
    %1629 = vset.pattern.permute.xlu0 23
    %1630 = vperm.xlu0 %1629, %v672
    %v1631 = vpop.permute.xlu0 %1630
    %v1633 = vperm.slane %v681, 7
    %v1634 = vmul.f32 %v1627, %v1633
    %v1635 = vmul.f32 %v1631, %v1633
    %v1636 = vmul.f32 %v1568, %v1474
    %v1637 = vmul.f32 %v1570, %v1475
    %v1638 = vadd.f32 %v1636, %v1601
    %v1639 = vadd.f32 %v1637, %v1602
    %v1640 = vmul.f32 %v1575, %v1638
    %v1641 = vmul.f32 %v1577, %v1639
    %v1642 = vadd.f32 %v1640, %v1612
    %v1643 = vadd.f32 %v1641, %v1613
    %v1644 = vmul.f32 %v1582, %v1642
    %v1645 = vmul.f32 %v1584, %v1643
    %v1646 = vadd.f32 %v1644, %v1623
    %v1647 = vadd.f32 %v1645, %v1624
    %v1648 = vmul.f32 %v1589, %v1646
    %v1649 = vmul.f32 %v1591, %v1647
    %v1650 = vadd.f32 %v1648, %v1634
    %v1651 = vadd.f32 %v1649, %v1635
    %1652 = vset.pattern.permute.xlu0 20
    %1653 = vperm.xlu0 %1652, %v675
    %v1654 = vpop.permute.xlu0 %1653
    %1656 = vset.pattern.permute.xlu0 20
    %1657 = vperm.xlu0 %1656, %v677
    %v1658 = vpop.permute.xlu0 %1657
    %v1660 = vmul.f32 %v1638, %v1654
    %v1661 = vmul.f32 %v1639, %v1658
    %v1662 = vsel %vm542, %v1660, 0.0
    %v1663 = vsel %vm542, %v1661, 0.0
    %v1664 = vadd.f32 %v1662, %v1663
    %v1665 = vrot.slane %v1664, 4
    %v1666 = vadd.f32 %v1664, %v1665
    %v1667 = vrot.slane %v1666, 2
    %v1668 = vadd.f32 %v1666, %v1667
    %v1669 = vrot.slane %v1668, 1
    %v1670 = vadd.f32 %v1668, %v1669
    %v1671 = vadd.f32 %v1670, %v686
    %v1672 = vmul.f32 %v1671, %v1498
    %1673 = vset.pattern.permute.xlu0 21
    %1674 = vperm.xlu0 %1673, %v675
    %v1675 = vpop.permute.xlu0 %1674
    %1677 = vset.pattern.permute.xlu0 21
    %1678 = vperm.xlu0 %1677, %v677
    %v1679 = vpop.permute.xlu0 %1678
    %v1681 = vmul.f32 %v1642, %v1675
    %v1682 = vmul.f32 %v1643, %v1679
    %v1683 = vsel %vm542, %v1681, 0.0
    %v1684 = vsel %vm542, %v1682, 0.0
    %v1685 = vadd.f32 %v1683, %v1684
    %v1686 = vrot.slane %v1685, 4
    %v1687 = vadd.f32 %v1685, %v1686
    %v1688 = vrot.slane %v1687, 2
    %v1689 = vadd.f32 %v1687, %v1688
    %v1690 = vrot.slane %v1689, 1
    %v1691 = vadd.f32 %v1689, %v1690
    %v1692 = vadd.f32 %v1691, %v686
    %v1693 = vmul.f32 %v1692, %v1498
    %1694 = vset.pattern.permute.xlu0 22
    %1695 = vperm.xlu0 %1694, %v675
    %v1696 = vpop.permute.xlu0 %1695
    %1698 = vset.pattern.permute.xlu0 22
    %1699 = vperm.xlu0 %1698, %v677
    %v1700 = vpop.permute.xlu0 %1699
    %v1702 = vmul.f32 %v1646, %v1696
    %v1703 = vmul.f32 %v1647, %v1700
    %v1704 = vsel %vm542, %v1702, 0.0
    %v1705 = vsel %vm542, %v1703, 0.0
    %v1706 = vadd.f32 %v1704, %v1705
    %v1707 = vrot.slane %v1706, 4
    %v1708 = vadd.f32 %v1706, %v1707
    %v1709 = vrot.slane %v1708, 2
    %v1710 = vadd.f32 %v1708, %v1709
    %v1711 = vrot.slane %v1710, 1
    %v1712 = vadd.f32 %v1710, %v1711
    %v1713 = vadd.f32 %v1712, %v686
    %v1714 = vmul.f32 %v1713, %v1498
    %1715 = vset.pattern.permute.xlu0 23
    %1716 = vperm.xlu0 %1715, %v675
    %v1717 = vpop.permute.xlu0 %1716
    %1719 = vset.pattern.permute.xlu0 23
    %1720 = vperm.xlu0 %1719, %v677
    %v1721 = vpop.permute.xlu0 %1720
    %v1723 = vmul.f32 %v1650, %v1717
    %v1724 = vmul.f32 %v1651, %v1721
    %v1725 = vsel %vm542, %v1723, 0.0
    %v1726 = vsel %vm542, %v1724, 0.0
    %v1727 = vadd.f32 %v1725, %v1726
    %v1728 = vrot.slane %v1727, 4
    %v1729 = vadd.f32 %v1727, %v1728
    %v1730 = vrot.slane %v1729, 2
    %v1731 = vadd.f32 %v1729, %v1730
    %v1732 = vrot.slane %v1731, 1
    %v1733 = vadd.f32 %v1731, %v1732
    %v1734 = vadd.f32 %v1733, %v686
    %v1735 = vmul.f32 %v1734, %v1498
    %v1736 = vperm.slane %v639, 0
    %v1737 = vmul.f32 %v1736, %v114
    %v1738 = vmul.f32 %v1736, %v115
    %v1739 = vmul.f32 %v1737, 1.442695
    %v1740 = vpow.pop %v1739
    %v1741 = vmul.f32 %v1738, 1.442695
    %v1742 = vpow.pop %v1741
    %v1743 = vperm.slane %v639, 1
    %v1744 = vmul.f32 %v1743, %v114
    %v1745 = vmul.f32 %v1743, %v115
    %v1746 = vmul.f32 %v1744, 1.442695
    %v1747 = vpow.pop %v1746
    %v1748 = vmul.f32 %v1745, 1.442695
    %v1749 = vpow.pop %v1748
    %v1750 = vperm.slane %v639, 2
    %v1751 = vmul.f32 %v1750, %v114
    %v1752 = vmul.f32 %v1750, %v115
    %v1753 = vmul.f32 %v1751, 1.442695
    %v1754 = vpow.pop %v1753
    %v1755 = vmul.f32 %v1752, 1.442695
    %v1756 = vpow.pop %v1755
    %v1757 = vperm.slane %v639, 3
    %v1758 = vmul.f32 %v1757, %v114
    %v1759 = vmul.f32 %v1757, %v115
    %v1760 = vmul.f32 %v1758, 1.442695
    %v1761 = vpow.pop %v1760
    %v1762 = vmul.f32 %v1759, 1.442695
    %v1763 = vpow.pop %v1762
    %1764 = vset.pattern.permute.xlu0 24
    %1765 = vperm.xlu0 %1764, %v670
    %v1766 = vpop.permute.xlu0 %1765
    %1768 = vset.pattern.permute.xlu0 24
    %1769 = vperm.xlu0 %1768, %v672
    %v1770 = vpop.permute.xlu0 %1769
    %v1772 = vperm.slane %v682, 0
    %v1773 = vmul.f32 %v1766, %v1772
    %v1774 = vmul.f32 %v1770, %v1772
    %1775 = vset.pattern.permute.xlu0 25
    %1776 = vperm.xlu0 %1775, %v670
    %v1777 = vpop.permute.xlu0 %1776
    %1779 = vset.pattern.permute.xlu0 25
    %1780 = vperm.xlu0 %1779, %v672
    %v1781 = vpop.permute.xlu0 %1780
    %v1783 = vperm.slane %v682, 1
    %v1784 = vmul.f32 %v1777, %v1783
    %v1785 = vmul.f32 %v1781, %v1783
    %1786 = vset.pattern.permute.xlu0 26
    %1787 = vperm.xlu0 %1786, %v670
    %v1788 = vpop.permute.xlu0 %1787
    %1790 = vset.pattern.permute.xlu0 26
    %1791 = vperm.xlu0 %1790, %v672
    %v1792 = vpop.permute.xlu0 %1791
    %v1794 = vperm.slane %v682, 2
    %v1795 = vmul.f32 %v1788, %v1794
    %v1796 = vmul.f32 %v1792, %v1794
    %1797 = vset.pattern.permute.xlu0 27
    %1798 = vperm.xlu0 %1797, %v670
    %v1799 = vpop.permute.xlu0 %1798
    %1801 = vset.pattern.permute.xlu0 27
    %1802 = vperm.xlu0 %1801, %v672
    %v1803 = vpop.permute.xlu0 %1802
    %v1805 = vperm.slane %v682, 3
    %v1806 = vmul.f32 %v1799, %v1805
    %v1807 = vmul.f32 %v1803, %v1805
    %v1808 = vmul.f32 %v1740, %v1650
    %v1809 = vmul.f32 %v1742, %v1651
    %v1810 = vadd.f32 %v1808, %v1773
    %v1811 = vadd.f32 %v1809, %v1774
    %v1812 = vmul.f32 %v1747, %v1810
    %v1813 = vmul.f32 %v1749, %v1811
    %v1814 = vadd.f32 %v1812, %v1784
    %v1815 = vadd.f32 %v1813, %v1785
    %v1816 = vmul.f32 %v1754, %v1814
    %v1817 = vmul.f32 %v1756, %v1815
    %v1818 = vadd.f32 %v1816, %v1795
    %v1819 = vadd.f32 %v1817, %v1796
    %v1820 = vmul.f32 %v1761, %v1818
    %v1821 = vmul.f32 %v1763, %v1819
    %v1822 = vadd.f32 %v1820, %v1806
    %v1823 = vadd.f32 %v1821, %v1807
    %1824 = vset.pattern.permute.xlu0 24
    %1825 = vperm.xlu0 %1824, %v675
    %v1826 = vpop.permute.xlu0 %1825
    %1828 = vset.pattern.permute.xlu0 24
    %1829 = vperm.xlu0 %1828, %v677
    %v1830 = vpop.permute.xlu0 %1829
    %v1832 = vmul.f32 %v1810, %v1826
    %v1833 = vmul.f32 %v1811, %v1830
    %v1834 = vsel %vm542, %v1832, 0.0
    %v1835 = vsel %vm542, %v1833, 0.0
    %v1836 = vadd.f32 %v1834, %v1835
    %v1837 = vrot.slane %v1836, 4
    %v1838 = vadd.f32 %v1836, %v1837
    %v1839 = vrot.slane %v1838, 2
    %v1840 = vadd.f32 %v1838, %v1839
    %v1841 = vrot.slane %v1840, 1
    %v1842 = vadd.f32 %v1840, %v1841
    %v1843 = vadd.f32 %v1842, %v687
    %1845 = vrot.lane.b32.xlu0 %v347, 64
    %v1846 = vpop.permute.xlu0 %1845
    %v1848 = vmul.f32 %v1843, %v1846
    %1849 = vset.pattern.permute.xlu0 25
    %1850 = vperm.xlu0 %1849, %v675
    %v1851 = vpop.permute.xlu0 %1850
    %1853 = vset.pattern.permute.xlu0 25
    %1854 = vperm.xlu0 %1853, %v677
    %v1855 = vpop.permute.xlu0 %1854
    %v1857 = vmul.f32 %v1814, %v1851
    %v1858 = vmul.f32 %v1815, %v1855
    %v1859 = vsel %vm542, %v1857, 0.0
    %v1860 = vsel %vm542, %v1858, 0.0
    %v1861 = vadd.f32 %v1859, %v1860
    %v1862 = vrot.slane %v1861, 4
    %v1863 = vadd.f32 %v1861, %v1862
    %v1864 = vrot.slane %v1863, 2
    %v1865 = vadd.f32 %v1863, %v1864
    %v1866 = vrot.slane %v1865, 1
    %v1867 = vadd.f32 %v1865, %v1866
    %v1868 = vadd.f32 %v1867, %v687
    %v1869 = vmul.f32 %v1868, %v1846
    %1870 = vset.pattern.permute.xlu0 26
    %1871 = vperm.xlu0 %1870, %v675
    %v1872 = vpop.permute.xlu0 %1871
    %1874 = vset.pattern.permute.xlu0 26
    %1875 = vperm.xlu0 %1874, %v677
    %v1876 = vpop.permute.xlu0 %1875
    %v1878 = vmul.f32 %v1818, %v1872
    %v1879 = vmul.f32 %v1819, %v1876
    %v1880 = vsel %vm542, %v1878, 0.0
    %v1881 = vsel %vm542, %v1879, 0.0
    %v1882 = vadd.f32 %v1880, %v1881
    %v1883 = vrot.slane %v1882, 4
    %v1884 = vadd.f32 %v1882, %v1883
    %v1885 = vrot.slane %v1884, 2
    %v1886 = vadd.f32 %v1884, %v1885
    %v1887 = vrot.slane %v1886, 1
    %v1888 = vadd.f32 %v1886, %v1887
    %v1889 = vadd.f32 %v1888, %v687
    %v1890 = vmul.f32 %v1889, %v1846
    %1891 = vset.pattern.permute.xlu0 27
    %1892 = vperm.xlu0 %1891, %v675
    %v1893 = vpop.permute.xlu0 %1892
    %1895 = vset.pattern.permute.xlu0 27
    %1896 = vperm.xlu0 %1895, %v677
    %v1897 = vpop.permute.xlu0 %1896
    %v1899 = vmul.f32 %v1822, %v1893
    %v1900 = vmul.f32 %v1823, %v1897
    %v1901 = vsel %vm542, %v1899, 0.0
    %v1902 = vsel %vm542, %v1900, 0.0
    %v1903 = vadd.f32 %v1901, %v1902
    %v1904 = vrot.slane %v1903, 4
    %v1905 = vadd.f32 %v1903, %v1904
    %v1906 = vrot.slane %v1905, 2
    %v1907 = vadd.f32 %v1905, %v1906
    %v1908 = vrot.slane %v1907, 1
    %v1909 = vadd.f32 %v1907, %v1908
    %v1910 = vadd.f32 %v1909, %v687
    %v1911 = vmul.f32 %v1910, %v1846
    %v1912 = vperm.slane %v639, 4
    %v1913 = vmul.f32 %v1912, %v114
    %v1914 = vmul.f32 %v1912, %v115
    %v1915 = vmul.f32 %v1913, 1.442695
    %v1916 = vpow.pop %v1915
    %v1917 = vmul.f32 %v1914, 1.442695
    %v1918 = vpow.pop %v1917
    %v1919 = vperm.slane %v639, 5
    %v1920 = vmul.f32 %v1919, %v114
    %v1921 = vmul.f32 %v1919, %v115
    %v1922 = vmul.f32 %v1920, 1.442695
    %v1923 = vpow.pop %v1922
    %v1924 = vmul.f32 %v1921, 1.442695
    %v1925 = vpow.pop %v1924
    %v1926 = vperm.slane %v639, 6
    %v1927 = vmul.f32 %v1926, %v114
    %v1928 = vmul.f32 %v1926, %v115
    %v1929 = vmul.f32 %v1927, 1.442695
    %v1930 = vpow.pop %v1929
    %v1931 = vmul.f32 %v1928, 1.442695
    %v1932 = vpow.pop %v1931
    %v1933 = vperm.slane %v639, 7
    %v1934 = vmul.f32 %v1933, %v114
    %v1935 = vmul.f32 %v1933, %v115
    %v1936 = vmul.f32 %v1934, 1.442695
    %v1937 = vpow.pop %v1936
    %v1938 = vmul.f32 %v1935, 1.442695
    %v1939 = vpow.pop %v1938
    %1940 = vset.pattern.permute.xlu0 28
    %1941 = vperm.xlu0 %1940, %v670
    %v1942 = vpop.permute.xlu0 %1941
    %1944 = vset.pattern.permute.xlu0 28
    %1945 = vperm.xlu0 %1944, %v672
    %v1946 = vpop.permute.xlu0 %1945
    %v1948 = vperm.slane %v682, 4
    %v1949 = vmul.f32 %v1942, %v1948
    %v1950 = vmul.f32 %v1946, %v1948
    %1951 = vset.pattern.permute.xlu0 29
    %1952 = vperm.xlu0 %1951, %v670
    %v1953 = vpop.permute.xlu0 %1952
    %1955 = vset.pattern.permute.xlu0 29
    %1956 = vperm.xlu0 %1955, %v672
    %v1957 = vpop.permute.xlu0 %1956
    %v1959 = vperm.slane %v682, 5
    %v1960 = vmul.f32 %v1953, %v1959
    %v1961 = vmul.f32 %v1957, %v1959
    %1962 = vset.pattern.permute.xlu0 30
    %1963 = vperm.xlu0 %1962, %v670
    %v1964 = vpop.permute.xlu0 %1963
    %1966 = vset.pattern.permute.xlu0 30
    %1967 = vperm.xlu0 %1966, %v672
    %v1968 = vpop.permute.xlu0 %1967
    %v1970 = vperm.slane %v682, 6
    %v1971 = vmul.f32 %v1964, %v1970
    %v1972 = vmul.f32 %v1968, %v1970
    %1973 = vset.pattern.permute.xlu0 31
    %1974 = vperm.xlu0 %1973, %v670
    %v1975 = vpop.permute.xlu0 %1974
    %1977 = vset.pattern.permute.xlu0 31
    %1978 = vperm.xlu0 %1977, %v672
    %v1979 = vpop.permute.xlu0 %1978
    %v1981 = vperm.slane %v682, 7
    %v1982 = vmul.f32 %v1975, %v1981
    %v1983 = vmul.f32 %v1979, %v1981
    %v1984 = vmul.f32 %v1916, %v1822
    %v1985 = vmul.f32 %v1918, %v1823
    %v1986 = vadd.f32 %v1984, %v1949
    %v1987 = vadd.f32 %v1985, %v1950
    %v1988 = vmul.f32 %v1923, %v1986
    %v1989 = vmul.f32 %v1925, %v1987
    %v1990 = vadd.f32 %v1988, %v1960
    %v1991 = vadd.f32 %v1989, %v1961
    %v1992 = vmul.f32 %v1930, %v1990
    %v1993 = vmul.f32 %v1932, %v1991
    %v1994 = vadd.f32 %v1992, %v1971
    %v1995 = vadd.f32 %v1993, %v1972
    %v1996 = vmul.f32 %v1937, %v1994
    %v1997 = vmul.f32 %v1939, %v1995
    %v1998 = vadd.f32 %v1996, %v1982
    %v1999 = vadd.f32 %v1997, %v1983
    %2000 = vset.pattern.permute.xlu0 28
    %2001 = vperm.xlu0 %2000, %v675
    %v2002 = vpop.permute.xlu0 %2001
    %2004 = vset.pattern.permute.xlu0 28
    %2005 = vperm.xlu0 %2004, %v677
    %v2006 = vpop.permute.xlu0 %2005
    %v2008 = vmul.f32 %v1986, %v2002
    %v2009 = vmul.f32 %v1987, %v2006
    %v2010 = vsel %vm542, %v2008, 0.0
    %v2011 = vsel %vm542, %v2009, 0.0
    %v2012 = vadd.f32 %v2010, %v2011
    %v2013 = vrot.slane %v2012, 4
    %v2014 = vadd.f32 %v2012, %v2013
    %v2015 = vrot.slane %v2014, 2
    %v2016 = vadd.f32 %v2014, %v2015
    %v2017 = vrot.slane %v2016, 1
    %v2018 = vadd.f32 %v2016, %v2017
    %v2019 = vadd.f32 %v2018, %v687
    %v2020 = vmul.f32 %v2019, %v1846
    %2021 = vset.pattern.permute.xlu0 29
    %2022 = vperm.xlu0 %2021, %v675
    %v2023 = vpop.permute.xlu0 %2022
    %2025 = vset.pattern.permute.xlu0 29
    %2026 = vperm.xlu0 %2025, %v677
    %v2027 = vpop.permute.xlu0 %2026
    %v2029 = vmul.f32 %v1990, %v2023
    %v2030 = vmul.f32 %v1991, %v2027
    %v2031 = vsel %vm542, %v2029, 0.0
    %v2032 = vsel %vm542, %v2030, 0.0
    %v2033 = vadd.f32 %v2031, %v2032
    %v2034 = vrot.slane %v2033, 4
    %v2035 = vadd.f32 %v2033, %v2034
    %v2036 = vrot.slane %v2035, 2
    %v2037 = vadd.f32 %v2035, %v2036
    %v2038 = vrot.slane %v2037, 1
    %v2039 = vadd.f32 %v2037, %v2038
    %v2040 = vadd.f32 %v2039, %v687
    %v2041 = vmul.f32 %v2040, %v1846
    %2042 = vset.pattern.permute.xlu0 30
    %2043 = vperm.xlu0 %2042, %v675
    %v2044 = vpop.permute.xlu0 %2043
    %2046 = vset.pattern.permute.xlu0 30
    %2047 = vperm.xlu0 %2046, %v677
    %v2048 = vpop.permute.xlu0 %2047
    %v2050 = vmul.f32 %v1994, %v2044
    %v2051 = vmul.f32 %v1995, %v2048
    %v2052 = vsel %vm542, %v2050, 0.0
    %v2053 = vsel %vm542, %v2051, 0.0
    %v2054 = vadd.f32 %v2052, %v2053
    %v2055 = vrot.slane %v2054, 4
    %v2056 = vadd.f32 %v2054, %v2055
    %v2057 = vrot.slane %v2056, 2
    %v2058 = vadd.f32 %v2056, %v2057
    %v2059 = vrot.slane %v2058, 1
    %v2060 = vadd.f32 %v2058, %v2059
    %v2061 = vadd.f32 %v2060, %v687
    %v2062 = vmul.f32 %v2061, %v1846
    %2063 = vset.pattern.permute.xlu0 31
    %2064 = vperm.xlu0 %2063, %v675
    %v2065 = vpop.permute.xlu0 %2064
    %2067 = vset.pattern.permute.xlu0 31
    %2068 = vperm.xlu0 %2067, %v677
    %v2069 = vpop.permute.xlu0 %2068
    %v2071 = vmul.f32 %v1998, %v2065
    %v2072 = vmul.f32 %v1999, %v2069
    %v2073 = vsel %vm542, %v2071, 0.0
    %v2074 = vsel %vm542, %v2072, 0.0
    %v2075 = vadd.f32 %v2073, %v2074
    %v2076 = vrot.slane %v2075, 4
    %v2077 = vadd.f32 %v2075, %v2076
    %v2078 = vrot.slane %v2077, 2
    %v2079 = vadd.f32 %v2077, %v2078
    %v2080 = vrot.slane %v2079, 1
    %v2081 = vadd.f32 %v2079, %v2080
    %v2082 = vadd.f32 %v2081, %v687
    %v2083 = vmul.f32 %v2082, %v1846
    %vm2084 = vcmask 1040384
    %v2085 = vsel %vm2084, %v804, %v825
    %vm2086 = vcmask 1041408
    %v2087 = vsel %vm2086, %v2085, %v846
    %vm2088 = vcmask 1042432
    %v2089 = vsel %vm2088, %v2087, %v867
    %vm2090 = vcmask 1043456
    %v2091 = vsel %vm2090, %v2089, %v976
    %vm2092 = vcmask 1044480
    %v2093 = vsel %vm2092, %v2091, %v997
    %vm2094 = vcmask 1045504
    %v2095 = vsel %vm2094, %v2093, %v1018
    %vm2096 = vcmask 1046528
    %v2097 = vsel %vm2096, %v2095, %v1039
    %v2098 = vsel %vm2084, %v1152, %v1173
    %v2099 = vsel %vm2086, %v2098, %v1194
    %v2100 = vsel %vm2088, %v2099, %v1215
    %v2101 = vsel %vm2090, %v2100, %v1324
    %v2102 = vsel %vm2092, %v2101, %v1345
    %v2103 = vsel %vm2094, %v2102, %v1366
    %v2104 = vsel %vm2096, %v2103, %v1387
    %v2105 = vsel %vm2084, %v1500, %v1521
    %v2106 = vsel %vm2086, %v2105, %v1542
    %v2107 = vsel %vm2088, %v2106, %v1563
    %v2108 = vsel %vm2090, %v2107, %v1672
    %v2109 = vsel %vm2092, %v2108, %v1693
    %v2110 = vsel %vm2094, %v2109, %v1714
    %v2111 = vsel %vm2096, %v2110, %v1735
    %v2112 = vsel %vm2084, %v1848, %v1869
    %v2113 = vsel %vm2086, %v2112, %v1890
    %v2114 = vsel %vm2088, %v2113, %v1911
    %v2115 = vsel %vm2090, %v2114, %v2020
    %v2116 = vsel %vm2092, %v2115, %v2041
    %v2117 = vsel %vm2094, %v2116, %v2062
    %v2118 = vsel %vm2096, %v2117, %v2083
    %v2119 = vld [vmem:[%s6] sm:$0xf]
    %v2120 = vld [vmem:[%s6 + $0x4] sm:$0xf]
    %v2121 = vld [vmem:[%s6 + $0x8] sm:$0xf]
    %v2122 = vld [vmem:[%s6 + $0xc] sm:$0xf]
    %v2123 = vld [vmem:[%s6 + $0x10] sm:$0xf]
    %v2124 = vld [vmem:[%s6 + $0x14] sm:$0xf]
    %v2125 = vld [vmem:[%s6 + $0x18] sm:$0xf]
    %v2126 = vld [vmem:[%s6 + $0x1c] sm:$0xf]
    %v2127 = vpack.c.bf16 %v2104, %v2097
    %v2128 = vpack.c.bf16 %v2118, %v2111
    %v2137 = vunpack.c.l.b16 %v2119
    %v2138 = vunpack.c.l.b16 %v2120
    %v2139 = vunpack.c.l.b16 %v2121
    %v2140 = vunpack.c.l.b16 %v2122
    %v2141 = vunpack.c.l.b16 %v2123
    %v2142 = vunpack.c.l.b16 %v2124
    %v2143 = vunpack.c.l.b16 %v2125
    %v2144 = vunpack.c.l.b16 %v2126
    %v2145 = vpack.c.b16 %v2138, %v2137
    %v2146 = vpack.c.b16 %v2140, %v2139
    %v2147 = vpack.c.b16 %v2142, %v2141
    %v2148 = vpack.c.b16 %v2144, %v2143
    %v2154 = vsel %vm542, %v2127, 0
    %v2157 = vsel %vm542, %v2128, 0
    %2159 = vmatpush.bf16.msra.mxu0 0
    %2160 = vmatpush.bf16.msra.mxu0 0
    %2161 = vmatpush.bf16.msra.mxu0 0
    %2162 = vmatpush.bf16.msra.mxu0 0
    %2163 = vmatpush.bf16.msra.mxu0 %v2148
    %2164 = vmatpush.bf16.msra.mxu0 %v2147
    %2165 = vmatpush.bf16.msra.mxu0 %v2146
    %2166 = vmatpush.bf16.msra.mxu0 %v2145
    %2167 = vmatmul.bf16.gmra.mxu0 %v2154
    %v2168 = vpop.f32.mrf.mxu0
    %v2169 = vadd.f32 0.0, %v2168
    %v2170 = vpop.f32.mrf.mxu0
    %v2171 = vadd.f32 0.0, %v2170
    %2172 = vmatmul.bf16.gmra.mxu0 %v2157
    %v2173 = vpop.f32.mrf.mxu0
    %v2174 = vadd.f32 0.0, %v2173
    %v2175 = vpop.f32.mrf.mxu0
    %v2176 = vadd.f32 0.0, %v2175
    %2177 = vdwg.mxu0
    %s2178 = scalar_lea.vmem %s5, 16
    %v2179 = vld [vmem:[%s2178] sm:$0xff]
    %v2180 = vld [vmem:[%s2178 + $0x8] sm:$0xff]
    %v2181 = vadd.f32 %v105, %v2169
    %v2182 = vadd.f32 %v107, %v2171
    %v2183 = vadd.f32 %v110, %v2174
    %v2184 = vadd.f32 %v112, %v2176
    %v2185 = vsel %vm116, %v2181, 0.0
    %2186 = vadd.xlane.f32.xlu0 %v2185
    %v2187 = vpop.xlane.xlu0 %2186
    %v2188 = vsel %vm116, %v2182, 0.0
    %2189 = vadd.xlane.f32.xlu0 %v2188
    %v2190 = vpop.xlane.xlu0 %2189
    %v2191 = vsel %vm116, %v2183, 0.0
    %2192 = vadd.xlane.f32.xlu0 %v2191
    %v2193 = vpop.xlane.xlu0 %2192
    %v2194 = vsel %vm116, %v2184, 0.0
    %2195 = vadd.xlane.f32.xlu0 %v2194
    %v2196 = vpop.xlane.xlu0 %2195
    %v2197 = vmul.f32 %v2187, %v135
    %v2198 = vmul.f32 %v2190, %v135
    %v2199 = vmul.f32 %v2193, %v135
    %v2200 = vmul.f32 %v2196, %v135
    %v2201 = vsub.f32 %v2181, %v2197
    %v2202 = vsub.f32 %v2182, %v2198
    %v2203 = vsub.f32 %v2183, %v2199
    %v2204 = vsub.f32 %v2184, %v2200
    %v2205 = vmul.f32 %v2201, %v2201
    %v2206 = vmul.f32 %v2202, %v2202
    %v2207 = vmul.f32 %v2203, %v2203
    %v2208 = vmul.f32 %v2204, %v2204
    %v2209 = vsel %vm116, %v2205, 0.0
    %2210 = vadd.xlane.f32.xlu0 %v2209
    %v2211 = vpop.xlane.xlu0 %2210
    %v2212 = vsel %vm116, %v2206, 0.0
    %2213 = vadd.xlane.f32.xlu0 %v2212
    %v2214 = vpop.xlane.xlu0 %2213
    %v2215 = vsel %vm116, %v2207, 0.0
    %2216 = vadd.xlane.f32.xlu0 %v2215
    %v2217 = vpop.xlane.xlu0 %2216
    %v2218 = vsel %vm116, %v2208, 0.0
    %2219 = vadd.xlane.f32.xlu0 %v2218
    %v2220 = vpop.xlane.xlu0 %2219
    %v2221 = vmul.f32 %v2211, %v135
    %v2222 = vmul.f32 %v2214, %v135
    %v2223 = vmul.f32 %v2217, %v135
    %v2224 = vmul.f32 %v2220, %v135
    %v2225 = vadd.f32 %v2221, 1e-05
    %v2226 = vadd.f32 %v2222, 1e-05
    %v2227 = vadd.f32 %v2223, 1e-05
    %v2228 = vadd.f32 %v2224, 1e-05
    %v2229 = vrsqrt.pop %v2225
    %v2230 = vmul.f32 %v2229, %v2225
    %v2231 = vmul.f32 %v2230, %v2229
    %v2232 = vmul.f32 0.5, %v2231
    %v2233 = vsub.f32 1.5, %v2232
    %v2234 = vmul.f32 %v2229, %v2233
    %vm2235 = vweird.f32 %v2225
    %vm2236 = vweird.f32 %v2229
    %vm2237 = vmor %vm2235, %vm2236
    %v2238 = vsel %vm2237, %v2229, %v2234
    %v2239 = vrsqrt.pop %v2226
    %v2240 = vmul.f32 %v2239, %v2226
    %v2241 = vmul.f32 %v2240, %v2239
    %v2242 = vmul.f32 0.5, %v2241
    %v2243 = vsub.f32 1.5, %v2242
    %v2244 = vmul.f32 %v2239, %v2243
    %vm2245 = vweird.f32 %v2226
    %vm2246 = vweird.f32 %v2239
    %vm2247 = vmor %vm2245, %vm2246
    %v2248 = vsel %vm2247, %v2239, %v2244
    %v2249 = vrsqrt.pop %v2227
    %v2250 = vmul.f32 %v2249, %v2227
    %v2251 = vmul.f32 %v2250, %v2249
    %v2252 = vmul.f32 0.5, %v2251
    %v2253 = vsub.f32 1.5, %v2252
    %v2254 = vmul.f32 %v2249, %v2253
    %vm2255 = vweird.f32 %v2227
    %vm2256 = vweird.f32 %v2249
    %vm2257 = vmor %vm2255, %vm2256
    %v2258 = vsel %vm2257, %v2249, %v2254
    %v2259 = vrsqrt.pop %v2228
    %v2260 = vmul.f32 %v2259, %v2228
    %v2261 = vmul.f32 %v2260, %v2259
    %v2262 = vmul.f32 0.5, %v2261
    %v2263 = vsub.f32 1.5, %v2262
    %v2264 = vmul.f32 %v2259, %v2263
    %vm2265 = vweird.f32 %v2228
    %vm2266 = vweird.f32 %v2259
    %vm2267 = vmor %vm2265, %vm2266
    %v2268 = vsel %vm2267, %v2259, %v2264
    %v2269 = vmul.f32 %v2201, %v2238
    %v2270 = vmul.f32 %v2202, %v2248
    %v2271 = vmul.f32 %v2203, %v2258
    %v2272 = vmul.f32 %v2204, %v2268
    %v2273 = vperm.slane %v35, 1
    %v2274 = vmul.f32 %v2269, %v2273
    %v2275 = vmul.f32 %v2270, %v2273
    %v2276 = vmul.f32 %v2271, %v2273
    %v2277 = vmul.f32 %v2272, %v2273
    %2279 = vrot.lane.b32.xlu0 %v2273, 96
    %v2280 = vpop.permute.xlu0 %2279
    %v2282 = vadd.f32 %v2274, %v2280
    %v2283 = vadd.f32 %v2275, %v2280
    %v2284 = vadd.f32 %v2276, %v2280
    %v2285 = vadd.f32 %v2277, %v2280
    %s2286 = scalar_lea.vmem %s2, 16
    %v2287 = vld [vmem:[%s2286] sm:$0xf]
    %v2288 = vld [vmem:[%s2286 + $0x4] sm:$0xf]
    %v2289 = vld [vmem:[%s2286 + $0x8] sm:$0xf]
    %v2290 = vld [vmem:[%s2286 + $0xc] sm:$0xf]
    %v2291 = vpack.c.bf16 %v2283, %v2282
    %v2292 = vpack.c.bf16 %v2285, %v2284
    %v2297 = vunpack.c.l.b16 %v2287
    %v2298 = vunpack.c.l.b16 %v2288
    %v2299 = vunpack.c.l.b16 %v2289
    %v2300 = vunpack.c.l.b16 %v2290
    %v2301 = vpack.c.b16 %v2298, %v2297
    %v2302 = vpack.c.b16 %v2300, %v2299
    %v2306 = vsel %vm116, %v2291, 0
    %v2309 = vsel %vm116, %v2292, 0
    %2311 = vmatpush.bf16.msra.mxu0 0
    %2312 = vmatpush.bf16.msra.mxu0 0
    %2313 = vmatpush.bf16.msra.mxu0 0
    %2314 = vmatpush.bf16.msra.mxu0 0
    %2315 = vmatpush.bf16.msra.mxu0 0
    %2316 = vmatpush.bf16.msra.mxu0 0
    %2317 = vmatpush.bf16.msra.mxu0 %v2302
    %2318 = vmatpush.bf16.msra.mxu0 %v2301
    %2319 = vmatmul.bf16.gmra.mxu0 %v2306
    %v2320 = vpop.f32.mrf.mxu0
    %v2321 = vadd.f32 0.0, %v2320
    %v2322 = vpop.f32.mrf.mxu0
    %v2323 = vadd.f32 0.0, %v2322
    %2324 = vmatmul.bf16.gmra.mxu0 %v2309
    %v2325 = vpop.f32.mrf.mxu0
    %v2326 = vadd.f32 0.0, %v2325
    %v2327 = vpop.f32.mrf.mxu0
    %v2328 = vadd.f32 0.0, %v2327
    %2329 = vdwg.mxu0
    %v2330 = vxor.u32 %v2321, 2147483648
    %v2331 = vxor.u32 %v2323, 2147483648
    %v2332 = vxor.u32 %v2326, 2147483648
    %v2333 = vxor.u32 %v2328, 2147483648
    %v2334 = vmul.f32 %v2330, 1.442695
    %v2335 = vpow.pop %v2334
    %v2336 = vmul.f32 %v2331, 1.442695
    %v2337 = vpow.pop %v2336
    %v2338 = vmul.f32 %v2332, 1.442695
    %v2339 = vpow.pop %v2338
    %v2340 = vmul.f32 %v2333, 1.442695
    %v2341 = vpow.pop %v2340
    %v2342 = vadd.f32 %v2335, 1.0
    %v2343 = vadd.f32 %v2337, 1.0
    %v2344 = vadd.f32 %v2339, 1.0
    %v2345 = vadd.f32 %v2341, 1.0
    %v2346 = vrcp.pop %v2342
    %v2347 = vmul.f32 %v2342, %v2346
    %v2348 = vsub.f32 1.0, %v2347
    %v2349 = vmul.f32 %v2346, %v2348
    %v2350 = vadd.f32 %v2346, %v2349
    %vm2351 = vweird.f32 %v2342
    %vm2352 = vweird.f32 %v2346
    %vm2353 = vmor %vm2351, %vm2352
    %v2354 = vsel %vm2353, %v2346, %v2350
    %v2355 = vand.u32 2147483647, %v2342
    %vm2356 = vcmp.eq.f32.partialorder %v2355, 8.507059e+37
    %v2357 = vand.u32 %v2342, 2147483648
    %v2358 = vor.u32 1.1754944e-38, %v2357
    %v2359 = vsel %vm2356, %v2358, %v2354
    %v2360 = vmul.f32 1.0, %v2359
    %v2361 = vrcp.pop %v2343
    %v2362 = vmul.f32 %v2343, %v2361
    %v2363 = vsub.f32 1.0, %v2362
    %v2364 = vmul.f32 %v2361, %v2363
    %v2365 = vadd.f32 %v2361, %v2364
    %vm2366 = vweird.f32 %v2343
    %vm2367 = vweird.f32 %v2361
    %vm2368 = vmor %vm2366, %vm2367
    %v2369 = vsel %vm2368, %v2361, %v2365
    %v2370 = vand.u32 2147483647, %v2343
    %vm2371 = vcmp.eq.f32.partialorder %v2370, 8.507059e+37
    %v2372 = vand.u32 %v2343, 2147483648
    %v2373 = vor.u32 1.1754944e-38, %v2372
    %v2374 = vsel %vm2371, %v2373, %v2369
    %v2375 = vmul.f32 1.0, %v2374
    %v2376 = vrcp.pop %v2344
    %v2377 = vmul.f32 %v2344, %v2376
    %v2378 = vsub.f32 1.0, %v2377
    %v2379 = vmul.f32 %v2376, %v2378
    %v2380 = vadd.f32 %v2376, %v2379
    %vm2381 = vweird.f32 %v2344
    %vm2382 = vweird.f32 %v2376
    %vm2383 = vmor %vm2381, %vm2382
    %v2384 = vsel %vm2383, %v2376, %v2380
    %v2385 = vand.u32 2147483647, %v2344
    %vm2386 = vcmp.eq.f32.partialorder %v2385, 8.507059e+37
    %v2387 = vand.u32 %v2344, 2147483648
    %v2388 = vor.u32 1.1754944e-38, %v2387
    %v2389 = vsel %vm2386, %v2388, %v2384
    %v2390 = vmul.f32 1.0, %v2389
    %v2391 = vrcp.pop %v2345
    %v2392 = vmul.f32 %v2345, %v2391
    %v2393 = vsub.f32 1.0, %v2392
    %v2394 = vmul.f32 %v2391, %v2393
    %v2395 = vadd.f32 %v2391, %v2394
    %vm2396 = vweird.f32 %v2345
    %vm2397 = vweird.f32 %v2391
    %vm2398 = vmor %vm2396, %vm2397
    %v2399 = vsel %vm2398, %v2391, %v2395
    %v2400 = vand.u32 2147483647, %v2345
    %vm2401 = vcmp.eq.f32.partialorder %v2400, 8.507059e+37
    %v2402 = vand.u32 %v2345, 2147483648
    %v2403 = vor.u32 1.1754944e-38, %v2402
    %v2404 = vsel %vm2401, %v2403, %v2399
    %v2405 = vmul.f32 1.0, %v2404
    %v2406 = vmul.f32 %v2321, %v2360
    %v2407 = vmul.f32 %v2323, %v2375
    %v2408 = vmul.f32 %v2326, %v2390
    %v2409 = vmul.f32 %v2328, %v2405
    %v2410 = vrot.slane %v2321, 5
    %v2411 = vrot.slane %v2323, 5
    %v2412 = vrot.slane %v2326, 5
    %v2413 = vrot.slane %v2328, 5
    %v2414 = vsel %vm352, %v2412, %v2413
    %v2415 = vsel %vm352, %v2411, %v2412
    %v2416 = vsel %vm352, %v2410, %v2411
    %v2417 = vsel %vm352, %v2413, %v2410
    %v2418 = vsel %vm53, %v2417, 0.0
    %v2419 = vsel %vm54, %v2416, 0.0
    %v2420 = vsel %vm55, %v2415, 0.0
    %v2421 = vsel %vm56, %v2414, 0.0
    %v2422 = vperm.slane %v35, 4
    %v2423 = vmul.f32 %v2418, %v2422
    %v2424 = vmul.f32 %v2419, %v2422
    %v2425 = vmul.f32 %v2420, %v2422
    %v2426 = vmul.f32 %v2421, %v2422
    %v2427 = vperm.slane %v35, 2
    %v2428 = vadd.f32 %v2427, %v2423
    %v2429 = vadd.f32 %v2427, %v2424
    %v2430 = vadd.f32 %v2427, %v2425
    %v2431 = vadd.f32 %v2427, %v2426
    %v2432 = vrot.slane %v2321, 6
    %v2433 = vrot.slane %v2323, 6
    %v2434 = vrot.slane %v2326, 6
    %v2435 = vrot.slane %v2328, 6
    %v2436 = vsel %vm375, %v2434, %v2435
    %v2437 = vsel %vm375, %v2433, %v2434
    %v2438 = vsel %vm375, %v2432, %v2433
    %v2439 = vsel %vm375, %v2435, %v2432
    %v2440 = vsel %vm49, %v2439, 0.0
    %v2441 = vsel %vm50, %v2438, 0.0
    %v2442 = vsel %vm51, %v2437, 0.0
    %v2443 = vsel %vm52, %v2436, 0.0
    %v2444 = vperm.slane %v35, 5
    %v2445 = vmul.f32 %v2440, %v2444
    %v2446 = vmul.f32 %v2441, %v2444
    %v2447 = vmul.f32 %v2442, %v2444
    %v2448 = vmul.f32 %v2443, %v2444
    %v2449 = vadd.f32 %v2428, %v2445
    %v2450 = vadd.f32 %v2429, %v2446
    %v2451 = vadd.f32 %v2430, %v2447
    %v2452 = vadd.f32 %v2431, %v2448
    %v2453 = vrot.slane %v2321, 7
    %v2454 = vrot.slane %v2323, 7
    %v2455 = vrot.slane %v2326, 7
    %v2456 = vrot.slane %v2328, 7
    %v2457 = vsel %vm397, %v2455, %v2456
    %v2458 = vsel %vm397, %v2454, %v2455
    %v2459 = vsel %vm397, %v2453, %v2454
    %v2460 = vsel %vm397, %v2456, %v2453
    %v2461 = vsel %vm45, %v2460, 0.0
    %v2462 = vsel %vm46, %v2459, 0.0
    %v2463 = vsel %vm47, %v2458, 0.0
    %v2464 = vsel %vm48, %v2457, 0.0
    %v2465 = vperm.slane %v35, 6
    %v2466 = vmul.f32 %v2461, %v2465
    %v2467 = vmul.f32 %v2462, %v2465
    %v2468 = vmul.f32 %v2463, %v2465
    %v2469 = vmul.f32 %v2464, %v2465
    %v2470 = vadd.f32 %v2449, %v2466
    %v2471 = vadd.f32 %v2450, %v2467
    %v2472 = vadd.f32 %v2451, %v2468
    %v2473 = vadd.f32 %v2452, %v2469
    %v2474 = vperm.slane %v35, 7
    %v2475 = vmul.f32 %v2321, %v2474
    %v2476 = vmul.f32 %v2323, %v2474
    %v2477 = vmul.f32 %v2326, %v2474
    %v2478 = vmul.f32 %v2328, %v2474
    %v2479 = vadd.f32 %v2470, %v2475
    %v2480 = vadd.f32 %v2471, %v2476
    %v2481 = vadd.f32 %v2472, %v2477
    %v2482 = vadd.f32 %v2473, %v2478
    %v2483 = vxor.u32 %v2479, 2147483648
    %v2484 = vxor.u32 %v2480, 2147483648
    %v2485 = vxor.u32 %v2481, 2147483648
    %v2486 = vxor.u32 %v2482, 2147483648
    %v2487 = vmul.f32 %v2483, 1.442695
    %v2488 = vpow.pop %v2487
    %v2489 = vmul.f32 %v2484, 1.442695
    %v2490 = vpow.pop %v2489
    %v2491 = vmul.f32 %v2485, 1.442695
    %v2492 = vpow.pop %v2491
    %v2493 = vmul.f32 %v2486, 1.442695
    %v2494 = vpow.pop %v2493
    %v2495 = vadd.f32 %v2488, 1.0
    %v2496 = vadd.f32 %v2490, 1.0
    %v2497 = vadd.f32 %v2492, 1.0
    %v2498 = vadd.f32 %v2494, 1.0
    %v2499 = vrcp.pop %v2495
    %v2500 = vmul.f32 %v2495, %v2499
    %v2501 = vsub.f32 1.0, %v2500
    %v2502 = vmul.f32 %v2499, %v2501
    %v2503 = vadd.f32 %v2499, %v2502
    %vm2504 = vweird.f32 %v2495
    %vm2505 = vweird.f32 %v2499
    %vm2506 = vmor %vm2504, %vm2505
    %v2507 = vsel %vm2506, %v2499, %v2503
    %v2508 = vand.u32 2147483647, %v2495
    %vm2509 = vcmp.eq.f32.partialorder %v2508, 8.507059e+37
    %v2510 = vand.u32 %v2495, 2147483648
    %v2511 = vor.u32 1.1754944e-38, %v2510
    %v2512 = vsel %vm2509, %v2511, %v2507
    %v2513 = vmul.f32 1.0, %v2512
    %v2514 = vrcp.pop %v2496
    %v2515 = vmul.f32 %v2496, %v2514
    %v2516 = vsub.f32 1.0, %v2515
    %v2517 = vmul.f32 %v2514, %v2516
    %v2518 = vadd.f32 %v2514, %v2517
    %vm2519 = vweird.f32 %v2496
    %vm2520 = vweird.f32 %v2514
    %vm2521 = vmor %vm2519, %vm2520
    %v2522 = vsel %vm2521, %v2514, %v2518
    %v2523 = vand.u32 2147483647, %v2496
    %vm2524 = vcmp.eq.f32.partialorder %v2523, 8.507059e+37
    %v2525 = vand.u32 %v2496, 2147483648
    %v2526 = vor.u32 1.1754944e-38, %v2525
    %v2527 = vsel %vm2524, %v2526, %v2522
    %v2528 = vmul.f32 1.0, %v2527
    %v2529 = vrcp.pop %v2497
    %v2530 = vmul.f32 %v2497, %v2529
    %v2531 = vsub.f32 1.0, %v2530
    %v2532 = vmul.f32 %v2529, %v2531
    %v2533 = vadd.f32 %v2529, %v2532
    %vm2534 = vweird.f32 %v2497
    %vm2535 = vweird.f32 %v2529
    %vm2536 = vmor %vm2534, %vm2535
    %v2537 = vsel %vm2536, %v2529, %v2533
    %v2538 = vand.u32 2147483647, %v2497
    %vm2539 = vcmp.eq.f32.partialorder %v2538, 8.507059e+37
    %v2540 = vand.u32 %v2497, 2147483648
    %v2541 = vor.u32 1.1754944e-38, %v2540
    %v2542 = vsel %vm2539, %v2541, %v2537
    %v2543 = vmul.f32 1.0, %v2542
    %v2544 = vrcp.pop %v2498
    %v2545 = vmul.f32 %v2498, %v2544
    %v2546 = vsub.f32 1.0, %v2545
    %v2547 = vmul.f32 %v2544, %v2546
    %v2548 = vadd.f32 %v2544, %v2547
    %vm2549 = vweird.f32 %v2498
    %vm2550 = vweird.f32 %v2544
    %vm2551 = vmor %vm2549, %vm2550
    %v2552 = vsel %vm2551, %v2544, %v2548
    %v2553 = vand.u32 2147483647, %v2498
    %vm2554 = vcmp.eq.f32.partialorder %v2553, 8.507059e+37
    %v2555 = vand.u32 %v2498, 2147483648
    %v2556 = vor.u32 1.1754944e-38, %v2555
    %v2557 = vsel %vm2554, %v2556, %v2552
    %v2558 = vmul.f32 1.0, %v2557
    %v2559 = vmul.f32 %v2479, %v2513
    %v2560 = vmul.f32 %v2480, %v2528
    %v2561 = vmul.f32 %v2481, %v2543
    %v2562 = vmul.f32 %v2482, %v2558
    %s2563 = scalar_lea.vmem %s3, 32
    %v2564 = vld [vmem:[%s2563] sm:$0xf]
    %v2565 = vld [vmem:[%s2563 + $0x4] sm:$0xf]
    %v2566 = vld [vmem:[%s2563 + $0x8] sm:$0xf]
    %v2567 = vld [vmem:[%s2563 + $0xc] sm:$0xf]
    %v2568 = vld [vmem:[%s2563 + $0x10] sm:$0xf]
    %v2569 = vld [vmem:[%s2563 + $0x14] sm:$0xf]
    %v2570 = vld [vmem:[%s2563 + $0x18] sm:$0xf]
    %v2571 = vld [vmem:[%s2563 + $0x1c] sm:$0xf]
    %v2572 = vpack.c.bf16 %v2560, %v2559
    %v2573 = vpack.c.bf16 %v2562, %v2561
    %v2582 = vunpack.c.l.b16 %v2564
    %v2583 = vunpack.c.l.b16 %v2565
    %v2584 = vunpack.c.l.b16 %v2566
    %v2585 = vunpack.c.l.b16 %v2567
    %v2586 = vunpack.c.l.b16 %v2568
    %v2587 = vunpack.c.l.b16 %v2569
    %v2588 = vunpack.c.l.b16 %v2570
    %v2589 = vunpack.c.l.b16 %v2571
    %v2590 = vpack.c.b16 %v2583, %v2582
    %v2591 = vpack.c.b16 %v2585, %v2584
    %v2592 = vpack.c.b16 %v2587, %v2586
    %v2593 = vpack.c.b16 %v2589, %v2588
    %2599 = vrot.lane.b32.xlu0 %v2427, 64
    %v2600 = vpop.permute.xlu0 %2599
    %v2603 = vsel %vm542, %v2572, 0
    %v2606 = vsel %vm542, %v2573, 0
    %2608 = vmatpush.bf16.msra.mxu0 0
    %2609 = vmatpush.bf16.msra.mxu0 0
    %2610 = vmatpush.bf16.msra.mxu0 0
    %2611 = vmatpush.bf16.msra.mxu0 0
    %2612 = vmatpush.bf16.msra.mxu0 %v2593
    %2613 = vmatpush.bf16.msra.mxu0 %v2592
    %2614 = vmatpush.bf16.msra.mxu0 %v2591
    %2615 = vmatpush.bf16.msra.mxu0 %v2590
    %2616 = vmatmul.bf16.gmra.mxu0 %v2603
    %v2617 = vpop.f32.mrf.mxu0
    %v2618 = vadd.f32 %v2600, %v2617
    %v2619 = vpop.f32.mrf.mxu0
    %v2620 = vadd.f32 %v2600, %v2619
    %2621 = vmatmul.bf16.gmra.mxu0 %v2606
    %v2622 = vpop.f32.mrf.mxu0
    %v2623 = vadd.f32 %v2600, %v2622
    %v2624 = vpop.f32.mrf.mxu0
    %v2625 = vadd.f32 %v2600, %v2624
    %2626 = vdwg.mxu0
    %v2627 = vmax.f32 %v2618, 0.0
    %v2628 = vmax.f32 %v2620, 0.0
    %v2629 = vmax.f32 %v2623, 0.0
    %v2630 = vmax.f32 %v2625, 0.0
    %vm2631 = vcmp.ne.f32.partialorder %v2618, %v2618
    %vm2632 = vcmp.ne.f32.partialorder %v2620, %v2620
    %vm2633 = vcmp.ne.f32.partialorder %v2623, %v2623
    %vm2634 = vcmp.ne.f32.partialorder %v2625, %v2625
    %v2635 = vadd.f32 %v2618, 0.0
    %v2636 = vadd.f32 %v2620, 0.0
    %v2637 = vadd.f32 %v2623, 0.0
    %v2638 = vadd.f32 %v2625, 0.0
    %v2639 = vand.u32 2147483647, %v2618
    %v2640 = vand.u32 2147483647, %v2620
    %v2641 = vand.u32 2147483647, %v2623
    %v2642 = vand.u32 2147483647, %v2625
    %v2643 = vsub.f32 0.0, %v2639
    %v2644 = vsub.f32 0.0, %v2640
    %v2645 = vsub.f32 0.0, %v2641
    %v2646 = vsub.f32 0.0, %v2642
    %v2647 = vmul.f32 %v2643, 1.442695
    %v2648 = vpow.pop %v2647
    %v2649 = vmul.f32 %v2644, 1.442695
    %v2650 = vpow.pop %v2649
    %v2651 = vmul.f32 %v2645, 1.442695
    %v2652 = vpow.pop %v2651
    %v2653 = vmul.f32 %v2646, 1.442695
    %v2654 = vpow.pop %v2653
    %v2655 = vadd.f32 %v2648, 1.0
    %v2656 = vlog2.pop %v2655
    %v2657 = vmul.f32 %v2656, 0.6931472
    %v2658 = vmul.f32 -0.5, %v2648
    %v2659 = vadd.f32 %v2658, 1.0
    %v2660 = vmul.f32 %v2659, %v2648
    %v2661 = vand.u32 2147483647, %v2648
    %vm2662 = vcmp.lt.f32.partialorder %v2661, 0.0004427343
    %v2663 = vsel %vm2662, %v2660, %v2657
    %v2664 = vadd.f32 %v2650, 1.0
    %v2665 = vlog2.pop %v2664
    %v2666 = vmul.f32 %v2665, 0.6931472
    %v2667 = vmul.f32 -0.5, %v2650
    %v2668 = vadd.f32 %v2667, 1.0
    %v2669 = vmul.f32 %v2668, %v2650
    %v2670 = vand.u32 2147483647, %v2650
    %vm2671 = vcmp.lt.f32.partialorder %v2670, 0.0004427343
    %v2672 = vsel %vm2671, %v2669, %v2666
    %v2673 = vadd.f32 %v2652, 1.0
    %v2674 = vlog2.pop %v2673
    %v2675 = vmul.f32 %v2674, 0.6931472
    %v2676 = vmul.f32 -0.5, %v2652
    %v2677 = vadd.f32 %v2676, 1.0
    %v2678 = vmul.f32 %v2677, %v2652
    %v2679 = vand.u32 2147483647, %v2652
    %vm2680 = vcmp.lt.f32.partialorder %v2679, 0.0004427343
    %v2681 = vsel %vm2680, %v2678, %v2675
    %v2682 = vadd.f32 %v2654, 1.0
    %v2683 = vlog2.pop %v2682
    %v2684 = vmul.f32 %v2683, 0.6931472
    %v2685 = vmul.f32 -0.5, %v2654
    %v2686 = vadd.f32 %v2685, 1.0
    %v2687 = vmul.f32 %v2686, %v2654
    %v2688 = vand.u32 2147483647, %v2654
    %vm2689 = vcmp.lt.f32.partialorder %v2688, 0.0004427343
    %v2690 = vsel %vm2689, %v2687, %v2684
    %v2691 = vadd.f32 %v2627, %v2663
    %v2692 = vadd.f32 %v2628, %v2672
    %v2693 = vadd.f32 %v2629, %v2681
    %v2694 = vadd.f32 %v2630, %v2690
    %v2695 = vsel %vm2631, %v2635, %v2691
    %v2696 = vsel %vm2632, %v2636, %v2692
    %v2697 = vsel %vm2633, %v2637, %v2693
    %v2698 = vsel %vm2634, %v2638, %v2694
    %s2699 = scalar_lea.vmem %s4, 16
    %v2700 = vld [vmem:[%s2699] sm:$0xf]
    %v2701 = vld [vmem:[%s2699 + $0x4] sm:$0xf]
    %v2702 = vld [vmem:[%s2699 + $0x8] sm:$0xf]
    %v2703 = vld [vmem:[%s2699 + $0xc] sm:$0xf]
    %v2708 = vunpack.c.l.b16 %v2700
    %v2709 = vunpack.c.l.b16 %v2701
    %v2710 = vunpack.c.l.b16 %v2702
    %v2711 = vunpack.c.l.b16 %v2703
    %v2712 = vpack.c.b16 %v2709, %v2708
    %v2713 = vpack.c.b16 %v2711, %v2710
    %v2715 = vsel %vm542, %v2712, 0
    %v2718 = vsel %vm542, %v2713, 0
    %2720 = vmatpush.bf16.xpose.msra.mxu0 0
    %2721 = vmatpush.bf16.xpose.msra.mxu0 0
    %2722 = vmatpush.bf16.xpose.msra.mxu0 0
    %2723 = vmatpush.bf16.xpose.msra.mxu0 0
    %2724 = vmatpush.bf16.xpose.msra.mxu0 0
    %2725 = vmatpush.bf16.xpose.msra.mxu0 0
    %2726 = vmatpush.bf16.xpose.msra.mxu0 %v2606
    %2727 = vmatpush.bf16.xpose.msra.mxu0 %v2603
    %2728 = vmatmul.bf16.gmra.mxu0 %v2715
    %v2729 = vpop.f32.mrf.mxu0
    %v2730 = vadd.f32 0.0, %v2729
    %v2731 = vpop.f32.mrf.mxu0
    %v2732 = vadd.f32 0.0, %v2731
    %2733 = vmatmul.bf16.gmra.mxu0 %v2718
    %v2734 = vpop.f32.mrf.mxu0
    %v2735 = vadd.f32 0.0, %v2734
    %v2736 = vpop.f32.mrf.mxu0
    %v2737 = vadd.f32 0.0, %v2736
    %2738 = vdwg.mxu0
    %v2739 = vmul.f32 %v2695, %v2559
    %v2740 = vmul.f32 %v2696, %v2560
    %v2741 = vmul.f32 %v2697, %v2561
    %v2742 = vmul.f32 %v2698, %v2562
    %v2743 = vperm.slane %v35, 3
    %v2744 = vmul.f32 %v2559, %v2743
    %v2745 = vmul.f32 %v2560, %v2743
    %v2746 = vmul.f32 %v2561, %v2743
    %v2747 = vmul.f32 %v2562, %v2743
    %v2748 = vperm.slane %v2695, 0
    %v2749 = vmul.f32 %v2748, %v2179
    %v2750 = vmul.f32 %v2748, %v2180
    %v2751 = vmul.f32 %v2749, 1.442695
    %v2752 = vpow.pop %v2751
    %v2753 = vmul.f32 %v2750, 1.442695
    %v2754 = vpow.pop %v2753
    %v2755 = vperm.slane %v2695, 1
    %v2756 = vmul.f32 %v2755, %v2179
    %v2757 = vmul.f32 %v2755, %v2180
    %v2758 = vmul.f32 %v2756, 1.442695
    %v2759 = vpow.pop %v2758
    %v2760 = vmul.f32 %v2757, 1.442695
    %v2761 = vpow.pop %v2760
    %v2762 = vperm.slane %v2695, 2
    %v2763 = vmul.f32 %v2762, %v2179
    %v2764 = vmul.f32 %v2762, %v2180
    %v2765 = vmul.f32 %v2763, 1.442695
    %v2766 = vpow.pop %v2765
    %v2767 = vmul.f32 %v2764, 1.442695
    %v2768 = vpow.pop %v2767
    %v2769 = vperm.slane %v2695, 3
    %v2770 = vmul.f32 %v2769, %v2179
    %v2771 = vmul.f32 %v2769, %v2180
    %v2772 = vmul.f32 %v2770, 1.442695
    %v2773 = vpow.pop %v2772
    %v2774 = vmul.f32 %v2771, 1.442695
    %v2775 = vpow.pop %v2774
    %2777 = vset.pattern.permute.xlu0 0
    %2778 = vperm.xlu0 %2777, %v2730
    %v2779 = vpop.permute.xlu0 %2778
    %2782 = vset.pattern.permute.xlu0 0
    %2783 = vperm.xlu0 %2782, %v2732
    %v2784 = vpop.permute.xlu0 %2783
    %v2786 = vperm.slane %v2739, 0
    %v2787 = vmul.f32 %v2779, %v2786
    %v2788 = vmul.f32 %v2784, %v2786
    %2789 = vset.pattern.permute.xlu0 1
    %2790 = vperm.xlu0 %2789, %v2730
    %v2791 = vpop.permute.xlu0 %2790
    %2793 = vset.pattern.permute.xlu0 1
    %2794 = vperm.xlu0 %2793, %v2732
    %v2795 = vpop.permute.xlu0 %2794
    %v2797 = vperm.slane %v2739, 1
    %v2798 = vmul.f32 %v2791, %v2797
    %v2799 = vmul.f32 %v2795, %v2797
    %2800 = vset.pattern.permute.xlu0 2
    %2801 = vperm.xlu0 %2800, %v2730
    %v2802 = vpop.permute.xlu0 %2801
    %2804 = vset.pattern.permute.xlu0 2
    %2805 = vperm.xlu0 %2804, %v2732
    %v2806 = vpop.permute.xlu0 %2805
    %v2808 = vperm.slane %v2739, 2
    %v2809 = vmul.f32 %v2802, %v2808
    %v2810 = vmul.f32 %v2806, %v2808
    %2811 = vset.pattern.permute.xlu0 3
    %2812 = vperm.xlu0 %2811, %v2730
    %v2813 = vpop.permute.xlu0 %2812
    %2815 = vset.pattern.permute.xlu0 3
    %2816 = vperm.xlu0 %2815, %v2732
    %v2817 = vpop.permute.xlu0 %2816
    %v2819 = vperm.slane %v2739, 3
    %v2820 = vmul.f32 %v2813, %v2819
    %v2821 = vmul.f32 %v2817, %v2819
    %v2822 = vmul.f32 %v2752, 0.0
    %v2823 = vmul.f32 %v2754, 0.0
    %v2824 = vadd.f32 %v2822, %v2787
    %v2825 = vadd.f32 %v2823, %v2788
    %v2826 = vmul.f32 %v2759, %v2824
    %v2827 = vmul.f32 %v2761, %v2825
    %v2828 = vadd.f32 %v2826, %v2798
    %v2829 = vadd.f32 %v2827, %v2799
    %v2830 = vmul.f32 %v2766, %v2828
    %v2831 = vmul.f32 %v2768, %v2829
    %v2832 = vadd.f32 %v2830, %v2809
    %v2833 = vadd.f32 %v2831, %v2810
    %v2834 = vmul.f32 %v2773, %v2832
    %v2835 = vmul.f32 %v2775, %v2833
    %v2836 = vadd.f32 %v2834, %v2820
    %v2837 = vadd.f32 %v2835, %v2821
    %2839 = vset.pattern.permute.xlu0 0
    %2840 = vperm.xlu0 %2839, %v2735
    %v2841 = vpop.permute.xlu0 %2840
    %2844 = vset.pattern.permute.xlu0 0
    %2845 = vperm.xlu0 %2844, %v2737
    %v2846 = vpop.permute.xlu0 %2845
    %v2848 = vmul.f32 %v2824, %v2841
    %v2849 = vmul.f32 %v2825, %v2846
    %v2850 = vsel %vm542, %v2848, 0.0
    %v2851 = vsel %vm542, %v2849, 0.0
    %v2852 = vadd.f32 %v2850, %v2851
    %v2853 = vrot.slane %v2852, 4
    %v2854 = vadd.f32 %v2852, %v2853
    %v2855 = vrot.slane %v2854, 2
    %v2856 = vadd.f32 %v2854, %v2855
    %v2857 = vrot.slane %v2856, 1
    %v2858 = vadd.f32 %v2856, %v2857
    %v2859 = vadd.f32 %v2858, %v2744
    %2861 = vrot.lane.b32.xlu0 %v2406, 64
    %v2862 = vpop.permute.xlu0 %2861
    %v2864 = vmul.f32 %v2859, %v2862
    %2865 = vset.pattern.permute.xlu0 1
    %2866 = vperm.xlu0 %2865, %v2735
    %v2867 = vpop.permute.xlu0 %2866
    %2869 = vset.pattern.permute.xlu0 1
    %2870 = vperm.xlu0 %2869, %v2737
    %v2871 = vpop.permute.xlu0 %2870
    %v2873 = vmul.f32 %v2828, %v2867
    %v2874 = vmul.f32 %v2829, %v2871
    %v2875 = vsel %vm542, %v2873, 0.0
    %v2876 = vsel %vm542, %v2874, 0.0
    %v2877 = vadd.f32 %v2875, %v2876
    %v2878 = vrot.slane %v2877, 4
    %v2879 = vadd.f32 %v2877, %v2878
    %v2880 = vrot.slane %v2879, 2
    %v2881 = vadd.f32 %v2879, %v2880
    %v2882 = vrot.slane %v2881, 1
    %v2883 = vadd.f32 %v2881, %v2882
    %v2884 = vadd.f32 %v2883, %v2744
    %v2885 = vmul.f32 %v2884, %v2862
    %2886 = vset.pattern.permute.xlu0 2
    %2887 = vperm.xlu0 %2886, %v2735
    %v2888 = vpop.permute.xlu0 %2887
    %2890 = vset.pattern.permute.xlu0 2
    %2891 = vperm.xlu0 %2890, %v2737
    %v2892 = vpop.permute.xlu0 %2891
    %v2894 = vmul.f32 %v2832, %v2888
    %v2895 = vmul.f32 %v2833, %v2892
    %v2896 = vsel %vm542, %v2894, 0.0
    %v2897 = vsel %vm542, %v2895, 0.0
    %v2898 = vadd.f32 %v2896, %v2897
    %v2899 = vrot.slane %v2898, 4
    %v2900 = vadd.f32 %v2898, %v2899
    %v2901 = vrot.slane %v2900, 2
    %v2902 = vadd.f32 %v2900, %v2901
    %v2903 = vrot.slane %v2902, 1
    %v2904 = vadd.f32 %v2902, %v2903
    %v2905 = vadd.f32 %v2904, %v2744
    %v2906 = vmul.f32 %v2905, %v2862
    %2907 = vset.pattern.permute.xlu0 3
    %2908 = vperm.xlu0 %2907, %v2735
    %v2909 = vpop.permute.xlu0 %2908
    %2911 = vset.pattern.permute.xlu0 3
    %2912 = vperm.xlu0 %2911, %v2737
    %v2913 = vpop.permute.xlu0 %2912
    %v2915 = vmul.f32 %v2836, %v2909
    %v2916 = vmul.f32 %v2837, %v2913
    %v2917 = vsel %vm542, %v2915, 0.0
    %v2918 = vsel %vm542, %v2916, 0.0
    %v2919 = vadd.f32 %v2917, %v2918
    %v2920 = vrot.slane %v2919, 4
    %v2921 = vadd.f32 %v2919, %v2920
    %v2922 = vrot.slane %v2921, 2
    %v2923 = vadd.f32 %v2921, %v2922
    %v2924 = vrot.slane %v2923, 1
    %v2925 = vadd.f32 %v2923, %v2924
    %v2926 = vadd.f32 %v2925, %v2744
    %v2927 = vmul.f32 %v2926, %v2862
    %v2928 = vperm.slane %v2695, 4
    %v2929 = vmul.f32 %v2928, %v2179
    %v2930 = vmul.f32 %v2928, %v2180
    %v2931 = vmul.f32 %v2929, 1.442695
    %v2932 = vpow.pop %v2931
    %v2933 = vmul.f32 %v2930, 1.442695
    %v2934 = vpow.pop %v2933
    %v2935 = vperm.slane %v2695, 5
    %v2936 = vmul.f32 %v2935, %v2179
    %v2937 = vmul.f32 %v2935, %v2180
    %v2938 = vmul.f32 %v2936, 1.442695
    %v2939 = vpow.pop %v2938
    %v2940 = vmul.f32 %v2937, 1.442695
    %v2941 = vpow.pop %v2940
    %v2942 = vperm.slane %v2695, 6
    %v2943 = vmul.f32 %v2942, %v2179
    %v2944 = vmul.f32 %v2942, %v2180
    %v2945 = vmul.f32 %v2943, 1.442695
    %v2946 = vpow.pop %v2945
    %v2947 = vmul.f32 %v2944, 1.442695
    %v2948 = vpow.pop %v2947
    %v2949 = vperm.slane %v2695, 7
    %v2950 = vmul.f32 %v2949, %v2179
    %v2951 = vmul.f32 %v2949, %v2180
    %v2952 = vmul.f32 %v2950, 1.442695
    %v2953 = vpow.pop %v2952
    %v2954 = vmul.f32 %v2951, 1.442695
    %v2955 = vpow.pop %v2954
    %2956 = vset.pattern.permute.xlu0 4
    %2957 = vperm.xlu0 %2956, %v2730
    %v2958 = vpop.permute.xlu0 %2957
    %2960 = vset.pattern.permute.xlu0 4
    %2961 = vperm.xlu0 %2960, %v2732
    %v2962 = vpop.permute.xlu0 %2961
    %v2964 = vperm.slane %v2739, 4
    %v2965 = vmul.f32 %v2958, %v2964
    %v2966 = vmul.f32 %v2962, %v2964
    %2967 = vset.pattern.permute.xlu0 5
    %2968 = vperm.xlu0 %2967, %v2730
    %v2969 = vpop.permute.xlu0 %2968
    %2971 = vset.pattern.permute.xlu0 5
    %2972 = vperm.xlu0 %2971, %v2732
    %v2973 = vpop.permute.xlu0 %2972
    %v2975 = vperm.slane %v2739, 5
    %v2976 = vmul.f32 %v2969, %v2975
    %v2977 = vmul.f32 %v2973, %v2975
    %2978 = vset.pattern.permute.xlu0 6
    %2979 = vperm.xlu0 %2978, %v2730
    %v2980 = vpop.permute.xlu0 %2979
    %2982 = vset.pattern.permute.xlu0 6
    %2983 = vperm.xlu0 %2982, %v2732
    %v2984 = vpop.permute.xlu0 %2983
    %v2986 = vperm.slane %v2739, 6
    %v2987 = vmul.f32 %v2980, %v2986
    %v2988 = vmul.f32 %v2984, %v2986
    %2989 = vset.pattern.permute.xlu0 7
    %2990 = vperm.xlu0 %2989, %v2730
    %v2991 = vpop.permute.xlu0 %2990
    %2993 = vset.pattern.permute.xlu0 7
    %2994 = vperm.xlu0 %2993, %v2732
    %v2995 = vpop.permute.xlu0 %2994
    %v2997 = vperm.slane %v2739, 7
    %v2998 = vmul.f32 %v2991, %v2997
    %v2999 = vmul.f32 %v2995, %v2997
    %v3000 = vmul.f32 %v2932, %v2836
    %v3001 = vmul.f32 %v2934, %v2837
    %v3002 = vadd.f32 %v3000, %v2965
    %v3003 = vadd.f32 %v3001, %v2966
    %v3004 = vmul.f32 %v2939, %v3002
    %v3005 = vmul.f32 %v2941, %v3003
    %v3006 = vadd.f32 %v3004, %v2976
    %v3007 = vadd.f32 %v3005, %v2977
    %v3008 = vmul.f32 %v2946, %v3006
    %v3009 = vmul.f32 %v2948, %v3007
    %v3010 = vadd.f32 %v3008, %v2987
    %v3011 = vadd.f32 %v3009, %v2988
    %v3012 = vmul.f32 %v2953, %v3010
    %v3013 = vmul.f32 %v2955, %v3011
    %v3014 = vadd.f32 %v3012, %v2998
    %v3015 = vadd.f32 %v3013, %v2999
    %3016 = vset.pattern.permute.xlu0 4
    %3017 = vperm.xlu0 %3016, %v2735
    %v3018 = vpop.permute.xlu0 %3017
    %3020 = vset.pattern.permute.xlu0 4
    %3021 = vperm.xlu0 %3020, %v2737
    %v3022 = vpop.permute.xlu0 %3021
    %v3024 = vmul.f32 %v3002, %v3018
    %v3025 = vmul.f32 %v3003, %v3022
    %v3026 = vsel %vm542, %v3024, 0.0
    %v3027 = vsel %vm542, %v3025, 0.0
    %v3028 = vadd.f32 %v3026, %v3027
    %v3029 = vrot.slane %v3028, 4
    %v3030 = vadd.f32 %v3028, %v3029
    %v3031 = vrot.slane %v3030, 2
    %v3032 = vadd.f32 %v3030, %v3031
    %v3033 = vrot.slane %v3032, 1
    %v3034 = vadd.f32 %v3032, %v3033
    %v3035 = vadd.f32 %v3034, %v2744
    %v3036 = vmul.f32 %v3035, %v2862
    %3037 = vset.pattern.permute.xlu0 5
    %3038 = vperm.xlu0 %3037, %v2735
    %v3039 = vpop.permute.xlu0 %3038
    %3041 = vset.pattern.permute.xlu0 5
    %3042 = vperm.xlu0 %3041, %v2737
    %v3043 = vpop.permute.xlu0 %3042
    %v3045 = vmul.f32 %v3006, %v3039
    %v3046 = vmul.f32 %v3007, %v3043
    %v3047 = vsel %vm542, %v3045, 0.0
    %v3048 = vsel %vm542, %v3046, 0.0
    %v3049 = vadd.f32 %v3047, %v3048
    %v3050 = vrot.slane %v3049, 4
    %v3051 = vadd.f32 %v3049, %v3050
    %v3052 = vrot.slane %v3051, 2
    %v3053 = vadd.f32 %v3051, %v3052
    %v3054 = vrot.slane %v3053, 1
    %v3055 = vadd.f32 %v3053, %v3054
    %v3056 = vadd.f32 %v3055, %v2744
    %v3057 = vmul.f32 %v3056, %v2862
    %3058 = vset.pattern.permute.xlu0 6
    %3059 = vperm.xlu0 %3058, %v2735
    %v3060 = vpop.permute.xlu0 %3059
    %3062 = vset.pattern.permute.xlu0 6
    %3063 = vperm.xlu0 %3062, %v2737
    %v3064 = vpop.permute.xlu0 %3063
    %v3066 = vmul.f32 %v3010, %v3060
    %v3067 = vmul.f32 %v3011, %v3064
    %v3068 = vsel %vm542, %v3066, 0.0
    %v3069 = vsel %vm542, %v3067, 0.0
    %v3070 = vadd.f32 %v3068, %v3069
    %v3071 = vrot.slane %v3070, 4
    %v3072 = vadd.f32 %v3070, %v3071
    %v3073 = vrot.slane %v3072, 2
    %v3074 = vadd.f32 %v3072, %v3073
    %v3075 = vrot.slane %v3074, 1
    %v3076 = vadd.f32 %v3074, %v3075
    %v3077 = vadd.f32 %v3076, %v2744
    %v3078 = vmul.f32 %v3077, %v2862
    %3079 = vset.pattern.permute.xlu0 7
    %3080 = vperm.xlu0 %3079, %v2735
    %v3081 = vpop.permute.xlu0 %3080
    %3083 = vset.pattern.permute.xlu0 7
    %3084 = vperm.xlu0 %3083, %v2737
    %v3085 = vpop.permute.xlu0 %3084
    %v3087 = vmul.f32 %v3014, %v3081
    %v3088 = vmul.f32 %v3015, %v3085
    %v3089 = vsel %vm542, %v3087, 0.0
    %v3090 = vsel %vm542, %v3088, 0.0
    %v3091 = vadd.f32 %v3089, %v3090
    %v3092 = vrot.slane %v3091, 4
    %v3093 = vadd.f32 %v3091, %v3092
    %v3094 = vrot.slane %v3093, 2
    %v3095 = vadd.f32 %v3093, %v3094
    %v3096 = vrot.slane %v3095, 1
    %v3097 = vadd.f32 %v3095, %v3096
    %v3098 = vadd.f32 %v3097, %v2744
    %v3099 = vmul.f32 %v3098, %v2862
    %v3100 = vperm.slane %v2696, 0
    %v3101 = vmul.f32 %v3100, %v2179
    %v3102 = vmul.f32 %v3100, %v2180
    %v3103 = vmul.f32 %v3101, 1.442695
    %v3104 = vpow.pop %v3103
    %v3105 = vmul.f32 %v3102, 1.442695
    %v3106 = vpow.pop %v3105
    %v3107 = vperm.slane %v2696, 1
    %v3108 = vmul.f32 %v3107, %v2179
    %v3109 = vmul.f32 %v3107, %v2180
    %v3110 = vmul.f32 %v3108, 1.442695
    %v3111 = vpow.pop %v3110
    %v3112 = vmul.f32 %v3109, 1.442695
    %v3113 = vpow.pop %v3112
    %v3114 = vperm.slane %v2696, 2
    %v3115 = vmul.f32 %v3114, %v2179
    %v3116 = vmul.f32 %v3114, %v2180
    %v3117 = vmul.f32 %v3115, 1.442695
    %v3118 = vpow.pop %v3117
    %v3119 = vmul.f32 %v3116, 1.442695
    %v3120 = vpow.pop %v3119
    %v3121 = vperm.slane %v2696, 3
    %v3122 = vmul.f32 %v3121, %v2179
    %v3123 = vmul.f32 %v3121, %v2180
    %v3124 = vmul.f32 %v3122, 1.442695
    %v3125 = vpow.pop %v3124
    %v3126 = vmul.f32 %v3123, 1.442695
    %v3127 = vpow.pop %v3126
    %3128 = vset.pattern.permute.xlu0 8
    %3129 = vperm.xlu0 %3128, %v2730
    %v3130 = vpop.permute.xlu0 %3129
    %3132 = vset.pattern.permute.xlu0 8
    %3133 = vperm.xlu0 %3132, %v2732
    %v3134 = vpop.permute.xlu0 %3133
    %v3136 = vperm.slane %v2740, 0
    %v3137 = vmul.f32 %v3130, %v3136
    %v3138 = vmul.f32 %v3134, %v3136
    %3139 = vset.pattern.permute.xlu0 9
    %3140 = vperm.xlu0 %3139, %v2730
    %v3141 = vpop.permute.xlu0 %3140
    %3143 = vset.pattern.permute.xlu0 9
    %3144 = vperm.xlu0 %3143, %v2732
    %v3145 = vpop.permute.xlu0 %3144
    %v3147 = vperm.slane %v2740, 1
    %v3148 = vmul.f32 %v3141, %v3147
    %v3149 = vmul.f32 %v3145, %v3147
    %3150 = vset.pattern.permute.xlu0 10
    %3151 = vperm.xlu0 %3150, %v2730
    %v3152 = vpop.permute.xlu0 %3151
    %3154 = vset.pattern.permute.xlu0 10
    %3155 = vperm.xlu0 %3154, %v2732
    %v3156 = vpop.permute.xlu0 %3155
    %v3158 = vperm.slane %v2740, 2
    %v3159 = vmul.f32 %v3152, %v3158
    %v3160 = vmul.f32 %v3156, %v3158
    %3161 = vset.pattern.permute.xlu0 11
    %3162 = vperm.xlu0 %3161, %v2730
    %v3163 = vpop.permute.xlu0 %3162
    %3165 = vset.pattern.permute.xlu0 11
    %3166 = vperm.xlu0 %3165, %v2732
    %v3167 = vpop.permute.xlu0 %3166
    %v3169 = vperm.slane %v2740, 3
    %v3170 = vmul.f32 %v3163, %v3169
    %v3171 = vmul.f32 %v3167, %v3169
    %v3172 = vmul.f32 %v3104, %v3014
    %v3173 = vmul.f32 %v3106, %v3015
    %v3174 = vadd.f32 %v3172, %v3137
    %v3175 = vadd.f32 %v3173, %v3138
    %v3176 = vmul.f32 %v3111, %v3174
    %v3177 = vmul.f32 %v3113, %v3175
    %v3178 = vadd.f32 %v3176, %v3148
    %v3179 = vadd.f32 %v3177, %v3149
    %v3180 = vmul.f32 %v3118, %v3178
    %v3181 = vmul.f32 %v3120, %v3179
    %v3182 = vadd.f32 %v3180, %v3159
    %v3183 = vadd.f32 %v3181, %v3160
    %v3184 = vmul.f32 %v3125, %v3182
    %v3185 = vmul.f32 %v3127, %v3183
    %v3186 = vadd.f32 %v3184, %v3170
    %v3187 = vadd.f32 %v3185, %v3171
    %3188 = vset.pattern.permute.xlu0 8
    %3189 = vperm.xlu0 %3188, %v2735
    %v3190 = vpop.permute.xlu0 %3189
    %3192 = vset.pattern.permute.xlu0 8
    %3193 = vperm.xlu0 %3192, %v2737
    %v3194 = vpop.permute.xlu0 %3193
    %v3196 = vmul.f32 %v3174, %v3190
    %v3197 = vmul.f32 %v3175, %v3194
    %v3198 = vsel %vm542, %v3196, 0.0
    %v3199 = vsel %vm542, %v3197, 0.0
    %v3200 = vadd.f32 %v3198, %v3199
    %v3201 = vrot.slane %v3200, 4
    %v3202 = vadd.f32 %v3200, %v3201
    %v3203 = vrot.slane %v3202, 2
    %v3204 = vadd.f32 %v3202, %v3203
    %v3205 = vrot.slane %v3204, 1
    %v3206 = vadd.f32 %v3204, %v3205
    %v3207 = vadd.f32 %v3206, %v2745
    %3209 = vrot.lane.b32.xlu0 %v2407, 64
    %v3210 = vpop.permute.xlu0 %3209
    %v3212 = vmul.f32 %v3207, %v3210
    %3213 = vset.pattern.permute.xlu0 9
    %3214 = vperm.xlu0 %3213, %v2735
    %v3215 = vpop.permute.xlu0 %3214
    %3217 = vset.pattern.permute.xlu0 9
    %3218 = vperm.xlu0 %3217, %v2737
    %v3219 = vpop.permute.xlu0 %3218
    %v3221 = vmul.f32 %v3178, %v3215
    %v3222 = vmul.f32 %v3179, %v3219
    %v3223 = vsel %vm542, %v3221, 0.0
    %v3224 = vsel %vm542, %v3222, 0.0
    %v3225 = vadd.f32 %v3223, %v3224
    %v3226 = vrot.slane %v3225, 4
    %v3227 = vadd.f32 %v3225, %v3226
    %v3228 = vrot.slane %v3227, 2
    %v3229 = vadd.f32 %v3227, %v3228
    %v3230 = vrot.slane %v3229, 1
    %v3231 = vadd.f32 %v3229, %v3230
    %v3232 = vadd.f32 %v3231, %v2745
    %v3233 = vmul.f32 %v3232, %v3210
    %3234 = vset.pattern.permute.xlu0 10
    %3235 = vperm.xlu0 %3234, %v2735
    %v3236 = vpop.permute.xlu0 %3235
    %3238 = vset.pattern.permute.xlu0 10
    %3239 = vperm.xlu0 %3238, %v2737
    %v3240 = vpop.permute.xlu0 %3239
    %v3242 = vmul.f32 %v3182, %v3236
    %v3243 = vmul.f32 %v3183, %v3240
    %v3244 = vsel %vm542, %v3242, 0.0
    %v3245 = vsel %vm542, %v3243, 0.0
    %v3246 = vadd.f32 %v3244, %v3245
    %v3247 = vrot.slane %v3246, 4
    %v3248 = vadd.f32 %v3246, %v3247
    %v3249 = vrot.slane %v3248, 2
    %v3250 = vadd.f32 %v3248, %v3249
    %v3251 = vrot.slane %v3250, 1
    %v3252 = vadd.f32 %v3250, %v3251
    %v3253 = vadd.f32 %v3252, %v2745
    %v3254 = vmul.f32 %v3253, %v3210
    %3255 = vset.pattern.permute.xlu0 11
    %3256 = vperm.xlu0 %3255, %v2735
    %v3257 = vpop.permute.xlu0 %3256
    %3259 = vset.pattern.permute.xlu0 11
    %3260 = vperm.xlu0 %3259, %v2737
    %v3261 = vpop.permute.xlu0 %3260
    %v3263 = vmul.f32 %v3186, %v3257
    %v3264 = vmul.f32 %v3187, %v3261
    %v3265 = vsel %vm542, %v3263, 0.0
    %v3266 = vsel %vm542, %v3264, 0.0
    %v3267 = vadd.f32 %v3265, %v3266
    %v3268 = vrot.slane %v3267, 4
    %v3269 = vadd.f32 %v3267, %v3268
    %v3270 = vrot.slane %v3269, 2
    %v3271 = vadd.f32 %v3269, %v3270
    %v3272 = vrot.slane %v3271, 1
    %v3273 = vadd.f32 %v3271, %v3272
    %v3274 = vadd.f32 %v3273, %v2745
    %v3275 = vmul.f32 %v3274, %v3210
    %v3276 = vperm.slane %v2696, 4
    %v3277 = vmul.f32 %v3276, %v2179
    %v3278 = vmul.f32 %v3276, %v2180
    %v3279 = vmul.f32 %v3277, 1.442695
    %v3280 = vpow.pop %v3279
    %v3281 = vmul.f32 %v3278, 1.442695
    %v3282 = vpow.pop %v3281
    %v3283 = vperm.slane %v2696, 5
    %v3284 = vmul.f32 %v3283, %v2179
    %v3285 = vmul.f32 %v3283, %v2180
    %v3286 = vmul.f32 %v3284, 1.442695
    %v3287 = vpow.pop %v3286
    %v3288 = vmul.f32 %v3285, 1.442695
    %v3289 = vpow.pop %v3288
    %v3290 = vperm.slane %v2696, 6
    %v3291 = vmul.f32 %v3290, %v2179
    %v3292 = vmul.f32 %v3290, %v2180
    %v3293 = vmul.f32 %v3291, 1.442695
    %v3294 = vpow.pop %v3293
    %v3295 = vmul.f32 %v3292, 1.442695
    %v3296 = vpow.pop %v3295
    %v3297 = vperm.slane %v2696, 7
    %v3298 = vmul.f32 %v3297, %v2179
    %v3299 = vmul.f32 %v3297, %v2180
    %v3300 = vmul.f32 %v3298, 1.442695
    %v3301 = vpow.pop %v3300
    %v3302 = vmul.f32 %v3299, 1.442695
    %v3303 = vpow.pop %v3302
    %3304 = vset.pattern.permute.xlu0 12
    %3305 = vperm.xlu0 %3304, %v2730
    %v3306 = vpop.permute.xlu0 %3305
    %3308 = vset.pattern.permute.xlu0 12
    %3309 = vperm.xlu0 %3308, %v2732
    %v3310 = vpop.permute.xlu0 %3309
    %v3312 = vperm.slane %v2740, 4
    %v3313 = vmul.f32 %v3306, %v3312
    %v3314 = vmul.f32 %v3310, %v3312
    %3315 = vset.pattern.permute.xlu0 13
    %3316 = vperm.xlu0 %3315, %v2730
    %v3317 = vpop.permute.xlu0 %3316
    %3319 = vset.pattern.permute.xlu0 13
    %3320 = vperm.xlu0 %3319, %v2732
    %v3321 = vpop.permute.xlu0 %3320
    %v3323 = vperm.slane %v2740, 5
    %v3324 = vmul.f32 %v3317, %v3323
    %v3325 = vmul.f32 %v3321, %v3323
    %3326 = vset.pattern.permute.xlu0 14
    %3327 = vperm.xlu0 %3326, %v2730
    %v3328 = vpop.permute.xlu0 %3327
    %3330 = vset.pattern.permute.xlu0 14
    %3331 = vperm.xlu0 %3330, %v2732
    %v3332 = vpop.permute.xlu0 %3331
    %v3334 = vperm.slane %v2740, 6
    %v3335 = vmul.f32 %v3328, %v3334
    %v3336 = vmul.f32 %v3332, %v3334
    %3337 = vset.pattern.permute.xlu0 15
    %3338 = vperm.xlu0 %3337, %v2730
    %v3339 = vpop.permute.xlu0 %3338
    %3341 = vset.pattern.permute.xlu0 15
    %3342 = vperm.xlu0 %3341, %v2732
    %v3343 = vpop.permute.xlu0 %3342
    %v3345 = vperm.slane %v2740, 7
    %v3346 = vmul.f32 %v3339, %v3345
    %v3347 = vmul.f32 %v3343, %v3345
    %v3348 = vmul.f32 %v3280, %v3186
    %v3349 = vmul.f32 %v3282, %v3187
    %v3350 = vadd.f32 %v3348, %v3313
    %v3351 = vadd.f32 %v3349, %v3314
    %v3352 = vmul.f32 %v3287, %v3350
    %v3353 = vmul.f32 %v3289, %v3351
    %v3354 = vadd.f32 %v3352, %v3324
    %v3355 = vadd.f32 %v3353, %v3325
    %v3356 = vmul.f32 %v3294, %v3354
    %v3357 = vmul.f32 %v3296, %v3355
    %v3358 = vadd.f32 %v3356, %v3335
    %v3359 = vadd.f32 %v3357, %v3336
    %v3360 = vmul.f32 %v3301, %v3358
    %v3361 = vmul.f32 %v3303, %v3359
    %v3362 = vadd.f32 %v3360, %v3346
    %v3363 = vadd.f32 %v3361, %v3347
    %3364 = vset.pattern.permute.xlu0 12
    %3365 = vperm.xlu0 %3364, %v2735
    %v3366 = vpop.permute.xlu0 %3365
    %3368 = vset.pattern.permute.xlu0 12
    %3369 = vperm.xlu0 %3368, %v2737
    %v3370 = vpop.permute.xlu0 %3369
    %v3372 = vmul.f32 %v3350, %v3366
    %v3373 = vmul.f32 %v3351, %v3370
    %v3374 = vsel %vm542, %v3372, 0.0
    %v3375 = vsel %vm542, %v3373, 0.0
    %v3376 = vadd.f32 %v3374, %v3375
    %v3377 = vrot.slane %v3376, 4
    %v3378 = vadd.f32 %v3376, %v3377
    %v3379 = vrot.slane %v3378, 2
    %v3380 = vadd.f32 %v3378, %v3379
    %v3381 = vrot.slane %v3380, 1
    %v3382 = vadd.f32 %v3380, %v3381
    %v3383 = vadd.f32 %v3382, %v2745
    %v3384 = vmul.f32 %v3383, %v3210
    %3385 = vset.pattern.permute.xlu0 13
    %3386 = vperm.xlu0 %3385, %v2735
    %v3387 = vpop.permute.xlu0 %3386
    %3389 = vset.pattern.permute.xlu0 13
    %3390 = vperm.xlu0 %3389, %v2737
    %v3391 = vpop.permute.xlu0 %3390
    %v3393 = vmul.f32 %v3354, %v3387
    %v3394 = vmul.f32 %v3355, %v3391
    %v3395 = vsel %vm542, %v3393, 0.0
    %v3396 = vsel %vm542, %v3394, 0.0
    %v3397 = vadd.f32 %v3395, %v3396
    %v3398 = vrot.slane %v3397, 4
    %v3399 = vadd.f32 %v3397, %v3398
    %v3400 = vrot.slane %v3399, 2
    %v3401 = vadd.f32 %v3399, %v3400
    %v3402 = vrot.slane %v3401, 1
    %v3403 = vadd.f32 %v3401, %v3402
    %v3404 = vadd.f32 %v3403, %v2745
    %v3405 = vmul.f32 %v3404, %v3210
    %3406 = vset.pattern.permute.xlu0 14
    %3407 = vperm.xlu0 %3406, %v2735
    %v3408 = vpop.permute.xlu0 %3407
    %3410 = vset.pattern.permute.xlu0 14
    %3411 = vperm.xlu0 %3410, %v2737
    %v3412 = vpop.permute.xlu0 %3411
    %v3414 = vmul.f32 %v3358, %v3408
    %v3415 = vmul.f32 %v3359, %v3412
    %v3416 = vsel %vm542, %v3414, 0.0
    %v3417 = vsel %vm542, %v3415, 0.0
    %v3418 = vadd.f32 %v3416, %v3417
    %v3419 = vrot.slane %v3418, 4
    %v3420 = vadd.f32 %v3418, %v3419
    %v3421 = vrot.slane %v3420, 2
    %v3422 = vadd.f32 %v3420, %v3421
    %v3423 = vrot.slane %v3422, 1
    %v3424 = vadd.f32 %v3422, %v3423
    %v3425 = vadd.f32 %v3424, %v2745
    %v3426 = vmul.f32 %v3425, %v3210
    %3427 = vset.pattern.permute.xlu0 15
    %3428 = vperm.xlu0 %3427, %v2735
    %v3429 = vpop.permute.xlu0 %3428
    %3431 = vset.pattern.permute.xlu0 15
    %3432 = vperm.xlu0 %3431, %v2737
    %v3433 = vpop.permute.xlu0 %3432
    %v3435 = vmul.f32 %v3362, %v3429
    %v3436 = vmul.f32 %v3363, %v3433
    %v3437 = vsel %vm542, %v3435, 0.0
    %v3438 = vsel %vm542, %v3436, 0.0
    %v3439 = vadd.f32 %v3437, %v3438
    %v3440 = vrot.slane %v3439, 4
    %v3441 = vadd.f32 %v3439, %v3440
    %v3442 = vrot.slane %v3441, 2
    %v3443 = vadd.f32 %v3441, %v3442
    %v3444 = vrot.slane %v3443, 1
    %v3445 = vadd.f32 %v3443, %v3444
    %v3446 = vadd.f32 %v3445, %v2745
    %v3447 = vmul.f32 %v3446, %v3210
    %v3448 = vperm.slane %v2697, 0
    %v3449 = vmul.f32 %v3448, %v2179
    %v3450 = vmul.f32 %v3448, %v2180
    %v3451 = vmul.f32 %v3449, 1.442695
    %v3452 = vpow.pop %v3451
    %v3453 = vmul.f32 %v3450, 1.442695
    %v3454 = vpow.pop %v3453
    %v3455 = vperm.slane %v2697, 1
    %v3456 = vmul.f32 %v3455, %v2179
    %v3457 = vmul.f32 %v3455, %v2180
    %v3458 = vmul.f32 %v3456, 1.442695
    %v3459 = vpow.pop %v3458
    %v3460 = vmul.f32 %v3457, 1.442695
    %v3461 = vpow.pop %v3460
    %v3462 = vperm.slane %v2697, 2
    %v3463 = vmul.f32 %v3462, %v2179
    %v3464 = vmul.f32 %v3462, %v2180
    %v3465 = vmul.f32 %v3463, 1.442695
    %v3466 = vpow.pop %v3465
    %v3467 = vmul.f32 %v3464, 1.442695
    %v3468 = vpow.pop %v3467
    %v3469 = vperm.slane %v2697, 3
    %v3470 = vmul.f32 %v3469, %v2179
    %v3471 = vmul.f32 %v3469, %v2180
    %v3472 = vmul.f32 %v3470, 1.442695
    %v3473 = vpow.pop %v3472
    %v3474 = vmul.f32 %v3471, 1.442695
    %v3475 = vpow.pop %v3474
    %3476 = vset.pattern.permute.xlu0 16
    %3477 = vperm.xlu0 %3476, %v2730
    %v3478 = vpop.permute.xlu0 %3477
    %3480 = vset.pattern.permute.xlu0 16
    %3481 = vperm.xlu0 %3480, %v2732
    %v3482 = vpop.permute.xlu0 %3481
    %v3484 = vperm.slane %v2741, 0
    %v3485 = vmul.f32 %v3478, %v3484
    %v3486 = vmul.f32 %v3482, %v3484
    %3487 = vset.pattern.permute.xlu0 17
    %3488 = vperm.xlu0 %3487, %v2730
    %v3489 = vpop.permute.xlu0 %3488
    %3491 = vset.pattern.permute.xlu0 17
    %3492 = vperm.xlu0 %3491, %v2732
    %v3493 = vpop.permute.xlu0 %3492
    %v3495 = vperm.slane %v2741, 1
    %v3496 = vmul.f32 %v3489, %v3495
    %v3497 = vmul.f32 %v3493, %v3495
    %3498 = vset.pattern.permute.xlu0 18
    %3499 = vperm.xlu0 %3498, %v2730
    %v3500 = vpop.permute.xlu0 %3499
    %3502 = vset.pattern.permute.xlu0 18
    %3503 = vperm.xlu0 %3502, %v2732
    %v3504 = vpop.permute.xlu0 %3503
    %v3506 = vperm.slane %v2741, 2
    %v3507 = vmul.f32 %v3500, %v3506
    %v3508 = vmul.f32 %v3504, %v3506
    %3509 = vset.pattern.permute.xlu0 19
    %3510 = vperm.xlu0 %3509, %v2730
    %v3511 = vpop.permute.xlu0 %3510
    %3513 = vset.pattern.permute.xlu0 19
    %3514 = vperm.xlu0 %3513, %v2732
    %v3515 = vpop.permute.xlu0 %3514
    %v3517 = vperm.slane %v2741, 3
    %v3518 = vmul.f32 %v3511, %v3517
    %v3519 = vmul.f32 %v3515, %v3517
    %v3520 = vmul.f32 %v3452, 0.0
    %v3521 = vmul.f32 %v3454, 0.0
    %v3522 = vadd.f32 %v3520, %v3485
    %v3523 = vadd.f32 %v3521, %v3486
    %v3524 = vmul.f32 %v3459, %v3522
    %v3525 = vmul.f32 %v3461, %v3523
    %v3526 = vadd.f32 %v3524, %v3496
    %v3527 = vadd.f32 %v3525, %v3497
    %v3528 = vmul.f32 %v3466, %v3526
    %v3529 = vmul.f32 %v3468, %v3527
    %v3530 = vadd.f32 %v3528, %v3507
    %v3531 = vadd.f32 %v3529, %v3508
    %v3532 = vmul.f32 %v3473, %v3530
    %v3533 = vmul.f32 %v3475, %v3531
    %v3534 = vadd.f32 %v3532, %v3518
    %v3535 = vadd.f32 %v3533, %v3519
    %3536 = vset.pattern.permute.xlu0 16
    %3537 = vperm.xlu0 %3536, %v2735
    %v3538 = vpop.permute.xlu0 %3537
    %3540 = vset.pattern.permute.xlu0 16
    %3541 = vperm.xlu0 %3540, %v2737
    %v3542 = vpop.permute.xlu0 %3541
    %v3544 = vmul.f32 %v3522, %v3538
    %v3545 = vmul.f32 %v3523, %v3542
    %v3546 = vsel %vm542, %v3544, 0.0
    %v3547 = vsel %vm542, %v3545, 0.0
    %v3548 = vadd.f32 %v3546, %v3547
    %v3549 = vrot.slane %v3548, 4
    %v3550 = vadd.f32 %v3548, %v3549
    %v3551 = vrot.slane %v3550, 2
    %v3552 = vadd.f32 %v3550, %v3551
    %v3553 = vrot.slane %v3552, 1
    %v3554 = vadd.f32 %v3552, %v3553
    %v3555 = vadd.f32 %v3554, %v2746
    %3557 = vrot.lane.b32.xlu0 %v2408, 64
    %v3558 = vpop.permute.xlu0 %3557
    %v3560 = vmul.f32 %v3555, %v3558
    %3561 = vset.pattern.permute.xlu0 17
    %3562 = vperm.xlu0 %3561, %v2735
    %v3563 = vpop.permute.xlu0 %3562
    %3565 = vset.pattern.permute.xlu0 17
    %3566 = vperm.xlu0 %3565, %v2737
    %v3567 = vpop.permute.xlu0 %3566
    %v3569 = vmul.f32 %v3526, %v3563
    %v3570 = vmul.f32 %v3527, %v3567
    %v3571 = vsel %vm542, %v3569, 0.0
    %v3572 = vsel %vm542, %v3570, 0.0
    %v3573 = vadd.f32 %v3571, %v3572
    %v3574 = vrot.slane %v3573, 4
    %v3575 = vadd.f32 %v3573, %v3574
    %v3576 = vrot.slane %v3575, 2
    %v3577 = vadd.f32 %v3575, %v3576
    %v3578 = vrot.slane %v3577, 1
    %v3579 = vadd.f32 %v3577, %v3578
    %v3580 = vadd.f32 %v3579, %v2746
    %v3581 = vmul.f32 %v3580, %v3558
    %3582 = vset.pattern.permute.xlu0 18
    %3583 = vperm.xlu0 %3582, %v2735
    %v3584 = vpop.permute.xlu0 %3583
    %3586 = vset.pattern.permute.xlu0 18
    %3587 = vperm.xlu0 %3586, %v2737
    %v3588 = vpop.permute.xlu0 %3587
    %v3590 = vmul.f32 %v3530, %v3584
    %v3591 = vmul.f32 %v3531, %v3588
    %v3592 = vsel %vm542, %v3590, 0.0
    %v3593 = vsel %vm542, %v3591, 0.0
    %v3594 = vadd.f32 %v3592, %v3593
    %v3595 = vrot.slane %v3594, 4
    %v3596 = vadd.f32 %v3594, %v3595
    %v3597 = vrot.slane %v3596, 2
    %v3598 = vadd.f32 %v3596, %v3597
    %v3599 = vrot.slane %v3598, 1
    %v3600 = vadd.f32 %v3598, %v3599
    %v3601 = vadd.f32 %v3600, %v2746
    %v3602 = vmul.f32 %v3601, %v3558
    %3603 = vset.pattern.permute.xlu0 19
    %3604 = vperm.xlu0 %3603, %v2735
    %v3605 = vpop.permute.xlu0 %3604
    %3607 = vset.pattern.permute.xlu0 19
    %3608 = vperm.xlu0 %3607, %v2737
    %v3609 = vpop.permute.xlu0 %3608
    %v3611 = vmul.f32 %v3534, %v3605
    %v3612 = vmul.f32 %v3535, %v3609
    %v3613 = vsel %vm542, %v3611, 0.0
    %v3614 = vsel %vm542, %v3612, 0.0
    %v3615 = vadd.f32 %v3613, %v3614
    %v3616 = vrot.slane %v3615, 4
    %v3617 = vadd.f32 %v3615, %v3616
    %v3618 = vrot.slane %v3617, 2
    %v3619 = vadd.f32 %v3617, %v3618
    %v3620 = vrot.slane %v3619, 1
    %v3621 = vadd.f32 %v3619, %v3620
    %v3622 = vadd.f32 %v3621, %v2746
    %v3623 = vmul.f32 %v3622, %v3558
    %v3624 = vperm.slane %v2697, 4
    %v3625 = vmul.f32 %v3624, %v2179
    %v3626 = vmul.f32 %v3624, %v2180
    %v3627 = vmul.f32 %v3625, 1.442695
    %v3628 = vpow.pop %v3627
    %v3629 = vmul.f32 %v3626, 1.442695
    %v3630 = vpow.pop %v3629
    %v3631 = vperm.slane %v2697, 5
    %v3632 = vmul.f32 %v3631, %v2179
    %v3633 = vmul.f32 %v3631, %v2180
    %v3634 = vmul.f32 %v3632, 1.442695
    %v3635 = vpow.pop %v3634
    %v3636 = vmul.f32 %v3633, 1.442695
    %v3637 = vpow.pop %v3636
    %v3638 = vperm.slane %v2697, 6
    %v3639 = vmul.f32 %v3638, %v2179
    %v3640 = vmul.f32 %v3638, %v2180
    %v3641 = vmul.f32 %v3639, 1.442695
    %v3642 = vpow.pop %v3641
    %v3643 = vmul.f32 %v3640, 1.442695
    %v3644 = vpow.pop %v3643
    %v3645 = vperm.slane %v2697, 7
    %v3646 = vmul.f32 %v3645, %v2179
    %v3647 = vmul.f32 %v3645, %v2180
    %v3648 = vmul.f32 %v3646, 1.442695
    %v3649 = vpow.pop %v3648
    %v3650 = vmul.f32 %v3647, 1.442695
    %v3651 = vpow.pop %v3650
    %3652 = vset.pattern.permute.xlu0 20
    %3653 = vperm.xlu0 %3652, %v2730
    %v3654 = vpop.permute.xlu0 %3653
    %3656 = vset.pattern.permute.xlu0 20
    %3657 = vperm.xlu0 %3656, %v2732
    %v3658 = vpop.permute.xlu0 %3657
    %v3660 = vperm.slane %v2741, 4
    %v3661 = vmul.f32 %v3654, %v3660
    %v3662 = vmul.f32 %v3658, %v3660
    %3663 = vset.pattern.permute.xlu0 21
    %3664 = vperm.xlu0 %3663, %v2730
    %v3665 = vpop.permute.xlu0 %3664
    %3667 = vset.pattern.permute.xlu0 21
    %3668 = vperm.xlu0 %3667, %v2732
    %v3669 = vpop.permute.xlu0 %3668
    %v3671 = vperm.slane %v2741, 5
    %v3672 = vmul.f32 %v3665, %v3671
    %v3673 = vmul.f32 %v3669, %v3671
    %3674 = vset.pattern.permute.xlu0 22
    %3675 = vperm.xlu0 %3674, %v2730
    %v3676 = vpop.permute.xlu0 %3675
    %3678 = vset.pattern.permute.xlu0 22
    %3679 = vperm.xlu0 %3678, %v2732
    %v3680 = vpop.permute.xlu0 %3679
    %v3682 = vperm.slane %v2741, 6
    %v3683 = vmul.f32 %v3676, %v3682
    %v3684 = vmul.f32 %v3680, %v3682
    %3685 = vset.pattern.permute.xlu0 23
    %3686 = vperm.xlu0 %3685, %v2730
    %v3687 = vpop.permute.xlu0 %3686
    %3689 = vset.pattern.permute.xlu0 23
    %3690 = vperm.xlu0 %3689, %v2732
    %v3691 = vpop.permute.xlu0 %3690
    %v3693 = vperm.slane %v2741, 7
    %v3694 = vmul.f32 %v3687, %v3693
    %v3695 = vmul.f32 %v3691, %v3693
    %v3696 = vmul.f32 %v3628, %v3534
    %v3697 = vmul.f32 %v3630, %v3535
    %v3698 = vadd.f32 %v3696, %v3661
    %v3699 = vadd.f32 %v3697, %v3662
    %v3700 = vmul.f32 %v3635, %v3698
    %v3701 = vmul.f32 %v3637, %v3699
    %v3702 = vadd.f32 %v3700, %v3672
    %v3703 = vadd.f32 %v3701, %v3673
    %v3704 = vmul.f32 %v3642, %v3702
    %v3705 = vmul.f32 %v3644, %v3703
    %v3706 = vadd.f32 %v3704, %v3683
    %v3707 = vadd.f32 %v3705, %v3684
    %v3708 = vmul.f32 %v3649, %v3706
    %v3709 = vmul.f32 %v3651, %v3707
    %v3710 = vadd.f32 %v3708, %v3694
    %v3711 = vadd.f32 %v3709, %v3695
    %3712 = vset.pattern.permute.xlu0 20
    %3713 = vperm.xlu0 %3712, %v2735
    %v3714 = vpop.permute.xlu0 %3713
    %3716 = vset.pattern.permute.xlu0 20
    %3717 = vperm.xlu0 %3716, %v2737
    %v3718 = vpop.permute.xlu0 %3717
    %v3720 = vmul.f32 %v3698, %v3714
    %v3721 = vmul.f32 %v3699, %v3718
    %v3722 = vsel %vm542, %v3720, 0.0
    %v3723 = vsel %vm542, %v3721, 0.0
    %v3724 = vadd.f32 %v3722, %v3723
    %v3725 = vrot.slane %v3724, 4
    %v3726 = vadd.f32 %v3724, %v3725
    %v3727 = vrot.slane %v3726, 2
    %v3728 = vadd.f32 %v3726, %v3727
    %v3729 = vrot.slane %v3728, 1
    %v3730 = vadd.f32 %v3728, %v3729
    %v3731 = vadd.f32 %v3730, %v2746
    %v3732 = vmul.f32 %v3731, %v3558
    %3733 = vset.pattern.permute.xlu0 21
    %3734 = vperm.xlu0 %3733, %v2735
    %v3735 = vpop.permute.xlu0 %3734
    %3737 = vset.pattern.permute.xlu0 21
    %3738 = vperm.xlu0 %3737, %v2737
    %v3739 = vpop.permute.xlu0 %3738
    %v3741 = vmul.f32 %v3702, %v3735
    %v3742 = vmul.f32 %v3703, %v3739
    %v3743 = vsel %vm542, %v3741, 0.0
    %v3744 = vsel %vm542, %v3742, 0.0
    %v3745 = vadd.f32 %v3743, %v3744
    %v3746 = vrot.slane %v3745, 4
    %v3747 = vadd.f32 %v3745, %v3746
    %v3748 = vrot.slane %v3747, 2
    %v3749 = vadd.f32 %v3747, %v3748
    %v3750 = vrot.slane %v3749, 1
    %v3751 = vadd.f32 %v3749, %v3750
    %v3752 = vadd.f32 %v3751, %v2746
    %v3753 = vmul.f32 %v3752, %v3558
    %3754 = vset.pattern.permute.xlu0 22
    %3755 = vperm.xlu0 %3754, %v2735
    %v3756 = vpop.permute.xlu0 %3755
    %3758 = vset.pattern.permute.xlu0 22
    %3759 = vperm.xlu0 %3758, %v2737
    %v3760 = vpop.permute.xlu0 %3759
    %v3762 = vmul.f32 %v3706, %v3756
    %v3763 = vmul.f32 %v3707, %v3760
    %v3764 = vsel %vm542, %v3762, 0.0
    %v3765 = vsel %vm542, %v3763, 0.0
    %v3766 = vadd.f32 %v3764, %v3765
    %v3767 = vrot.slane %v3766, 4
    %v3768 = vadd.f32 %v3766, %v3767
    %v3769 = vrot.slane %v3768, 2
    %v3770 = vadd.f32 %v3768, %v3769
    %v3771 = vrot.slane %v3770, 1
    %v3772 = vadd.f32 %v3770, %v3771
    %v3773 = vadd.f32 %v3772, %v2746
    %v3774 = vmul.f32 %v3773, %v3558
    %3775 = vset.pattern.permute.xlu0 23
    %3776 = vperm.xlu0 %3775, %v2735
    %v3777 = vpop.permute.xlu0 %3776
    %3779 = vset.pattern.permute.xlu0 23
    %3780 = vperm.xlu0 %3779, %v2737
    %v3781 = vpop.permute.xlu0 %3780
    %v3783 = vmul.f32 %v3710, %v3777
    %v3784 = vmul.f32 %v3711, %v3781
    %v3785 = vsel %vm542, %v3783, 0.0
    %v3786 = vsel %vm542, %v3784, 0.0
    %v3787 = vadd.f32 %v3785, %v3786
    %v3788 = vrot.slane %v3787, 4
    %v3789 = vadd.f32 %v3787, %v3788
    %v3790 = vrot.slane %v3789, 2
    %v3791 = vadd.f32 %v3789, %v3790
    %v3792 = vrot.slane %v3791, 1
    %v3793 = vadd.f32 %v3791, %v3792
    %v3794 = vadd.f32 %v3793, %v2746
    %v3795 = vmul.f32 %v3794, %v3558
    %v3796 = vperm.slane %v2698, 0
    %v3797 = vmul.f32 %v3796, %v2179
    %v3798 = vmul.f32 %v3796, %v2180
    %v3799 = vmul.f32 %v3797, 1.442695
    %v3800 = vpow.pop %v3799
    %v3801 = vmul.f32 %v3798, 1.442695
    %v3802 = vpow.pop %v3801
    %v3803 = vperm.slane %v2698, 1
    %v3804 = vmul.f32 %v3803, %v2179
    %v3805 = vmul.f32 %v3803, %v2180
    %v3806 = vmul.f32 %v3804, 1.442695
    %v3807 = vpow.pop %v3806
    %v3808 = vmul.f32 %v3805, 1.442695
    %v3809 = vpow.pop %v3808
    %v3810 = vperm.slane %v2698, 2
    %v3811 = vmul.f32 %v3810, %v2179
    %v3812 = vmul.f32 %v3810, %v2180
    %v3813 = vmul.f32 %v3811, 1.442695
    %v3814 = vpow.pop %v3813
    %v3815 = vmul.f32 %v3812, 1.442695
    %v3816 = vpow.pop %v3815
    %v3817 = vperm.slane %v2698, 3
    %v3818 = vmul.f32 %v3817, %v2179
    %v3819 = vmul.f32 %v3817, %v2180
    %v3820 = vmul.f32 %v3818, 1.442695
    %v3821 = vpow.pop %v3820
    %v3822 = vmul.f32 %v3819, 1.442695
    %v3823 = vpow.pop %v3822
    %3824 = vset.pattern.permute.xlu0 24
    %3825 = vperm.xlu0 %3824, %v2730
    %v3826 = vpop.permute.xlu0 %3825
    %3828 = vset.pattern.permute.xlu0 24
    %3829 = vperm.xlu0 %3828, %v2732
    %v3830 = vpop.permute.xlu0 %3829
    %v3832 = vperm.slane %v2742, 0
    %v3833 = vmul.f32 %v3826, %v3832
    %v3834 = vmul.f32 %v3830, %v3832
    %3835 = vset.pattern.permute.xlu0 25
    %3836 = vperm.xlu0 %3835, %v2730
    %v3837 = vpop.permute.xlu0 %3836
    %3839 = vset.pattern.permute.xlu0 25
    %3840 = vperm.xlu0 %3839, %v2732
    %v3841 = vpop.permute.xlu0 %3840
    %v3843 = vperm.slane %v2742, 1
    %v3844 = vmul.f32 %v3837, %v3843
    %v3845 = vmul.f32 %v3841, %v3843
    %3846 = vset.pattern.permute.xlu0 26
    %3847 = vperm.xlu0 %3846, %v2730
    %v3848 = vpop.permute.xlu0 %3847
    %3850 = vset.pattern.permute.xlu0 26
    %3851 = vperm.xlu0 %3850, %v2732
    %v3852 = vpop.permute.xlu0 %3851
    %v3854 = vperm.slane %v2742, 2
    %v3855 = vmul.f32 %v3848, %v3854
    %v3856 = vmul.f32 %v3852, %v3854
    %3857 = vset.pattern.permute.xlu0 27
    %3858 = vperm.xlu0 %3857, %v2730
    %v3859 = vpop.permute.xlu0 %3858
    %3861 = vset.pattern.permute.xlu0 27
    %3862 = vperm.xlu0 %3861, %v2732
    %v3863 = vpop.permute.xlu0 %3862
    %v3865 = vperm.slane %v2742, 3
    %v3866 = vmul.f32 %v3859, %v3865
    %v3867 = vmul.f32 %v3863, %v3865
    %v3868 = vmul.f32 %v3800, %v3710
    %v3869 = vmul.f32 %v3802, %v3711
    %v3870 = vadd.f32 %v3868, %v3833
    %v3871 = vadd.f32 %v3869, %v3834
    %v3872 = vmul.f32 %v3807, %v3870
    %v3873 = vmul.f32 %v3809, %v3871
    %v3874 = vadd.f32 %v3872, %v3844
    %v3875 = vadd.f32 %v3873, %v3845
    %v3876 = vmul.f32 %v3814, %v3874
    %v3877 = vmul.f32 %v3816, %v3875
    %v3878 = vadd.f32 %v3876, %v3855
    %v3879 = vadd.f32 %v3877, %v3856
    %v3880 = vmul.f32 %v3821, %v3878
    %v3881 = vmul.f32 %v3823, %v3879
    %v3882 = vadd.f32 %v3880, %v3866
    %v3883 = vadd.f32 %v3881, %v3867
    %3884 = vset.pattern.permute.xlu0 24
    %3885 = vperm.xlu0 %3884, %v2735
    %v3886 = vpop.permute.xlu0 %3885
    %3888 = vset.pattern.permute.xlu0 24
    %3889 = vperm.xlu0 %3888, %v2737
    %v3890 = vpop.permute.xlu0 %3889
    %v3892 = vmul.f32 %v3870, %v3886
    %v3893 = vmul.f32 %v3871, %v3890
    %v3894 = vsel %vm542, %v3892, 0.0
    %v3895 = vsel %vm542, %v3893, 0.0
    %v3896 = vadd.f32 %v3894, %v3895
    %v3897 = vrot.slane %v3896, 4
    %v3898 = vadd.f32 %v3896, %v3897
    %v3899 = vrot.slane %v3898, 2
    %v3900 = vadd.f32 %v3898, %v3899
    %v3901 = vrot.slane %v3900, 1
    %v3902 = vadd.f32 %v3900, %v3901
    %v3903 = vadd.f32 %v3902, %v2747
    %3905 = vrot.lane.b32.xlu0 %v2409, 64
    %v3906 = vpop.permute.xlu0 %3905
    %v3908 = vmul.f32 %v3903, %v3906
    %3909 = vset.pattern.permute.xlu0 25
    %3910 = vperm.xlu0 %3909, %v2735
    %v3911 = vpop.permute.xlu0 %3910
    %3913 = vset.pattern.permute.xlu0 25
    %3914 = vperm.xlu0 %3913, %v2737
    %v3915 = vpop.permute.xlu0 %3914
    %v3917 = vmul.f32 %v3874, %v3911
    %v3918 = vmul.f32 %v3875, %v3915
    %v3919 = vsel %vm542, %v3917, 0.0
    %v3920 = vsel %vm542, %v3918, 0.0
    %v3921 = vadd.f32 %v3919, %v3920
    %v3922 = vrot.slane %v3921, 4
    %v3923 = vadd.f32 %v3921, %v3922
    %v3924 = vrot.slane %v3923, 2
    %v3925 = vadd.f32 %v3923, %v3924
    %v3926 = vrot.slane %v3925, 1
    %v3927 = vadd.f32 %v3925, %v3926
    %v3928 = vadd.f32 %v3927, %v2747
    %v3929 = vmul.f32 %v3928, %v3906
    %3930 = vset.pattern.permute.xlu0 26
    %3931 = vperm.xlu0 %3930, %v2735
    %v3932 = vpop.permute.xlu0 %3931
    %3934 = vset.pattern.permute.xlu0 26
    %3935 = vperm.xlu0 %3934, %v2737
    %v3936 = vpop.permute.xlu0 %3935
    %v3938 = vmul.f32 %v3878, %v3932
    %v3939 = vmul.f32 %v3879, %v3936
    %v3940 = vsel %vm542, %v3938, 0.0
    %v3941 = vsel %vm542, %v3939, 0.0
    %v3942 = vadd.f32 %v3940, %v3941
    %v3943 = vrot.slane %v3942, 4
    %v3944 = vadd.f32 %v3942, %v3943
    %v3945 = vrot.slane %v3944, 2
    %v3946 = vadd.f32 %v3944, %v3945
    %v3947 = vrot.slane %v3946, 1
    %v3948 = vadd.f32 %v3946, %v3947
    %v3949 = vadd.f32 %v3948, %v2747
    %v3950 = vmul.f32 %v3949, %v3906
    %3951 = vset.pattern.permute.xlu0 27
    %3952 = vperm.xlu0 %3951, %v2735
    %v3953 = vpop.permute.xlu0 %3952
    %3955 = vset.pattern.permute.xlu0 27
    %3956 = vperm.xlu0 %3955, %v2737
    %v3957 = vpop.permute.xlu0 %3956
    %v3959 = vmul.f32 %v3882, %v3953
    %v3960 = vmul.f32 %v3883, %v3957
    %v3961 = vsel %vm542, %v3959, 0.0
    %v3962 = vsel %vm542, %v3960, 0.0
    %v3963 = vadd.f32 %v3961, %v3962
    %v3964 = vrot.slane %v3963, 4
    %v3965 = vadd.f32 %v3963, %v3964
    %v3966 = vrot.slane %v3965, 2
    %v3967 = vadd.f32 %v3965, %v3966
    %v3968 = vrot.slane %v3967, 1
    %v3969 = vadd.f32 %v3967, %v3968
    %v3970 = vadd.f32 %v3969, %v2747
    %v3971 = vmul.f32 %v3970, %v3906
    %v3972 = vperm.slane %v2698, 4
    %v3973 = vmul.f32 %v3972, %v2179
    %v3974 = vmul.f32 %v3972, %v2180
    %v3975 = vmul.f32 %v3973, 1.442695
    %v3976 = vpow.pop %v3975
    %v3977 = vmul.f32 %v3974, 1.442695
    %v3978 = vpow.pop %v3977
    %v3979 = vperm.slane %v2698, 5
    %v3980 = vmul.f32 %v3979, %v2179
    %v3981 = vmul.f32 %v3979, %v2180
    %v3982 = vmul.f32 %v3980, 1.442695
    %v3983 = vpow.pop %v3982
    %v3984 = vmul.f32 %v3981, 1.442695
    %v3985 = vpow.pop %v3984
    %v3986 = vperm.slane %v2698, 6
    %v3987 = vmul.f32 %v3986, %v2179
    %v3988 = vmul.f32 %v3986, %v2180
    %v3989 = vmul.f32 %v3987, 1.442695
    %v3990 = vpow.pop %v3989
    %v3991 = vmul.f32 %v3988, 1.442695
    %v3992 = vpow.pop %v3991
    %v3993 = vperm.slane %v2698, 7
    %v3994 = vmul.f32 %v3993, %v2179
    %v3995 = vmul.f32 %v3993, %v2180
    %v3996 = vmul.f32 %v3994, 1.442695
    %v3997 = vpow.pop %v3996
    %v3998 = vmul.f32 %v3995, 1.442695
    %v3999 = vpow.pop %v3998
    %4000 = vset.pattern.permute.xlu0 28
    %4001 = vperm.xlu0 %4000, %v2730
    %v4002 = vpop.permute.xlu0 %4001
    %4004 = vset.pattern.permute.xlu0 28
    %4005 = vperm.xlu0 %4004, %v2732
    %v4006 = vpop.permute.xlu0 %4005
    %v4008 = vperm.slane %v2742, 4
    %v4009 = vmul.f32 %v4002, %v4008
    %v4010 = vmul.f32 %v4006, %v4008
    %4011 = vset.pattern.permute.xlu0 29
    %4012 = vperm.xlu0 %4011, %v2730
    %v4013 = vpop.permute.xlu0 %4012
    %4015 = vset.pattern.permute.xlu0 29
    %4016 = vperm.xlu0 %4015, %v2732
    %v4017 = vpop.permute.xlu0 %4016
    %v4019 = vperm.slane %v2742, 5
    %v4020 = vmul.f32 %v4013, %v4019
    %v4021 = vmul.f32 %v4017, %v4019
    %4022 = vset.pattern.permute.xlu0 30
    %4023 = vperm.xlu0 %4022, %v2730
    %v4024 = vpop.permute.xlu0 %4023
    %4026 = vset.pattern.permute.xlu0 30
    %4027 = vperm.xlu0 %4026, %v2732
    %v4028 = vpop.permute.xlu0 %4027
    %v4030 = vperm.slane %v2742, 6
    %v4031 = vmul.f32 %v4024, %v4030
    %v4032 = vmul.f32 %v4028, %v4030
    %4033 = vset.pattern.permute.xlu0 31
    %4034 = vperm.xlu0 %4033, %v2730
    %v4035 = vpop.permute.xlu0 %4034
    %4037 = vset.pattern.permute.xlu0 31
    %4038 = vperm.xlu0 %4037, %v2732
    %v4039 = vpop.permute.xlu0 %4038
    %v4041 = vperm.slane %v2742, 7
    %v4042 = vmul.f32 %v4035, %v4041
    %v4043 = vmul.f32 %v4039, %v4041
    %v4044 = vmul.f32 %v3976, %v3882
    %v4045 = vmul.f32 %v3978, %v3883
    %v4046 = vadd.f32 %v4044, %v4009
    %v4047 = vadd.f32 %v4045, %v4010
    %v4048 = vmul.f32 %v3983, %v4046
    %v4049 = vmul.f32 %v3985, %v4047
    %v4050 = vadd.f32 %v4048, %v4020
    %v4051 = vadd.f32 %v4049, %v4021
    %v4052 = vmul.f32 %v3990, %v4050
    %v4053 = vmul.f32 %v3992, %v4051
    %v4054 = vadd.f32 %v4052, %v4031
    %v4055 = vadd.f32 %v4053, %v4032
    %v4056 = vmul.f32 %v3997, %v4054
    %v4057 = vmul.f32 %v3999, %v4055
    %v4058 = vadd.f32 %v4056, %v4042
    %v4059 = vadd.f32 %v4057, %v4043
    %4060 = vset.pattern.permute.xlu0 28
    %4061 = vperm.xlu0 %4060, %v2735
    %v4062 = vpop.permute.xlu0 %4061
    %4064 = vset.pattern.permute.xlu0 28
    %4065 = vperm.xlu0 %4064, %v2737
    %v4066 = vpop.permute.xlu0 %4065
    %v4068 = vmul.f32 %v4046, %v4062
    %v4069 = vmul.f32 %v4047, %v4066
    %v4070 = vsel %vm542, %v4068, 0.0
    %v4071 = vsel %vm542, %v4069, 0.0
    %v4072 = vadd.f32 %v4070, %v4071
    %v4073 = vrot.slane %v4072, 4
    %v4074 = vadd.f32 %v4072, %v4073
    %v4075 = vrot.slane %v4074, 2
    %v4076 = vadd.f32 %v4074, %v4075
    %v4077 = vrot.slane %v4076, 1
    %v4078 = vadd.f32 %v4076, %v4077
    %v4079 = vadd.f32 %v4078, %v2747
    %v4080 = vmul.f32 %v4079, %v3906
    %4081 = vset.pattern.permute.xlu0 29
    %4082 = vperm.xlu0 %4081, %v2735
    %v4083 = vpop.permute.xlu0 %4082
    %4085 = vset.pattern.permute.xlu0 29
    %4086 = vperm.xlu0 %4085, %v2737
    %v4087 = vpop.permute.xlu0 %4086
    %v4089 = vmul.f32 %v4050, %v4083
    %v4090 = vmul.f32 %v4051, %v4087
    %v4091 = vsel %vm542, %v4089, 0.0
    %v4092 = vsel %vm542, %v4090, 0.0
    %v4093 = vadd.f32 %v4091, %v4092
    %v4094 = vrot.slane %v4093, 4
    %v4095 = vadd.f32 %v4093, %v4094
    %v4096 = vrot.slane %v4095, 2
    %v4097 = vadd.f32 %v4095, %v4096
    %v4098 = vrot.slane %v4097, 1
    %v4099 = vadd.f32 %v4097, %v4098
    %v4100 = vadd.f32 %v4099, %v2747
    %v4101 = vmul.f32 %v4100, %v3906
    %4102 = vset.pattern.permute.xlu0 30
    %4103 = vperm.xlu0 %4102, %v2735
    %v4104 = vpop.permute.xlu0 %4103
    %4106 = vset.pattern.permute.xlu0 30
    %4107 = vperm.xlu0 %4106, %v2737
    %v4108 = vpop.permute.xlu0 %4107
    %v4110 = vmul.f32 %v4054, %v4104
    %v4111 = vmul.f32 %v4055, %v4108
    %v4112 = vsel %vm542, %v4110, 0.0
    %v4113 = vsel %vm542, %v4111, 0.0
    %v4114 = vadd.f32 %v4112, %v4113
    %v4115 = vrot.slane %v4114, 4
    %v4116 = vadd.f32 %v4114, %v4115
    %v4117 = vrot.slane %v4116, 2
    %v4118 = vadd.f32 %v4116, %v4117
    %v4119 = vrot.slane %v4118, 1
    %v4120 = vadd.f32 %v4118, %v4119
    %v4121 = vadd.f32 %v4120, %v2747
    %v4122 = vmul.f32 %v4121, %v3906
    %4123 = vset.pattern.permute.xlu0 31
    %4124 = vperm.xlu0 %4123, %v2735
    %v4125 = vpop.permute.xlu0 %4124
    %4127 = vset.pattern.permute.xlu0 31
    %4128 = vperm.xlu0 %4127, %v2737
    %v4129 = vpop.permute.xlu0 %4128
    %v4131 = vmul.f32 %v4058, %v4125
    %v4132 = vmul.f32 %v4059, %v4129
    %v4133 = vsel %vm542, %v4131, 0.0
    %v4134 = vsel %vm542, %v4132, 0.0
    %v4135 = vadd.f32 %v4133, %v4134
    %v4136 = vrot.slane %v4135, 4
    %v4137 = vadd.f32 %v4135, %v4136
    %v4138 = vrot.slane %v4137, 2
    %v4139 = vadd.f32 %v4137, %v4138
    %v4140 = vrot.slane %v4139, 1
    %v4141 = vadd.f32 %v4139, %v4140
    %v4142 = vadd.f32 %v4141, %v2747
    %v4143 = vmul.f32 %v4142, %v3906
    %v4144 = vsel %vm2084, %v2864, %v2885
    %v4145 = vsel %vm2086, %v4144, %v2906
    %v4146 = vsel %vm2088, %v4145, %v2927
    %v4147 = vsel %vm2090, %v4146, %v3036
    %v4148 = vsel %vm2092, %v4147, %v3057
    %v4149 = vsel %vm2094, %v4148, %v3078
    %v4150 = vsel %vm2096, %v4149, %v3099
    %v4151 = vsel %vm2084, %v3212, %v3233
    %v4152 = vsel %vm2086, %v4151, %v3254
    %v4153 = vsel %vm2088, %v4152, %v3275
    %v4154 = vsel %vm2090, %v4153, %v3384
    %v4155 = vsel %vm2092, %v4154, %v3405
    %v4156 = vsel %vm2094, %v4155, %v3426
    %v4157 = vsel %vm2096, %v4156, %v3447
    %v4158 = vsel %vm2084, %v3560, %v3581
    %v4159 = vsel %vm2086, %v4158, %v3602
    %v4160 = vsel %vm2088, %v4159, %v3623
    %v4161 = vsel %vm2090, %v4160, %v3732
    %v4162 = vsel %vm2092, %v4161, %v3753
    %v4163 = vsel %vm2094, %v4162, %v3774
    %v4164 = vsel %vm2096, %v4163, %v3795
    %v4165 = vsel %vm2084, %v3908, %v3929
    %v4166 = vsel %vm2086, %v4165, %v3950
    %v4167 = vsel %vm2088, %v4166, %v3971
    %v4168 = vsel %vm2090, %v4167, %v4080
    %v4169 = vsel %vm2092, %v4168, %v4101
    %v4170 = vsel %vm2094, %v4169, %v4122
    %v4171 = vsel %vm2096, %v4170, %v4143
    %s4172 = scalar_lea.vmem %s6, 32
    %v4173 = vld [vmem:[%s4172] sm:$0xf]
    %v4174 = vld [vmem:[%s4172 + $0x4] sm:$0xf]
    %v4175 = vld [vmem:[%s4172 + $0x8] sm:$0xf]
    %v4176 = vld [vmem:[%s4172 + $0xc] sm:$0xf]
    %v4177 = vld [vmem:[%s4172 + $0x10] sm:$0xf]
    %v4178 = vld [vmem:[%s4172 + $0x14] sm:$0xf]
    %v4179 = vld [vmem:[%s4172 + $0x18] sm:$0xf]
    %v4180 = vld [vmem:[%s4172 + $0x1c] sm:$0xf]
    %v4181 = vpack.c.bf16 %v4157, %v4150
    %v4182 = vpack.c.bf16 %v4171, %v4164
    %v4191 = vunpack.c.l.b16 %v4173
    %v4192 = vunpack.c.l.b16 %v4174
    %v4193 = vunpack.c.l.b16 %v4175
    %v4194 = vunpack.c.l.b16 %v4176
    %v4195 = vunpack.c.l.b16 %v4177
    %v4196 = vunpack.c.l.b16 %v4178
    %v4197 = vunpack.c.l.b16 %v4179
    %v4198 = vunpack.c.l.b16 %v4180
    %v4199 = vpack.c.b16 %v4192, %v4191
    %v4200 = vpack.c.b16 %v4194, %v4193
    %v4201 = vpack.c.b16 %v4196, %v4195
    %v4202 = vpack.c.b16 %v4198, %v4197
    %v4208 = vsel %vm542, %v4181, 0
    %v4211 = vsel %vm542, %v4182, 0
    %4213 = vmatpush.bf16.msra.mxu0 0
    %4214 = vmatpush.bf16.msra.mxu0 0
    %4215 = vmatpush.bf16.msra.mxu0 0
    %4216 = vmatpush.bf16.msra.mxu0 0
    %4217 = vmatpush.bf16.msra.mxu0 %v4202
    %4218 = vmatpush.bf16.msra.mxu0 %v4201
    %4219 = vmatpush.bf16.msra.mxu0 %v4200
    %4220 = vmatpush.bf16.msra.mxu0 %v4199
    %4221 = vmatmul.bf16.gmra.mxu0 %v4208
    %v4222 = vpop.f32.mrf.mxu0
    %v4223 = vpop.f32.mrf.mxu0
    %v4224 = vadd.f32 0.0, %v4223
    %4225 = vmatmul.bf16.gmra.mxu0 %v4211
    %v4226 = vpop.f32.mrf.mxu0
    %v4227 = vpop.f32.mrf.mxu0
    %v4228 = vadd.f32 0.0, %v4227
    %4229 = vdwg.mxu0
    %v4230 = vadd.f32 %v2182, %v4224
    %v4231 = vadd.f32 %v2184, %v4228
    %v4232 = vsel %vm116, %v4230, 0.0
    %4233 = vadd.xlane.f32.xlu0 %v4232
    %v4234 = vpop.xlane.xlu0 %4233
    %v4235 = vsel %vm116, %v4231, 0.0
    %4236 = vadd.xlane.f32.xlu0 %v4235
    %v4237 = vpop.xlane.xlu0 %4236
    %v4238 = vmul.f32 %v4234, %v135
    %v4239 = vmul.f32 %v4237, %v135
    %v4240 = vsub.f32 %v4230, %v4238
    %v4241 = vsub.f32 %v4231, %v4239
    %v4242 = vmul.f32 %v4240, %v4240
    %v4243 = vmul.f32 %v4241, %v4241
    %v4244 = vsel %vm116, %v4242, 0.0
    %4245 = vadd.xlane.f32.xlu0 %v4244
    %v4246 = vpop.xlane.xlu0 %4245
    %v4247 = vsel %vm116, %v4243, 0.0
    %4248 = vadd.xlane.f32.xlu0 %v4247
    %v4249 = vpop.xlane.xlu0 %4248
    %v4250 = vmul.f32 %v4246, %v135
    %v4251 = vmul.f32 %v4249, %v135
    %v4252 = vadd.f32 %v4250, 1e-05
    %v4253 = vadd.f32 %v4251, 1e-05
    %v4254 = vrsqrt.pop %v4252
    %v4255 = vmul.f32 %v4254, %v4252
    %v4256 = vmul.f32 %v4255, %v4254
    %v4257 = vmul.f32 0.5, %v4256
    %v4258 = vsub.f32 1.5, %v4257
    %v4259 = vmul.f32 %v4254, %v4258
    %vm4260 = vweird.f32 %v4252
    %vm4261 = vweird.f32 %v4254
    %vm4262 = vmor %vm4260, %vm4261
    %v4263 = vsel %vm4262, %v4254, %v4259
    %v4264 = vrsqrt.pop %v4253
    %v4265 = vmul.f32 %v4264, %v4253
    %v4266 = vmul.f32 %v4265, %v4264
    %v4267 = vmul.f32 0.5, %v4266
    %v4268 = vsub.f32 1.5, %v4267
    %v4269 = vmul.f32 %v4264, %v4268
    %vm4270 = vweird.f32 %v4253
    %vm4271 = vweird.f32 %v4264
    %vm4272 = vmor %vm4270, %vm4271
    %v4273 = vsel %vm4272, %v4264, %v4269
    %v4274 = vmul.f32 %v4240, %v4263
    %v4275 = vmul.f32 %v4241, %v4273
    %4277 = vrot.lane.b32.xlu0 %v69, 96
    %v4278 = vpop.permute.xlu0 %4277
    %v4280 = vmul.f32 %v4274, %v4278
    %v4281 = vmul.f32 %v4275, %v4278
    %4282 = vrot.lane.b32.xlu0 %v69, 64
    %v4283 = vpop.permute.xlu0 %4282
    %v4285 = vadd.f32 %v4280, %v4283
    %v4286 = vadd.f32 %v4281, %v4283
    %v4288 = vrot.slane %v4285, 7
    %v4291 = vrot.slane %v4286, 6
    %v4293 = vsel %vm2084, %v4288, %v4291
    %v4294 = vld [vmem:[%s7] sm:$0xf]
    %v4295 = vld [vmem:[%s7 + $0x4] sm:$0xf]
    %v4296 = vld [vmem:[%s7 + $0x8] sm:$0xf]
    %v4297 = vld [vmem:[%s7 + $0xc] sm:$0xf]
    %v4298 = vpack.c.bf16 %v4293, %v4293
    %v4299 = vperm.slane %v34, 1
    %v4304 = vunpack.c.l.b16 %v4294
    %v4305 = vunpack.c.l.b16 %v4295
    %v4306 = vunpack.c.l.b16 %v4296
    %v4307 = vunpack.c.l.b16 %v4297
    %v4308 = vpack.c.b16 %v4305, %v4304
    %v4309 = vpack.c.b16 %v4307, %v4306
    %v4313 = vsel %vm116, %v4298, 0
    %4315 = vmatpush.bf16.msra.mxu0 0
    %4316 = vmatpush.bf16.msra.mxu0 0
    %4317 = vmatpush.bf16.msra.mxu0 0
    %4318 = vmatpush.bf16.msra.mxu0 0
    %4319 = vmatpush.bf16.msra.mxu0 0
    %4320 = vmatpush.bf16.msra.mxu0 0
    %4321 = vmatpush.bf16.msra.mxu0 %v4309
    %4322 = vmatpush.bf16.msra.mxu0 %v4308
    %4323 = vmatmul.bf16.gmra.mxu0 %v4313
    %v4324 = vpop.f32.mrf.mxu0
    %v4325 = vadd.f32 %v4299, %v4324
    %v4326 = vpop.f32.mrf.mxu0
    %4327 = vdwg.mxu0
    %4328 = vst [vmem:[#allocation2] sm:$0x3] %v4325
    // Predicated region
    $region38: #{vision_mamba_forward.1} parent=1 // pred_check
      _
    $region39: #{vision_mamba_forward.1} parent=1 // pred_check_branch
      %4330 = sbr.rel (0) target = $region41
    $region40: #{vision_mamba_forward.1} parent=1 // pred_region
      %4332 = vsyncadd [#allocation3], 0
      %s4334 = sshll.u32 [#allocation2], 4
      %s4335 = int_to_ptr.vmem [resolvable:$true] %s4334
      %s4336 = sshll.u32 %s9, 4
      %s4337 = int_to_ptr.hbm [resolvable:$true] %s4336
      %4339 = dma.vmem_to_hbm [thread:$0]  %s4335, 32, %s4337, [#allocation3]
    $region41: #{vision_mamba_forward.1} parent=1 // pred_fallthru
      _
    // Predicated region
    $region42: #{vision_mamba_forward.1} parent=1 // pred_check
      _
    $region43: #{vision_mamba_forward.1} parent=1 // pred_check_branch
      %4341 = sbr.rel (0) target = $region45
    $region44: #{vision_mamba_forward.1} parent=1 // pred_region
      %4343 = dma.done [#allocation3], 32
    $region45: #{vision_mamba_forward.1} parent=1 // pred_fallthru
      _
    %4344 = vsyncpa [#allocation3], 1

</llo_original>
